<compile_context>
chip_gen: v6e
topology: v6e:2x2x1
jax: 0.10.0
libtpu: 0.0.40
codegen_flags: <defaults>
</compile_context>

<pallas_src>
import jax
import jax.numpy as jnp
from jax.experimental import pallas as pl
from jax.experimental.pallas import tpu as pltpu

SEQ = 196          # hard-coded in the torch forward (range(196))
D_IN = 2048        # Linear in_features
D_OUT = 1024       # Linear out_features
N_SPLIT = 2        # output split into two 512-wide halves (v7x 2-TC coverage)


def _linear_relu_mean_kernel(x_ref, w_ref, b_ref, avg_ref, out_ref, mean_ref):
    """One (batch-block, N-half) tile.

    x_ref   : (bt*196, 2048)   bf16   flattened activations
    w_ref   : (2048, TN)       bf16   weight half
    b_ref   : (1, TN)          f32    bias half
    avg_ref : (bt, bt*196)     f32    block-diagonal 1/196 averaging matrix
    out_ref : (bt*196, TN)     f32
    mean_ref: (bt, TN)         f32
    """
    # Single full-K MXU contraction with f32 accumulation.
    y = jnp.dot(x_ref[...], w_ref[...], preferred_element_type=jnp.float32)
    # Bias + ReLU once (bias broadcast (1, TN) -> (bt*196, TN)).
    y = jnp.maximum(y + b_ref[...], 0.0)
    out_ref[...] = y
    # Per-image mean over the 196 sequence rows via a tiny MXU matmul.
    mean_ref[...] = jnp.dot(avg_ref[...], y, preferred_element_type=jnp.float32)


def _pick_batch_block(batch):
    # bt*196 must be a multiple of 16 (bf16 sublane tiling) or cover the full
    # flattened M extent; bt=8 satisfies both goals and amortizes per-step cost.
    if batch % 8 == 0:
        return 8
    # TODO(synk): large batches not divisible by 8 fall back to bt=batch, which
    #             may exceed the VMEM budget; add a padded-M path if needed.
    return batch


def extract_image_feature(x, w, bias):
    """x: (batch, 196, 2048)  w: (2048, 1024)  bias: (1024,)
    Returns (mean (batch, 1024), output (196, batch, 1024)) like the torch module."""
    batch, seq, d_in = x.shape
    assert seq == SEQ and d_in == D_IN
    assert D_OUT % N_SPLIT == 0
    bt = _pick_batch_block(batch)
    tn = D_OUT // N_SPLIT

    # bf16 inputs (halve HBM traffic, native MXU rate); accumulation stays f32.
    x2 = x.reshape(batch * SEQ, D_IN).astype(jnp.bfloat16)
    w_bf = w.astype(jnp.bfloat16)
    b2 = bias.reshape(1, D_OUT).astype(jnp.float32)

    # Block-diagonal averaging matrix: avg[i, j] = (j // 196 == i) / 196.
    row = jax.lax.broadcasted_iota(jnp.int32, (bt, bt * SEQ), 0)
    col = jax.lax.broadcasted_iota(jnp.int32, (bt, bt * SEQ), 1) // SEQ
    avg = jnp.where(row == col, jnp.float32(1.0 / SEQ), jnp.float32(0.0))

    out2, mean = pl.pallas_call(
        _linear_relu_mean_kernel,
        out_shape=(
            jax.ShapeDtypeStruct((batch * SEQ, D_OUT), jnp.float32),
            jax.ShapeDtypeStruct((batch, D_OUT), jnp.float32),
        ),
        grid_spec=pltpu.PrefetchScalarGridSpec(
            num_scalar_prefetch=0,
            grid=(batch // bt, N_SPLIT),
            in_specs=[
                pl.BlockSpec((bt * SEQ, D_IN), lambda i, j: (i, 0)),   # x (resident over j)
                pl.BlockSpec((D_IN, tn), lambda i, j: (0, j)),         # W half
                pl.BlockSpec((1, tn), lambda i, j: (0, j)),            # bias half
                pl.BlockSpec((bt, bt * SEQ), lambda i, j: (0, 0)),     # avg (resident)
            ],
            out_specs=[
                pl.BlockSpec((bt * SEQ, tn), lambda i, j: (i, j)),     # activations
                pl.BlockSpec((bt, tn), lambda i, j: (i, j)),           # means (2-D, lane-dense)
            ],
        ),
        compiler_params=pltpu.CompilerParams(
            dimension_semantics=("parallel", "parallel"),
            vmem_limit_bytes=48 * 1024 * 1024,
        ),
    )(x2, w_bf, b2, avg)

    # Recover torch's (196, batch, 1024) stacked layout (glue-level transpose).
    output = jnp.transpose(out2.reshape(batch, SEQ, D_OUT), (1, 0, 2))
    return mean, output


if __name__ == "__main__":
    key = jax.random.PRNGKey(0)
    kx, kw, kb = jax.random.split(key, 3)

    BATCH = 2
    # deterministic "parameters" (torch Linear default: U(-1/sqrt(fan_in), ..))
    bound = 1.0 / jnp.sqrt(jnp.float32(D_IN))
    w = jax.random.uniform(kw, (D_IN, D_OUT), jnp.float32, -bound, bound)
    bias = jax.random.uniform(kb, (D_OUT,), jnp.float32, -bound, bound)
    x = jax.random.normal(kx, (BATCH, SEQ, D_IN), jnp.float32)

    mean, output = extract_image_feature(x, w, bias)
    jax.block_until_ready((mean, output))

    # pure-JAX f32 reference (kernel uses bf16 inputs + f32 accumulation,
    # so allow ~1e-2 level deviation — deliberate tradeoff, not a bug).
    y_ref = jnp.maximum(jnp.einsum("bsk,kn->bsn", x, w) + bias, 0.0)
    out_ref = jnp.transpose(y_ref, (1, 0, 2))      # (196, batch, 1024)
    mean_ref = jnp.mean(out_ref, axis=0)           # (batch, 1024)
    assert output.shape == (SEQ, BATCH, D_OUT)
    assert mean.shape == (BATCH, D_OUT)
    assert jnp.allclose(output, out_ref, atol=3e-2, rtol=3e-2)
    assert jnp.allclose(mean, mean_ref, atol=3e-2, rtol=3e-2)

    print("KERNEL_OK")
</pallas_src>

<mosaic_0001>
module attributes {stable_mosaic.version = 11 : i64} {
  func.func @_linear_relu_mean_kernel(%arg0: i32, %arg1: i32, %arg2: memref<392x2048xbf16, #tpu.memory_space<vmem>>, %arg3: memref<2048x512xbf16, #tpu.memory_space<vmem>>, %arg4: memref<1x512xf32, #tpu.memory_space<vmem>>, %arg5: memref<2x392xf32, #tpu.memory_space<vmem>>, %arg6: memref<392x512xf32, #tpu.memory_space<vmem>>, %arg7: memref<2x512xf32, #tpu.memory_space<vmem>>) attributes {dimension_semantics = [#tpu.dimension_semantics<parallel>, #tpu.dimension_semantics<parallel>], iteration_bounds = array<i64: 1, 2>, scalar_prefetch = 0 : i64, scratch_operands = 0 : i64, tpu.core_type = #tpu.core_type<tc>, window_params = [{transform_indices = @transform_0, window_bounds = array<i64: 392, 2048>}, {transform_indices = @transform_1, window_bounds = array<i64: 2048, 512>}, {transform_indices = @transform_2, window_bounds = array<i64: 1, 512>}, {pipeline_mode = #tpu.pipeline_mode<synchronous>, transform_indices = @transform_3, window_bounds = array<i64: 2, 392>}, {transform_indices = @transform_4, window_bounds = array<i64: 392, 512>}, {transform_indices = @transform_5, window_bounds = array<i64: 2, 512>}]} {
    %c0 = arith.constant 0 : index
    %c0_0 = arith.constant 0 : index
    %0 = vector.load %arg2[%c0, %c0_0] : memref<392x2048xbf16, #tpu.memory_space<vmem>>, vector<392x2048xbf16>
    %c0_1 = arith.constant 0 : index
    %c0_2 = arith.constant 0 : index
    %1 = vector.load %arg3[%c0_1, %c0_2] : memref<2048x512xbf16, #tpu.memory_space<vmem>>, vector<2048x512xbf16>
    %cst = arith.constant dense<0.000000e+00> : vector<392x512xf32>
    %2 = tpu.matmul %0, %1, %cst {dimension_numbers = #tpu.dot_dimension_numbers<[1], [0], [0], [1], [0, 0, 1, 1], [], []>} : vector<392x2048xbf16>, vector<2048x512xbf16>, vector<392x512xf32> -> vector<392x512xf32>
    %c0_3 = arith.constant 0 : index
    %c0_4 = arith.constant 0 : index
    %3 = vector.load %arg4[%c0_3, %c0_4] : memref<1x512xf32, #tpu.memory_space<vmem>>, vector<1x512xf32>
    %4 = vector.broadcast %3 : vector<1x512xf32> to vector<392x512xf32>
    %5 = arith.addf %2, %4 : vector<392x512xf32>
    %cst_5 = arith.constant 0.000000e+00 : f32
    %6 = vector.broadcast %cst_5 : f32 to vector<392x512xf32>
    %7 = arith.maximumf %5, %6 : vector<392x512xf32>
    %c0_6 = arith.constant 0 : index
    %c0_7 = arith.constant 0 : index
    %8 = vector.load %arg6[%c0_6, %c0_7] : memref<392x512xf32, #tpu.memory_space<vmem>>, vector<392x512xf32>
    tpu.vector_store %arg6[%c0_6, %c0_7], %7 {strides = array<i32>} : memref<392x512xf32, #tpu.memory_space<vmem>>, vector<392x512xf32>,
    %c0_8 = arith.constant 0 : index
    %c0_9 = arith.constant 0 : index
    %9 = vector.load %arg5[%c0_8, %c0_9] : memref<2x392xf32, #tpu.memory_space<vmem>>, vector<2x392xf32>
    %cst_10 = arith.constant dense<0.000000e+00> : vector<2x512xf32>
    %10 = tpu.matmul %9, %7, %cst_10 {dimension_numbers = #tpu.dot_dimension_numbers<[1], [0], [0], [1], [0, 0, 1, 1], [], []>} : vector<2x392xf32>, vector<392x512xf32>, vector<2x512xf32> -> vector<2x512xf32>
    %c0_11 = arith.constant 0 : index
    %c0_12 = arith.constant 0 : index
    %11 = vector.load %arg7[%c0_11, %c0_12] : memref<2x512xf32, #tpu.memory_space<vmem>>, vector<2x512xf32>
    tpu.vector_store %arg7[%c0_11, %c0_12], %10 {strides = array<i32>} : memref<2x512xf32, #tpu.memory_space<vmem>>, vector<2x512xf32>,
    return
  }
  func.func @transform_0(%arg0: i32, %arg1: i32) -> (i32, i32) {
    %c0_i32 = arith.constant 0 : i32
    %c0_i32_0 = arith.constant 0 : i32
    return %arg0, %c0_i32 : i32, i32
  }
  func.func @transform_1(%arg0: i32, %arg1: i32) -> (i32, i32) {
    %c0_i32 = arith.constant 0 : i32
    %c0_i32_0 = arith.constant 0 : i32
    return %c0_i32, %arg1 : i32, i32
  }
  func.func @transform_2(%arg0: i32, %arg1: i32) -> (i32, i32) {
    %c0_i32 = arith.constant 0 : i32
    %c0_i32_0 = arith.constant 0 : i32
    return %c0_i32, %arg1 : i32, i32
  }
  func.func @transform_3(%arg0: i32, %arg1: i32) -> (i32, i32) {
    %c0_i32 = arith.constant 0 : i32
    %c0_i32_0 = arith.constant 0 : i32
    %c0_i32_1 = arith.constant 0 : i32
    return %c0_i32, %c0_i32_0 : i32, i32
  }
  func.func @transform_4(%arg0: i32, %arg1: i32) -> (i32, i32) {
    %c0_i32 = arith.constant 0 : i32
    return %arg0, %arg1 : i32, i32
  }
  func.func @transform_5(%arg0: i32, %arg1: i32) -> (i32, i32) {
    %c0_i32 = arith.constant 0 : i32
    return %arg0, %arg1 : i32, i32
  }
}

</mosaic_0001>

<llo_original>
// kernel: tpu_custom_call.1
$region0: #{tpu_custom_call.1}
  #allocation0 [shape = 'u32[]', space=smem, size = 0x4, offset = 0x4, fixed_abs, tag = 'smem constant byte address 0x4 - core index']
  #allocation1 [shape = 'u32[144,128]{1,0:T(1,128)}', space=vmem, size = 0x12000, scoped, tag = 'internal scratch']
  %s0 = inlined_call_operand.hbm [shape: bf16[392,2048], index: 0, kind: input, shape index: {}]
  %s1 = inlined_call_operand.hbm [shape: bf16[2048,1024], index: 1, kind: input, shape index: {}]
  %s2 = inlined_call_operand.hbm [shape: f32[1,1024], index: 2, kind: input, shape index: {}]
  %s3 = inlined_call_operand.hbm [shape: f32[2,392], index: 3, kind: input, shape index: {}]
  %s4 = inlined_call_operand.hbm [shape: f32[392,1024], index: 4, kind: output, shape index: {0}]
  %s5 = inlined_call_operand.hbm [shape: f32[2,1024], index: 5, kind: output, shape index: {1}]
  %6 = xla_tuple %s4, %s5
  %s7 = sld [smem:[#allocation0]]
  $region73: #{tpu_custom_call.1} parent=0
    _
  %s9 = ssub.s32 1, %s7
  %s10 = scalar_select 0, %s9, %s7
  $region1: #{tpu_custom_call.1} parent=0
    #allocation2 [shape = 'u8[1605632]{0}', space=vmem, size = 0x188000, scoped, tag = 'input window, operand 0, single buffered']
    #allocation3 [shape = 's32[2]{0}', space=sflag, size = 0x8, scoped, tag = 'scoped memory for tpu_custom_call.1']
    #allocation4 [shape = 's32[2]{0}', space=sflag, size = 0x8, scoped, tag = 'scoped memory for tpu_custom_call.1']
    #allocation5 [shape = 'u8[4194304]{0}', space=vmem, size = 0x400000, scoped, tag = 'input window, operand 1']
    #allocation6 [shape = 's32[2]{0}', space=sflag, size = 0x8, scoped, tag = 'scoped memory for tpu_custom_call.1']
    #allocation7 [shape = 'u8[4096]{0}', space=vmem, size = 0x1000, scoped, tag = 'input window, operand 2']
    #allocation8 [shape = 'u8[4096]{0}', space=vmem, size = 0x1000, scoped, tag = 'input window, operand 3, single buffered']
    #allocation9 [shape = 's32[1]{0}', space=sflag, size = 0x4, scoped, tag = 'scoped memory for tpu_custom_call.1']
    #allocation10 [shape = 'u8[1605632]{0}', space=vmem, size = 0x188000, scoped, tag = 'output window, operand 0']
    #allocation11 [shape = 'u8[8192]{0}', space=vmem, size = 0x2000, scoped, tag = 'output window, operand 1']
    #allocation12 [shape = 's32[2]{0}', space=sflag, size = 0x8, scoped, tag = 'scoped memory for tpu_custom_call.1']
    %11 = vsyncpa [#allocation3], 0
    %12 = vsyncpa [#allocation6], 0
    %s13 = scalar_lea.sflag [#allocation6], 1
    %14 = vsyncpa %s13, 0
    %15 = vsyncpa [#allocation9], 0
    %16 = vsyncpa [#allocation4], 0
    %s17 = scalar_lea.sflag [#allocation4], 1
    %18 = vsyncpa %s17, 0
    %19 = vsyncpa [#allocation12], 0
    %s20 = scalar_lea.sflag [#allocation12], 1
    %21 = vsyncpa %s20, 0
    loop: start=0, step=1, limit=4
    $region2: #{tpu_custom_call.1} parent=1 // loop_pre_header
      _
    $region3: #{tpu_custom_call.1} parent=1 // loop_header
      %s23 = sphi 0, %s27
      %p24 = scmp.ge.s32.totalorder %s23, 4
      %s30 = sphi 0, %s42
      %s31 = sphi 0, %s38
      %s32 = sphi 0, %s30
      %s33 = sphi 0, %s31
      %s34 = sphi 0, %s32
      %s35 = sphi 0, %s33
      %s45 = sphi 0, %s47
      %s48 = sphi 0, %s45
      %s49 = sphi 0, %s48
      %s65 = sphi 0, %s49
      %s71 = sphi 0, %s73
      %s74 = sphi 0, %s71
      %s75 = sphi 0, %s74
      %s91 = sphi 0, %s75
      %s97 = sphi 0, %s99
      %s100 = sphi 0, %s97
      %s101 = sphi 0, %s100
      %s117 = sphi 0, %s101
      %s121 = sphi 0, %s121
      %s123 = sphi 0, %s121
      %s124 = sphi 0, %s123
      %s138 = sphi 0, %s124
      %s146 = sphi 0, %s148
      %s149 = sphi 0, %s146
      %s150 = sphi 0, %s149
      %s166 = sphi 0, %s150
      %s174 = sphi 0, %s176
      %s177 = sphi 0, %s174
      %s178 = sphi 0, %s177
      %s194 = sphi 0, %s178
    $region4: #{tpu_custom_call.1} parent=1 // loop_header_branch
      %26 = sbr.rel (%p24) target = $region8
    $region5: #{tpu_custom_call.1} parent=1 // loop_body
      %s28 = ssub.s32 %s23, 1
      %s29 = ssub.s32 %s23, 2
      %s36 = sadd.s32 1, %s31
      %p37 = scmp.ge.s32.totalorder %s36, 2
      %s38 = scalar_select %p37, 0, %s36
      %s39 = sadd.s32 1, %s30
      %s40 = scalar_select %p37, %s39, %s30
      %p41 = scmp.ge.s32.totalorder %s40, 1
      %s42 = scalar_select %p41, 0, %s40
      %s43 = ssub.s32 %s30, %s42
      %p44 = scmp.eq.s32.totalorder %s43, 0
      %s46 = sadd.s32 %s45, 1
      %s47 = scalar_select %p44, %s45, %s46
      %p50 = pneg %p44
      %p51 = scmp.eq.s32.totalorder %s23, 1
      %p52 = por %p50, %p51
      %p53 = scmp.ne.s32.totalorder %s45, %s48
      %p54 = scmp.eq.s32.totalorder %s23, 0
      %p55 = por %p53, %p54
      %p56 = scmp.ne.s32.totalorder %s45, %s48
      %p57 = scmp.eq.s32.totalorder %s28, 1
      %p58 = por %p56, %p57
      %p59 = scmp.ne.s32.totalorder %s48, %s49
      %p60 = scmp.eq.s32.totalorder %s28, 0
      %p61 = por %p59, %p60
      %p62 = scmp.ne.s32.totalorder %s48, %s49
      %p63 = scmp.eq.s32.totalorder %s29, 1
      %p64 = por %p62, %p63
      %p66 = scmp.ne.s32.totalorder %s49, %s65
      %p67 = scmp.eq.s32.totalorder %s29, 0
      %p68 = por %p66, %p67
      %s69 = ssub.s32 %s31, %s38
      %p70 = scmp.eq.s32.totalorder %s69, 0
      %s72 = sadd.s32 %s71, 1
      %s73 = scalar_select %p70, %s71, %s72
      %p76 = pneg %p70
      %p77 = scmp.eq.s32.totalorder %s23, 1
      %p78 = por %p76, %p77
      %p79 = scmp.ne.s32.totalorder %s71, %s74
      %p80 = scmp.eq.s32.totalorder %s23, 0
      %p81 = por %p79, %p80
      %p82 = scmp.ne.s32.totalorder %s71, %s74
      %p83 = scmp.eq.s32.totalorder %s28, 1
      %p84 = por %p82, %p83
      %p85 = scmp.ne.s32.totalorder %s74, %s75
      %p86 = scmp.eq.s32.totalorder %s28, 0
      %p87 = por %p85, %p86
      %p88 = scmp.ne.s32.totalorder %s74, %s75
      %p89 = scmp.eq.s32.totalorder %s29, 1
      %p90 = por %p88, %p89
      %p92 = scmp.ne.s32.totalorder %s75, %s91
      %p93 = scmp.eq.s32.totalorder %s29, 0
      %p94 = por %p92, %p93
      %s95 = ssub.s32 %s31, %s38
      %p96 = scmp.eq.s32.totalorder %s95, 0
      %s98 = sadd.s32 %s97, 1
      %s99 = scalar_select %p96, %s97, %s98
      %p102 = pneg %p96
      %p103 = scmp.eq.s32.totalorder %s23, 1
      %p104 = por %p102, %p103
      %p105 = scmp.ne.s32.totalorder %s97, %s100
      %p106 = scmp.eq.s32.totalorder %s23, 0
      %p107 = por %p105, %p106
      %p108 = scmp.ne.s32.totalorder %s97, %s100
      %p109 = scmp.eq.s32.totalorder %s28, 1
      %p110 = por %p108, %p109
      %p111 = scmp.ne.s32.totalorder %s100, %s101
      %p112 = scmp.eq.s32.totalorder %s28, 0
      %p113 = por %p111, %p112
      %p114 = scmp.ne.s32.totalorder %s100, %s101
      %p115 = scmp.eq.s32.totalorder %s29, 1
      %p116 = por %p114, %p115
      %p118 = scmp.ne.s32.totalorder %s101, %s117
      %p119 = scmp.eq.s32.totalorder %s29, 0
      %p120 = por %p118, %p119
      %s122 = sadd.s32 %s121, 1
      %p125 = scmp.eq.s32.totalorder %s23, 1
      %p126 = scmp.ne.s32.totalorder %s121, %s123
      %p127 = scmp.eq.s32.totalorder %s23, 0
      %p128 = por %p126, %p127
      %p129 = scmp.ne.s32.totalorder %s121, %s123
      %p130 = scmp.eq.s32.totalorder %s28, 1
      %p131 = por %p129, %p130
      %p132 = scmp.ne.s32.totalorder %s123, %s124
      %p133 = scmp.eq.s32.totalorder %s28, 0
      %p134 = por %p132, %p133
      %p135 = scmp.ne.s32.totalorder %s123, %s124
      %p136 = scmp.eq.s32.totalorder %s29, 1
      %p137 = por %p135, %p136
      %p139 = scmp.ne.s32.totalorder %s124, %s138
      %p140 = scmp.eq.s32.totalorder %s29, 0
      %p141 = por %p139, %p140
      %s142 = ssub.s32 %s30, %s42
      %s143 = ssub.s32 %s31, %s38
      %s144 = sor.u32 %s142, %s143
      %p145 = scmp.eq.s32.totalorder %s144, 0
      %s147 = sadd.s32 %s146, 1
      %s148 = scalar_select %p145, %s146, %s147
      %p151 = pneg %p145
      %p152 = scmp.eq.s32.totalorder %s23, 1
      %p153 = por %p151, %p152
      %p154 = scmp.ne.s32.totalorder %s146, %s149
      %p155 = scmp.eq.s32.totalorder %s23, 0
      %p156 = por %p154, %p155
      %p157 = scmp.ne.s32.totalorder %s146, %s149
      %p158 = scmp.eq.s32.totalorder %s28, 1
      %p159 = por %p157, %p158
      %p160 = scmp.ne.s32.totalorder %s149, %s150
      %p161 = scmp.eq.s32.totalorder %s28, 0
      %p162 = por %p160, %p161
      %p163 = scmp.ne.s32.totalorder %s149, %s150
      %p164 = scmp.eq.s32.totalorder %s29, 1
      %p165 = por %p163, %p164
      %p167 = scmp.ne.s32.totalorder %s150, %s166
      %p168 = scmp.eq.s32.totalorder %s29, 0
      %p169 = por %p167, %p168
      %s170 = ssub.s32 %s30, %s42
      %s171 = ssub.s32 %s31, %s38
      %s172 = sor.u32 %s170, %s171
      %p173 = scmp.eq.s32.totalorder %s172, 0
      %s175 = sadd.s32 %s174, 1
      %s176 = scalar_select %p173, %s174, %s175
      %p179 = pneg %p173
      %p180 = scmp.eq.s32.totalorder %s23, 1
      %p181 = por %p179, %p180
      %p182 = scmp.ne.s32.totalorder %s174, %s177
      %p183 = scmp.eq.s32.totalorder %s23, 0
      %p184 = por %p182, %p183
      %p185 = scmp.ne.s32.totalorder %s174, %s177
      %p186 = scmp.eq.s32.totalorder %s28, 1
      %p187 = por %p185, %p186
      %p188 = scmp.ne.s32.totalorder %s177, %s178
      %p189 = scmp.eq.s32.totalorder %s28, 0
      %p190 = por %p188, %p189
      %p191 = scmp.ne.s32.totalorder %s177, %s178
      %p192 = scmp.eq.s32.totalorder %s29, 1
      %p193 = por %p191, %p192
      %p195 = scmp.ne.s32.totalorder %s178, %s194
      %p196 = scmp.eq.s32.totalorder %s29, 0
      %p197 = por %p195, %p196
      %p198 = scmp.le.s32.totalorder 1, %s23
      %p199 = scmp.lt.s32.totalorder %s23, 3
      %p200 = pnand %p198, %p199
      %p201 = pneg %p200
      // Predicated region
      $region9: #{tpu_custom_call.1} parent=5 // pred_check
        _
      $region10: #{tpu_custom_call.1} parent=5 // pred_check_branch
        %203 = sbr.rel (%p200) target = $region12
      $region11: #{tpu_custom_call.1} parent=5 // pred_region
        %s204 = ssub.s32 %s23, 1
        // Predicated region
        $region13: #{tpu_custom_call.1} parent=11 // pred_check
          %p205 = pneg %p61
        $region14: #{tpu_custom_call.1} parent=11 // pred_check_branch
          %207 = sbr.rel (%p205) target = $region16
        $region15: #{tpu_custom_call.1} parent=11 // pred_region
          %s208 = smul.u32 49, %s32
          %s210 = ssub.s32 50176, 50176
          %211 = vsyncadd [#allocation3], %s210
          %s212 = smul.addr %s208, 16
          %s213 = smul.addr %s212, 64
          %s214 = scalar_lea.hbm %s0, %s213
          %s215 = sshll.u32 [#allocation2], 4
          %s216 = int_to_ptr.vmem [resolvable:$true] %s215
          %221 = dma.hbm_to_vmem [thread:$0]  %s214, 50176, %s216, [#allocation3], 1024, 1024, 64
        $region16: #{tpu_custom_call.1} parent=11 // pred_fallthru
          _
        // Predicated region
        $region17: #{tpu_custom_call.1} parent=11 // pred_check
          %p222 = pneg %p134
        $region18: #{tpu_custom_call.1} parent=11 // pred_check_branch
          %224 = sbr.rel (%p222) target = $region20
        $region19: #{tpu_custom_call.1} parent=11 // pred_region
          %s226 = ssub.s32 128, 128
          %227 = vsyncadd [#allocation9], %s226
          %s229 = sshll.u32 [#allocation8], 4
          %s230 = int_to_ptr.vmem [resolvable:$true] %s229
          %232 = dma.hbm_to_vmem [thread:$0]  %s3, 128, %s230, [#allocation9]
        $region20: #{tpu_custom_call.1} parent=11 // pred_fallthru
          _
      $region12: #{tpu_custom_call.1} parent=5 // pred_fallthru
        _
      %p233 = scmp.lt.s32.totalorder %s23, 2
      // Predicated region
      $region21: #{tpu_custom_call.1} parent=5 // pred_check
        %p234 = pneg %p233
      $region22: #{tpu_custom_call.1} parent=5 // pred_check_branch
        %236 = sbr.rel (%p234) target = $region24
      $region23: #{tpu_custom_call.1} parent=5 // pred_region
        // Predicated region
        $region25: #{tpu_custom_call.1} parent=23 // pred_check
          %p237 = pneg %p81
        $region26: #{tpu_custom_call.1} parent=23 // pred_check_branch
          %239 = sbr.rel (%p237) target = $region28
        $region27: #{tpu_custom_call.1} parent=23 // pred_region
          %s240 = sand.u32 %s23, 1
          %s241 = scalar_lea.sflag [#allocation6], %s240
          %s242 = sand.u32 %s71, 1
          %s243 = smul.addr %s242, 4096
          %s244 = scalar_lea.vmem [#allocation5], %s243
          %s245 = smul.u32 4, %s31
          %s247 = ssub.s32 65536, 65536
          %248 = vsyncadd %s241, %s247
          %s249 = smul.addr %s245, 64
          %s250 = scalar_lea.hbm %s1, %s249
          %s251 = sshll.u32 %s244, 4
          %s252 = int_to_ptr.vmem [resolvable:$true] %s251
          %257 = dma.hbm_to_vmem [thread:$0]  %s250, 65536, %s252, %s241, 512, 256, 16
        $region28: #{tpu_custom_call.1} parent=23 // pred_fallthru
          _
        // Predicated region
        $region29: #{tpu_custom_call.1} parent=23 // pred_check
          %p258 = pneg %p107
        $region30: #{tpu_custom_call.1} parent=23 // pred_check_branch
          %260 = sbr.rel (%p258) target = $region32
        $region31: #{tpu_custom_call.1} parent=23 // pred_region
          %s261 = sand.u32 %s23, 1
          %s262 = scalar_lea.sflag [#allocation6], %s261
          %s263 = sand.u32 %s97, 1
          %s264 = smul.addr %s263, 4
          %s265 = scalar_lea.vmem [#allocation7], %s264
          %s266 = smul.u32 4, %s31
          %s268 = ssub.s32 64, 64
          %269 = vsyncadd %s262, %s268
          %s270 = smul.addr %s266, 16
          %s271 = scalar_lea.hbm %s2, %s270
          %s273 = sshll.u32 %s265, 4
          %s274 = int_to_ptr.vmem [resolvable:$true] %s273
          %276 = dma.hbm_to_vmem [thread:$0]  %s271, 64, %s274, %s262
        $region32: #{tpu_custom_call.1} parent=23 // pred_fallthru
          _
      $region24: #{tpu_custom_call.1} parent=5 // pred_fallthru
        _
      %p277 = scmp.le.s32.totalorder 1, %s23
      %p278 = scmp.lt.s32.totalorder %s23, 3
      %p279 = pnand %p277, %p278
      %p280 = pneg %p279
      // Predicated region
      $region33: #{tpu_custom_call.1} parent=5 // pred_check
        _
      $region34: #{tpu_custom_call.1} parent=5 // pred_check_branch
        %282 = sbr.rel (%p279) target = $region36
      $region35: #{tpu_custom_call.1} parent=5 // pred_region
        %s283 = ssub.s32 %s23, 1
        // Predicated region
        $region37: #{tpu_custom_call.1} parent=35 // pred_check
          %p284 = pneg %p61
        $region38: #{tpu_custom_call.1} parent=35 // pred_check_branch
          %286 = sbr.rel (%p284) target = $region40
        $region39: #{tpu_custom_call.1} parent=35 // pred_region
          %287 = dma.done [#allocation3], 50176
        $region40: #{tpu_custom_call.1} parent=35 // pred_fallthru
          _
        %s288 = sand.u32 %s28, 1
        %s289 = scalar_lea.sflag [#allocation6], %s288
        %s290 = sand.u32 %s74, 1
        %s291 = smul.addr %s290, 4096
        %s292 = scalar_lea.vmem [#allocation5], %s291
        // Predicated region
        $region41: #{tpu_custom_call.1} parent=35 // pred_check
          %p293 = pneg %p87
        $region42: #{tpu_custom_call.1} parent=35 // pred_check_branch
          %295 = sbr.rel (%p293) target = $region44
        $region43: #{tpu_custom_call.1} parent=35 // pred_region
          %296 = dma.done %s289, 65536
        $region44: #{tpu_custom_call.1} parent=35 // pred_fallthru
          _
        %s297 = sand.u32 %s28, 1
        %s298 = scalar_lea.sflag [#allocation6], %s297
        %s299 = sand.u32 %s100, 1
        %s300 = smul.addr %s299, 4
        %s301 = scalar_lea.vmem [#allocation7], %s300
        // Predicated region
        $region45: #{tpu_custom_call.1} parent=35 // pred_check
          %p302 = pneg %p113
        $region46: #{tpu_custom_call.1} parent=35 // pred_check_branch
          %304 = sbr.rel (%p302) target = $region48
        $region47: #{tpu_custom_call.1} parent=35 // pred_region
          %305 = dma.done %s298, 64
        $region48: #{tpu_custom_call.1} parent=35 // pred_fallthru
          _
        // Predicated region
        $region49: #{tpu_custom_call.1} parent=35 // pred_check
          %p306 = pneg %p134
        $region50: #{tpu_custom_call.1} parent=35 // pred_check_branch
          %308 = sbr.rel (%p306) target = $region52
        $region51: #{tpu_custom_call.1} parent=35 // pred_region
          %309 = dma.done [#allocation9], 128
        $region52: #{tpu_custom_call.1} parent=35 // pred_fallthru
          _
        %p310 = pneg %p61
        %p311 = pneg %p58
        %s312 = sand.u32 %s28, 1
        %s313 = scalar_lea.sflag [#allocation6], %s312
        %s314 = sand.u32 %s74, 1
        %s315 = smul.addr %s314, 4096
        %s316 = scalar_lea.vmem [#allocation5], %s315
        %p317 = pneg %p87
        %p318 = pneg %p84
        %s319 = sand.u32 %s28, 1
        %s320 = scalar_lea.sflag [#allocation6], %s319
        %s321 = sand.u32 %s100, 1
        %s322 = smul.addr %s321, 4
        %s323 = scalar_lea.vmem [#allocation7], %s322
        %p324 = pneg %p113
        %p325 = pneg %p110
        %p326 = pneg %p134
        %p327 = pneg %p131
        %p328 = pneg %p162
        %p329 = pneg %p159
        %s330 = sand.u32 %s149, 1
        %s331 = scalar_lea.sflag [#allocation4], %s330
        %s332 = sand.u32 %s149, 1
        %s333 = smul.addr %s332, 1568
        %s334 = scalar_lea.vmem [#allocation10], %s333
        %p335 = pneg %p190
        %p336 = pneg %p187
        %s337 = sand.u32 %s177, 1
        %s338 = scalar_lea.sflag [#allocation12], %s337
        %s339 = sand.u32 %s177, 1
        %s340 = smul.addr %s339, 8
        %s341 = scalar_lea.vmem [#allocation11], %s340
        %s342 = smul.u32 49, %s32
        %s343 = smul.u32 4, %s33
        %s344 = smul.u32 4, %s33
        %s345 = smul.u32 49, %s32
        %s346 = smul.u32 4, %s33
        %s347 = smul.u32 4, %s33
        %v348 = vld [vmem:[#allocation2] sm:$0xff]
        %v349 = vld [vmem:[#allocation2 + $0x8] sm:$0xff]
        %v350 = vld [vmem:[#allocation2 + $0x10] sm:$0xff]
        %v351 = vld [vmem:[#allocation2 + $0x18] sm:$0xff]
        %v352 = vld [vmem:[#allocation2 + $0x20] sm:$0xff]
        %v353 = vld [vmem:[#allocation2 + $0x28] sm:$0xff]
        %v354 = vld [vmem:[#allocation2 + $0x30] sm:$0xff]
        %v355 = vld [vmem:[#allocation2 + $0x38] sm:$0xff]
        %v356 = vld [vmem:[#allocation2 + $0x40] sm:$0xff]
        %v357 = vld [vmem:[#allocation2 + $0x48] sm:$0xff]
        %v358 = vld [vmem:[#allocation2 + $0x50] sm:$0xff]
        %v359 = vld [vmem:[#allocation2 + $0x58] sm:$0xff]
        %v360 = vld [vmem:[#allocation2 + $0x60] sm:$0xff]
        %v361 = vld [vmem:[#allocation2 + $0x68] sm:$0xff]
        %v362 = vld [vmem:[#allocation2 + $0x70] sm:$0xff]
        %v363 = vld [vmem:[#allocation2 + $0x78] sm:$0xff]
        %v364 = vld [vmem:[#allocation2 + $0x80] sm:$0xff]
        %v365 = vld [vmem:[#allocation2 + $0x88] sm:$0xff]
        %v366 = vld [vmem:[#allocation2 + $0x90] sm:$0xff]
        %v367 = vld [vmem:[#allocation2 + $0x98] sm:$0xff]
        %v368 = vld [vmem:[#allocation2 + $0xa0] sm:$0xff]
        %v369 = vld [vmem:[#allocation2 + $0xa8] sm:$0xff]
        %v370 = vld [vmem:[#allocation2 + $0xb0] sm:$0xff]
        %v371 = vld [vmem:[#allocation2 + $0xb8] sm:$0xff]
        %v372 = vld [vmem:[#allocation2 + $0xc0] sm:$0xff]
        %v373 = vld [vmem:[#allocation2 + $0xc8] sm:$0xff]
        %v374 = vld [vmem:[#allocation2 + $0xd0] sm:$0xff]
        %v375 = vld [vmem:[#allocation2 + $0xd8] sm:$0xff]
        %v376 = vld [vmem:[#allocation2 + $0xe0] sm:$0xff]
        %v377 = vld [vmem:[#allocation2 + $0xe8] sm:$0xff]
        %v378 = vld [vmem:[#allocation2 + $0xf0] sm:$0xff]
        %v379 = vld [vmem:[#allocation2 + $0xf8] sm:$0xff]
        %v380 = vld [vmem:[#allocation2 + $0x100] sm:$0xff]
        %v381 = vld [vmem:[#allocation2 + $0x108] sm:$0xff]
        %v382 = vld [vmem:[#allocation2 + $0x110] sm:$0xff]
        %v383 = vld [vmem:[#allocation2 + $0x118] sm:$0xff]
        %v384 = vld [vmem:[#allocation2 + $0x120] sm:$0xff]
        %v385 = vld [vmem:[#allocation2 + $0x128] sm:$0xff]
        %v386 = vld [vmem:[#allocation2 + $0x130] sm:$0xff]
        %v387 = vld [vmem:[#allocation2 + $0x138] sm:$0xff]
        %v388 = vld [vmem:[#allocation2 + $0x140] sm:$0xff]
        %v389 = vld [vmem:[#allocation2 + $0x148] sm:$0xff]
        %v390 = vld [vmem:[#allocation2 + $0x150] sm:$0xff]
        %v391 = vld [vmem:[#allocation2 + $0x158] sm:$0xff]
        %v392 = vld [vmem:[#allocation2 + $0x160] sm:$0xff]
        %v393 = vld [vmem:[#allocation2 + $0x168] sm:$0xff]
        %v394 = vld [vmem:[#allocation2 + $0x170] sm:$0xff]
        %v395 = vld [vmem:[#allocation2 + $0x178] sm:$0xff]
        %v396 = vld [vmem:[#allocation2 + $0x180] sm:$0xff]
        %v397 = vld [vmem:[#allocation2 + $0x188] sm:$0xff]
        %v398 = vld [vmem:[#allocation2 + $0x190] sm:$0xff]
        %v399 = vld [vmem:[#allocation2 + $0x198] sm:$0xff]
        %v400 = vld [vmem:[#allocation2 + $0x1a0] sm:$0xff]
        %v401 = vld [vmem:[#allocation2 + $0x1a8] sm:$0xff]
        %v402 = vld [vmem:[#allocation2 + $0x1b0] sm:$0xff]
        %v403 = vld [vmem:[#allocation2 + $0x1b8] sm:$0xff]
        %v404 = vld [vmem:[#allocation2 + $0x1c0] sm:$0xff]
        %v405 = vld [vmem:[#allocation2 + $0x1c8] sm:$0xff]
        %v406 = vld [vmem:[#allocation2 + $0x1d0] sm:$0xff]
        %v407 = vld [vmem:[#allocation2 + $0x1d8] sm:$0xff]
        %v408 = vld [vmem:[#allocation2 + $0x1e0] sm:$0xff]
        %v409 = vld [vmem:[#allocation2 + $0x1e8] sm:$0xff]
        %v410 = vld [vmem:[#allocation2 + $0x1f0] sm:$0xff]
        %v411 = vld [vmem:[#allocation2 + $0x1f8] sm:$0xff]
        %v412 = vld [vmem:[#allocation2 + $0x200] sm:$0xff]
        %v413 = vld [vmem:[#allocation2 + $0x208] sm:$0xff]
        %v414 = vld [vmem:[#allocation2 + $0x210] sm:$0xff]
        %v415 = vld [vmem:[#allocation2 + $0x218] sm:$0xff]
        %v416 = vld [vmem:[#allocation2 + $0x220] sm:$0xff]
        %v417 = vld [vmem:[#allocation2 + $0x228] sm:$0xff]
        %v418 = vld [vmem:[#allocation2 + $0x230] sm:$0xff]
        %v419 = vld [vmem:[#allocation2 + $0x238] sm:$0xff]
        %v420 = vld [vmem:[#allocation2 + $0x240] sm:$0xff]
        %v421 = vld [vmem:[#allocation2 + $0x248] sm:$0xff]
        %v422 = vld [vmem:[#allocation2 + $0x250] sm:$0xff]
        %v423 = vld [vmem:[#allocation2 + $0x258] sm:$0xff]
        %v424 = vld [vmem:[#allocation2 + $0x260] sm:$0xff]
        %v425 = vld [vmem:[#allocation2 + $0x268] sm:$0xff]
        %v426 = vld [vmem:[#allocation2 + $0x270] sm:$0xff]
        %v427 = vld [vmem:[#allocation2 + $0x278] sm:$0xff]
        %v428 = vld [vmem:[#allocation2 + $0x280] sm:$0xff]
        %v429 = vld [vmem:[#allocation2 + $0x288] sm:$0xff]
        %v430 = vld [vmem:[#allocation2 + $0x290] sm:$0xff]
        %v431 = vld [vmem:[#allocation2 + $0x298] sm:$0xff]
        %v432 = vld [vmem:[#allocation2 + $0x2a0] sm:$0xff]
        %v433 = vld [vmem:[#allocation2 + $0x2a8] sm:$0xff]
        %v434 = vld [vmem:[#allocation2 + $0x2b0] sm:$0xff]
        %v435 = vld [vmem:[#allocation2 + $0x2b8] sm:$0xff]
        %v436 = vld [vmem:[#allocation2 + $0x2c0] sm:$0xff]
        %v437 = vld [vmem:[#allocation2 + $0x2c8] sm:$0xff]
        %v438 = vld [vmem:[#allocation2 + $0x2d0] sm:$0xff]
        %v439 = vld [vmem:[#allocation2 + $0x2d8] sm:$0xff]
        %v440 = vld [vmem:[#allocation2 + $0x2e0] sm:$0xff]
        %v441 = vld [vmem:[#allocation2 + $0x2e8] sm:$0xff]
        %v442 = vld [vmem:[#allocation2 + $0x2f0] sm:$0xff]
        %v443 = vld [vmem:[#allocation2 + $0x2f8] sm:$0xff]
        %v444 = vld [vmem:[#allocation2 + $0x300] sm:$0xff]
        %v445 = vld [vmem:[#allocation2 + $0x308] sm:$0xff]
        %v446 = vld [vmem:[#allocation2 + $0x310] sm:$0xff]
        %v447 = vld [vmem:[#allocation2 + $0x318] sm:$0xff]
        %v448 = vld [vmem:[#allocation2 + $0x320] sm:$0xff]
        %v449 = vld [vmem:[#allocation2 + $0x328] sm:$0xff]
        %v450 = vld [vmem:[#allocation2 + $0x330] sm:$0xff]
        %v451 = vld [vmem:[#allocation2 + $0x338] sm:$0xff]
        %v452 = vld [vmem:[#allocation2 + $0x340] sm:$0xff]
        %v453 = vld [vmem:[#allocation2 + $0x348] sm:$0xff]
        %v454 = vld [vmem:[#allocation2 + $0x350] sm:$0xff]
        %v455 = vld [vmem:[#allocation2 + $0x358] sm:$0xff]
        %v456 = vld [vmem:[#allocation2 + $0x360] sm:$0xff]
        %v457 = vld [vmem:[#allocation2 + $0x368] sm:$0xff]
        %v458 = vld [vmem:[#allocation2 + $0x370] sm:$0xff]
        %v459 = vld [vmem:[#allocation2 + $0x378] sm:$0xff]
        %v460 = vld [vmem:[#allocation2 + $0x380] sm:$0xff]
        %v461 = vld [vmem:[#allocation2 + $0x388] sm:$0xff]
        %v462 = vld [vmem:[#allocation2 + $0x390] sm:$0xff]
        %v463 = vld [vmem:[#allocation2 + $0x398] sm:$0xff]
        %v464 = vld [vmem:[#allocation2 + $0x3a0] sm:$0xff]
        %v465 = vld [vmem:[#allocation2 + $0x3a8] sm:$0xff]
        %v466 = vld [vmem:[#allocation2 + $0x3b0] sm:$0xff]
        %v467 = vld [vmem:[#allocation2 + $0x3b8] sm:$0xff]
        %v468 = vld [vmem:[#allocation2 + $0x3c0] sm:$0xff]
        %v469 = vld [vmem:[#allocation2 + $0x3c8] sm:$0xff]
        %v470 = vld [vmem:[#allocation2 + $0x3d0] sm:$0xff]
        %v471 = vld [vmem:[#allocation2 + $0x3d8] sm:$0xff]
        %v472 = vld [vmem:[#allocation2 + $0x3e0] sm:$0xff]
        %v473 = vld [vmem:[#allocation2 + $0x3e8] sm:$0xff]
        %v474 = vld [vmem:[#allocation2 + $0x3f0] sm:$0xff]
        %v475 = vld [vmem:[#allocation2 + $0x3f8] sm:$0xff]
        %v476 = vld [vmem:[#allocation2 + $0x400] sm:$0xff]
        %v477 = vld [vmem:[#allocation2 + $0x408] sm:$0xff]
        %v478 = vld [vmem:[#allocation2 + $0x410] sm:$0xff]
        %v479 = vld [vmem:[#allocation2 + $0x418] sm:$0xff]
        %v480 = vld [vmem:[#allocation2 + $0x420] sm:$0xff]
        %v481 = vld [vmem:[#allocation2 + $0x428] sm:$0xff]
        %v482 = vld [vmem:[#allocation2 + $0x430] sm:$0xff]
        %v483 = vld [vmem:[#allocation2 + $0x438] sm:$0xff]
        %v484 = vld [vmem:[#allocation2 + $0x440] sm:$0xff]
        %v485 = vld [vmem:[#allocation2 + $0x448] sm:$0xff]
        %v486 = vld [vmem:[#allocation2 + $0x450] sm:$0xff]
        %v487 = vld [vmem:[#allocation2 + $0x458] sm:$0xff]
        %v488 = vld [vmem:[#allocation2 + $0x460] sm:$0xff]
        %v489 = vld [vmem:[#allocation2 + $0x468] sm:$0xff]
        %v490 = vld [vmem:[#allocation2 + $0x470] sm:$0xff]
        %v491 = vld [vmem:[#allocation2 + $0x478] sm:$0xff]
        %v492 = vld [vmem:[#allocation2 + $0x480] sm:$0xff]
        %v493 = vld [vmem:[#allocation2 + $0x488] sm:$0xff]
        %v494 = vld [vmem:[#allocation2 + $0x490] sm:$0xff]
        %v495 = vld [vmem:[#allocation2 + $0x498] sm:$0xff]
        %v496 = vld [vmem:[#allocation2 + $0x4a0] sm:$0xff]
        %v497 = vld [vmem:[#allocation2 + $0x4a8] sm:$0xff]
        %v498 = vld [vmem:[#allocation2 + $0x4b0] sm:$0xff]
        %v499 = vld [vmem:[#allocation2 + $0x4b8] sm:$0xff]
        %v500 = vld [vmem:[#allocation2 + $0x4c0] sm:$0xff]
        %v501 = vld [vmem:[#allocation2 + $0x4c8] sm:$0xff]
        %v502 = vld [vmem:[#allocation2 + $0x4d0] sm:$0xff]
        %v503 = vld [vmem:[#allocation2 + $0x4d8] sm:$0xff]
        %v504 = vld [vmem:[#allocation2 + $0x4e0] sm:$0xff]
        %v505 = vld [vmem:[#allocation2 + $0x4e8] sm:$0xff]
        %v506 = vld [vmem:[#allocation2 + $0x4f0] sm:$0xff]
        %v507 = vld [vmem:[#allocation2 + $0x4f8] sm:$0xff]
        %v508 = vld [vmem:[#allocation2 + $0x500] sm:$0xff]
        %v509 = vld [vmem:[#allocation2 + $0x508] sm:$0xff]
        %v510 = vld [vmem:[#allocation2 + $0x510] sm:$0xff]
        %v511 = vld [vmem:[#allocation2 + $0x518] sm:$0xff]
        %v512 = vld [vmem:[#allocation2 + $0x520] sm:$0xff]
        %v513 = vld [vmem:[#allocation2 + $0x528] sm:$0xff]
        %v514 = vld [vmem:[#allocation2 + $0x530] sm:$0xff]
        %v515 = vld [vmem:[#allocation2 + $0x538] sm:$0xff]
        %v516 = vld [vmem:[#allocation2 + $0x540] sm:$0xff]
        %v517 = vld [vmem:[#allocation2 + $0x548] sm:$0xff]
        %v518 = vld [vmem:[#allocation2 + $0x550] sm:$0xff]
        %v519 = vld [vmem:[#allocation2 + $0x558] sm:$0xff]
        %v520 = vld [vmem:[#allocation2 + $0x560] sm:$0xff]
        %v521 = vld [vmem:[#allocation2 + $0x568] sm:$0xff]
        %v522 = vld [vmem:[#allocation2 + $0x570] sm:$0xff]
        %v523 = vld [vmem:[#allocation2 + $0x578] sm:$0xff]
        %v524 = vld [vmem:[#allocation2 + $0x580] sm:$0xff]
        %v525 = vld [vmem:[#allocation2 + $0x588] sm:$0xff]
        %v526 = vld [vmem:[#allocation2 + $0x590] sm:$0xff]
        %v527 = vld [vmem:[#allocation2 + $0x598] sm:$0xff]
        %v528 = vld [vmem:[#allocation2 + $0x5a0] sm:$0xff]
        %v529 = vld [vmem:[#allocation2 + $0x5a8] sm:$0xff]
        %v530 = vld [vmem:[#allocation2 + $0x5b0] sm:$0xff]
        %v531 = vld [vmem:[#allocation2 + $0x5b8] sm:$0xff]
        %v532 = vld [vmem:[#allocation2 + $0x5c0] sm:$0xff]
        %v533 = vld [vmem:[#allocation2 + $0x5c8] sm:$0xff]
        %v534 = vld [vmem:[#allocation2 + $0x5d0] sm:$0xff]
        %v535 = vld [vmem:[#allocation2 + $0x5d8] sm:$0xff]
        %v536 = vld [vmem:[#allocation2 + $0x5e0] sm:$0xff]
        %v537 = vld [vmem:[#allocation2 + $0x5e8] sm:$0xff]
        %v538 = vld [vmem:[#allocation2 + $0x5f0] sm:$0xff]
        %v539 = vld [vmem:[#allocation2 + $0x5f8] sm:$0xff]
        %v540 = vld [vmem:[#allocation2 + $0x600] sm:$0xff]
        %v541 = vld [vmem:[#allocation2 + $0x608] sm:$0xff]
        %v542 = vld [vmem:[#allocation2 + $0x610] sm:$0xff]
        %v543 = vld [vmem:[#allocation2 + $0x618] sm:$0xff]
        %v544 = vld [vmem:[#allocation2 + $0x620] sm:$0xff]
        %v545 = vld [vmem:[#allocation2 + $0x628] sm:$0xff]
        %v546 = vld [vmem:[#allocation2 + $0x630] sm:$0xff]
        %v547 = vld [vmem:[#allocation2 + $0x638] sm:$0xff]
        %v548 = vld [vmem:[#allocation2 + $0x640] sm:$0xff]
        %v549 = vld [vmem:[#allocation2 + $0x648] sm:$0xff]
        %v550 = vld [vmem:[#allocation2 + $0x650] sm:$0xff]
        %v551 = vld [vmem:[#allocation2 + $0x658] sm:$0xff]
        %v552 = vld [vmem:[#allocation2 + $0x660] sm:$0xff]
        %v553 = vld [vmem:[#allocation2 + $0x668] sm:$0xff]
        %v554 = vld [vmem:[#allocation2 + $0x670] sm:$0xff]
        %v555 = vld [vmem:[#allocation2 + $0x678] sm:$0xff]
        %v556 = vld [vmem:[#allocation2 + $0x680] sm:$0xff]
        %v557 = vld [vmem:[#allocation2 + $0x688] sm:$0xff]
        %v558 = vld [vmem:[#allocation2 + $0x690] sm:$0xff]
        %v559 = vld [vmem:[#allocation2 + $0x698] sm:$0xff]
        %v560 = vld [vmem:[#allocation2 + $0x6a0] sm:$0xff]
        %v561 = vld [vmem:[#allocation2 + $0x6a8] sm:$0xff]
        %v562 = vld [vmem:[#allocation2 + $0x6b0] sm:$0xff]
        %v563 = vld [vmem:[#allocation2 + $0x6b8] sm:$0xff]
        %v564 = vld [vmem:[#allocation2 + $0x6c0] sm:$0xff]
        %v565 = vld [vmem:[#allocation2 + $0x6c8] sm:$0xff]
        %v566 = vld [vmem:[#allocation2 + $0x6d0] sm:$0xff]
        %v567 = vld [vmem:[#allocation2 + $0x6d8] sm:$0xff]
        %v568 = vld [vmem:[#allocation2 + $0x6e0] sm:$0xff]
        %v569 = vld [vmem:[#allocation2 + $0x6e8] sm:$0xff]
        %v570 = vld [vmem:[#allocation2 + $0x6f0] sm:$0xff]
        %v571 = vld [vmem:[#allocation2 + $0x6f8] sm:$0xff]
        %v572 = vld [vmem:[#allocation2 + $0x700] sm:$0xff]
        %v573 = vld [vmem:[#allocation2 + $0x708] sm:$0xff]
        %v574 = vld [vmem:[#allocation2 + $0x710] sm:$0xff]
        %v575 = vld [vmem:[#allocation2 + $0x718] sm:$0xff]
        %v576 = vld [vmem:[#allocation2 + $0x720] sm:$0xff]
        %v577 = vld [vmem:[#allocation2 + $0x728] sm:$0xff]
        %v578 = vld [vmem:[#allocation2 + $0x730] sm:$0xff]
        %v579 = vld [vmem:[#allocation2 + $0x738] sm:$0xff]
        %v580 = vld [vmem:[#allocation2 + $0x740] sm:$0xff]
        %v581 = vld [vmem:[#allocation2 + $0x748] sm:$0xff]
        %v582 = vld [vmem:[#allocation2 + $0x750] sm:$0xff]
        %v583 = vld [vmem:[#allocation2 + $0x758] sm:$0xff]
        %v584 = vld [vmem:[#allocation2 + $0x760] sm:$0xff]
        %v585 = vld [vmem:[#allocation2 + $0x768] sm:$0xff]
        %v586 = vld [vmem:[#allocation2 + $0x770] sm:$0xff]
        %v587 = vld [vmem:[#allocation2 + $0x778] sm:$0xff]
        %v588 = vld [vmem:[#allocation2 + $0x780] sm:$0xff]
        %v589 = vld [vmem:[#allocation2 + $0x788] sm:$0xff]
        %v590 = vld [vmem:[#allocation2 + $0x790] sm:$0xff]
        %v591 = vld [vmem:[#allocation2 + $0x798] sm:$0xff]
        %v592 = vld [vmem:[#allocation2 + $0x7a0] sm:$0xff]
        %v593 = vld [vmem:[#allocation2 + $0x7a8] sm:$0xff]
        %v594 = vld [vmem:[#allocation2 + $0x7b0] sm:$0xff]
        %v595 = vld [vmem:[#allocation2 + $0x7b8] sm:$0xff]
        %v596 = vld [vmem:[#allocation2 + $0x7c0] sm:$0xff]
        %v597 = vld [vmem:[#allocation2 + $0x7c8] sm:$0xff]
        %v598 = vld [vmem:[#allocation2 + $0x7d0] sm:$0xff]
        %v599 = vld [vmem:[#allocation2 + $0x7d8] sm:$0xff]
        %v600 = vld [vmem:[#allocation2 + $0x7e0] sm:$0xff]
        %v601 = vld [vmem:[#allocation2 + $0x7e8] sm:$0xff]
        %v602 = vld [vmem:[#allocation2 + $0x7f0] sm:$0xff]
        %v603 = vld [vmem:[#allocation2 + $0x7f8] sm:$0xff]
        %v604 = vld [vmem:[#allocation2 + $0x800] sm:$0xff]
        %v605 = vld [vmem:[#allocation2 + $0x808] sm:$0xff]
        %v606 = vld [vmem:[#allocation2 + $0x810] sm:$0xff]
        %v607 = vld [vmem:[#allocation2 + $0x818] sm:$0xff]
        %v608 = vld [vmem:[#allocation2 + $0x820] sm:$0xff]
        %v609 = vld [vmem:[#allocation2 + $0x828] sm:$0xff]
        %v610 = vld [vmem:[#allocation2 + $0x830] sm:$0xff]
        %v611 = vld [vmem:[#allocation2 + $0x838] sm:$0xff]
        %v612 = vld [vmem:[#allocation2 + $0x840] sm:$0xff]
        %v613 = vld [vmem:[#allocation2 + $0x848] sm:$0xff]
        %v614 = vld [vmem:[#allocation2 + $0x850] sm:$0xff]
        %v615 = vld [vmem:[#allocation2 + $0x858] sm:$0xff]
        %v616 = vld [vmem:[#allocation2 + $0x860] sm:$0xff]
        %v617 = vld [vmem:[#allocation2 + $0x868] sm:$0xff]
        %v618 = vld [vmem:[#allocation2 + $0x870] sm:$0xff]
        %v619 = vld [vmem:[#allocation2 + $0x878] sm:$0xff]
        %v620 = vld [vmem:[#allocation2 + $0x880] sm:$0xff]
        %v621 = vld [vmem:[#allocation2 + $0x888] sm:$0xff]
        %v622 = vld [vmem:[#allocation2 + $0x890] sm:$0xff]
        %v623 = vld [vmem:[#allocation2 + $0x898] sm:$0xff]
        %v624 = vld [vmem:[#allocation2 + $0x8a0] sm:$0xff]
        %v625 = vld [vmem:[#allocation2 + $0x8a8] sm:$0xff]
        %v626 = vld [vmem:[#allocation2 + $0x8b0] sm:$0xff]
        %v627 = vld [vmem:[#allocation2 + $0x8b8] sm:$0xff]
        %v628 = vld [vmem:[#allocation2 + $0x8c0] sm:$0xff]
        %v629 = vld [vmem:[#allocation2 + $0x8c8] sm:$0xff]
        %v630 = vld [vmem:[#allocation2 + $0x8d0] sm:$0xff]
        %v631 = vld [vmem:[#allocation2 + $0x8d8] sm:$0xff]
        %v632 = vld [vmem:[#allocation2 + $0x8e0] sm:$0xff]
        %v633 = vld [vmem:[#allocation2 + $0x8e8] sm:$0xff]
        %v634 = vld [vmem:[#allocation2 + $0x8f0] sm:$0xff]
        %v635 = vld [vmem:[#allocation2 + $0x8f8] sm:$0xff]
        %v636 = vld [vmem:[#allocation2 + $0x900] sm:$0xff]
        %v637 = vld [vmem:[#allocation2 + $0x908] sm:$0xff]
        %v638 = vld [vmem:[#allocation2 + $0x910] sm:$0xff]
        %v639 = vld [vmem:[#allocation2 + $0x918] sm:$0xff]
        %v640 = vld [vmem:[#allocation2 + $0x920] sm:$0xff]
        %v641 = vld [vmem:[#allocation2 + $0x928] sm:$0xff]
        %v642 = vld [vmem:[#allocation2 + $0x930] sm:$0xff]
        %v643 = vld [vmem:[#allocation2 + $0x938] sm:$0xff]
        %v644 = vld [vmem:[#allocation2 + $0x940] sm:$0xff]
        %v645 = vld [vmem:[#allocation2 + $0x948] sm:$0xff]
        %v646 = vld [vmem:[#allocation2 + $0x950] sm:$0xff]
        %v647 = vld [vmem:[#allocation2 + $0x958] sm:$0xff]
        %v648 = vld [vmem:[#allocation2 + $0x960] sm:$0xff]
        %v649 = vld [vmem:[#allocation2 + $0x968] sm:$0xff]
        %v650 = vld [vmem:[#allocation2 + $0x970] sm:$0xff]
        %v651 = vld [vmem:[#allocation2 + $0x978] sm:$0xff]
        %v652 = vld [vmem:[#allocation2 + $0x980] sm:$0xff]
        %v653 = vld [vmem:[#allocation2 + $0x988] sm:$0xff]
        %v654 = vld [vmem:[#allocation2 + $0x990] sm:$0xff]
        %v655 = vld [vmem:[#allocation2 + $0x998] sm:$0xff]
        %v656 = vld [vmem:[#allocation2 + $0x9a0] sm:$0xff]
        %v657 = vld [vmem:[#allocation2 + $0x9a8] sm:$0xff]
        %v658 = vld [vmem:[#allocation2 + $0x9b0] sm:$0xff]
        %v659 = vld [vmem:[#allocation2 + $0x9b8] sm:$0xff]
        %v660 = vld [vmem:[#allocation2 + $0x9c0] sm:$0xff]
        %v661 = vld [vmem:[#allocation2 + $0x9c8] sm:$0xff]
        %v662 = vld [vmem:[#allocation2 + $0x9d0] sm:$0xff]
        %v663 = vld [vmem:[#allocation2 + $0x9d8] sm:$0xff]
        %v664 = vld [vmem:[#allocation2 + $0x9e0] sm:$0xff]
        %v665 = vld [vmem:[#allocation2 + $0x9e8] sm:$0xff]
        %v666 = vld [vmem:[#allocation2 + $0x9f0] sm:$0xff]
        %v667 = vld [vmem:[#allocation2 + $0x9f8] sm:$0xff]
        %v668 = vld [vmem:[#allocation2 + $0xa00] sm:$0xff]
        %v669 = vld [vmem:[#allocation2 + $0xa08] sm:$0xff]
        %v670 = vld [vmem:[#allocation2 + $0xa10] sm:$0xff]
        %v671 = vld [vmem:[#allocation2 + $0xa18] sm:$0xff]
        %v672 = vld [vmem:[#allocation2 + $0xa20] sm:$0xff]
        %v673 = vld [vmem:[#allocation2 + $0xa28] sm:$0xff]
        %v674 = vld [vmem:[#allocation2 + $0xa30] sm:$0xff]
        %v675 = vld [vmem:[#allocation2 + $0xa38] sm:$0xff]
        %v676 = vld [vmem:[#allocation2 + $0xa40] sm:$0xff]
        %v677 = vld [vmem:[#allocation2 + $0xa48] sm:$0xff]
        %v678 = vld [vmem:[#allocation2 + $0xa50] sm:$0xff]
        %v679 = vld [vmem:[#allocation2 + $0xa58] sm:$0xff]
        %v680 = vld [vmem:[#allocation2 + $0xa60] sm:$0xff]
        %v681 = vld [vmem:[#allocation2 + $0xa68] sm:$0xff]
        %v682 = vld [vmem:[#allocation2 + $0xa70] sm:$0xff]
        %v683 = vld [vmem:[#allocation2 + $0xa78] sm:$0xff]
        %v684 = vld [vmem:[#allocation2 + $0xa80] sm:$0xff]
        %v685 = vld [vmem:[#allocation2 + $0xa88] sm:$0xff]
        %v686 = vld [vmem:[#allocation2 + $0xa90] sm:$0xff]
        %v687 = vld [vmem:[#allocation2 + $0xa98] sm:$0xff]
        %v688 = vld [vmem:[#allocation2 + $0xaa0] sm:$0xff]
        %v689 = vld [vmem:[#allocation2 + $0xaa8] sm:$0xff]
        %v690 = vld [vmem:[#allocation2 + $0xab0] sm:$0xff]
        %v691 = vld [vmem:[#allocation2 + $0xab8] sm:$0xff]
        %v692 = vld [vmem:[#allocation2 + $0xac0] sm:$0xff]
        %v693 = vld [vmem:[#allocation2 + $0xac8] sm:$0xff]
        %v694 = vld [vmem:[#allocation2 + $0xad0] sm:$0xff]
        %v695 = vld [vmem:[#allocation2 + $0xad8] sm:$0xff]
        %v696 = vld [vmem:[#allocation2 + $0xae0] sm:$0xff]
        %v697 = vld [vmem:[#allocation2 + $0xae8] sm:$0xff]
        %v698 = vld [vmem:[#allocation2 + $0xaf0] sm:$0xff]
        %v699 = vld [vmem:[#allocation2 + $0xaf8] sm:$0xff]
        %v700 = vld [vmem:[#allocation2 + $0xb00] sm:$0xff]
        %v701 = vld [vmem:[#allocation2 + $0xb08] sm:$0xff]
        %v702 = vld [vmem:[#allocation2 + $0xb10] sm:$0xff]
        %v703 = vld [vmem:[#allocation2 + $0xb18] sm:$0xff]
        %v704 = vld [vmem:[#allocation2 + $0xb20] sm:$0xff]
        %v705 = vld [vmem:[#allocation2 + $0xb28] sm:$0xff]
        %v706 = vld [vmem:[#allocation2 + $0xb30] sm:$0xff]
        %v707 = vld [vmem:[#allocation2 + $0xb38] sm:$0xff]
        %v708 = vld [vmem:[#allocation2 + $0xb40] sm:$0xff]
        %v709 = vld [vmem:[#allocation2 + $0xb48] sm:$0xff]
        %v710 = vld [vmem:[#allocation2 + $0xb50] sm:$0xff]
        %v711 = vld [vmem:[#allocation2 + $0xb58] sm:$0xff]
        %v712 = vld [vmem:[#allocation2 + $0xb60] sm:$0xff]
        %v713 = vld [vmem:[#allocation2 + $0xb68] sm:$0xff]
        %v714 = vld [vmem:[#allocation2 + $0xb70] sm:$0xff]
        %v715 = vld [vmem:[#allocation2 + $0xb78] sm:$0xff]
        %v716 = vld [vmem:[#allocation2 + $0xb80] sm:$0xff]
        %v717 = vld [vmem:[#allocation2 + $0xb88] sm:$0xff]
        %v718 = vld [vmem:[#allocation2 + $0xb90] sm:$0xff]
        %v719 = vld [vmem:[#allocation2 + $0xb98] sm:$0xff]
        %v720 = vld [vmem:[#allocation2 + $0xba0] sm:$0xff]
        %v721 = vld [vmem:[#allocation2 + $0xba8] sm:$0xff]
        %v722 = vld [vmem:[#allocation2 + $0xbb0] sm:$0xff]
        %v723 = vld [vmem:[#allocation2 + $0xbb8] sm:$0xff]
        %v724 = vld [vmem:[#allocation2 + $0xbc0] sm:$0xff]
        %v725 = vld [vmem:[#allocation2 + $0xbc8] sm:$0xff]
        %v726 = vld [vmem:[#allocation2 + $0xbd0] sm:$0xff]
        %v727 = vld [vmem:[#allocation2 + $0xbd8] sm:$0xff]
        %v728 = vld [vmem:[#allocation2 + $0xbe0] sm:$0xff]
        %v729 = vld [vmem:[#allocation2 + $0xbe8] sm:$0xff]
        %v730 = vld [vmem:[#allocation2 + $0xbf0] sm:$0xff]
        %v731 = vld [vmem:[#allocation2 + $0xbf8] sm:$0xff]
        %v732 = vld [vmem:[#allocation2 + $0xc00] sm:$0xff]
        %v733 = vld [vmem:[#allocation2 + $0xc08] sm:$0xff]
        %v734 = vld [vmem:[#allocation2 + $0xc10] sm:$0xff]
        %v735 = vld [vmem:[#allocation2 + $0xc18] sm:$0xff]
        %v736 = vld [vmem:[#allocation2 + $0xc20] sm:$0xff]
        %v737 = vld [vmem:[#allocation2 + $0xc28] sm:$0xff]
        %v738 = vld [vmem:[#allocation2 + $0xc30] sm:$0xff]
        %v739 = vld [vmem:[#allocation2 + $0xc38] sm:$0xff]
        %v740 = vld [vmem:[%s292] sm:$0xff]
        %v741 = vld [vmem:[%s292 + $0x8] sm:$0xff]
        %v742 = vld [vmem:[%s292 + $0x10] sm:$0xff]
        %v743 = vld [vmem:[%s292 + $0x18] sm:$0xff]
        %v744 = vld [vmem:[%s292 + $0x20] sm:$0xff]
        %v745 = vld [vmem:[%s292 + $0x28] sm:$0xff]
        %v746 = vld [vmem:[%s292 + $0x30] sm:$0xff]
        %v747 = vld [vmem:[%s292 + $0x38] sm:$0xff]
        %v748 = vld [vmem:[%s292 + $0x40] sm:$0xff]
        %v749 = vld [vmem:[%s292 + $0x48] sm:$0xff]
        %v750 = vld [vmem:[%s292 + $0x50] sm:$0xff]
        %v751 = vld [vmem:[%s292 + $0x58] sm:$0xff]
        %v752 = vld [vmem:[%s292 + $0x60] sm:$0xff]
        %v753 = vld [vmem:[%s292 + $0x68] sm:$0xff]
        %v754 = vld [vmem:[%s292 + $0x70] sm:$0xff]
        %v755 = vld [vmem:[%s292 + $0x78] sm:$0xff]
        %v756 = vld [vmem:[%s292 + $0x80] sm:$0xff]
        %v757 = vld [vmem:[%s292 + $0x88] sm:$0xff]
        %v758 = vld [vmem:[%s292 + $0x90] sm:$0xff]
        %v759 = vld [vmem:[%s292 + $0x98] sm:$0xff]
        %v760 = vld [vmem:[%s292 + $0xa0] sm:$0xff]
        %v761 = vld [vmem:[%s292 + $0xa8] sm:$0xff]
        %v762 = vld [vmem:[%s292 + $0xb0] sm:$0xff]
        %v763 = vld [vmem:[%s292 + $0xb8] sm:$0xff]
        %v764 = vld [vmem:[%s292 + $0xc0] sm:$0xff]
        %v765 = vld [vmem:[%s292 + $0xc8] sm:$0xff]
        %v766 = vld [vmem:[%s292 + $0xd0] sm:$0xff]
        %v767 = vld [vmem:[%s292 + $0xd8] sm:$0xff]
        %v768 = vld [vmem:[%s292 + $0xe0] sm:$0xff]
        %v769 = vld [vmem:[%s292 + $0xe8] sm:$0xff]
        %v770 = vld [vmem:[%s292 + $0xf0] sm:$0xff]
        %v771 = vld [vmem:[%s292 + $0xf8] sm:$0xff]
        %v772 = vld [vmem:[%s292 + $0x100] sm:$0xff]
        %v773 = vld [vmem:[%s292 + $0x108] sm:$0xff]
        %v774 = vld [vmem:[%s292 + $0x110] sm:$0xff]
        %v775 = vld [vmem:[%s292 + $0x118] sm:$0xff]
        %v776 = vld [vmem:[%s292 + $0x120] sm:$0xff]
        %v777 = vld [vmem:[%s292 + $0x128] sm:$0xff]
        %v778 = vld [vmem:[%s292 + $0x130] sm:$0xff]
        %v779 = vld [vmem:[%s292 + $0x138] sm:$0xff]
        %v780 = vld [vmem:[%s292 + $0x140] sm:$0xff]
        %v781 = vld [vmem:[%s292 + $0x148] sm:$0xff]
        %v782 = vld [vmem:[%s292 + $0x150] sm:$0xff]
        %v783 = vld [vmem:[%s292 + $0x158] sm:$0xff]
        %v784 = vld [vmem:[%s292 + $0x160] sm:$0xff]
        %v785 = vld [vmem:[%s292 + $0x168] sm:$0xff]
        %v786 = vld [vmem:[%s292 + $0x170] sm:$0xff]
        %v787 = vld [vmem:[%s292 + $0x178] sm:$0xff]
        %v788 = vld [vmem:[%s292 + $0x180] sm:$0xff]
        %v789 = vld [vmem:[%s292 + $0x188] sm:$0xff]
        %v790 = vld [vmem:[%s292 + $0x190] sm:$0xff]
        %v791 = vld [vmem:[%s292 + $0x198] sm:$0xff]
        %v792 = vld [vmem:[%s292 + $0x1a0] sm:$0xff]
        %v793 = vld [vmem:[%s292 + $0x1a8] sm:$0xff]
        %v794 = vld [vmem:[%s292 + $0x1b0] sm:$0xff]
        %v795 = vld [vmem:[%s292 + $0x1b8] sm:$0xff]
        %v796 = vld [vmem:[%s292 + $0x1c0] sm:$0xff]
        %v797 = vld [vmem:[%s292 + $0x1c8] sm:$0xff]
        %v798 = vld [vmem:[%s292 + $0x1d0] sm:$0xff]
        %v799 = vld [vmem:[%s292 + $0x1d8] sm:$0xff]
        %v800 = vld [vmem:[%s292 + $0x1e0] sm:$0xff]
        %v801 = vld [vmem:[%s292 + $0x1e8] sm:$0xff]
        %v802 = vld [vmem:[%s292 + $0x1f0] sm:$0xff]
        %v803 = vld [vmem:[%s292 + $0x1f8] sm:$0xff]
        %v804 = vld [vmem:[%s292 + $0x200] sm:$0xff]
        %v805 = vld [vmem:[%s292 + $0x208] sm:$0xff]
        %v806 = vld [vmem:[%s292 + $0x210] sm:$0xff]
        %v807 = vld [vmem:[%s292 + $0x218] sm:$0xff]
        %v808 = vld [vmem:[%s292 + $0x220] sm:$0xff]
        %v809 = vld [vmem:[%s292 + $0x228] sm:$0xff]
        %v810 = vld [vmem:[%s292 + $0x230] sm:$0xff]
        %v811 = vld [vmem:[%s292 + $0x238] sm:$0xff]
        %v812 = vld [vmem:[%s292 + $0x240] sm:$0xff]
        %v813 = vld [vmem:[%s292 + $0x248] sm:$0xff]
        %v814 = vld [vmem:[%s292 + $0x250] sm:$0xff]
        %v815 = vld [vmem:[%s292 + $0x258] sm:$0xff]
        %v816 = vld [vmem:[%s292 + $0x260] sm:$0xff]
        %v817 = vld [vmem:[%s292 + $0x268] sm:$0xff]
        %v818 = vld [vmem:[%s292 + $0x270] sm:$0xff]
        %v819 = vld [vmem:[%s292 + $0x278] sm:$0xff]
        %v820 = vld [vmem:[%s292 + $0x280] sm:$0xff]
        %v821 = vld [vmem:[%s292 + $0x288] sm:$0xff]
        %v822 = vld [vmem:[%s292 + $0x290] sm:$0xff]
        %v823 = vld [vmem:[%s292 + $0x298] sm:$0xff]
        %v824 = vld [vmem:[%s292 + $0x2a0] sm:$0xff]
        %v825 = vld [vmem:[%s292 + $0x2a8] sm:$0xff]
        %v826 = vld [vmem:[%s292 + $0x2b0] sm:$0xff]
        %v827 = vld [vmem:[%s292 + $0x2b8] sm:$0xff]
        %v828 = vld [vmem:[%s292 + $0x2c0] sm:$0xff]
        %v829 = vld [vmem:[%s292 + $0x2c8] sm:$0xff]
        %v830 = vld [vmem:[%s292 + $0x2d0] sm:$0xff]
        %v831 = vld [vmem:[%s292 + $0x2d8] sm:$0xff]
        %v832 = vld [vmem:[%s292 + $0x2e0] sm:$0xff]
        %v833 = vld [vmem:[%s292 + $0x2e8] sm:$0xff]
        %v834 = vld [vmem:[%s292 + $0x2f0] sm:$0xff]
        %v835 = vld [vmem:[%s292 + $0x2f8] sm:$0xff]
        %v836 = vld [vmem:[%s292 + $0x300] sm:$0xff]
        %v837 = vld [vmem:[%s292 + $0x308] sm:$0xff]
        %v838 = vld [vmem:[%s292 + $0x310] sm:$0xff]
        %v839 = vld [vmem:[%s292 + $0x318] sm:$0xff]
        %v840 = vld [vmem:[%s292 + $0x320] sm:$0xff]
        %v841 = vld [vmem:[%s292 + $0x328] sm:$0xff]
        %v842 = vld [vmem:[%s292 + $0x330] sm:$0xff]
        %v843 = vld [vmem:[%s292 + $0x338] sm:$0xff]
        %v844 = vld [vmem:[%s292 + $0x340] sm:$0xff]
        %v845 = vld [vmem:[%s292 + $0x348] sm:$0xff]
        %v846 = vld [vmem:[%s292 + $0x350] sm:$0xff]
        %v847 = vld [vmem:[%s292 + $0x358] sm:$0xff]
        %v848 = vld [vmem:[%s292 + $0x360] sm:$0xff]
        %v849 = vld [vmem:[%s292 + $0x368] sm:$0xff]
        %v850 = vld [vmem:[%s292 + $0x370] sm:$0xff]
        %v851 = vld [vmem:[%s292 + $0x378] sm:$0xff]
        %v852 = vld [vmem:[%s292 + $0x380] sm:$0xff]
        %v853 = vld [vmem:[%s292 + $0x388] sm:$0xff]
        %v854 = vld [vmem:[%s292 + $0x390] sm:$0xff]
        %v855 = vld [vmem:[%s292 + $0x398] sm:$0xff]
        %v856 = vld [vmem:[%s292 + $0x3a0] sm:$0xff]
        %v857 = vld [vmem:[%s292 + $0x3a8] sm:$0xff]
        %v858 = vld [vmem:[%s292 + $0x3b0] sm:$0xff]
        %v859 = vld [vmem:[%s292 + $0x3b8] sm:$0xff]
        %v860 = vld [vmem:[%s292 + $0x3c0] sm:$0xff]
        %v861 = vld [vmem:[%s292 + $0x3c8] sm:$0xff]
        %v862 = vld [vmem:[%s292 + $0x3d0] sm:$0xff]
        %v863 = vld [vmem:[%s292 + $0x3d8] sm:$0xff]
        %v864 = vld [vmem:[%s292 + $0x3e0] sm:$0xff]
        %v865 = vld [vmem:[%s292 + $0x3e8] sm:$0xff]
        %v866 = vld [vmem:[%s292 + $0x3f0] sm:$0xff]
        %v867 = vld [vmem:[%s292 + $0x3f8] sm:$0xff]
        %v868 = vld [vmem:[%s292 + $0x400] sm:$0xff]
        %v869 = vld [vmem:[%s292 + $0x408] sm:$0xff]
        %v870 = vld [vmem:[%s292 + $0x410] sm:$0xff]
        %v871 = vld [vmem:[%s292 + $0x418] sm:$0xff]
        %v872 = vld [vmem:[%s292 + $0x420] sm:$0xff]
        %v873 = vld [vmem:[%s292 + $0x428] sm:$0xff]
        %v874 = vld [vmem:[%s292 + $0x430] sm:$0xff]
        %v875 = vld [vmem:[%s292 + $0x438] sm:$0xff]
        %v876 = vld [vmem:[%s292 + $0x440] sm:$0xff]
        %v877 = vld [vmem:[%s292 + $0x448] sm:$0xff]
        %v878 = vld [vmem:[%s292 + $0x450] sm:$0xff]
        %v879 = vld [vmem:[%s292 + $0x458] sm:$0xff]
        %v880 = vld [vmem:[%s292 + $0x460] sm:$0xff]
        %v881 = vld [vmem:[%s292 + $0x468] sm:$0xff]
        %v882 = vld [vmem:[%s292 + $0x470] sm:$0xff]
        %v883 = vld [vmem:[%s292 + $0x478] sm:$0xff]
        %v884 = vld [vmem:[%s292 + $0x480] sm:$0xff]
        %v885 = vld [vmem:[%s292 + $0x488] sm:$0xff]
        %v886 = vld [vmem:[%s292 + $0x490] sm:$0xff]
        %v887 = vld [vmem:[%s292 + $0x498] sm:$0xff]
        %v888 = vld [vmem:[%s292 + $0x4a0] sm:$0xff]
        %v889 = vld [vmem:[%s292 + $0x4a8] sm:$0xff]
        %v890 = vld [vmem:[%s292 + $0x4b0] sm:$0xff]
        %v891 = vld [vmem:[%s292 + $0x4b8] sm:$0xff]
        %v892 = vld [vmem:[%s292 + $0x4c0] sm:$0xff]
        %v893 = vld [vmem:[%s292 + $0x4c8] sm:$0xff]
        %v894 = vld [vmem:[%s292 + $0x4d0] sm:$0xff]
        %v895 = vld [vmem:[%s292 + $0x4d8] sm:$0xff]
        %v896 = vld [vmem:[%s292 + $0x4e0] sm:$0xff]
        %v897 = vld [vmem:[%s292 + $0x4e8] sm:$0xff]
        %v898 = vld [vmem:[%s292 + $0x4f0] sm:$0xff]
        %v899 = vld [vmem:[%s292 + $0x4f8] sm:$0xff]
        %v900 = vld [vmem:[%s292 + $0x500] sm:$0xff]
        %v901 = vld [vmem:[%s292 + $0x508] sm:$0xff]
        %v902 = vld [vmem:[%s292 + $0x510] sm:$0xff]
        %v903 = vld [vmem:[%s292 + $0x518] sm:$0xff]
        %v904 = vld [vmem:[%s292 + $0x520] sm:$0xff]
        %v905 = vld [vmem:[%s292 + $0x528] sm:$0xff]
        %v906 = vld [vmem:[%s292 + $0x530] sm:$0xff]
        %v907 = vld [vmem:[%s292 + $0x538] sm:$0xff]
        %v908 = vld [vmem:[%s292 + $0x540] sm:$0xff]
        %v909 = vld [vmem:[%s292 + $0x548] sm:$0xff]
        %v910 = vld [vmem:[%s292 + $0x550] sm:$0xff]
        %v911 = vld [vmem:[%s292 + $0x558] sm:$0xff]
        %v912 = vld [vmem:[%s292 + $0x560] sm:$0xff]
        %v913 = vld [vmem:[%s292 + $0x568] sm:$0xff]
        %v914 = vld [vmem:[%s292 + $0x570] sm:$0xff]
        %v915 = vld [vmem:[%s292 + $0x578] sm:$0xff]
        %v916 = vld [vmem:[%s292 + $0x580] sm:$0xff]
        %v917 = vld [vmem:[%s292 + $0x588] sm:$0xff]
        %v918 = vld [vmem:[%s292 + $0x590] sm:$0xff]
        %v919 = vld [vmem:[%s292 + $0x598] sm:$0xff]
        %v920 = vld [vmem:[%s292 + $0x5a0] sm:$0xff]
        %v921 = vld [vmem:[%s292 + $0x5a8] sm:$0xff]
        %v922 = vld [vmem:[%s292 + $0x5b0] sm:$0xff]
        %v923 = vld [vmem:[%s292 + $0x5b8] sm:$0xff]
        %v924 = vld [vmem:[%s292 + $0x5c0] sm:$0xff]
        %v925 = vld [vmem:[%s292 + $0x5c8] sm:$0xff]
        %v926 = vld [vmem:[%s292 + $0x5d0] sm:$0xff]
        %v927 = vld [vmem:[%s292 + $0x5d8] sm:$0xff]
        %v928 = vld [vmem:[%s292 + $0x5e0] sm:$0xff]
        %v929 = vld [vmem:[%s292 + $0x5e8] sm:$0xff]
        %v930 = vld [vmem:[%s292 + $0x5f0] sm:$0xff]
        %v931 = vld [vmem:[%s292 + $0x5f8] sm:$0xff]
        %v932 = vld [vmem:[%s292 + $0x600] sm:$0xff]
        %v933 = vld [vmem:[%s292 + $0x608] sm:$0xff]
        %v934 = vld [vmem:[%s292 + $0x610] sm:$0xff]
        %v935 = vld [vmem:[%s292 + $0x618] sm:$0xff]
        %v936 = vld [vmem:[%s292 + $0x620] sm:$0xff]
        %v937 = vld [vmem:[%s292 + $0x628] sm:$0xff]
        %v938 = vld [vmem:[%s292 + $0x630] sm:$0xff]
        %v939 = vld [vmem:[%s292 + $0x638] sm:$0xff]
        %v940 = vld [vmem:[%s292 + $0x640] sm:$0xff]
        %v941 = vld [vmem:[%s292 + $0x648] sm:$0xff]
        %v942 = vld [vmem:[%s292 + $0x650] sm:$0xff]
        %v943 = vld [vmem:[%s292 + $0x658] sm:$0xff]
        %v944 = vld [vmem:[%s292 + $0x660] sm:$0xff]
        %v945 = vld [vmem:[%s292 + $0x668] sm:$0xff]
        %v946 = vld [vmem:[%s292 + $0x670] sm:$0xff]
        %v947 = vld [vmem:[%s292 + $0x678] sm:$0xff]
        %v948 = vld [vmem:[%s292 + $0x680] sm:$0xff]
        %v949 = vld [vmem:[%s292 + $0x688] sm:$0xff]
        %v950 = vld [vmem:[%s292 + $0x690] sm:$0xff]
        %v951 = vld [vmem:[%s292 + $0x698] sm:$0xff]
        %v952 = vld [vmem:[%s292 + $0x6a0] sm:$0xff]
        %v953 = vld [vmem:[%s292 + $0x6a8] sm:$0xff]
        %v954 = vld [vmem:[%s292 + $0x6b0] sm:$0xff]
        %v955 = vld [vmem:[%s292 + $0x6b8] sm:$0xff]
        %v956 = vld [vmem:[%s292 + $0x6c0] sm:$0xff]
        %v957 = vld [vmem:[%s292 + $0x6c8] sm:$0xff]
        %v958 = vld [vmem:[%s292 + $0x6d0] sm:$0xff]
        %v959 = vld [vmem:[%s292 + $0x6d8] sm:$0xff]
        %v960 = vld [vmem:[%s292 + $0x6e0] sm:$0xff]
        %v961 = vld [vmem:[%s292 + $0x6e8] sm:$0xff]
        %v962 = vld [vmem:[%s292 + $0x6f0] sm:$0xff]
        %v963 = vld [vmem:[%s292 + $0x6f8] sm:$0xff]
        %v964 = vld [vmem:[%s292 + $0x700] sm:$0xff]
        %v965 = vld [vmem:[%s292 + $0x708] sm:$0xff]
        %v966 = vld [vmem:[%s292 + $0x710] sm:$0xff]
        %v967 = vld [vmem:[%s292 + $0x718] sm:$0xff]
        %v968 = vld [vmem:[%s292 + $0x720] sm:$0xff]
        %v969 = vld [vmem:[%s292 + $0x728] sm:$0xff]
        %v970 = vld [vmem:[%s292 + $0x730] sm:$0xff]
        %v971 = vld [vmem:[%s292 + $0x738] sm:$0xff]
        %v972 = vld [vmem:[%s292 + $0x740] sm:$0xff]
        %v973 = vld [vmem:[%s292 + $0x748] sm:$0xff]
        %v974 = vld [vmem:[%s292 + $0x750] sm:$0xff]
        %v975 = vld [vmem:[%s292 + $0x758] sm:$0xff]
        %v976 = vld [vmem:[%s292 + $0x760] sm:$0xff]
        %v977 = vld [vmem:[%s292 + $0x768] sm:$0xff]
        %v978 = vld [vmem:[%s292 + $0x770] sm:$0xff]
        %v979 = vld [vmem:[%s292 + $0x778] sm:$0xff]
        %v980 = vld [vmem:[%s292 + $0x780] sm:$0xff]
        %v981 = vld [vmem:[%s292 + $0x788] sm:$0xff]
        %v982 = vld [vmem:[%s292 + $0x790] sm:$0xff]
        %v983 = vld [vmem:[%s292 + $0x798] sm:$0xff]
        %v984 = vld [vmem:[%s292 + $0x7a0] sm:$0xff]
        %v985 = vld [vmem:[%s292 + $0x7a8] sm:$0xff]
        %v986 = vld [vmem:[%s292 + $0x7b0] sm:$0xff]
        %v987 = vld [vmem:[%s292 + $0x7b8] sm:$0xff]
        %v988 = vld [vmem:[%s292 + $0x7c0] sm:$0xff]
        %v989 = vld [vmem:[%s292 + $0x7c8] sm:$0xff]
        %v990 = vld [vmem:[%s292 + $0x7d0] sm:$0xff]
        %v991 = vld [vmem:[%s292 + $0x7d8] sm:$0xff]
        %v992 = vld [vmem:[%s292 + $0x7e0] sm:$0xff]
        %v993 = vld [vmem:[%s292 + $0x7e8] sm:$0xff]
        %v994 = vld [vmem:[%s292 + $0x7f0] sm:$0xff]
        %v995 = vld [vmem:[%s292 + $0x7f8] sm:$0xff]
        %v996 = vld [vmem:[%s292 + $0x800] sm:$0xff]
        %v997 = vld [vmem:[%s292 + $0x808] sm:$0xff]
        %v998 = vld [vmem:[%s292 + $0x810] sm:$0xff]
        %v999 = vld [vmem:[%s292 + $0x818] sm:$0xff]
        %v1000 = vld [vmem:[%s292 + $0x820] sm:$0xff]
        %v1001 = vld [vmem:[%s292 + $0x828] sm:$0xff]
        %v1002 = vld [vmem:[%s292 + $0x830] sm:$0xff]
        %v1003 = vld [vmem:[%s292 + $0x838] sm:$0xff]
        %v1004 = vld [vmem:[%s292 + $0x840] sm:$0xff]
        %v1005 = vld [vmem:[%s292 + $0x848] sm:$0xff]
        %v1006 = vld [vmem:[%s292 + $0x850] sm:$0xff]
        %v1007 = vld [vmem:[%s292 + $0x858] sm:$0xff]
        %v1008 = vld [vmem:[%s292 + $0x860] sm:$0xff]
        %v1009 = vld [vmem:[%s292 + $0x868] sm:$0xff]
        %v1010 = vld [vmem:[%s292 + $0x870] sm:$0xff]
        %v1011 = vld [vmem:[%s292 + $0x878] sm:$0xff]
        %v1012 = vld [vmem:[%s292 + $0x880] sm:$0xff]
        %v1013 = vld [vmem:[%s292 + $0x888] sm:$0xff]
        %v1014 = vld [vmem:[%s292 + $0x890] sm:$0xff]
        %v1015 = vld [vmem:[%s292 + $0x898] sm:$0xff]
        %v1016 = vld [vmem:[%s292 + $0x8a0] sm:$0xff]
        %v1017 = vld [vmem:[%s292 + $0x8a8] sm:$0xff]
        %v1018 = vld [vmem:[%s292 + $0x8b0] sm:$0xff]
        %v1019 = vld [vmem:[%s292 + $0x8b8] sm:$0xff]
        %v1020 = vld [vmem:[%s292 + $0x8c0] sm:$0xff]
        %v1021 = vld [vmem:[%s292 + $0x8c8] sm:$0xff]
        %v1022 = vld [vmem:[%s292 + $0x8d0] sm:$0xff]
        %v1023 = vld [vmem:[%s292 + $0x8d8] sm:$0xff]
        %v1024 = vld [vmem:[%s292 + $0x8e0] sm:$0xff]
        %v1025 = vld [vmem:[%s292 + $0x8e8] sm:$0xff]
        %v1026 = vld [vmem:[%s292 + $0x8f0] sm:$0xff]
        %v1027 = vld [vmem:[%s292 + $0x8f8] sm:$0xff]
        %v1028 = vld [vmem:[%s292 + $0x900] sm:$0xff]
        %v1029 = vld [vmem:[%s292 + $0x908] sm:$0xff]
        %v1030 = vld [vmem:[%s292 + $0x910] sm:$0xff]
        %v1031 = vld [vmem:[%s292 + $0x918] sm:$0xff]
        %v1032 = vld [vmem:[%s292 + $0x920] sm:$0xff]
        %v1033 = vld [vmem:[%s292 + $0x928] sm:$0xff]
        %v1034 = vld [vmem:[%s292 + $0x930] sm:$0xff]
        %v1035 = vld [vmem:[%s292 + $0x938] sm:$0xff]
        %v1036 = vld [vmem:[%s292 + $0x940] sm:$0xff]
        %v1037 = vld [vmem:[%s292 + $0x948] sm:$0xff]
        %v1038 = vld [vmem:[%s292 + $0x950] sm:$0xff]
        %v1039 = vld [vmem:[%s292 + $0x958] sm:$0xff]
        %v1040 = vld [vmem:[%s292 + $0x960] sm:$0xff]
        %v1041 = vld [vmem:[%s292 + $0x968] sm:$0xff]
        %v1042 = vld [vmem:[%s292 + $0x970] sm:$0xff]
        %v1043 = vld [vmem:[%s292 + $0x978] sm:$0xff]
        %v1044 = vld [vmem:[%s292 + $0x980] sm:$0xff]
        %v1045 = vld [vmem:[%s292 + $0x988] sm:$0xff]
        %v1046 = vld [vmem:[%s292 + $0x990] sm:$0xff]
        %v1047 = vld [vmem:[%s292 + $0x998] sm:$0xff]
        %v1048 = vld [vmem:[%s292 + $0x9a0] sm:$0xff]
        %v1049 = vld [vmem:[%s292 + $0x9a8] sm:$0xff]
        %v1050 = vld [vmem:[%s292 + $0x9b0] sm:$0xff]
        %v1051 = vld [vmem:[%s292 + $0x9b8] sm:$0xff]
        %v1052 = vld [vmem:[%s292 + $0x9c0] sm:$0xff]
        %v1053 = vld [vmem:[%s292 + $0x9c8] sm:$0xff]
        %v1054 = vld [vmem:[%s292 + $0x9d0] sm:$0xff]
        %v1055 = vld [vmem:[%s292 + $0x9d8] sm:$0xff]
        %v1056 = vld [vmem:[%s292 + $0x9e0] sm:$0xff]
        %v1057 = vld [vmem:[%s292 + $0x9e8] sm:$0xff]
        %v1058 = vld [vmem:[%s292 + $0x9f0] sm:$0xff]
        %v1059 = vld [vmem:[%s292 + $0x9f8] sm:$0xff]
        %v1060 = vld [vmem:[%s292 + $0xa00] sm:$0xff]
        %v1061 = vld [vmem:[%s292 + $0xa08] sm:$0xff]
        %v1062 = vld [vmem:[%s292 + $0xa10] sm:$0xff]
        %v1063 = vld [vmem:[%s292 + $0xa18] sm:$0xff]
        %v1064 = vld [vmem:[%s292 + $0xa20] sm:$0xff]
        %v1065 = vld [vmem:[%s292 + $0xa28] sm:$0xff]
        %v1066 = vld [vmem:[%s292 + $0xa30] sm:$0xff]
        %v1067 = vld [vmem:[%s292 + $0xa38] sm:$0xff]
        %v1068 = vld [vmem:[%s292 + $0xa40] sm:$0xff]
        %v1069 = vld [vmem:[%s292 + $0xa48] sm:$0xff]
        %v1070 = vld [vmem:[%s292 + $0xa50] sm:$0xff]
        %v1071 = vld [vmem:[%s292 + $0xa58] sm:$0xff]
        %v1072 = vld [vmem:[%s292 + $0xa60] sm:$0xff]
        %v1073 = vld [vmem:[%s292 + $0xa68] sm:$0xff]
        %v1074 = vld [vmem:[%s292 + $0xa70] sm:$0xff]
        %v1075 = vld [vmem:[%s292 + $0xa78] sm:$0xff]
        %v1076 = vld [vmem:[%s292 + $0xa80] sm:$0xff]
        %v1077 = vld [vmem:[%s292 + $0xa88] sm:$0xff]
        %v1078 = vld [vmem:[%s292 + $0xa90] sm:$0xff]
        %v1079 = vld [vmem:[%s292 + $0xa98] sm:$0xff]
        %v1080 = vld [vmem:[%s292 + $0xaa0] sm:$0xff]
        %v1081 = vld [vmem:[%s292 + $0xaa8] sm:$0xff]
        %v1082 = vld [vmem:[%s292 + $0xab0] sm:$0xff]
        %v1083 = vld [vmem:[%s292 + $0xab8] sm:$0xff]
        %v1084 = vld [vmem:[%s292 + $0xac0] sm:$0xff]
        %v1085 = vld [vmem:[%s292 + $0xac8] sm:$0xff]
        %v1086 = vld [vmem:[%s292 + $0xad0] sm:$0xff]
        %v1087 = vld [vmem:[%s292 + $0xad8] sm:$0xff]
        %v1088 = vld [vmem:[%s292 + $0xae0] sm:$0xff]
        %v1089 = vld [vmem:[%s292 + $0xae8] sm:$0xff]
        %v1090 = vld [vmem:[%s292 + $0xaf0] sm:$0xff]
        %v1091 = vld [vmem:[%s292 + $0xaf8] sm:$0xff]
        %v1092 = vld [vmem:[%s292 + $0xb00] sm:$0xff]
        %v1093 = vld [vmem:[%s292 + $0xb08] sm:$0xff]
        %v1094 = vld [vmem:[%s292 + $0xb10] sm:$0xff]
        %v1095 = vld [vmem:[%s292 + $0xb18] sm:$0xff]
        %v1096 = vld [vmem:[%s292 + $0xb20] sm:$0xff]
        %v1097 = vld [vmem:[%s292 + $0xb28] sm:$0xff]
        %v1098 = vld [vmem:[%s292 + $0xb30] sm:$0xff]
        %v1099 = vld [vmem:[%s292 + $0xb38] sm:$0xff]
        %v1100 = vld [vmem:[%s292 + $0xb40] sm:$0xff]
        %v1101 = vld [vmem:[%s292 + $0xb48] sm:$0xff]
        %v1102 = vld [vmem:[%s292 + $0xb50] sm:$0xff]
        %v1103 = vld [vmem:[%s292 + $0xb58] sm:$0xff]
        %v1104 = vld [vmem:[%s292 + $0xb60] sm:$0xff]
        %v1105 = vld [vmem:[%s292 + $0xb68] sm:$0xff]
        %v1106 = vld [vmem:[%s292 + $0xb70] sm:$0xff]
        %v1107 = vld [vmem:[%s292 + $0xb78] sm:$0xff]
        %v1108 = vld [vmem:[%s292 + $0xb80] sm:$0xff]
        %v1109 = vld [vmem:[%s292 + $0xb88] sm:$0xff]
        %v1110 = vld [vmem:[%s292 + $0xb90] sm:$0xff]
        %v1111 = vld [vmem:[%s292 + $0xb98] sm:$0xff]
        %v1112 = vld [vmem:[%s292 + $0xba0] sm:$0xff]
        %v1113 = vld [vmem:[%s292 + $0xba8] sm:$0xff]
        %v1114 = vld [vmem:[%s292 + $0xbb0] sm:$0xff]
        %v1115 = vld [vmem:[%s292 + $0xbb8] sm:$0xff]
        %v1116 = vld [vmem:[%s292 + $0xbc0] sm:$0xff]
        %v1117 = vld [vmem:[%s292 + $0xbc8] sm:$0xff]
        %v1118 = vld [vmem:[%s292 + $0xbd0] sm:$0xff]
        %v1119 = vld [vmem:[%s292 + $0xbd8] sm:$0xff]
        %v1120 = vld [vmem:[%s292 + $0xbe0] sm:$0xff]
        %v1121 = vld [vmem:[%s292 + $0xbe8] sm:$0xff]
        %v1122 = vld [vmem:[%s292 + $0xbf0] sm:$0xff]
        %v1123 = vld [vmem:[%s292 + $0xbf8] sm:$0xff]
        %v1124 = vld [vmem:[%s292 + $0xc00] sm:$0xff]
        %v1125 = vld [vmem:[%s292 + $0xc08] sm:$0xff]
        %v1126 = vld [vmem:[%s292 + $0xc10] sm:$0xff]
        %v1127 = vld [vmem:[%s292 + $0xc18] sm:$0xff]
        %v1128 = vld [vmem:[%s292 + $0xc20] sm:$0xff]
        %v1129 = vld [vmem:[%s292 + $0xc28] sm:$0xff]
        %v1130 = vld [vmem:[%s292 + $0xc30] sm:$0xff]
        %v1131 = vld [vmem:[%s292 + $0xc38] sm:$0xff]
        %v1132 = vld [vmem:[%s292 + $0xc40] sm:$0xff]
        %v1133 = vld [vmem:[%s292 + $0xc48] sm:$0xff]
        %v1134 = vld [vmem:[%s292 + $0xc50] sm:$0xff]
        %v1135 = vld [vmem:[%s292 + $0xc58] sm:$0xff]
        %v1136 = vld [vmem:[%s292 + $0xc60] sm:$0xff]
        %v1137 = vld [vmem:[%s292 + $0xc68] sm:$0xff]
        %v1138 = vld [vmem:[%s292 + $0xc70] sm:$0xff]
        %v1139 = vld [vmem:[%s292 + $0xc78] sm:$0xff]
        %v1140 = vld [vmem:[%s292 + $0xc80] sm:$0xff]
        %v1141 = vld [vmem:[%s292 + $0xc88] sm:$0xff]
        %v1142 = vld [vmem:[%s292 + $0xc90] sm:$0xff]
        %v1143 = vld [vmem:[%s292 + $0xc98] sm:$0xff]
        %v1144 = vld [vmem:[%s292 + $0xca0] sm:$0xff]
        %v1145 = vld [vmem:[%s292 + $0xca8] sm:$0xff]
        %v1146 = vld [vmem:[%s292 + $0xcb0] sm:$0xff]
        %v1147 = vld [vmem:[%s292 + $0xcb8] sm:$0xff]
        %v1148 = vld [vmem:[%s292 + $0xcc0] sm:$0xff]
        %v1149 = vld [vmem:[%s292 + $0xcc8] sm:$0xff]
        %v1150 = vld [vmem:[%s292 + $0xcd0] sm:$0xff]
        %v1151 = vld [vmem:[%s292 + $0xcd8] sm:$0xff]
        %v1152 = vld [vmem:[%s292 + $0xce0] sm:$0xff]
        %v1153 = vld [vmem:[%s292 + $0xce8] sm:$0xff]
        %v1154 = vld [vmem:[%s292 + $0xcf0] sm:$0xff]
        %v1155 = vld [vmem:[%s292 + $0xcf8] sm:$0xff]
        %v1156 = vld [vmem:[%s292 + $0xd00] sm:$0xff]
        %v1157 = vld [vmem:[%s292 + $0xd08] sm:$0xff]
        %v1158 = vld [vmem:[%s292 + $0xd10] sm:$0xff]
        %v1159 = vld [vmem:[%s292 + $0xd18] sm:$0xff]
        %v1160 = vld [vmem:[%s292 + $0xd20] sm:$0xff]
        %v1161 = vld [vmem:[%s292 + $0xd28] sm:$0xff]
        %v1162 = vld [vmem:[%s292 + $0xd30] sm:$0xff]
        %v1163 = vld [vmem:[%s292 + $0xd38] sm:$0xff]
        %v1164 = vld [vmem:[%s292 + $0xd40] sm:$0xff]
        %v1165 = vld [vmem:[%s292 + $0xd48] sm:$0xff]
        %v1166 = vld [vmem:[%s292 + $0xd50] sm:$0xff]
        %v1167 = vld [vmem:[%s292 + $0xd58] sm:$0xff]
        %v1168 = vld [vmem:[%s292 + $0xd60] sm:$0xff]
        %v1169 = vld [vmem:[%s292 + $0xd68] sm:$0xff]
        %v1170 = vld [vmem:[%s292 + $0xd70] sm:$0xff]
        %v1171 = vld [vmem:[%s292 + $0xd78] sm:$0xff]
        %v1172 = vld [vmem:[%s292 + $0xd80] sm:$0xff]
        %v1173 = vld [vmem:[%s292 + $0xd88] sm:$0xff]
        %v1174 = vld [vmem:[%s292 + $0xd90] sm:$0xff]
        %v1175 = vld [vmem:[%s292 + $0xd98] sm:$0xff]
        %v1176 = vld [vmem:[%s292 + $0xda0] sm:$0xff]
        %v1177 = vld [vmem:[%s292 + $0xda8] sm:$0xff]
        %v1178 = vld [vmem:[%s292 + $0xdb0] sm:$0xff]
        %v1179 = vld [vmem:[%s292 + $0xdb8] sm:$0xff]
        %v1180 = vld [vmem:[%s292 + $0xdc0] sm:$0xff]
        %v1181 = vld [vmem:[%s292 + $0xdc8] sm:$0xff]
        %v1182 = vld [vmem:[%s292 + $0xdd0] sm:$0xff]
        %v1183 = vld [vmem:[%s292 + $0xdd8] sm:$0xff]
        %v1184 = vld [vmem:[%s292 + $0xde0] sm:$0xff]
        %v1185 = vld [vmem:[%s292 + $0xde8] sm:$0xff]
        %v1186 = vld [vmem:[%s292 + $0xdf0] sm:$0xff]
        %v1187 = vld [vmem:[%s292 + $0xdf8] sm:$0xff]
        %v1188 = vld [vmem:[%s292 + $0xe00] sm:$0xff]
        %v1189 = vld [vmem:[%s292 + $0xe08] sm:$0xff]
        %v1190 = vld [vmem:[%s292 + $0xe10] sm:$0xff]
        %v1191 = vld [vmem:[%s292 + $0xe18] sm:$0xff]
        %v1192 = vld [vmem:[%s292 + $0xe20] sm:$0xff]
        %v1193 = vld [vmem:[%s292 + $0xe28] sm:$0xff]
        %v1194 = vld [vmem:[%s292 + $0xe30] sm:$0xff]
        %v1195 = vld [vmem:[%s292 + $0xe38] sm:$0xff]
        %v1196 = vld [vmem:[%s292 + $0xe40] sm:$0xff]
        %v1197 = vld [vmem:[%s292 + $0xe48] sm:$0xff]
        %v1198 = vld [vmem:[%s292 + $0xe50] sm:$0xff]
        %v1199 = vld [vmem:[%s292 + $0xe58] sm:$0xff]
        %v1200 = vld [vmem:[%s292 + $0xe60] sm:$0xff]
        %v1201 = vld [vmem:[%s292 + $0xe68] sm:$0xff]
        %v1202 = vld [vmem:[%s292 + $0xe70] sm:$0xff]
        %v1203 = vld [vmem:[%s292 + $0xe78] sm:$0xff]
        %v1204 = vld [vmem:[%s292 + $0xe80] sm:$0xff]
        %v1205 = vld [vmem:[%s292 + $0xe88] sm:$0xff]
        %v1206 = vld [vmem:[%s292 + $0xe90] sm:$0xff]
        %v1207 = vld [vmem:[%s292 + $0xe98] sm:$0xff]
        %v1208 = vld [vmem:[%s292 + $0xea0] sm:$0xff]
        %v1209 = vld [vmem:[%s292 + $0xea8] sm:$0xff]
        %v1210 = vld [vmem:[%s292 + $0xeb0] sm:$0xff]
        %v1211 = vld [vmem:[%s292 + $0xeb8] sm:$0xff]
        %v1212 = vld [vmem:[%s292 + $0xec0] sm:$0xff]
        %v1213 = vld [vmem:[%s292 + $0xec8] sm:$0xff]
        %v1214 = vld [vmem:[%s292 + $0xed0] sm:$0xff]
        %v1215 = vld [vmem:[%s292 + $0xed8] sm:$0xff]
        %v1216 = vld [vmem:[%s292 + $0xee0] sm:$0xff]
        %v1217 = vld [vmem:[%s292 + $0xee8] sm:$0xff]
        %v1218 = vld [vmem:[%s292 + $0xef0] sm:$0xff]
        %v1219 = vld [vmem:[%s292 + $0xef8] sm:$0xff]
        %v1220 = vld [vmem:[%s292 + $0xf00] sm:$0xff]
        %v1221 = vld [vmem:[%s292 + $0xf08] sm:$0xff]
        %v1222 = vld [vmem:[%s292 + $0xf10] sm:$0xff]
        %v1223 = vld [vmem:[%s292 + $0xf18] sm:$0xff]
        %v1224 = vld [vmem:[%s292 + $0xf20] sm:$0xff]
        %v1225 = vld [vmem:[%s292 + $0xf28] sm:$0xff]
        %v1226 = vld [vmem:[%s292 + $0xf30] sm:$0xff]
        %v1227 = vld [vmem:[%s292 + $0xf38] sm:$0xff]
        %v1228 = vld [vmem:[%s292 + $0xf40] sm:$0xff]
        %v1229 = vld [vmem:[%s292 + $0xf48] sm:$0xff]
        %v1230 = vld [vmem:[%s292 + $0xf50] sm:$0xff]
        %v1231 = vld [vmem:[%s292 + $0xf58] sm:$0xff]
        %v1232 = vld [vmem:[%s292 + $0xf60] sm:$0xff]
        %v1233 = vld [vmem:[%s292 + $0xf68] sm:$0xff]
        %v1234 = vld [vmem:[%s292 + $0xf70] sm:$0xff]
        %v1235 = vld [vmem:[%s292 + $0xf78] sm:$0xff]
        %v1236 = vld [vmem:[%s292 + $0xf80] sm:$0xff]
        %v1237 = vld [vmem:[%s292 + $0xf88] sm:$0xff]
        %v1238 = vld [vmem:[%s292 + $0xf90] sm:$0xff]
        %v1239 = vld [vmem:[%s292 + $0xf98] sm:$0xff]
        %v1240 = vld [vmem:[%s292 + $0xfa0] sm:$0xff]
        %v1241 = vld [vmem:[%s292 + $0xfa8] sm:$0xff]
        %v1242 = vld [vmem:[%s292 + $0xfb0] sm:$0xff]
        %v1243 = vld [vmem:[%s292 + $0xfb8] sm:$0xff]
        %v1244 = vld [vmem:[%s292 + $0xfc0] sm:$0xff]
        %v1245 = vld [vmem:[%s292 + $0xfc8] sm:$0xff]
        %v1246 = vld [vmem:[%s292 + $0xfd0] sm:$0xff]
        %v1247 = vld [vmem:[%s292 + $0xfd8] sm:$0xff]
        %v1248 = vld [vmem:[%s292 + $0xfe0] sm:$0xff]
        %v1249 = vld [vmem:[%s292 + $0xfe8] sm:$0xff]
        %v1250 = vld [vmem:[%s292 + $0xff0] sm:$0xff]
        %v1251 = vld [vmem:[%s292 + $0xff8] sm:$0xff]
        %v1252 = vld [vmem:[%s301] sm:$0xf]
        %v1254 = vlaneseq
        %v1255 = vshrl.u32 %v1254, 7
        %v1256 = vsub.s32 0, %v1255
        %v1257 = vrot.slane %v1252, %v1256
        %v1258 = vlaneseq
        %v1259 = vshrl.u32 %v1258, 7
        %v1260 = vsub.s32 1, %v1259
        %v1261 = vrot.slane %v1252, %v1260
        %v1262 = vlaneseq
        %v1263 = vshrl.u32 %v1262, 7
        %v1264 = vsub.s32 2, %v1263
        %v1265 = vrot.slane %v1252, %v1264
        %v1266 = vlaneseq
        %v1267 = vshrl.u32 %v1266, 7
        %v1268 = vsub.s32 3, %v1267
        %v1269 = vrot.slane %v1252, %v1268
        %v1666 = vunpack.c.l.b16 %v348
        %v1667 = vunpack.c.h.b16 %v348
        %v1668 = vunpack.c.l.b16 %v349
        %v1669 = vunpack.c.h.b16 %v349
        %v1670 = vunpack.c.l.b16 %v350
        %v1671 = vunpack.c.h.b16 %v350
        %v1672 = vunpack.c.l.b16 %v351
        %v1673 = vunpack.c.h.b16 %v351
        %v1674 = vunpack.c.l.b16 %v352
        %v1675 = vunpack.c.h.b16 %v352
        %v1676 = vunpack.c.l.b16 %v353
        %v1677 = vunpack.c.h.b16 %v353
        %v1678 = vunpack.c.l.b16 %v354
        %v1679 = vunpack.c.h.b16 %v354
        %v1680 = vunpack.c.l.b16 %v355
        %v1681 = vunpack.c.h.b16 %v355
        %v1682 = vunpack.c.l.b16 %v356
        %v1683 = vunpack.c.h.b16 %v356
        %v1684 = vunpack.c.l.b16 %v357
        %v1685 = vunpack.c.h.b16 %v357
        %v1686 = vunpack.c.l.b16 %v358
        %v1687 = vunpack.c.h.b16 %v358
        %v1688 = vunpack.c.l.b16 %v359
        %v1689 = vunpack.c.h.b16 %v359
        %v1690 = vunpack.c.l.b16 %v360
        %v1691 = vunpack.c.h.b16 %v360
        %v1692 = vunpack.c.l.b16 %v361
        %v1693 = vunpack.c.h.b16 %v361
        %v1694 = vunpack.c.l.b16 %v362
        %v1695 = vunpack.c.h.b16 %v362
        %v1696 = vunpack.c.l.b16 %v363
        %v1697 = vunpack.c.h.b16 %v363
        %v1698 = vunpack.c.l.b16 %v364
        %v1699 = vunpack.c.h.b16 %v364
        %v1700 = vunpack.c.l.b16 %v365
        %v1701 = vunpack.c.h.b16 %v365
        %v1702 = vunpack.c.l.b16 %v366
        %v1703 = vunpack.c.h.b16 %v366
        %v1704 = vunpack.c.l.b16 %v367
        %v1705 = vunpack.c.h.b16 %v367
        %v1706 = vunpack.c.l.b16 %v368
        %v1707 = vunpack.c.h.b16 %v368
        %v1708 = vunpack.c.l.b16 %v369
        %v1709 = vunpack.c.h.b16 %v369
        %v1710 = vunpack.c.l.b16 %v370
        %v1711 = vunpack.c.h.b16 %v370
        %v1712 = vunpack.c.l.b16 %v371
        %v1713 = vunpack.c.h.b16 %v371
        %v1714 = vunpack.c.l.b16 %v372
        %v1715 = vunpack.c.h.b16 %v372
        %v1716 = vunpack.c.l.b16 %v373
        %v1717 = vunpack.c.h.b16 %v373
        %v1718 = vunpack.c.l.b16 %v374
        %v1719 = vunpack.c.h.b16 %v374
        %v1720 = vunpack.c.l.b16 %v375
        %v1721 = vunpack.c.h.b16 %v375
        %v1722 = vunpack.c.l.b16 %v376
        %v1723 = vunpack.c.h.b16 %v376
        %v1724 = vunpack.c.l.b16 %v377
        %v1725 = vunpack.c.h.b16 %v377
        %v1726 = vunpack.c.l.b16 %v378
        %v1727 = vunpack.c.h.b16 %v378
        %v1728 = vunpack.c.l.b16 %v379
        %v1729 = vunpack.c.h.b16 %v379
        %v1730 = vunpack.c.l.b16 %v380
        %v1731 = vunpack.c.h.b16 %v380
        %v1732 = vunpack.c.l.b16 %v381
        %v1733 = vunpack.c.h.b16 %v381
        %v1734 = vunpack.c.l.b16 %v382
        %v1735 = vunpack.c.h.b16 %v382
        %v1736 = vunpack.c.l.b16 %v383
        %v1737 = vunpack.c.h.b16 %v383
        %v1738 = vunpack.c.l.b16 %v384
        %v1739 = vunpack.c.h.b16 %v384
        %v1740 = vunpack.c.l.b16 %v385
        %v1741 = vunpack.c.h.b16 %v385
        %v1742 = vunpack.c.l.b16 %v386
        %v1743 = vunpack.c.h.b16 %v386
        %v1744 = vunpack.c.l.b16 %v387
        %v1745 = vunpack.c.h.b16 %v387
        %v1746 = vunpack.c.l.b16 %v388
        %v1747 = vunpack.c.h.b16 %v388
        %v1748 = vunpack.c.l.b16 %v389
        %v1749 = vunpack.c.h.b16 %v389
        %v1750 = vunpack.c.l.b16 %v390
        %v1751 = vunpack.c.h.b16 %v390
        %v1752 = vunpack.c.l.b16 %v391
        %v1753 = vunpack.c.h.b16 %v391
        %v1754 = vunpack.c.l.b16 %v392
        %v1755 = vunpack.c.h.b16 %v392
        %v1756 = vunpack.c.l.b16 %v393
        %v1757 = vunpack.c.h.b16 %v393
        %v1758 = vunpack.c.l.b16 %v394
        %v1759 = vunpack.c.h.b16 %v394
        %v1760 = vunpack.c.l.b16 %v395
        %v1761 = vunpack.c.h.b16 %v395
        %v1762 = vunpack.c.l.b16 %v396
        %v1763 = vunpack.c.h.b16 %v396
        %v1764 = vunpack.c.l.b16 %v397
        %v1765 = vunpack.c.h.b16 %v397
        %v1766 = vunpack.c.l.b16 %v398
        %v1767 = vunpack.c.h.b16 %v398
        %v1768 = vunpack.c.l.b16 %v399
        %v1769 = vunpack.c.h.b16 %v399
        %v1770 = vunpack.c.l.b16 %v400
        %v1771 = vunpack.c.h.b16 %v400
        %v1772 = vunpack.c.l.b16 %v401
        %v1773 = vunpack.c.h.b16 %v401
        %v1774 = vunpack.c.l.b16 %v402
        %v1775 = vunpack.c.h.b16 %v402
        %v1776 = vunpack.c.l.b16 %v403
        %v1777 = vunpack.c.h.b16 %v403
        %v1778 = vunpack.c.l.b16 %v404
        %v1779 = vunpack.c.h.b16 %v404
        %v1780 = vunpack.c.l.b16 %v405
        %v1781 = vunpack.c.h.b16 %v405
        %v1782 = vunpack.c.l.b16 %v406
        %v1783 = vunpack.c.h.b16 %v406
        %v1784 = vunpack.c.l.b16 %v407
        %v1785 = vunpack.c.h.b16 %v407
        %v1786 = vunpack.c.l.b16 %v408
        %v1787 = vunpack.c.h.b16 %v408
        %v1788 = vunpack.c.l.b16 %v409
        %v1789 = vunpack.c.h.b16 %v409
        %v1790 = vunpack.c.l.b16 %v410
        %v1791 = vunpack.c.h.b16 %v410
        %v1792 = vunpack.c.l.b16 %v411
        %v1793 = vunpack.c.h.b16 %v411
        %v1794 = vunpack.c.l.b16 %v412
        %v1795 = vunpack.c.h.b16 %v412
        %v1796 = vunpack.c.l.b16 %v413
        %v1797 = vunpack.c.h.b16 %v413
        %v1798 = vunpack.c.l.b16 %v414
        %v1799 = vunpack.c.h.b16 %v414
        %v1800 = vunpack.c.l.b16 %v415
        %v1801 = vunpack.c.h.b16 %v415
        %v1802 = vunpack.c.l.b16 %v416
        %v1803 = vunpack.c.h.b16 %v416
        %v1804 = vunpack.c.l.b16 %v417
        %v1805 = vunpack.c.h.b16 %v417
        %v1806 = vunpack.c.l.b16 %v418
        %v1807 = vunpack.c.h.b16 %v418
        %v1808 = vunpack.c.l.b16 %v419
        %v1809 = vunpack.c.h.b16 %v419
        %v1810 = vunpack.c.l.b16 %v420
        %v1811 = vunpack.c.h.b16 %v420
        %v1812 = vunpack.c.l.b16 %v421
        %v1813 = vunpack.c.h.b16 %v421
        %v1814 = vunpack.c.l.b16 %v422
        %v1815 = vunpack.c.h.b16 %v422
        %v1816 = vunpack.c.l.b16 %v423
        %v1817 = vunpack.c.h.b16 %v423
        %v1818 = vunpack.c.l.b16 %v424
        %v1819 = vunpack.c.h.b16 %v424
        %v1820 = vunpack.c.l.b16 %v425
        %v1821 = vunpack.c.h.b16 %v425
        %v1822 = vunpack.c.l.b16 %v426
        %v1823 = vunpack.c.h.b16 %v426
        %v1824 = vunpack.c.l.b16 %v427
        %v1825 = vunpack.c.h.b16 %v427
        %v1826 = vunpack.c.l.b16 %v428
        %v1827 = vunpack.c.h.b16 %v428
        %v1828 = vunpack.c.l.b16 %v429
        %v1829 = vunpack.c.h.b16 %v429
        %v1830 = vunpack.c.l.b16 %v430
        %v1831 = vunpack.c.h.b16 %v430
        %v1832 = vunpack.c.l.b16 %v431
        %v1833 = vunpack.c.h.b16 %v431
        %v1834 = vunpack.c.l.b16 %v432
        %v1835 = vunpack.c.h.b16 %v432
        %v1836 = vunpack.c.l.b16 %v433
        %v1837 = vunpack.c.h.b16 %v433
        %v1838 = vunpack.c.l.b16 %v434
        %v1839 = vunpack.c.h.b16 %v434
        %v1840 = vunpack.c.l.b16 %v435
        %v1841 = vunpack.c.h.b16 %v435
        %v1842 = vunpack.c.l.b16 %v436
        %v1843 = vunpack.c.h.b16 %v436
        %v1844 = vunpack.c.l.b16 %v437
        %v1845 = vunpack.c.h.b16 %v437
        %v1846 = vunpack.c.l.b16 %v438
        %v1847 = vunpack.c.h.b16 %v438
        %v1848 = vunpack.c.l.b16 %v439
        %v1849 = vunpack.c.h.b16 %v439
        %v1850 = vunpack.c.l.b16 %v440
        %v1851 = vunpack.c.h.b16 %v440
        %v1852 = vunpack.c.l.b16 %v441
        %v1853 = vunpack.c.h.b16 %v441
        %v1854 = vunpack.c.l.b16 %v442
        %v1855 = vunpack.c.h.b16 %v442
        %v1856 = vunpack.c.l.b16 %v443
        %v1857 = vunpack.c.h.b16 %v443
        %v1858 = vunpack.c.l.b16 %v444
        %v1859 = vunpack.c.h.b16 %v444
        %v1860 = vunpack.c.l.b16 %v445
        %v1861 = vunpack.c.h.b16 %v445
        %v1862 = vunpack.c.l.b16 %v446
        %v1863 = vunpack.c.h.b16 %v446
        %v1864 = vunpack.c.l.b16 %v447
        %v1865 = vunpack.c.h.b16 %v447
        %v1866 = vunpack.c.l.b16 %v448
        %v1867 = vunpack.c.h.b16 %v448
        %v1868 = vunpack.c.l.b16 %v449
        %v1869 = vunpack.c.h.b16 %v449
        %v1870 = vunpack.c.l.b16 %v450
        %v1871 = vunpack.c.h.b16 %v450
        %v1872 = vunpack.c.l.b16 %v451
        %v1873 = vunpack.c.h.b16 %v451
        %v1874 = vunpack.c.l.b16 %v452
        %v1875 = vunpack.c.h.b16 %v452
        %v1876 = vunpack.c.l.b16 %v453
        %v1877 = vunpack.c.h.b16 %v453
        %v1878 = vunpack.c.l.b16 %v454
        %v1879 = vunpack.c.h.b16 %v454
        %v1880 = vunpack.c.l.b16 %v455
        %v1881 = vunpack.c.h.b16 %v455
        %v1882 = vunpack.c.l.b16 %v456
        %v1883 = vunpack.c.h.b16 %v456
        %v1884 = vunpack.c.l.b16 %v457
        %v1885 = vunpack.c.h.b16 %v457
        %v1886 = vunpack.c.l.b16 %v458
        %v1887 = vunpack.c.h.b16 %v458
        %v1888 = vunpack.c.l.b16 %v459
        %v1889 = vunpack.c.h.b16 %v459
        %v1890 = vunpack.c.l.b16 %v460
        %v1891 = vunpack.c.h.b16 %v460
        %v1892 = vunpack.c.l.b16 %v461
        %v1893 = vunpack.c.h.b16 %v461
        %v1894 = vunpack.c.l.b16 %v462
        %v1895 = vunpack.c.h.b16 %v462
        %v1896 = vunpack.c.l.b16 %v463
        %v1897 = vunpack.c.h.b16 %v463
        %v1898 = vunpack.c.l.b16 %v464
        %v1899 = vunpack.c.h.b16 %v464
        %v1900 = vunpack.c.l.b16 %v465
        %v1901 = vunpack.c.h.b16 %v465
        %v1902 = vunpack.c.l.b16 %v466
        %v1903 = vunpack.c.h.b16 %v466
        %v1904 = vunpack.c.l.b16 %v467
        %v1905 = vunpack.c.h.b16 %v467
        %v1906 = vunpack.c.l.b16 %v468
        %v1907 = vunpack.c.h.b16 %v468
        %v1908 = vunpack.c.l.b16 %v469
        %v1909 = vunpack.c.h.b16 %v469
        %v1910 = vunpack.c.l.b16 %v470
        %v1911 = vunpack.c.h.b16 %v470
        %v1912 = vunpack.c.l.b16 %v471
        %v1913 = vunpack.c.h.b16 %v471
        %v1914 = vunpack.c.l.b16 %v472
        %v1915 = vunpack.c.h.b16 %v472
        %v1916 = vunpack.c.l.b16 %v473
        %v1917 = vunpack.c.h.b16 %v473
        %v1918 = vunpack.c.l.b16 %v474
        %v1919 = vunpack.c.h.b16 %v474
        %v1920 = vunpack.c.l.b16 %v475
        %v1921 = vunpack.c.h.b16 %v475
        %v1922 = vunpack.c.l.b16 %v476
        %v1923 = vunpack.c.h.b16 %v476
        %v1924 = vunpack.c.l.b16 %v477
        %v1925 = vunpack.c.h.b16 %v477
        %v1926 = vunpack.c.l.b16 %v478
        %v1927 = vunpack.c.h.b16 %v478
        %v1928 = vunpack.c.l.b16 %v479
        %v1929 = vunpack.c.h.b16 %v479
        %v1930 = vunpack.c.l.b16 %v480
        %v1931 = vunpack.c.h.b16 %v480
        %v1932 = vunpack.c.l.b16 %v481
        %v1933 = vunpack.c.h.b16 %v481
        %v1934 = vunpack.c.l.b16 %v482
        %v1935 = vunpack.c.h.b16 %v482
        %v1936 = vunpack.c.l.b16 %v483
        %v1937 = vunpack.c.h.b16 %v483
        %v1938 = vunpack.c.l.b16 %v484
        %v1939 = vunpack.c.h.b16 %v484
        %v1940 = vunpack.c.l.b16 %v485
        %v1941 = vunpack.c.h.b16 %v485
        %v1942 = vunpack.c.l.b16 %v486
        %v1943 = vunpack.c.h.b16 %v486
        %v1944 = vunpack.c.l.b16 %v487
        %v1945 = vunpack.c.h.b16 %v487
        %v1946 = vunpack.c.l.b16 %v488
        %v1947 = vunpack.c.h.b16 %v488
        %v1948 = vunpack.c.l.b16 %v489
        %v1949 = vunpack.c.h.b16 %v489
        %v1950 = vunpack.c.l.b16 %v490
        %v1951 = vunpack.c.h.b16 %v490
        %v1952 = vunpack.c.l.b16 %v491
        %v1953 = vunpack.c.h.b16 %v491
        %v1954 = vunpack.c.l.b16 %v492
        %v1955 = vunpack.c.h.b16 %v492
        %v1956 = vunpack.c.l.b16 %v493
        %v1957 = vunpack.c.h.b16 %v493
        %v1958 = vunpack.c.l.b16 %v494
        %v1959 = vunpack.c.h.b16 %v494
        %v1960 = vunpack.c.l.b16 %v495
        %v1961 = vunpack.c.h.b16 %v495
        %v1962 = vunpack.c.l.b16 %v496
        %v1963 = vunpack.c.h.b16 %v496
        %v1964 = vunpack.c.l.b16 %v497
        %v1965 = vunpack.c.h.b16 %v497
        %v1966 = vunpack.c.l.b16 %v498
        %v1967 = vunpack.c.h.b16 %v498
        %v1968 = vunpack.c.l.b16 %v499
        %v1969 = vunpack.c.h.b16 %v499
        %v1970 = vunpack.c.l.b16 %v500
        %v1971 = vunpack.c.h.b16 %v500
        %v1972 = vunpack.c.l.b16 %v501
        %v1973 = vunpack.c.h.b16 %v501
        %v1974 = vunpack.c.l.b16 %v502
        %v1975 = vunpack.c.h.b16 %v502
        %v1976 = vunpack.c.l.b16 %v503
        %v1977 = vunpack.c.h.b16 %v503
        %v1978 = vunpack.c.l.b16 %v504
        %v1979 = vunpack.c.h.b16 %v504
        %v1980 = vunpack.c.l.b16 %v505
        %v1981 = vunpack.c.h.b16 %v505
        %v1982 = vunpack.c.l.b16 %v506
        %v1983 = vunpack.c.h.b16 %v506
        %v1984 = vunpack.c.l.b16 %v507
        %v1985 = vunpack.c.h.b16 %v507
        %v1986 = vunpack.c.l.b16 %v508
        %v1987 = vunpack.c.h.b16 %v508
        %v1988 = vunpack.c.l.b16 %v509
        %v1989 = vunpack.c.h.b16 %v509
        %v1990 = vunpack.c.l.b16 %v510
        %v1991 = vunpack.c.h.b16 %v510
        %v1992 = vunpack.c.l.b16 %v511
        %v1993 = vunpack.c.h.b16 %v511
        %v1994 = vunpack.c.l.b16 %v512
        %v1995 = vunpack.c.h.b16 %v512
        %v1996 = vunpack.c.l.b16 %v513
        %v1997 = vunpack.c.h.b16 %v513
        %v1998 = vunpack.c.l.b16 %v514
        %v1999 = vunpack.c.h.b16 %v514
        %v2000 = vunpack.c.l.b16 %v515
        %v2001 = vunpack.c.h.b16 %v515
        %v2002 = vunpack.c.l.b16 %v516
        %v2003 = vunpack.c.h.b16 %v516
        %v2004 = vunpack.c.l.b16 %v517
        %v2005 = vunpack.c.h.b16 %v517
        %v2006 = vunpack.c.l.b16 %v518
        %v2007 = vunpack.c.h.b16 %v518
        %v2008 = vunpack.c.l.b16 %v519
        %v2009 = vunpack.c.h.b16 %v519
        %v2010 = vunpack.c.l.b16 %v520
        %v2011 = vunpack.c.h.b16 %v520
        %v2012 = vunpack.c.l.b16 %v521
        %v2013 = vunpack.c.h.b16 %v521
        %v2014 = vunpack.c.l.b16 %v522
        %v2015 = vunpack.c.h.b16 %v522
        %v2016 = vunpack.c.l.b16 %v523
        %v2017 = vunpack.c.h.b16 %v523
        %v2018 = vunpack.c.l.b16 %v524
        %v2019 = vunpack.c.h.b16 %v524
        %v2020 = vunpack.c.l.b16 %v525
        %v2021 = vunpack.c.h.b16 %v525
        %v2022 = vunpack.c.l.b16 %v526
        %v2023 = vunpack.c.h.b16 %v526
        %v2024 = vunpack.c.l.b16 %v527
        %v2025 = vunpack.c.h.b16 %v527
        %v2026 = vunpack.c.l.b16 %v528
        %v2027 = vunpack.c.h.b16 %v528
        %v2028 = vunpack.c.l.b16 %v529
        %v2029 = vunpack.c.h.b16 %v529
        %v2030 = vunpack.c.l.b16 %v530
        %v2031 = vunpack.c.h.b16 %v530
        %v2032 = vunpack.c.l.b16 %v531
        %v2033 = vunpack.c.h.b16 %v531
        %v2034 = vunpack.c.l.b16 %v532
        %v2035 = vunpack.c.h.b16 %v532
        %v2036 = vunpack.c.l.b16 %v533
        %v2037 = vunpack.c.h.b16 %v533
        %v2038 = vunpack.c.l.b16 %v534
        %v2039 = vunpack.c.h.b16 %v534
        %v2040 = vunpack.c.l.b16 %v535
        %v2041 = vunpack.c.h.b16 %v535
        %v2042 = vunpack.c.l.b16 %v536
        %v2043 = vunpack.c.h.b16 %v536
        %v2044 = vunpack.c.l.b16 %v537
        %v2045 = vunpack.c.h.b16 %v537
        %v2046 = vunpack.c.l.b16 %v538
        %v2047 = vunpack.c.h.b16 %v538
        %v2048 = vunpack.c.l.b16 %v539
        %v2049 = vunpack.c.h.b16 %v539
        %v2050 = vunpack.c.l.b16 %v540
        %v2051 = vunpack.c.h.b16 %v540
        %v2052 = vunpack.c.l.b16 %v541
        %v2053 = vunpack.c.h.b16 %v541
        %v2054 = vunpack.c.l.b16 %v542
        %v2055 = vunpack.c.h.b16 %v542
        %v2056 = vunpack.c.l.b16 %v543
        %v2057 = vunpack.c.h.b16 %v543
        %v2058 = vunpack.c.l.b16 %v544
        %v2059 = vunpack.c.h.b16 %v544
        %v2060 = vunpack.c.l.b16 %v545
        %v2061 = vunpack.c.h.b16 %v545
        %v2062 = vunpack.c.l.b16 %v546
        %v2063 = vunpack.c.h.b16 %v546
        %v2064 = vunpack.c.l.b16 %v547
        %v2065 = vunpack.c.h.b16 %v547
        %v2066 = vunpack.c.l.b16 %v548
        %v2067 = vunpack.c.h.b16 %v548
        %v2068 = vunpack.c.l.b16 %v549
        %v2069 = vunpack.c.h.b16 %v549
        %v2070 = vunpack.c.l.b16 %v550
        %v2071 = vunpack.c.h.b16 %v550
        %v2072 = vunpack.c.l.b16 %v551
        %v2073 = vunpack.c.h.b16 %v551
        %v2074 = vunpack.c.l.b16 %v552
        %v2075 = vunpack.c.h.b16 %v552
        %v2076 = vunpack.c.l.b16 %v553
        %v2077 = vunpack.c.h.b16 %v553
        %v2078 = vunpack.c.l.b16 %v554
        %v2079 = vunpack.c.h.b16 %v554
        %v2080 = vunpack.c.l.b16 %v555
        %v2081 = vunpack.c.h.b16 %v555
        %v2082 = vunpack.c.l.b16 %v556
        %v2083 = vunpack.c.h.b16 %v556
        %v2084 = vunpack.c.l.b16 %v557
        %v2085 = vunpack.c.h.b16 %v557
        %v2086 = vunpack.c.l.b16 %v558
        %v2087 = vunpack.c.h.b16 %v558
        %v2088 = vunpack.c.l.b16 %v559
        %v2089 = vunpack.c.h.b16 %v559
        %v2090 = vunpack.c.l.b16 %v560
        %v2091 = vunpack.c.h.b16 %v560
        %v2092 = vunpack.c.l.b16 %v561
        %v2093 = vunpack.c.h.b16 %v561
        %v2094 = vunpack.c.l.b16 %v562
        %v2095 = vunpack.c.h.b16 %v562
        %v2096 = vunpack.c.l.b16 %v563
        %v2097 = vunpack.c.h.b16 %v563
        %v2098 = vunpack.c.l.b16 %v564
        %v2099 = vunpack.c.h.b16 %v564
        %v2100 = vunpack.c.l.b16 %v565
        %v2101 = vunpack.c.h.b16 %v565
        %v2102 = vunpack.c.l.b16 %v566
        %v2103 = vunpack.c.h.b16 %v566
        %v2104 = vunpack.c.l.b16 %v567
        %v2105 = vunpack.c.h.b16 %v567
        %v2106 = vunpack.c.l.b16 %v568
        %v2107 = vunpack.c.h.b16 %v568
        %v2108 = vunpack.c.l.b16 %v569
        %v2109 = vunpack.c.h.b16 %v569
        %v2110 = vunpack.c.l.b16 %v570
        %v2111 = vunpack.c.h.b16 %v570
        %v2112 = vunpack.c.l.b16 %v571
        %v2113 = vunpack.c.h.b16 %v571
        %v2114 = vunpack.c.l.b16 %v572
        %v2115 = vunpack.c.h.b16 %v572
        %v2116 = vunpack.c.l.b16 %v573
        %v2117 = vunpack.c.h.b16 %v573
        %v2118 = vunpack.c.l.b16 %v574
        %v2119 = vunpack.c.h.b16 %v574
        %v2120 = vunpack.c.l.b16 %v575
        %v2121 = vunpack.c.h.b16 %v575
        %v2122 = vunpack.c.l.b16 %v576
        %v2123 = vunpack.c.h.b16 %v576
        %v2124 = vunpack.c.l.b16 %v577
        %v2125 = vunpack.c.h.b16 %v577
        %v2126 = vunpack.c.l.b16 %v578
        %v2127 = vunpack.c.h.b16 %v578
        %v2128 = vunpack.c.l.b16 %v579
        %v2129 = vunpack.c.h.b16 %v579
        %v2130 = vunpack.c.l.b16 %v580
        %v2131 = vunpack.c.h.b16 %v580
        %v2132 = vunpack.c.l.b16 %v581
        %v2133 = vunpack.c.h.b16 %v581
        %v2134 = vunpack.c.l.b16 %v582
        %v2135 = vunpack.c.h.b16 %v582
        %v2136 = vunpack.c.l.b16 %v583
        %v2137 = vunpack.c.h.b16 %v583
        %v2138 = vunpack.c.l.b16 %v584
        %v2139 = vunpack.c.h.b16 %v584
        %v2140 = vunpack.c.l.b16 %v585
        %v2141 = vunpack.c.h.b16 %v585
        %v2142 = vunpack.c.l.b16 %v586
        %v2143 = vunpack.c.h.b16 %v586
        %v2144 = vunpack.c.l.b16 %v587
        %v2145 = vunpack.c.h.b16 %v587
        %v2146 = vunpack.c.l.b16 %v588
        %v2147 = vunpack.c.h.b16 %v588
        %v2148 = vunpack.c.l.b16 %v589
        %v2149 = vunpack.c.h.b16 %v589
        %v2150 = vunpack.c.l.b16 %v590
        %v2151 = vunpack.c.h.b16 %v590
        %v2152 = vunpack.c.l.b16 %v591
        %v2153 = vunpack.c.h.b16 %v591
        %v2154 = vunpack.c.l.b16 %v592
        %v2155 = vunpack.c.h.b16 %v592
        %v2156 = vunpack.c.l.b16 %v593
        %v2157 = vunpack.c.h.b16 %v593
        %v2158 = vunpack.c.l.b16 %v594
        %v2159 = vunpack.c.h.b16 %v594
        %v2160 = vunpack.c.l.b16 %v595
        %v2161 = vunpack.c.h.b16 %v595
        %v2162 = vunpack.c.l.b16 %v596
        %v2163 = vunpack.c.h.b16 %v596
        %v2164 = vunpack.c.l.b16 %v597
        %v2165 = vunpack.c.h.b16 %v597
        %v2166 = vunpack.c.l.b16 %v598
        %v2167 = vunpack.c.h.b16 %v598
        %v2168 = vunpack.c.l.b16 %v599
        %v2169 = vunpack.c.h.b16 %v599
        %v2170 = vunpack.c.l.b16 %v600
        %v2171 = vunpack.c.h.b16 %v600
        %v2172 = vunpack.c.l.b16 %v601
        %v2173 = vunpack.c.h.b16 %v601
        %v2174 = vunpack.c.l.b16 %v602
        %v2175 = vunpack.c.h.b16 %v602
        %v2176 = vunpack.c.l.b16 %v603
        %v2177 = vunpack.c.h.b16 %v603
        %v2178 = vunpack.c.l.b16 %v604
        %v2179 = vunpack.c.h.b16 %v604
        %v2180 = vunpack.c.l.b16 %v605
        %v2181 = vunpack.c.h.b16 %v605
        %v2182 = vunpack.c.l.b16 %v606
        %v2183 = vunpack.c.h.b16 %v606
        %v2184 = vunpack.c.l.b16 %v607
        %v2185 = vunpack.c.h.b16 %v607
        %v2186 = vunpack.c.l.b16 %v608
        %v2187 = vunpack.c.h.b16 %v608
        %v2188 = vunpack.c.l.b16 %v609
        %v2189 = vunpack.c.h.b16 %v609
        %v2190 = vunpack.c.l.b16 %v610
        %v2191 = vunpack.c.h.b16 %v610
        %v2192 = vunpack.c.l.b16 %v611
        %v2193 = vunpack.c.h.b16 %v611
        %v2194 = vunpack.c.l.b16 %v612
        %v2195 = vunpack.c.h.b16 %v612
        %v2196 = vunpack.c.l.b16 %v613
        %v2197 = vunpack.c.h.b16 %v613
        %v2198 = vunpack.c.l.b16 %v614
        %v2199 = vunpack.c.h.b16 %v614
        %v2200 = vunpack.c.l.b16 %v615
        %v2201 = vunpack.c.h.b16 %v615
        %v2202 = vunpack.c.l.b16 %v616
        %v2203 = vunpack.c.h.b16 %v616
        %v2204 = vunpack.c.l.b16 %v617
        %v2205 = vunpack.c.h.b16 %v617
        %v2206 = vunpack.c.l.b16 %v618
        %v2207 = vunpack.c.h.b16 %v618
        %v2208 = vunpack.c.l.b16 %v619
        %v2209 = vunpack.c.h.b16 %v619
        %v2210 = vunpack.c.l.b16 %v620
        %v2211 = vunpack.c.h.b16 %v620
        %v2212 = vunpack.c.l.b16 %v621
        %v2213 = vunpack.c.h.b16 %v621
        %v2214 = vunpack.c.l.b16 %v622
        %v2215 = vunpack.c.h.b16 %v622
        %v2216 = vunpack.c.l.b16 %v623
        %v2217 = vunpack.c.h.b16 %v623
        %v2218 = vunpack.c.l.b16 %v624
        %v2219 = vunpack.c.h.b16 %v624
        %v2220 = vunpack.c.l.b16 %v625
        %v2221 = vunpack.c.h.b16 %v625
        %v2222 = vunpack.c.l.b16 %v626
        %v2223 = vunpack.c.h.b16 %v626
        %v2224 = vunpack.c.l.b16 %v627
        %v2225 = vunpack.c.h.b16 %v627
        %v2226 = vunpack.c.l.b16 %v628
        %v2227 = vunpack.c.h.b16 %v628
        %v2228 = vunpack.c.l.b16 %v629
        %v2229 = vunpack.c.h.b16 %v629
        %v2230 = vunpack.c.l.b16 %v630
        %v2231 = vunpack.c.h.b16 %v630
        %v2232 = vunpack.c.l.b16 %v631
        %v2233 = vunpack.c.h.b16 %v631
        %v2234 = vunpack.c.l.b16 %v632
        %v2235 = vunpack.c.h.b16 %v632
        %v2236 = vunpack.c.l.b16 %v633
        %v2237 = vunpack.c.h.b16 %v633
        %v2238 = vunpack.c.l.b16 %v634
        %v2239 = vunpack.c.h.b16 %v634
        %v2240 = vunpack.c.l.b16 %v635
        %v2241 = vunpack.c.h.b16 %v635
        %v2242 = vunpack.c.l.b16 %v636
        %v2243 = vunpack.c.h.b16 %v636
        %v2244 = vunpack.c.l.b16 %v637
        %v2245 = vunpack.c.h.b16 %v637
        %v2246 = vunpack.c.l.b16 %v638
        %v2247 = vunpack.c.h.b16 %v638
        %v2248 = vunpack.c.l.b16 %v639
        %v2249 = vunpack.c.h.b16 %v639
        %v2250 = vunpack.c.l.b16 %v640
        %v2251 = vunpack.c.h.b16 %v640
        %v2252 = vunpack.c.l.b16 %v641
        %v2253 = vunpack.c.h.b16 %v641
        %v2254 = vunpack.c.l.b16 %v642
        %v2255 = vunpack.c.h.b16 %v642
        %v2256 = vunpack.c.l.b16 %v643
        %v2257 = vunpack.c.h.b16 %v643
        %v2258 = vunpack.c.l.b16 %v644
        %v2259 = vunpack.c.h.b16 %v644
        %v2260 = vunpack.c.l.b16 %v645
        %v2261 = vunpack.c.h.b16 %v645
        %v2262 = vunpack.c.l.b16 %v646
        %v2263 = vunpack.c.h.b16 %v646
        %v2264 = vunpack.c.l.b16 %v647
        %v2265 = vunpack.c.h.b16 %v647
        %v2266 = vunpack.c.l.b16 %v648
        %v2267 = vunpack.c.h.b16 %v648
        %v2268 = vunpack.c.l.b16 %v649
        %v2269 = vunpack.c.h.b16 %v649
        %v2270 = vunpack.c.l.b16 %v650
        %v2271 = vunpack.c.h.b16 %v650
        %v2272 = vunpack.c.l.b16 %v651
        %v2273 = vunpack.c.h.b16 %v651
        %v2274 = vunpack.c.l.b16 %v652
        %v2275 = vunpack.c.h.b16 %v652
        %v2276 = vunpack.c.l.b16 %v653
        %v2277 = vunpack.c.h.b16 %v653
        %v2278 = vunpack.c.l.b16 %v654
        %v2279 = vunpack.c.h.b16 %v654
        %v2280 = vunpack.c.l.b16 %v655
        %v2281 = vunpack.c.h.b16 %v655
        %v2282 = vunpack.c.l.b16 %v656
        %v2283 = vunpack.c.h.b16 %v656
        %v2284 = vunpack.c.l.b16 %v657
        %v2285 = vunpack.c.h.b16 %v657
        %v2286 = vunpack.c.l.b16 %v658
        %v2287 = vunpack.c.h.b16 %v658
        %v2288 = vunpack.c.l.b16 %v659
        %v2289 = vunpack.c.h.b16 %v659
        %v2290 = vunpack.c.l.b16 %v660
        %v2291 = vunpack.c.h.b16 %v660
        %v2292 = vunpack.c.l.b16 %v661
        %v2293 = vunpack.c.h.b16 %v661
        %v2294 = vunpack.c.l.b16 %v662
        %v2295 = vunpack.c.h.b16 %v662
        %v2296 = vunpack.c.l.b16 %v663
        %v2297 = vunpack.c.h.b16 %v663
        %v2298 = vunpack.c.l.b16 %v664
        %v2299 = vunpack.c.h.b16 %v664
        %v2300 = vunpack.c.l.b16 %v665
        %v2301 = vunpack.c.h.b16 %v665
        %v2302 = vunpack.c.l.b16 %v666
        %v2303 = vunpack.c.h.b16 %v666
        %v2304 = vunpack.c.l.b16 %v667
        %v2305 = vunpack.c.h.b16 %v667
        %v2306 = vunpack.c.l.b16 %v668
        %v2307 = vunpack.c.h.b16 %v668
        %v2308 = vunpack.c.l.b16 %v669
        %v2309 = vunpack.c.h.b16 %v669
        %v2310 = vunpack.c.l.b16 %v670
        %v2311 = vunpack.c.h.b16 %v670
        %v2312 = vunpack.c.l.b16 %v671
        %v2313 = vunpack.c.h.b16 %v671
        %v2314 = vunpack.c.l.b16 %v672
        %v2315 = vunpack.c.h.b16 %v672
        %v2316 = vunpack.c.l.b16 %v673
        %v2317 = vunpack.c.h.b16 %v673
        %v2318 = vunpack.c.l.b16 %v674
        %v2319 = vunpack.c.h.b16 %v674
        %v2320 = vunpack.c.l.b16 %v675
        %v2321 = vunpack.c.h.b16 %v675
        %v2322 = vunpack.c.l.b16 %v676
        %v2323 = vunpack.c.h.b16 %v676
        %v2324 = vunpack.c.l.b16 %v677
        %v2325 = vunpack.c.h.b16 %v677
        %v2326 = vunpack.c.l.b16 %v678
        %v2327 = vunpack.c.h.b16 %v678
        %v2328 = vunpack.c.l.b16 %v679
        %v2329 = vunpack.c.h.b16 %v679
        %v2330 = vunpack.c.l.b16 %v680
        %v2331 = vunpack.c.h.b16 %v680
        %v2332 = vunpack.c.l.b16 %v681
        %v2333 = vunpack.c.h.b16 %v681
        %v2334 = vunpack.c.l.b16 %v682
        %v2335 = vunpack.c.h.b16 %v682
        %v2336 = vunpack.c.l.b16 %v683
        %v2337 = vunpack.c.h.b16 %v683
        %v2338 = vunpack.c.l.b16 %v684
        %v2339 = vunpack.c.h.b16 %v684
        %v2340 = vunpack.c.l.b16 %v685
        %v2341 = vunpack.c.h.b16 %v685
        %v2342 = vunpack.c.l.b16 %v686
        %v2343 = vunpack.c.h.b16 %v686
        %v2344 = vunpack.c.l.b16 %v687
        %v2345 = vunpack.c.h.b16 %v687
        %v2346 = vunpack.c.l.b16 %v688
        %v2347 = vunpack.c.h.b16 %v688
        %v2348 = vunpack.c.l.b16 %v689
        %v2349 = vunpack.c.h.b16 %v689
        %v2350 = vunpack.c.l.b16 %v690
        %v2351 = vunpack.c.h.b16 %v690
        %v2352 = vunpack.c.l.b16 %v691
        %v2353 = vunpack.c.h.b16 %v691
        %v2354 = vunpack.c.l.b16 %v692
        %v2355 = vunpack.c.h.b16 %v692
        %v2356 = vunpack.c.l.b16 %v693
        %v2357 = vunpack.c.h.b16 %v693
        %v2358 = vunpack.c.l.b16 %v694
        %v2359 = vunpack.c.h.b16 %v694
        %v2360 = vunpack.c.l.b16 %v695
        %v2361 = vunpack.c.h.b16 %v695
        %v2362 = vunpack.c.l.b16 %v696
        %v2363 = vunpack.c.h.b16 %v696
        %v2364 = vunpack.c.l.b16 %v697
        %v2365 = vunpack.c.h.b16 %v697
        %v2366 = vunpack.c.l.b16 %v698
        %v2367 = vunpack.c.h.b16 %v698
        %v2368 = vunpack.c.l.b16 %v699
        %v2369 = vunpack.c.h.b16 %v699
        %v2370 = vunpack.c.l.b16 %v700
        %v2371 = vunpack.c.h.b16 %v700
        %v2372 = vunpack.c.l.b16 %v701
        %v2373 = vunpack.c.h.b16 %v701
        %v2374 = vunpack.c.l.b16 %v702
        %v2375 = vunpack.c.h.b16 %v702
        %v2376 = vunpack.c.l.b16 %v703
        %v2377 = vunpack.c.h.b16 %v703
        %v2378 = vunpack.c.l.b16 %v704
        %v2379 = vunpack.c.h.b16 %v704
        %v2380 = vunpack.c.l.b16 %v705
        %v2381 = vunpack.c.h.b16 %v705
        %v2382 = vunpack.c.l.b16 %v706
        %v2383 = vunpack.c.h.b16 %v706
        %v2384 = vunpack.c.l.b16 %v707
        %v2385 = vunpack.c.h.b16 %v707
        %v2386 = vunpack.c.l.b16 %v708
        %v2387 = vunpack.c.h.b16 %v708
        %v2388 = vunpack.c.l.b16 %v709
        %v2389 = vunpack.c.h.b16 %v709
        %v2390 = vunpack.c.l.b16 %v710
        %v2391 = vunpack.c.h.b16 %v710
        %v2392 = vunpack.c.l.b16 %v711
        %v2393 = vunpack.c.h.b16 %v711
        %v2394 = vunpack.c.l.b16 %v712
        %v2395 = vunpack.c.h.b16 %v712
        %v2396 = vunpack.c.l.b16 %v713
        %v2397 = vunpack.c.h.b16 %v713
        %v2398 = vunpack.c.l.b16 %v714
        %v2399 = vunpack.c.h.b16 %v714
        %v2400 = vunpack.c.l.b16 %v715
        %v2401 = vunpack.c.h.b16 %v715
        %v2402 = vunpack.c.l.b16 %v716
        %v2403 = vunpack.c.h.b16 %v716
        %v2404 = vunpack.c.l.b16 %v717
        %v2405 = vunpack.c.h.b16 %v717
        %v2406 = vunpack.c.l.b16 %v718
        %v2407 = vunpack.c.h.b16 %v718
        %v2408 = vunpack.c.l.b16 %v719
        %v2409 = vunpack.c.h.b16 %v719
        %v2410 = vunpack.c.l.b16 %v720
        %v2411 = vunpack.c.h.b16 %v720
        %v2412 = vunpack.c.l.b16 %v721
        %v2413 = vunpack.c.h.b16 %v721
        %v2414 = vunpack.c.l.b16 %v722
        %v2415 = vunpack.c.h.b16 %v722
        %v2416 = vunpack.c.l.b16 %v723
        %v2417 = vunpack.c.h.b16 %v723
        %v2418 = vunpack.c.l.b16 %v724
        %v2419 = vunpack.c.h.b16 %v724
        %v2420 = vunpack.c.l.b16 %v725
        %v2421 = vunpack.c.h.b16 %v725
        %v2422 = vunpack.c.l.b16 %v726
        %v2423 = vunpack.c.h.b16 %v726
        %v2424 = vunpack.c.l.b16 %v727
        %v2425 = vunpack.c.h.b16 %v727
        %v2426 = vunpack.c.l.b16 %v728
        %v2427 = vunpack.c.h.b16 %v728
        %v2428 = vunpack.c.l.b16 %v729
        %v2429 = vunpack.c.h.b16 %v729
        %v2430 = vunpack.c.l.b16 %v730
        %v2431 = vunpack.c.h.b16 %v730
        %v2432 = vunpack.c.l.b16 %v731
        %v2433 = vunpack.c.h.b16 %v731
        %v2434 = vunpack.c.l.b16 %v732
        %v2435 = vunpack.c.h.b16 %v732
        %v2436 = vunpack.c.l.b16 %v733
        %v2437 = vunpack.c.h.b16 %v733
        %v2438 = vunpack.c.l.b16 %v734
        %v2439 = vunpack.c.h.b16 %v734
        %v2440 = vunpack.c.l.b16 %v735
        %v2441 = vunpack.c.h.b16 %v735
        %v2442 = vunpack.c.l.b16 %v736
        %v2443 = vunpack.c.h.b16 %v736
        %v2444 = vunpack.c.l.b16 %v737
        %v2445 = vunpack.c.h.b16 %v737
        %v2446 = vunpack.c.l.b16 %v738
        %v2447 = vunpack.c.h.b16 %v738
        %v2448 = vunpack.c.l.b16 %v739
        %v2449 = vunpack.c.h.b16 %v739
        %v2450 = vpack.c.b16 %v1682, %v1666
        %v2451 = vpack.c.b16 %v1683, %v1667
        %v2452 = vpack.c.b16 %v1684, %v1668
        %v2453 = vpack.c.b16 %v1685, %v1669
        %v2454 = vpack.c.b16 %v1686, %v1670
        %v2455 = vpack.c.b16 %v1687, %v1671
        %v2456 = vpack.c.b16 %v1688, %v1672
        %v2457 = vpack.c.b16 %v1689, %v1673
        %v2458 = vpack.c.b16 %v1690, %v1674
        %v2459 = vpack.c.b16 %v1691, %v1675
        %v2460 = vpack.c.b16 %v1692, %v1676
        %v2461 = vpack.c.b16 %v1693, %v1677
        %v2462 = vpack.c.b16 %v1694, %v1678
        %v2463 = vpack.c.b16 %v1695, %v1679
        %v2464 = vpack.c.b16 %v1696, %v1680
        %v2465 = vpack.c.b16 %v1697, %v1681
        %v2466 = vpack.c.b16 %v1714, %v1698
        %v2467 = vpack.c.b16 %v1715, %v1699
        %v2468 = vpack.c.b16 %v1716, %v1700
        %v2469 = vpack.c.b16 %v1717, %v1701
        %v2470 = vpack.c.b16 %v1718, %v1702
        %v2471 = vpack.c.b16 %v1719, %v1703
        %v2472 = vpack.c.b16 %v1720, %v1704
        %v2473 = vpack.c.b16 %v1721, %v1705
        %v2474 = vpack.c.b16 %v1722, %v1706
        %v2475 = vpack.c.b16 %v1723, %v1707
        %v2476 = vpack.c.b16 %v1724, %v1708
        %v2477 = vpack.c.b16 %v1725, %v1709
        %v2478 = vpack.c.b16 %v1726, %v1710
        %v2479 = vpack.c.b16 %v1727, %v1711
        %v2480 = vpack.c.b16 %v1728, %v1712
        %v2481 = vpack.c.b16 %v1729, %v1713
        %v2482 = vpack.c.b16 %v1746, %v1730
        %v2483 = vpack.c.b16 %v1747, %v1731
        %v2484 = vpack.c.b16 %v1748, %v1732
        %v2485 = vpack.c.b16 %v1749, %v1733
        %v2486 = vpack.c.b16 %v1750, %v1734
        %v2487 = vpack.c.b16 %v1751, %v1735
        %v2488 = vpack.c.b16 %v1752, %v1736
        %v2489 = vpack.c.b16 %v1753, %v1737
        %v2490 = vpack.c.b16 %v1754, %v1738
        %v2491 = vpack.c.b16 %v1755, %v1739
        %v2492 = vpack.c.b16 %v1756, %v1740
        %v2493 = vpack.c.b16 %v1757, %v1741
        %v2494 = vpack.c.b16 %v1758, %v1742
        %v2495 = vpack.c.b16 %v1759, %v1743
        %v2496 = vpack.c.b16 %v1760, %v1744
        %v2497 = vpack.c.b16 %v1761, %v1745
        %v2498 = vpack.c.b16 %v1778, %v1762
        %v2499 = vpack.c.b16 %v1779, %v1763
        %v2500 = vpack.c.b16 %v1780, %v1764
        %v2501 = vpack.c.b16 %v1781, %v1765
        %v2502 = vpack.c.b16 %v1782, %v1766
        %v2503 = vpack.c.b16 %v1783, %v1767
        %v2504 = vpack.c.b16 %v1784, %v1768
        %v2505 = vpack.c.b16 %v1785, %v1769
        %v2506 = vpack.c.b16 %v1786, %v1770
        %v2507 = vpack.c.b16 %v1787, %v1771
        %v2508 = vpack.c.b16 %v1788, %v1772
        %v2509 = vpack.c.b16 %v1789, %v1773
        %v2510 = vpack.c.b16 %v1790, %v1774
        %v2511 = vpack.c.b16 %v1791, %v1775
        %v2512 = vpack.c.b16 %v1792, %v1776
        %v2513 = vpack.c.b16 %v1793, %v1777
        %v2514 = vpack.c.b16 %v1810, %v1794
        %v2515 = vpack.c.b16 %v1811, %v1795
        %v2516 = vpack.c.b16 %v1812, %v1796
        %v2517 = vpack.c.b16 %v1813, %v1797
        %v2518 = vpack.c.b16 %v1814, %v1798
        %v2519 = vpack.c.b16 %v1815, %v1799
        %v2520 = vpack.c.b16 %v1816, %v1800
        %v2521 = vpack.c.b16 %v1817, %v1801
        %v2522 = vpack.c.b16 %v1818, %v1802
        %v2523 = vpack.c.b16 %v1819, %v1803
        %v2524 = vpack.c.b16 %v1820, %v1804
        %v2525 = vpack.c.b16 %v1821, %v1805
        %v2526 = vpack.c.b16 %v1822, %v1806
        %v2527 = vpack.c.b16 %v1823, %v1807
        %v2528 = vpack.c.b16 %v1824, %v1808
        %v2529 = vpack.c.b16 %v1825, %v1809
        %v2530 = vpack.c.b16 %v1842, %v1826
        %v2531 = vpack.c.b16 %v1843, %v1827
        %v2532 = vpack.c.b16 %v1844, %v1828
        %v2533 = vpack.c.b16 %v1845, %v1829
        %v2534 = vpack.c.b16 %v1846, %v1830
        %v2535 = vpack.c.b16 %v1847, %v1831
        %v2536 = vpack.c.b16 %v1848, %v1832
        %v2537 = vpack.c.b16 %v1849, %v1833
        %v2538 = vpack.c.b16 %v1850, %v1834
        %v2539 = vpack.c.b16 %v1851, %v1835
        %v2540 = vpack.c.b16 %v1852, %v1836
        %v2541 = vpack.c.b16 %v1853, %v1837
        %v2542 = vpack.c.b16 %v1854, %v1838
        %v2543 = vpack.c.b16 %v1855, %v1839
        %v2544 = vpack.c.b16 %v1856, %v1840
        %v2545 = vpack.c.b16 %v1857, %v1841
        %v2546 = vpack.c.b16 %v1874, %v1858
        %v2547 = vpack.c.b16 %v1875, %v1859
        %v2548 = vpack.c.b16 %v1876, %v1860
        %v2549 = vpack.c.b16 %v1877, %v1861
        %v2550 = vpack.c.b16 %v1878, %v1862
        %v2551 = vpack.c.b16 %v1879, %v1863
        %v2552 = vpack.c.b16 %v1880, %v1864
        %v2553 = vpack.c.b16 %v1881, %v1865
        %v2554 = vpack.c.b16 %v1882, %v1866
        %v2555 = vpack.c.b16 %v1883, %v1867
        %v2556 = vpack.c.b16 %v1884, %v1868
        %v2557 = vpack.c.b16 %v1885, %v1869
        %v2558 = vpack.c.b16 %v1886, %v1870
        %v2559 = vpack.c.b16 %v1887, %v1871
        %v2560 = vpack.c.b16 %v1888, %v1872
        %v2561 = vpack.c.b16 %v1889, %v1873
        %v2562 = vpack.c.b16 %v1906, %v1890
        %v2563 = vpack.c.b16 %v1907, %v1891
        %v2564 = vpack.c.b16 %v1908, %v1892
        %v2565 = vpack.c.b16 %v1909, %v1893
        %v2566 = vpack.c.b16 %v1910, %v1894
        %v2567 = vpack.c.b16 %v1911, %v1895
        %v2568 = vpack.c.b16 %v1912, %v1896
        %v2569 = vpack.c.b16 %v1913, %v1897
        %v2570 = vpack.c.b16 %v1914, %v1898
        %v2571 = vpack.c.b16 %v1915, %v1899
        %v2572 = vpack.c.b16 %v1916, %v1900
        %v2573 = vpack.c.b16 %v1917, %v1901
        %v2574 = vpack.c.b16 %v1918, %v1902
        %v2575 = vpack.c.b16 %v1919, %v1903
        %v2576 = vpack.c.b16 %v1920, %v1904
        %v2577 = vpack.c.b16 %v1921, %v1905
        %v2578 = vpack.c.b16 %v1938, %v1922
        %v2579 = vpack.c.b16 %v1939, %v1923
        %v2580 = vpack.c.b16 %v1940, %v1924
        %v2581 = vpack.c.b16 %v1941, %v1925
        %v2582 = vpack.c.b16 %v1942, %v1926
        %v2583 = vpack.c.b16 %v1943, %v1927
        %v2584 = vpack.c.b16 %v1944, %v1928
        %v2585 = vpack.c.b16 %v1945, %v1929
        %v2586 = vpack.c.b16 %v1946, %v1930
        %v2587 = vpack.c.b16 %v1947, %v1931
        %v2588 = vpack.c.b16 %v1948, %v1932
        %v2589 = vpack.c.b16 %v1949, %v1933
        %v2590 = vpack.c.b16 %v1950, %v1934
        %v2591 = vpack.c.b16 %v1951, %v1935
        %v2592 = vpack.c.b16 %v1952, %v1936
        %v2593 = vpack.c.b16 %v1953, %v1937
        %v2594 = vpack.c.b16 %v1970, %v1954
        %v2595 = vpack.c.b16 %v1971, %v1955
        %v2596 = vpack.c.b16 %v1972, %v1956
        %v2597 = vpack.c.b16 %v1973, %v1957
        %v2598 = vpack.c.b16 %v1974, %v1958
        %v2599 = vpack.c.b16 %v1975, %v1959
        %v2600 = vpack.c.b16 %v1976, %v1960
        %v2601 = vpack.c.b16 %v1977, %v1961
        %v2602 = vpack.c.b16 %v1978, %v1962
        %v2603 = vpack.c.b16 %v1979, %v1963
        %v2604 = vpack.c.b16 %v1980, %v1964
        %v2605 = vpack.c.b16 %v1981, %v1965
        %v2606 = vpack.c.b16 %v1982, %v1966
        %v2607 = vpack.c.b16 %v1983, %v1967
        %v2608 = vpack.c.b16 %v1984, %v1968
        %v2609 = vpack.c.b16 %v1985, %v1969
        %v2610 = vpack.c.b16 %v2002, %v1986
        %v2611 = vpack.c.b16 %v2003, %v1987
        %v2612 = vpack.c.b16 %v2004, %v1988
        %v2613 = vpack.c.b16 %v2005, %v1989
        %v2614 = vpack.c.b16 %v2006, %v1990
        %v2615 = vpack.c.b16 %v2007, %v1991
        %v2616 = vpack.c.b16 %v2008, %v1992
        %v2617 = vpack.c.b16 %v2009, %v1993
        %v2618 = vpack.c.b16 %v2010, %v1994
        %v2619 = vpack.c.b16 %v2011, %v1995
        %v2620 = vpack.c.b16 %v2012, %v1996
        %v2621 = vpack.c.b16 %v2013, %v1997
        %v2622 = vpack.c.b16 %v2014, %v1998
        %v2623 = vpack.c.b16 %v2015, %v1999
        %v2624 = vpack.c.b16 %v2016, %v2000
        %v2625 = vpack.c.b16 %v2017, %v2001
        %v2626 = vpack.c.b16 %v2034, %v2018
        %v2627 = vpack.c.b16 %v2035, %v2019
        %v2628 = vpack.c.b16 %v2036, %v2020
        %v2629 = vpack.c.b16 %v2037, %v2021
        %v2630 = vpack.c.b16 %v2038, %v2022
        %v2631 = vpack.c.b16 %v2039, %v2023
        %v2632 = vpack.c.b16 %v2040, %v2024
        %v2633 = vpack.c.b16 %v2041, %v2025
        %v2634 = vpack.c.b16 %v2042, %v2026
        %v2635 = vpack.c.b16 %v2043, %v2027
        %v2636 = vpack.c.b16 %v2044, %v2028
        %v2637 = vpack.c.b16 %v2045, %v2029
        %v2638 = vpack.c.b16 %v2046, %v2030
        %v2639 = vpack.c.b16 %v2047, %v2031
        %v2640 = vpack.c.b16 %v2048, %v2032
        %v2641 = vpack.c.b16 %v2049, %v2033
        %v2642 = vpack.c.b16 %v2066, %v2050
        %v2643 = vpack.c.b16 %v2067, %v2051
        %v2644 = vpack.c.b16 %v2068, %v2052
        %v2645 = vpack.c.b16 %v2069, %v2053
        %v2646 = vpack.c.b16 %v2070, %v2054
        %v2647 = vpack.c.b16 %v2071, %v2055
        %v2648 = vpack.c.b16 %v2072, %v2056
        %v2649 = vpack.c.b16 %v2073, %v2057
        %v2650 = vpack.c.b16 %v2074, %v2058
        %v2651 = vpack.c.b16 %v2075, %v2059
        %v2652 = vpack.c.b16 %v2076, %v2060
        %v2653 = vpack.c.b16 %v2077, %v2061
        %v2654 = vpack.c.b16 %v2078, %v2062
        %v2655 = vpack.c.b16 %v2079, %v2063
        %v2656 = vpack.c.b16 %v2080, %v2064
        %v2657 = vpack.c.b16 %v2081, %v2065
        %v2658 = vpack.c.b16 %v2098, %v2082
        %v2659 = vpack.c.b16 %v2099, %v2083
        %v2660 = vpack.c.b16 %v2100, %v2084
        %v2661 = vpack.c.b16 %v2101, %v2085
        %v2662 = vpack.c.b16 %v2102, %v2086
        %v2663 = vpack.c.b16 %v2103, %v2087
        %v2664 = vpack.c.b16 %v2104, %v2088
        %v2665 = vpack.c.b16 %v2105, %v2089
        %v2666 = vpack.c.b16 %v2106, %v2090
        %v2667 = vpack.c.b16 %v2107, %v2091
        %v2668 = vpack.c.b16 %v2108, %v2092
        %v2669 = vpack.c.b16 %v2109, %v2093
        %v2670 = vpack.c.b16 %v2110, %v2094
        %v2671 = vpack.c.b16 %v2111, %v2095
        %v2672 = vpack.c.b16 %v2112, %v2096
        %v2673 = vpack.c.b16 %v2113, %v2097
        %v2674 = vpack.c.b16 %v2130, %v2114
        %v2675 = vpack.c.b16 %v2131, %v2115
        %v2676 = vpack.c.b16 %v2132, %v2116
        %v2677 = vpack.c.b16 %v2133, %v2117
        %v2678 = vpack.c.b16 %v2134, %v2118
        %v2679 = vpack.c.b16 %v2135, %v2119
        %v2680 = vpack.c.b16 %v2136, %v2120
        %v2681 = vpack.c.b16 %v2137, %v2121
        %v2682 = vpack.c.b16 %v2138, %v2122
        %v2683 = vpack.c.b16 %v2139, %v2123
        %v2684 = vpack.c.b16 %v2140, %v2124
        %v2685 = vpack.c.b16 %v2141, %v2125
        %v2686 = vpack.c.b16 %v2142, %v2126
        %v2687 = vpack.c.b16 %v2143, %v2127
        %v2688 = vpack.c.b16 %v2144, %v2128
        %v2689 = vpack.c.b16 %v2145, %v2129
        %v2690 = vpack.c.b16 %v2162, %v2146
        %v2691 = vpack.c.b16 %v2163, %v2147
        %v2692 = vpack.c.b16 %v2164, %v2148
        %v2693 = vpack.c.b16 %v2165, %v2149
        %v2694 = vpack.c.b16 %v2166, %v2150
        %v2695 = vpack.c.b16 %v2167, %v2151
        %v2696 = vpack.c.b16 %v2168, %v2152
        %v2697 = vpack.c.b16 %v2169, %v2153
        %v2698 = vpack.c.b16 %v2170, %v2154
        %v2699 = vpack.c.b16 %v2171, %v2155
        %v2700 = vpack.c.b16 %v2172, %v2156
        %v2701 = vpack.c.b16 %v2173, %v2157
        %v2702 = vpack.c.b16 %v2174, %v2158
        %v2703 = vpack.c.b16 %v2175, %v2159
        %v2704 = vpack.c.b16 %v2176, %v2160
        %v2705 = vpack.c.b16 %v2177, %v2161
        %v2706 = vpack.c.b16 %v2194, %v2178
        %v2707 = vpack.c.b16 %v2195, %v2179
        %v2708 = vpack.c.b16 %v2196, %v2180
        %v2709 = vpack.c.b16 %v2197, %v2181
        %v2710 = vpack.c.b16 %v2198, %v2182
        %v2711 = vpack.c.b16 %v2199, %v2183
        %v2712 = vpack.c.b16 %v2200, %v2184
        %v2713 = vpack.c.b16 %v2201, %v2185
        %v2714 = vpack.c.b16 %v2202, %v2186
        %v2715 = vpack.c.b16 %v2203, %v2187
        %v2716 = vpack.c.b16 %v2204, %v2188
        %v2717 = vpack.c.b16 %v2205, %v2189
        %v2718 = vpack.c.b16 %v2206, %v2190
        %v2719 = vpack.c.b16 %v2207, %v2191
        %v2720 = vpack.c.b16 %v2208, %v2192
        %v2721 = vpack.c.b16 %v2209, %v2193
        %v2722 = vpack.c.b16 %v2226, %v2210
        %v2723 = vpack.c.b16 %v2227, %v2211
        %v2724 = vpack.c.b16 %v2228, %v2212
        %v2725 = vpack.c.b16 %v2229, %v2213
        %v2726 = vpack.c.b16 %v2230, %v2214
        %v2727 = vpack.c.b16 %v2231, %v2215
        %v2728 = vpack.c.b16 %v2232, %v2216
        %v2729 = vpack.c.b16 %v2233, %v2217
        %v2730 = vpack.c.b16 %v2234, %v2218
        %v2731 = vpack.c.b16 %v2235, %v2219
        %v2732 = vpack.c.b16 %v2236, %v2220
        %v2733 = vpack.c.b16 %v2237, %v2221
        %v2734 = vpack.c.b16 %v2238, %v2222
        %v2735 = vpack.c.b16 %v2239, %v2223
        %v2736 = vpack.c.b16 %v2240, %v2224
        %v2737 = vpack.c.b16 %v2241, %v2225
        %v2738 = vpack.c.b16 %v2258, %v2242
        %v2739 = vpack.c.b16 %v2259, %v2243
        %v2740 = vpack.c.b16 %v2260, %v2244
        %v2741 = vpack.c.b16 %v2261, %v2245
        %v2742 = vpack.c.b16 %v2262, %v2246
        %v2743 = vpack.c.b16 %v2263, %v2247
        %v2744 = vpack.c.b16 %v2264, %v2248
        %v2745 = vpack.c.b16 %v2265, %v2249
        %v2746 = vpack.c.b16 %v2266, %v2250
        %v2747 = vpack.c.b16 %v2267, %v2251
        %v2748 = vpack.c.b16 %v2268, %v2252
        %v2749 = vpack.c.b16 %v2269, %v2253
        %v2750 = vpack.c.b16 %v2270, %v2254
        %v2751 = vpack.c.b16 %v2271, %v2255
        %v2752 = vpack.c.b16 %v2272, %v2256
        %v2753 = vpack.c.b16 %v2273, %v2257
        %v2754 = vpack.c.b16 %v2290, %v2274
        %v2755 = vpack.c.b16 %v2291, %v2275
        %v2756 = vpack.c.b16 %v2292, %v2276
        %v2757 = vpack.c.b16 %v2293, %v2277
        %v2758 = vpack.c.b16 %v2294, %v2278
        %v2759 = vpack.c.b16 %v2295, %v2279
        %v2760 = vpack.c.b16 %v2296, %v2280
        %v2761 = vpack.c.b16 %v2297, %v2281
        %v2762 = vpack.c.b16 %v2298, %v2282
        %v2763 = vpack.c.b16 %v2299, %v2283
        %v2764 = vpack.c.b16 %v2300, %v2284
        %v2765 = vpack.c.b16 %v2301, %v2285
        %v2766 = vpack.c.b16 %v2302, %v2286
        %v2767 = vpack.c.b16 %v2303, %v2287
        %v2768 = vpack.c.b16 %v2304, %v2288
        %v2769 = vpack.c.b16 %v2305, %v2289
        %v2770 = vpack.c.b16 %v2322, %v2306
        %v2771 = vpack.c.b16 %v2323, %v2307
        %v2772 = vpack.c.b16 %v2324, %v2308
        %v2773 = vpack.c.b16 %v2325, %v2309
        %v2774 = vpack.c.b16 %v2326, %v2310
        %v2775 = vpack.c.b16 %v2327, %v2311
        %v2776 = vpack.c.b16 %v2328, %v2312
        %v2777 = vpack.c.b16 %v2329, %v2313
        %v2778 = vpack.c.b16 %v2330, %v2314
        %v2779 = vpack.c.b16 %v2331, %v2315
        %v2780 = vpack.c.b16 %v2332, %v2316
        %v2781 = vpack.c.b16 %v2333, %v2317
        %v2782 = vpack.c.b16 %v2334, %v2318
        %v2783 = vpack.c.b16 %v2335, %v2319
        %v2784 = vpack.c.b16 %v2336, %v2320
        %v2785 = vpack.c.b16 %v2337, %v2321
        %v2786 = vpack.c.b16 %v2354, %v2338
        %v2787 = vpack.c.b16 %v2355, %v2339
        %v2788 = vpack.c.b16 %v2356, %v2340
        %v2789 = vpack.c.b16 %v2357, %v2341
        %v2790 = vpack.c.b16 %v2358, %v2342
        %v2791 = vpack.c.b16 %v2359, %v2343
        %v2792 = vpack.c.b16 %v2360, %v2344
        %v2793 = vpack.c.b16 %v2361, %v2345
        %v2794 = vpack.c.b16 %v2362, %v2346
        %v2795 = vpack.c.b16 %v2363, %v2347
        %v2796 = vpack.c.b16 %v2364, %v2348
        %v2797 = vpack.c.b16 %v2365, %v2349
        %v2798 = vpack.c.b16 %v2366, %v2350
        %v2799 = vpack.c.b16 %v2367, %v2351
        %v2800 = vpack.c.b16 %v2368, %v2352
        %v2801 = vpack.c.b16 %v2369, %v2353
        %v2802 = vpack.c.b16 %v2386, %v2370
        %v2803 = vpack.c.b16 %v2387, %v2371
        %v2804 = vpack.c.b16 %v2388, %v2372
        %v2805 = vpack.c.b16 %v2389, %v2373
        %v2806 = vpack.c.b16 %v2390, %v2374
        %v2807 = vpack.c.b16 %v2391, %v2375
        %v2808 = vpack.c.b16 %v2392, %v2376
        %v2809 = vpack.c.b16 %v2393, %v2377
        %v2810 = vpack.c.b16 %v2394, %v2378
        %v2811 = vpack.c.b16 %v2395, %v2379
        %v2812 = vpack.c.b16 %v2396, %v2380
        %v2813 = vpack.c.b16 %v2397, %v2381
        %v2814 = vpack.c.b16 %v2398, %v2382
        %v2815 = vpack.c.b16 %v2399, %v2383
        %v2816 = vpack.c.b16 %v2400, %v2384
        %v2817 = vpack.c.b16 %v2401, %v2385
        %v2818 = vpack.c.b16 %v2418, %v2402
        %v2819 = vpack.c.b16 %v2419, %v2403
        %v2820 = vpack.c.b16 %v2420, %v2404
        %v2821 = vpack.c.b16 %v2421, %v2405
        %v2822 = vpack.c.b16 %v2422, %v2406
        %v2823 = vpack.c.b16 %v2423, %v2407
        %v2824 = vpack.c.b16 %v2424, %v2408
        %v2825 = vpack.c.b16 %v2425, %v2409
        %v2826 = vpack.c.b16 %v2426, %v2410
        %v2827 = vpack.c.b16 %v2427, %v2411
        %v2828 = vpack.c.b16 %v2428, %v2412
        %v2829 = vpack.c.b16 %v2429, %v2413
        %v2830 = vpack.c.b16 %v2430, %v2414
        %v2831 = vpack.c.b16 %v2431, %v2415
        %v2832 = vpack.c.b16 %v2432, %v2416
        %v2833 = vpack.c.b16 %v2433, %v2417
        %v2834 = vpack.c.b16 %v2434, %v2434
        %v2835 = vpack.c.b16 %v2435, %v2435
        %v2836 = vpack.c.b16 %v2436, %v2436
        %v2837 = vpack.c.b16 %v2437, %v2437
        %v2838 = vpack.c.b16 %v2438, %v2438
        %v2839 = vpack.c.b16 %v2439, %v2439
        %v2840 = vpack.c.b16 %v2440, %v2440
        %v2841 = vpack.c.b16 %v2441, %v2441
        %v2842 = vpack.c.b16 %v2442, %v2442
        %v2843 = vpack.c.b16 %v2443, %v2443
        %v2844 = vpack.c.b16 %v2444, %v2444
        %v2845 = vpack.c.b16 %v2445, %v2445
        %v2846 = vpack.c.b16 %v2446, %v2446
        %v2847 = vpack.c.b16 %v2447, %v2447
        %v2848 = vpack.c.b16 %v2448, %v2448
        %v2849 = vpack.c.b16 %v2449, %v2449
        %v3762 = vunpack.c.l.b16 %v740
        %v3763 = vunpack.c.h.b16 %v740
        %v3764 = vunpack.c.l.b16 %v741
        %v3765 = vunpack.c.h.b16 %v741
        %v3766 = vunpack.c.l.b16 %v742
        %v3767 = vunpack.c.h.b16 %v742
        %v3768 = vunpack.c.l.b16 %v743
        %v3769 = vunpack.c.h.b16 %v743
        %v3770 = vunpack.c.l.b16 %v744
        %v3771 = vunpack.c.h.b16 %v744
        %v3772 = vunpack.c.l.b16 %v745
        %v3773 = vunpack.c.h.b16 %v745
        %v3774 = vunpack.c.l.b16 %v746
        %v3775 = vunpack.c.h.b16 %v746
        %v3776 = vunpack.c.l.b16 %v747
        %v3777 = vunpack.c.h.b16 %v747
        %v3778 = vunpack.c.l.b16 %v748
        %v3779 = vunpack.c.h.b16 %v748
        %v3780 = vunpack.c.l.b16 %v749
        %v3781 = vunpack.c.h.b16 %v749
        %v3782 = vunpack.c.l.b16 %v750
        %v3783 = vunpack.c.h.b16 %v750
        %v3784 = vunpack.c.l.b16 %v751
        %v3785 = vunpack.c.h.b16 %v751
        %v3786 = vunpack.c.l.b16 %v752
        %v3787 = vunpack.c.h.b16 %v752
        %v3788 = vunpack.c.l.b16 %v753
        %v3789 = vunpack.c.h.b16 %v753
        %v3790 = vunpack.c.l.b16 %v754
        %v3791 = vunpack.c.h.b16 %v754
        %v3792 = vunpack.c.l.b16 %v755
        %v3793 = vunpack.c.h.b16 %v755
        %v3794 = vunpack.c.l.b16 %v756
        %v3795 = vunpack.c.h.b16 %v756
        %v3796 = vunpack.c.l.b16 %v757
        %v3797 = vunpack.c.h.b16 %v757
        %v3798 = vunpack.c.l.b16 %v758
        %v3799 = vunpack.c.h.b16 %v758
        %v3800 = vunpack.c.l.b16 %v759
        %v3801 = vunpack.c.h.b16 %v759
        %v3802 = vunpack.c.l.b16 %v760
        %v3803 = vunpack.c.h.b16 %v760
        %v3804 = vunpack.c.l.b16 %v761
        %v3805 = vunpack.c.h.b16 %v761
        %v3806 = vunpack.c.l.b16 %v762
        %v3807 = vunpack.c.h.b16 %v762
        %v3808 = vunpack.c.l.b16 %v763
        %v3809 = vunpack.c.h.b16 %v763
        %v3810 = vunpack.c.l.b16 %v764
        %v3811 = vunpack.c.h.b16 %v764
        %v3812 = vunpack.c.l.b16 %v765
        %v3813 = vunpack.c.h.b16 %v765
        %v3814 = vunpack.c.l.b16 %v766
        %v3815 = vunpack.c.h.b16 %v766
        %v3816 = vunpack.c.l.b16 %v767
        %v3817 = vunpack.c.h.b16 %v767
        %v3818 = vunpack.c.l.b16 %v768
        %v3819 = vunpack.c.h.b16 %v768
        %v3820 = vunpack.c.l.b16 %v769
        %v3821 = vunpack.c.h.b16 %v769
        %v3822 = vunpack.c.l.b16 %v770
        %v3823 = vunpack.c.h.b16 %v770
        %v3824 = vunpack.c.l.b16 %v771
        %v3825 = vunpack.c.h.b16 %v771
        %v3826 = vunpack.c.l.b16 %v772
        %v3827 = vunpack.c.h.b16 %v772
        %v3828 = vunpack.c.l.b16 %v773
        %v3829 = vunpack.c.h.b16 %v773
        %v3830 = vunpack.c.l.b16 %v774
        %v3831 = vunpack.c.h.b16 %v774
        %v3832 = vunpack.c.l.b16 %v775
        %v3833 = vunpack.c.h.b16 %v775
        %v3834 = vunpack.c.l.b16 %v776
        %v3835 = vunpack.c.h.b16 %v776
        %v3836 = vunpack.c.l.b16 %v777
        %v3837 = vunpack.c.h.b16 %v777
        %v3838 = vunpack.c.l.b16 %v778
        %v3839 = vunpack.c.h.b16 %v778
        %v3840 = vunpack.c.l.b16 %v779
        %v3841 = vunpack.c.h.b16 %v779
        %v3842 = vunpack.c.l.b16 %v780
        %v3843 = vunpack.c.h.b16 %v780
        %v3844 = vunpack.c.l.b16 %v781
        %v3845 = vunpack.c.h.b16 %v781
        %v3846 = vunpack.c.l.b16 %v782
        %v3847 = vunpack.c.h.b16 %v782
        %v3848 = vunpack.c.l.b16 %v783
        %v3849 = vunpack.c.h.b16 %v783
        %v3850 = vunpack.c.l.b16 %v784
        %v3851 = vunpack.c.h.b16 %v784
        %v3852 = vunpack.c.l.b16 %v785
        %v3853 = vunpack.c.h.b16 %v785
        %v3854 = vunpack.c.l.b16 %v786
        %v3855 = vunpack.c.h.b16 %v786
        %v3856 = vunpack.c.l.b16 %v787
        %v3857 = vunpack.c.h.b16 %v787
        %v3858 = vunpack.c.l.b16 %v788
        %v3859 = vunpack.c.h.b16 %v788
        %v3860 = vunpack.c.l.b16 %v789
        %v3861 = vunpack.c.h.b16 %v789
        %v3862 = vunpack.c.l.b16 %v790
        %v3863 = vunpack.c.h.b16 %v790
        %v3864 = vunpack.c.l.b16 %v791
        %v3865 = vunpack.c.h.b16 %v791
        %v3866 = vunpack.c.l.b16 %v792
        %v3867 = vunpack.c.h.b16 %v792
        %v3868 = vunpack.c.l.b16 %v793
        %v3869 = vunpack.c.h.b16 %v793
        %v3870 = vunpack.c.l.b16 %v794
        %v3871 = vunpack.c.h.b16 %v794
        %v3872 = vunpack.c.l.b16 %v795
        %v3873 = vunpack.c.h.b16 %v795
        %v3874 = vunpack.c.l.b16 %v796
        %v3875 = vunpack.c.h.b16 %v796
        %v3876 = vunpack.c.l.b16 %v797
        %v3877 = vunpack.c.h.b16 %v797
        %v3878 = vunpack.c.l.b16 %v798
        %v3879 = vunpack.c.h.b16 %v798
        %v3880 = vunpack.c.l.b16 %v799
        %v3881 = vunpack.c.h.b16 %v799
        %v3882 = vunpack.c.l.b16 %v800
        %v3883 = vunpack.c.h.b16 %v800
        %v3884 = vunpack.c.l.b16 %v801
        %v3885 = vunpack.c.h.b16 %v801
        %v3886 = vunpack.c.l.b16 %v802
        %v3887 = vunpack.c.h.b16 %v802
        %v3888 = vunpack.c.l.b16 %v803
        %v3889 = vunpack.c.h.b16 %v803
        %v3890 = vunpack.c.l.b16 %v804
        %v3891 = vunpack.c.h.b16 %v804
        %v3892 = vunpack.c.l.b16 %v805
        %v3893 = vunpack.c.h.b16 %v805
        %v3894 = vunpack.c.l.b16 %v806
        %v3895 = vunpack.c.h.b16 %v806
        %v3896 = vunpack.c.l.b16 %v807
        %v3897 = vunpack.c.h.b16 %v807
        %v3898 = vunpack.c.l.b16 %v808
        %v3899 = vunpack.c.h.b16 %v808
        %v3900 = vunpack.c.l.b16 %v809
        %v3901 = vunpack.c.h.b16 %v809
        %v3902 = vunpack.c.l.b16 %v810
        %v3903 = vunpack.c.h.b16 %v810
        %v3904 = vunpack.c.l.b16 %v811
        %v3905 = vunpack.c.h.b16 %v811
        %v3906 = vunpack.c.l.b16 %v812
        %v3907 = vunpack.c.h.b16 %v812
        %v3908 = vunpack.c.l.b16 %v813
        %v3909 = vunpack.c.h.b16 %v813
        %v3910 = vunpack.c.l.b16 %v814
        %v3911 = vunpack.c.h.b16 %v814
        %v3912 = vunpack.c.l.b16 %v815
        %v3913 = vunpack.c.h.b16 %v815
        %v3914 = vunpack.c.l.b16 %v816
        %v3915 = vunpack.c.h.b16 %v816
        %v3916 = vunpack.c.l.b16 %v817
        %v3917 = vunpack.c.h.b16 %v817
        %v3918 = vunpack.c.l.b16 %v818
        %v3919 = vunpack.c.h.b16 %v818
        %v3920 = vunpack.c.l.b16 %v819
        %v3921 = vunpack.c.h.b16 %v819
        %v3922 = vunpack.c.l.b16 %v820
        %v3923 = vunpack.c.h.b16 %v820
        %v3924 = vunpack.c.l.b16 %v821
        %v3925 = vunpack.c.h.b16 %v821
        %v3926 = vunpack.c.l.b16 %v822
        %v3927 = vunpack.c.h.b16 %v822
        %v3928 = vunpack.c.l.b16 %v823
        %v3929 = vunpack.c.h.b16 %v823
        %v3930 = vunpack.c.l.b16 %v824
        %v3931 = vunpack.c.h.b16 %v824
        %v3932 = vunpack.c.l.b16 %v825
        %v3933 = vunpack.c.h.b16 %v825
        %v3934 = vunpack.c.l.b16 %v826
        %v3935 = vunpack.c.h.b16 %v826
        %v3936 = vunpack.c.l.b16 %v827
        %v3937 = vunpack.c.h.b16 %v827
        %v3938 = vunpack.c.l.b16 %v828
        %v3939 = vunpack.c.h.b16 %v828
        %v3940 = vunpack.c.l.b16 %v829
        %v3941 = vunpack.c.h.b16 %v829
        %v3942 = vunpack.c.l.b16 %v830
        %v3943 = vunpack.c.h.b16 %v830
        %v3944 = vunpack.c.l.b16 %v831
        %v3945 = vunpack.c.h.b16 %v831
        %v3946 = vunpack.c.l.b16 %v832
        %v3947 = vunpack.c.h.b16 %v832
        %v3948 = vunpack.c.l.b16 %v833
        %v3949 = vunpack.c.h.b16 %v833
        %v3950 = vunpack.c.l.b16 %v834
        %v3951 = vunpack.c.h.b16 %v834
        %v3952 = vunpack.c.l.b16 %v835
        %v3953 = vunpack.c.h.b16 %v835
        %v3954 = vunpack.c.l.b16 %v836
        %v3955 = vunpack.c.h.b16 %v836
        %v3956 = vunpack.c.l.b16 %v837
        %v3957 = vunpack.c.h.b16 %v837
        %v3958 = vunpack.c.l.b16 %v838
        %v3959 = vunpack.c.h.b16 %v838
        %v3960 = vunpack.c.l.b16 %v839
        %v3961 = vunpack.c.h.b16 %v839
        %v3962 = vunpack.c.l.b16 %v840
        %v3963 = vunpack.c.h.b16 %v840
        %v3964 = vunpack.c.l.b16 %v841
        %v3965 = vunpack.c.h.b16 %v841
        %v3966 = vunpack.c.l.b16 %v842
        %v3967 = vunpack.c.h.b16 %v842
        %v3968 = vunpack.c.l.b16 %v843
        %v3969 = vunpack.c.h.b16 %v843
        %v3970 = vunpack.c.l.b16 %v844
        %v3971 = vunpack.c.h.b16 %v844
        %v3972 = vunpack.c.l.b16 %v845
        %v3973 = vunpack.c.h.b16 %v845
        %v3974 = vunpack.c.l.b16 %v846
        %v3975 = vunpack.c.h.b16 %v846
        %v3976 = vunpack.c.l.b16 %v847
        %v3977 = vunpack.c.h.b16 %v847
        %v3978 = vunpack.c.l.b16 %v848
        %v3979 = vunpack.c.h.b16 %v848
        %v3980 = vunpack.c.l.b16 %v849
        %v3981 = vunpack.c.h.b16 %v849
        %v3982 = vunpack.c.l.b16 %v850
        %v3983 = vunpack.c.h.b16 %v850
        %v3984 = vunpack.c.l.b16 %v851
        %v3985 = vunpack.c.h.b16 %v851
        %v3986 = vunpack.c.l.b16 %v852
        %v3987 = vunpack.c.h.b16 %v852
        %v3988 = vunpack.c.l.b16 %v853
        %v3989 = vunpack.c.h.b16 %v853
        %v3990 = vunpack.c.l.b16 %v854
        %v3991 = vunpack.c.h.b16 %v854
        %v3992 = vunpack.c.l.b16 %v855
        %v3993 = vunpack.c.h.b16 %v855
        %v3994 = vunpack.c.l.b16 %v856
        %v3995 = vunpack.c.h.b16 %v856
        %v3996 = vunpack.c.l.b16 %v857
        %v3997 = vunpack.c.h.b16 %v857
        %v3998 = vunpack.c.l.b16 %v858
        %v3999 = vunpack.c.h.b16 %v858
        %v4000 = vunpack.c.l.b16 %v859
        %v4001 = vunpack.c.h.b16 %v859
        %v4002 = vunpack.c.l.b16 %v860
        %v4003 = vunpack.c.h.b16 %v860
        %v4004 = vunpack.c.l.b16 %v861
        %v4005 = vunpack.c.h.b16 %v861
        %v4006 = vunpack.c.l.b16 %v862
        %v4007 = vunpack.c.h.b16 %v862
        %v4008 = vunpack.c.l.b16 %v863
        %v4009 = vunpack.c.h.b16 %v863
        %v4010 = vunpack.c.l.b16 %v864
        %v4011 = vunpack.c.h.b16 %v864
        %v4012 = vunpack.c.l.b16 %v865
        %v4013 = vunpack.c.h.b16 %v865
        %v4014 = vunpack.c.l.b16 %v866
        %v4015 = vunpack.c.h.b16 %v866
        %v4016 = vunpack.c.l.b16 %v867
        %v4017 = vunpack.c.h.b16 %v867
        %v4018 = vunpack.c.l.b16 %v868
        %v4019 = vunpack.c.h.b16 %v868
        %v4020 = vunpack.c.l.b16 %v869
        %v4021 = vunpack.c.h.b16 %v869
        %v4022 = vunpack.c.l.b16 %v870
        %v4023 = vunpack.c.h.b16 %v870
        %v4024 = vunpack.c.l.b16 %v871
        %v4025 = vunpack.c.h.b16 %v871
        %v4026 = vunpack.c.l.b16 %v872
        %v4027 = vunpack.c.h.b16 %v872
        %v4028 = vunpack.c.l.b16 %v873
        %v4029 = vunpack.c.h.b16 %v873
        %v4030 = vunpack.c.l.b16 %v874
        %v4031 = vunpack.c.h.b16 %v874
        %v4032 = vunpack.c.l.b16 %v875
        %v4033 = vunpack.c.h.b16 %v875
        %v4034 = vunpack.c.l.b16 %v876
        %v4035 = vunpack.c.h.b16 %v876
        %v4036 = vunpack.c.l.b16 %v877
        %v4037 = vunpack.c.h.b16 %v877
        %v4038 = vunpack.c.l.b16 %v878
        %v4039 = vunpack.c.h.b16 %v878
        %v4040 = vunpack.c.l.b16 %v879
        %v4041 = vunpack.c.h.b16 %v879
        %v4042 = vunpack.c.l.b16 %v880
        %v4043 = vunpack.c.h.b16 %v880
        %v4044 = vunpack.c.l.b16 %v881
        %v4045 = vunpack.c.h.b16 %v881
        %v4046 = vunpack.c.l.b16 %v882
        %v4047 = vunpack.c.h.b16 %v882
        %v4048 = vunpack.c.l.b16 %v883
        %v4049 = vunpack.c.h.b16 %v883
        %v4050 = vunpack.c.l.b16 %v884
        %v4051 = vunpack.c.h.b16 %v884
        %v4052 = vunpack.c.l.b16 %v885
        %v4053 = vunpack.c.h.b16 %v885
        %v4054 = vunpack.c.l.b16 %v886
        %v4055 = vunpack.c.h.b16 %v886
        %v4056 = vunpack.c.l.b16 %v887
        %v4057 = vunpack.c.h.b16 %v887
        %v4058 = vunpack.c.l.b16 %v888
        %v4059 = vunpack.c.h.b16 %v888
        %v4060 = vunpack.c.l.b16 %v889
        %v4061 = vunpack.c.h.b16 %v889
        %v4062 = vunpack.c.l.b16 %v890
        %v4063 = vunpack.c.h.b16 %v890
        %v4064 = vunpack.c.l.b16 %v891
        %v4065 = vunpack.c.h.b16 %v891
        %v4066 = vunpack.c.l.b16 %v892
        %v4067 = vunpack.c.h.b16 %v892
        %v4068 = vunpack.c.l.b16 %v893
        %v4069 = vunpack.c.h.b16 %v893
        %v4070 = vunpack.c.l.b16 %v894
        %v4071 = vunpack.c.h.b16 %v894
        %v4072 = vunpack.c.l.b16 %v895
        %v4073 = vunpack.c.h.b16 %v895
        %v4074 = vunpack.c.l.b16 %v896
        %v4075 = vunpack.c.h.b16 %v896
        %v4076 = vunpack.c.l.b16 %v897
        %v4077 = vunpack.c.h.b16 %v897
        %v4078 = vunpack.c.l.b16 %v898
        %v4079 = vunpack.c.h.b16 %v898
        %v4080 = vunpack.c.l.b16 %v899
        %v4081 = vunpack.c.h.b16 %v899
        %v4082 = vunpack.c.l.b16 %v900
        %v4083 = vunpack.c.h.b16 %v900
        %v4084 = vunpack.c.l.b16 %v901
        %v4085 = vunpack.c.h.b16 %v901
        %v4086 = vunpack.c.l.b16 %v902
        %v4087 = vunpack.c.h.b16 %v902
        %v4088 = vunpack.c.l.b16 %v903
        %v4089 = vunpack.c.h.b16 %v903
        %v4090 = vunpack.c.l.b16 %v904
        %v4091 = vunpack.c.h.b16 %v904
        %v4092 = vunpack.c.l.b16 %v905
        %v4093 = vunpack.c.h.b16 %v905
        %v4094 = vunpack.c.l.b16 %v906
        %v4095 = vunpack.c.h.b16 %v906
        %v4096 = vunpack.c.l.b16 %v907
        %v4097 = vunpack.c.h.b16 %v907
        %v4098 = vunpack.c.l.b16 %v908
        %v4099 = vunpack.c.h.b16 %v908
        %v4100 = vunpack.c.l.b16 %v909
        %v4101 = vunpack.c.h.b16 %v909
        %v4102 = vunpack.c.l.b16 %v910
        %v4103 = vunpack.c.h.b16 %v910
        %v4104 = vunpack.c.l.b16 %v911
        %v4105 = vunpack.c.h.b16 %v911
        %v4106 = vunpack.c.l.b16 %v912
        %v4107 = vunpack.c.h.b16 %v912
        %v4108 = vunpack.c.l.b16 %v913
        %v4109 = vunpack.c.h.b16 %v913
        %v4110 = vunpack.c.l.b16 %v914
        %v4111 = vunpack.c.h.b16 %v914
        %v4112 = vunpack.c.l.b16 %v915
        %v4113 = vunpack.c.h.b16 %v915
        %v4114 = vunpack.c.l.b16 %v916
        %v4115 = vunpack.c.h.b16 %v916
        %v4116 = vunpack.c.l.b16 %v917
        %v4117 = vunpack.c.h.b16 %v917
        %v4118 = vunpack.c.l.b16 %v918
        %v4119 = vunpack.c.h.b16 %v918
        %v4120 = vunpack.c.l.b16 %v919
        %v4121 = vunpack.c.h.b16 %v919
        %v4122 = vunpack.c.l.b16 %v920
        %v4123 = vunpack.c.h.b16 %v920
        %v4124 = vunpack.c.l.b16 %v921
        %v4125 = vunpack.c.h.b16 %v921
        %v4126 = vunpack.c.l.b16 %v922
        %v4127 = vunpack.c.h.b16 %v922
        %v4128 = vunpack.c.l.b16 %v923
        %v4129 = vunpack.c.h.b16 %v923
        %v4130 = vunpack.c.l.b16 %v924
        %v4131 = vunpack.c.h.b16 %v924
        %v4132 = vunpack.c.l.b16 %v925
        %v4133 = vunpack.c.h.b16 %v925
        %v4134 = vunpack.c.l.b16 %v926
        %v4135 = vunpack.c.h.b16 %v926
        %v4136 = vunpack.c.l.b16 %v927
        %v4137 = vunpack.c.h.b16 %v927
        %v4138 = vunpack.c.l.b16 %v928
        %v4139 = vunpack.c.h.b16 %v928
        %v4140 = vunpack.c.l.b16 %v929
        %v4141 = vunpack.c.h.b16 %v929
        %v4142 = vunpack.c.l.b16 %v930
        %v4143 = vunpack.c.h.b16 %v930
        %v4144 = vunpack.c.l.b16 %v931
        %v4145 = vunpack.c.h.b16 %v931
        %v4146 = vunpack.c.l.b16 %v932
        %v4147 = vunpack.c.h.b16 %v932
        %v4148 = vunpack.c.l.b16 %v933
        %v4149 = vunpack.c.h.b16 %v933
        %v4150 = vunpack.c.l.b16 %v934
        %v4151 = vunpack.c.h.b16 %v934
        %v4152 = vunpack.c.l.b16 %v935
        %v4153 = vunpack.c.h.b16 %v935
        %v4154 = vunpack.c.l.b16 %v936
        %v4155 = vunpack.c.h.b16 %v936
        %v4156 = vunpack.c.l.b16 %v937
        %v4157 = vunpack.c.h.b16 %v937
        %v4158 = vunpack.c.l.b16 %v938
        %v4159 = vunpack.c.h.b16 %v938
        %v4160 = vunpack.c.l.b16 %v939
        %v4161 = vunpack.c.h.b16 %v939
        %v4162 = vunpack.c.l.b16 %v940
        %v4163 = vunpack.c.h.b16 %v940
        %v4164 = vunpack.c.l.b16 %v941
        %v4165 = vunpack.c.h.b16 %v941
        %v4166 = vunpack.c.l.b16 %v942
        %v4167 = vunpack.c.h.b16 %v942
        %v4168 = vunpack.c.l.b16 %v943
        %v4169 = vunpack.c.h.b16 %v943
        %v4170 = vunpack.c.l.b16 %v944
        %v4171 = vunpack.c.h.b16 %v944
        %v4172 = vunpack.c.l.b16 %v945
        %v4173 = vunpack.c.h.b16 %v945
        %v4174 = vunpack.c.l.b16 %v946
        %v4175 = vunpack.c.h.b16 %v946
        %v4176 = vunpack.c.l.b16 %v947
        %v4177 = vunpack.c.h.b16 %v947
        %v4178 = vunpack.c.l.b16 %v948
        %v4179 = vunpack.c.h.b16 %v948
        %v4180 = vunpack.c.l.b16 %v949
        %v4181 = vunpack.c.h.b16 %v949
        %v4182 = vunpack.c.l.b16 %v950
        %v4183 = vunpack.c.h.b16 %v950
        %v4184 = vunpack.c.l.b16 %v951
        %v4185 = vunpack.c.h.b16 %v951
        %v4186 = vunpack.c.l.b16 %v952
        %v4187 = vunpack.c.h.b16 %v952
        %v4188 = vunpack.c.l.b16 %v953
        %v4189 = vunpack.c.h.b16 %v953
        %v4190 = vunpack.c.l.b16 %v954
        %v4191 = vunpack.c.h.b16 %v954
        %v4192 = vunpack.c.l.b16 %v955
        %v4193 = vunpack.c.h.b16 %v955
        %v4194 = vunpack.c.l.b16 %v956
        %v4195 = vunpack.c.h.b16 %v956
        %v4196 = vunpack.c.l.b16 %v957
        %v4197 = vunpack.c.h.b16 %v957
        %v4198 = vunpack.c.l.b16 %v958
        %v4199 = vunpack.c.h.b16 %v958
        %v4200 = vunpack.c.l.b16 %v959
        %v4201 = vunpack.c.h.b16 %v959
        %v4202 = vunpack.c.l.b16 %v960
        %v4203 = vunpack.c.h.b16 %v960
        %v4204 = vunpack.c.l.b16 %v961
        %v4205 = vunpack.c.h.b16 %v961
        %v4206 = vunpack.c.l.b16 %v962
        %v4207 = vunpack.c.h.b16 %v962
        %v4208 = vunpack.c.l.b16 %v963
        %v4209 = vunpack.c.h.b16 %v963
        %v4210 = vunpack.c.l.b16 %v964
        %v4211 = vunpack.c.h.b16 %v964
        %v4212 = vunpack.c.l.b16 %v965
        %v4213 = vunpack.c.h.b16 %v965
        %v4214 = vunpack.c.l.b16 %v966
        %v4215 = vunpack.c.h.b16 %v966
        %v4216 = vunpack.c.l.b16 %v967
        %v4217 = vunpack.c.h.b16 %v967
        %v4218 = vunpack.c.l.b16 %v968
        %v4219 = vunpack.c.h.b16 %v968
        %v4220 = vunpack.c.l.b16 %v969
        %v4221 = vunpack.c.h.b16 %v969
        %v4222 = vunpack.c.l.b16 %v970
        %v4223 = vunpack.c.h.b16 %v970
        %v4224 = vunpack.c.l.b16 %v971
        %v4225 = vunpack.c.h.b16 %v971
        %v4226 = vunpack.c.l.b16 %v972
        %v4227 = vunpack.c.h.b16 %v972
        %v4228 = vunpack.c.l.b16 %v973
        %v4229 = vunpack.c.h.b16 %v973
        %v4230 = vunpack.c.l.b16 %v974
        %v4231 = vunpack.c.h.b16 %v974
        %v4232 = vunpack.c.l.b16 %v975
        %v4233 = vunpack.c.h.b16 %v975
        %v4234 = vunpack.c.l.b16 %v976
        %v4235 = vunpack.c.h.b16 %v976
        %v4236 = vunpack.c.l.b16 %v977
        %v4237 = vunpack.c.h.b16 %v977
        %v4238 = vunpack.c.l.b16 %v978
        %v4239 = vunpack.c.h.b16 %v978
        %v4240 = vunpack.c.l.b16 %v979
        %v4241 = vunpack.c.h.b16 %v979
        %v4242 = vunpack.c.l.b16 %v980
        %v4243 = vunpack.c.h.b16 %v980
        %v4244 = vunpack.c.l.b16 %v981
        %v4245 = vunpack.c.h.b16 %v981
        %v4246 = vunpack.c.l.b16 %v982
        %v4247 = vunpack.c.h.b16 %v982
        %v4248 = vunpack.c.l.b16 %v983
        %v4249 = vunpack.c.h.b16 %v983
        %v4250 = vunpack.c.l.b16 %v984
        %v4251 = vunpack.c.h.b16 %v984
        %v4252 = vunpack.c.l.b16 %v985
        %v4253 = vunpack.c.h.b16 %v985
        %v4254 = vunpack.c.l.b16 %v986
        %v4255 = vunpack.c.h.b16 %v986
        %v4256 = vunpack.c.l.b16 %v987
        %v4257 = vunpack.c.h.b16 %v987
        %v4258 = vunpack.c.l.b16 %v988
        %v4259 = vunpack.c.h.b16 %v988
        %v4260 = vunpack.c.l.b16 %v989
        %v4261 = vunpack.c.h.b16 %v989
        %v4262 = vunpack.c.l.b16 %v990
        %v4263 = vunpack.c.h.b16 %v990
        %v4264 = vunpack.c.l.b16 %v991
        %v4265 = vunpack.c.h.b16 %v991
        %v4266 = vunpack.c.l.b16 %v992
        %v4267 = vunpack.c.h.b16 %v992
        %v4268 = vunpack.c.l.b16 %v993
        %v4269 = vunpack.c.h.b16 %v993
        %v4270 = vunpack.c.l.b16 %v994
        %v4271 = vunpack.c.h.b16 %v994
        %v4272 = vunpack.c.l.b16 %v995
        %v4273 = vunpack.c.h.b16 %v995
        %v4274 = vunpack.c.l.b16 %v996
        %v4275 = vunpack.c.h.b16 %v996
        %v4276 = vunpack.c.l.b16 %v997
        %v4277 = vunpack.c.h.b16 %v997
        %v4278 = vunpack.c.l.b16 %v998
        %v4279 = vunpack.c.h.b16 %v998
        %v4280 = vunpack.c.l.b16 %v999
        %v4281 = vunpack.c.h.b16 %v999
        %v4282 = vunpack.c.l.b16 %v1000
        %v4283 = vunpack.c.h.b16 %v1000
        %v4284 = vunpack.c.l.b16 %v1001
        %v4285 = vunpack.c.h.b16 %v1001
        %v4286 = vunpack.c.l.b16 %v1002
        %v4287 = vunpack.c.h.b16 %v1002
        %v4288 = vunpack.c.l.b16 %v1003
        %v4289 = vunpack.c.h.b16 %v1003
        %v4290 = vunpack.c.l.b16 %v1004
        %v4291 = vunpack.c.h.b16 %v1004
        %v4292 = vunpack.c.l.b16 %v1005
        %v4293 = vunpack.c.h.b16 %v1005
        %v4294 = vunpack.c.l.b16 %v1006
        %v4295 = vunpack.c.h.b16 %v1006
        %v4296 = vunpack.c.l.b16 %v1007
        %v4297 = vunpack.c.h.b16 %v1007
        %v4298 = vunpack.c.l.b16 %v1008
        %v4299 = vunpack.c.h.b16 %v1008
        %v4300 = vunpack.c.l.b16 %v1009
        %v4301 = vunpack.c.h.b16 %v1009
        %v4302 = vunpack.c.l.b16 %v1010
        %v4303 = vunpack.c.h.b16 %v1010
        %v4304 = vunpack.c.l.b16 %v1011
        %v4305 = vunpack.c.h.b16 %v1011
        %v4306 = vunpack.c.l.b16 %v1012
        %v4307 = vunpack.c.h.b16 %v1012
        %v4308 = vunpack.c.l.b16 %v1013
        %v4309 = vunpack.c.h.b16 %v1013
        %v4310 = vunpack.c.l.b16 %v1014
        %v4311 = vunpack.c.h.b16 %v1014
        %v4312 = vunpack.c.l.b16 %v1015
        %v4313 = vunpack.c.h.b16 %v1015
        %v4314 = vunpack.c.l.b16 %v1016
        %v4315 = vunpack.c.h.b16 %v1016
        %v4316 = vunpack.c.l.b16 %v1017
        %v4317 = vunpack.c.h.b16 %v1017
        %v4318 = vunpack.c.l.b16 %v1018
        %v4319 = vunpack.c.h.b16 %v1018
        %v4320 = vunpack.c.l.b16 %v1019
        %v4321 = vunpack.c.h.b16 %v1019
        %v4322 = vunpack.c.l.b16 %v1020
        %v4323 = vunpack.c.h.b16 %v1020
        %v4324 = vunpack.c.l.b16 %v1021
        %v4325 = vunpack.c.h.b16 %v1021
        %v4326 = vunpack.c.l.b16 %v1022
        %v4327 = vunpack.c.h.b16 %v1022
        %v4328 = vunpack.c.l.b16 %v1023
        %v4329 = vunpack.c.h.b16 %v1023
        %v4330 = vunpack.c.l.b16 %v1024
        %v4331 = vunpack.c.h.b16 %v1024
        %v4332 = vunpack.c.l.b16 %v1025
        %v4333 = vunpack.c.h.b16 %v1025
        %v4334 = vunpack.c.l.b16 %v1026
        %v4335 = vunpack.c.h.b16 %v1026
        %v4336 = vunpack.c.l.b16 %v1027
        %v4337 = vunpack.c.h.b16 %v1027
        %v4338 = vunpack.c.l.b16 %v1028
        %v4339 = vunpack.c.h.b16 %v1028
        %v4340 = vunpack.c.l.b16 %v1029
        %v4341 = vunpack.c.h.b16 %v1029
        %v4342 = vunpack.c.l.b16 %v1030
        %v4343 = vunpack.c.h.b16 %v1030
        %v4344 = vunpack.c.l.b16 %v1031
        %v4345 = vunpack.c.h.b16 %v1031
        %v4346 = vunpack.c.l.b16 %v1032
        %v4347 = vunpack.c.h.b16 %v1032
        %v4348 = vunpack.c.l.b16 %v1033
        %v4349 = vunpack.c.h.b16 %v1033
        %v4350 = vunpack.c.l.b16 %v1034
        %v4351 = vunpack.c.h.b16 %v1034
        %v4352 = vunpack.c.l.b16 %v1035
        %v4353 = vunpack.c.h.b16 %v1035
        %v4354 = vunpack.c.l.b16 %v1036
        %v4355 = vunpack.c.h.b16 %v1036
        %v4356 = vunpack.c.l.b16 %v1037
        %v4357 = vunpack.c.h.b16 %v1037
        %v4358 = vunpack.c.l.b16 %v1038
        %v4359 = vunpack.c.h.b16 %v1038
        %v4360 = vunpack.c.l.b16 %v1039
        %v4361 = vunpack.c.h.b16 %v1039
        %v4362 = vunpack.c.l.b16 %v1040
        %v4363 = vunpack.c.h.b16 %v1040
        %v4364 = vunpack.c.l.b16 %v1041
        %v4365 = vunpack.c.h.b16 %v1041
        %v4366 = vunpack.c.l.b16 %v1042
        %v4367 = vunpack.c.h.b16 %v1042
        %v4368 = vunpack.c.l.b16 %v1043
        %v4369 = vunpack.c.h.b16 %v1043
        %v4370 = vunpack.c.l.b16 %v1044
        %v4371 = vunpack.c.h.b16 %v1044
        %v4372 = vunpack.c.l.b16 %v1045
        %v4373 = vunpack.c.h.b16 %v1045
        %v4374 = vunpack.c.l.b16 %v1046
        %v4375 = vunpack.c.h.b16 %v1046
        %v4376 = vunpack.c.l.b16 %v1047
        %v4377 = vunpack.c.h.b16 %v1047
        %v4378 = vunpack.c.l.b16 %v1048
        %v4379 = vunpack.c.h.b16 %v1048
        %v4380 = vunpack.c.l.b16 %v1049
        %v4381 = vunpack.c.h.b16 %v1049
        %v4382 = vunpack.c.l.b16 %v1050
        %v4383 = vunpack.c.h.b16 %v1050
        %v4384 = vunpack.c.l.b16 %v1051
        %v4385 = vunpack.c.h.b16 %v1051
        %v4386 = vunpack.c.l.b16 %v1052
        %v4387 = vunpack.c.h.b16 %v1052
        %v4388 = vunpack.c.l.b16 %v1053
        %v4389 = vunpack.c.h.b16 %v1053
        %v4390 = vunpack.c.l.b16 %v1054
        %v4391 = vunpack.c.h.b16 %v1054
        %v4392 = vunpack.c.l.b16 %v1055
        %v4393 = vunpack.c.h.b16 %v1055
        %v4394 = vunpack.c.l.b16 %v1056
        %v4395 = vunpack.c.h.b16 %v1056
        %v4396 = vunpack.c.l.b16 %v1057
        %v4397 = vunpack.c.h.b16 %v1057
        %v4398 = vunpack.c.l.b16 %v1058
        %v4399 = vunpack.c.h.b16 %v1058
        %v4400 = vunpack.c.l.b16 %v1059
        %v4401 = vunpack.c.h.b16 %v1059
        %v4402 = vunpack.c.l.b16 %v1060
        %v4403 = vunpack.c.h.b16 %v1060
        %v4404 = vunpack.c.l.b16 %v1061
        %v4405 = vunpack.c.h.b16 %v1061
        %v4406 = vunpack.c.l.b16 %v1062
        %v4407 = vunpack.c.h.b16 %v1062
        %v4408 = vunpack.c.l.b16 %v1063
        %v4409 = vunpack.c.h.b16 %v1063
        %v4410 = vunpack.c.l.b16 %v1064
        %v4411 = vunpack.c.h.b16 %v1064
        %v4412 = vunpack.c.l.b16 %v1065
        %v4413 = vunpack.c.h.b16 %v1065
        %v4414 = vunpack.c.l.b16 %v1066
        %v4415 = vunpack.c.h.b16 %v1066
        %v4416 = vunpack.c.l.b16 %v1067
        %v4417 = vunpack.c.h.b16 %v1067
        %v4418 = vunpack.c.l.b16 %v1068
        %v4419 = vunpack.c.h.b16 %v1068
        %v4420 = vunpack.c.l.b16 %v1069
        %v4421 = vunpack.c.h.b16 %v1069
        %v4422 = vunpack.c.l.b16 %v1070
        %v4423 = vunpack.c.h.b16 %v1070
        %v4424 = vunpack.c.l.b16 %v1071
        %v4425 = vunpack.c.h.b16 %v1071
        %v4426 = vunpack.c.l.b16 %v1072
        %v4427 = vunpack.c.h.b16 %v1072
        %v4428 = vunpack.c.l.b16 %v1073
        %v4429 = vunpack.c.h.b16 %v1073
        %v4430 = vunpack.c.l.b16 %v1074
        %v4431 = vunpack.c.h.b16 %v1074
        %v4432 = vunpack.c.l.b16 %v1075
        %v4433 = vunpack.c.h.b16 %v1075
        %v4434 = vunpack.c.l.b16 %v1076
        %v4435 = vunpack.c.h.b16 %v1076
        %v4436 = vunpack.c.l.b16 %v1077
        %v4437 = vunpack.c.h.b16 %v1077
        %v4438 = vunpack.c.l.b16 %v1078
        %v4439 = vunpack.c.h.b16 %v1078
        %v4440 = vunpack.c.l.b16 %v1079
        %v4441 = vunpack.c.h.b16 %v1079
        %v4442 = vunpack.c.l.b16 %v1080
        %v4443 = vunpack.c.h.b16 %v1080
        %v4444 = vunpack.c.l.b16 %v1081
        %v4445 = vunpack.c.h.b16 %v1081
        %v4446 = vunpack.c.l.b16 %v1082
        %v4447 = vunpack.c.h.b16 %v1082
        %v4448 = vunpack.c.l.b16 %v1083
        %v4449 = vunpack.c.h.b16 %v1083
        %v4450 = vunpack.c.l.b16 %v1084
        %v4451 = vunpack.c.h.b16 %v1084
        %v4452 = vunpack.c.l.b16 %v1085
        %v4453 = vunpack.c.h.b16 %v1085
        %v4454 = vunpack.c.l.b16 %v1086
        %v4455 = vunpack.c.h.b16 %v1086
        %v4456 = vunpack.c.l.b16 %v1087
        %v4457 = vunpack.c.h.b16 %v1087
        %v4458 = vunpack.c.l.b16 %v1088
        %v4459 = vunpack.c.h.b16 %v1088
        %v4460 = vunpack.c.l.b16 %v1089
        %v4461 = vunpack.c.h.b16 %v1089
        %v4462 = vunpack.c.l.b16 %v1090
        %v4463 = vunpack.c.h.b16 %v1090
        %v4464 = vunpack.c.l.b16 %v1091
        %v4465 = vunpack.c.h.b16 %v1091
        %v4466 = vunpack.c.l.b16 %v1092
        %v4467 = vunpack.c.h.b16 %v1092
        %v4468 = vunpack.c.l.b16 %v1093
        %v4469 = vunpack.c.h.b16 %v1093
        %v4470 = vunpack.c.l.b16 %v1094
        %v4471 = vunpack.c.h.b16 %v1094
        %v4472 = vunpack.c.l.b16 %v1095
        %v4473 = vunpack.c.h.b16 %v1095
        %v4474 = vunpack.c.l.b16 %v1096
        %v4475 = vunpack.c.h.b16 %v1096
        %v4476 = vunpack.c.l.b16 %v1097
        %v4477 = vunpack.c.h.b16 %v1097
        %v4478 = vunpack.c.l.b16 %v1098
        %v4479 = vunpack.c.h.b16 %v1098
        %v4480 = vunpack.c.l.b16 %v1099
        %v4481 = vunpack.c.h.b16 %v1099
        %v4482 = vunpack.c.l.b16 %v1100
        %v4483 = vunpack.c.h.b16 %v1100
        %v4484 = vunpack.c.l.b16 %v1101
        %v4485 = vunpack.c.h.b16 %v1101
        %v4486 = vunpack.c.l.b16 %v1102
        %v4487 = vunpack.c.h.b16 %v1102
        %v4488 = vunpack.c.l.b16 %v1103
        %v4489 = vunpack.c.h.b16 %v1103
        %v4490 = vunpack.c.l.b16 %v1104
        %v4491 = vunpack.c.h.b16 %v1104
        %v4492 = vunpack.c.l.b16 %v1105
        %v4493 = vunpack.c.h.b16 %v1105
        %v4494 = vunpack.c.l.b16 %v1106
        %v4495 = vunpack.c.h.b16 %v1106
        %v4496 = vunpack.c.l.b16 %v1107
        %v4497 = vunpack.c.h.b16 %v1107
        %v4498 = vunpack.c.l.b16 %v1108
        %v4499 = vunpack.c.h.b16 %v1108
        %v4500 = vunpack.c.l.b16 %v1109
        %v4501 = vunpack.c.h.b16 %v1109
        %v4502 = vunpack.c.l.b16 %v1110
        %v4503 = vunpack.c.h.b16 %v1110
        %v4504 = vunpack.c.l.b16 %v1111
        %v4505 = vunpack.c.h.b16 %v1111
        %v4506 = vunpack.c.l.b16 %v1112
        %v4507 = vunpack.c.h.b16 %v1112
        %v4508 = vunpack.c.l.b16 %v1113
        %v4509 = vunpack.c.h.b16 %v1113
        %v4510 = vunpack.c.l.b16 %v1114
        %v4511 = vunpack.c.h.b16 %v1114
        %v4512 = vunpack.c.l.b16 %v1115
        %v4513 = vunpack.c.h.b16 %v1115
        %v4514 = vunpack.c.l.b16 %v1116
        %v4515 = vunpack.c.h.b16 %v1116
        %v4516 = vunpack.c.l.b16 %v1117
        %v4517 = vunpack.c.h.b16 %v1117
        %v4518 = vunpack.c.l.b16 %v1118
        %v4519 = vunpack.c.h.b16 %v1118
        %v4520 = vunpack.c.l.b16 %v1119
        %v4521 = vunpack.c.h.b16 %v1119
        %v4522 = vunpack.c.l.b16 %v1120
        %v4523 = vunpack.c.h.b16 %v1120
        %v4524 = vunpack.c.l.b16 %v1121
        %v4525 = vunpack.c.h.b16 %v1121
        %v4526 = vunpack.c.l.b16 %v1122
        %v4527 = vunpack.c.h.b16 %v1122
        %v4528 = vunpack.c.l.b16 %v1123
        %v4529 = vunpack.c.h.b16 %v1123
        %v4530 = vunpack.c.l.b16 %v1124
        %v4531 = vunpack.c.h.b16 %v1124
        %v4532 = vunpack.c.l.b16 %v1125
        %v4533 = vunpack.c.h.b16 %v1125
        %v4534 = vunpack.c.l.b16 %v1126
        %v4535 = vunpack.c.h.b16 %v1126
        %v4536 = vunpack.c.l.b16 %v1127
        %v4537 = vunpack.c.h.b16 %v1127
        %v4538 = vunpack.c.l.b16 %v1128
        %v4539 = vunpack.c.h.b16 %v1128
        %v4540 = vunpack.c.l.b16 %v1129
        %v4541 = vunpack.c.h.b16 %v1129
        %v4542 = vunpack.c.l.b16 %v1130
        %v4543 = vunpack.c.h.b16 %v1130
        %v4544 = vunpack.c.l.b16 %v1131
        %v4545 = vunpack.c.h.b16 %v1131
        %v4546 = vunpack.c.l.b16 %v1132
        %v4547 = vunpack.c.h.b16 %v1132
        %v4548 = vunpack.c.l.b16 %v1133
        %v4549 = vunpack.c.h.b16 %v1133
        %v4550 = vunpack.c.l.b16 %v1134
        %v4551 = vunpack.c.h.b16 %v1134
        %v4552 = vunpack.c.l.b16 %v1135
        %v4553 = vunpack.c.h.b16 %v1135
        %v4554 = vunpack.c.l.b16 %v1136
        %v4555 = vunpack.c.h.b16 %v1136
        %v4556 = vunpack.c.l.b16 %v1137
        %v4557 = vunpack.c.h.b16 %v1137
        %v4558 = vunpack.c.l.b16 %v1138
        %v4559 = vunpack.c.h.b16 %v1138
        %v4560 = vunpack.c.l.b16 %v1139
        %v4561 = vunpack.c.h.b16 %v1139
        %v4562 = vunpack.c.l.b16 %v1140
        %v4563 = vunpack.c.h.b16 %v1140
        %v4564 = vunpack.c.l.b16 %v1141
        %v4565 = vunpack.c.h.b16 %v1141
        %v4566 = vunpack.c.l.b16 %v1142
        %v4567 = vunpack.c.h.b16 %v1142
        %v4568 = vunpack.c.l.b16 %v1143
        %v4569 = vunpack.c.h.b16 %v1143
        %v4570 = vunpack.c.l.b16 %v1144
        %v4571 = vunpack.c.h.b16 %v1144
        %v4572 = vunpack.c.l.b16 %v1145
        %v4573 = vunpack.c.h.b16 %v1145
        %v4574 = vunpack.c.l.b16 %v1146
        %v4575 = vunpack.c.h.b16 %v1146
        %v4576 = vunpack.c.l.b16 %v1147
        %v4577 = vunpack.c.h.b16 %v1147
        %v4578 = vunpack.c.l.b16 %v1148
        %v4579 = vunpack.c.h.b16 %v1148
        %v4580 = vunpack.c.l.b16 %v1149
        %v4581 = vunpack.c.h.b16 %v1149
        %v4582 = vunpack.c.l.b16 %v1150
        %v4583 = vunpack.c.h.b16 %v1150
        %v4584 = vunpack.c.l.b16 %v1151
        %v4585 = vunpack.c.h.b16 %v1151
        %v4586 = vunpack.c.l.b16 %v1152
        %v4587 = vunpack.c.h.b16 %v1152
        %v4588 = vunpack.c.l.b16 %v1153
        %v4589 = vunpack.c.h.b16 %v1153
        %v4590 = vunpack.c.l.b16 %v1154
        %v4591 = vunpack.c.h.b16 %v1154
        %v4592 = vunpack.c.l.b16 %v1155
        %v4593 = vunpack.c.h.b16 %v1155
        %v4594 = vunpack.c.l.b16 %v1156
        %v4595 = vunpack.c.h.b16 %v1156
        %v4596 = vunpack.c.l.b16 %v1157
        %v4597 = vunpack.c.h.b16 %v1157
        %v4598 = vunpack.c.l.b16 %v1158
        %v4599 = vunpack.c.h.b16 %v1158
        %v4600 = vunpack.c.l.b16 %v1159
        %v4601 = vunpack.c.h.b16 %v1159
        %v4602 = vunpack.c.l.b16 %v1160
        %v4603 = vunpack.c.h.b16 %v1160
        %v4604 = vunpack.c.l.b16 %v1161
        %v4605 = vunpack.c.h.b16 %v1161
        %v4606 = vunpack.c.l.b16 %v1162
        %v4607 = vunpack.c.h.b16 %v1162
        %v4608 = vunpack.c.l.b16 %v1163
        %v4609 = vunpack.c.h.b16 %v1163
        %v4610 = vunpack.c.l.b16 %v1164
        %v4611 = vunpack.c.h.b16 %v1164
        %v4612 = vunpack.c.l.b16 %v1165
        %v4613 = vunpack.c.h.b16 %v1165
        %v4614 = vunpack.c.l.b16 %v1166
        %v4615 = vunpack.c.h.b16 %v1166
        %v4616 = vunpack.c.l.b16 %v1167
        %v4617 = vunpack.c.h.b16 %v1167
        %v4618 = vunpack.c.l.b16 %v1168
        %v4619 = vunpack.c.h.b16 %v1168
        %v4620 = vunpack.c.l.b16 %v1169
        %v4621 = vunpack.c.h.b16 %v1169
        %v4622 = vunpack.c.l.b16 %v1170
        %v4623 = vunpack.c.h.b16 %v1170
        %v4624 = vunpack.c.l.b16 %v1171
        %v4625 = vunpack.c.h.b16 %v1171
        %v4626 = vunpack.c.l.b16 %v1172
        %v4627 = vunpack.c.h.b16 %v1172
        %v4628 = vunpack.c.l.b16 %v1173
        %v4629 = vunpack.c.h.b16 %v1173
        %v4630 = vunpack.c.l.b16 %v1174
        %v4631 = vunpack.c.h.b16 %v1174
        %v4632 = vunpack.c.l.b16 %v1175
        %v4633 = vunpack.c.h.b16 %v1175
        %v4634 = vunpack.c.l.b16 %v1176
        %v4635 = vunpack.c.h.b16 %v1176
        %v4636 = vunpack.c.l.b16 %v1177
        %v4637 = vunpack.c.h.b16 %v1177
        %v4638 = vunpack.c.l.b16 %v1178
        %v4639 = vunpack.c.h.b16 %v1178
        %v4640 = vunpack.c.l.b16 %v1179
        %v4641 = vunpack.c.h.b16 %v1179
        %v4642 = vunpack.c.l.b16 %v1180
        %v4643 = vunpack.c.h.b16 %v1180
        %v4644 = vunpack.c.l.b16 %v1181
        %v4645 = vunpack.c.h.b16 %v1181
        %v4646 = vunpack.c.l.b16 %v1182
        %v4647 = vunpack.c.h.b16 %v1182
        %v4648 = vunpack.c.l.b16 %v1183
        %v4649 = vunpack.c.h.b16 %v1183
        %v4650 = vunpack.c.l.b16 %v1184
        %v4651 = vunpack.c.h.b16 %v1184
        %v4652 = vunpack.c.l.b16 %v1185
        %v4653 = vunpack.c.h.b16 %v1185
        %v4654 = vunpack.c.l.b16 %v1186
        %v4655 = vunpack.c.h.b16 %v1186
        %v4656 = vunpack.c.l.b16 %v1187
        %v4657 = vunpack.c.h.b16 %v1187
        %v4658 = vunpack.c.l.b16 %v1188
        %v4659 = vunpack.c.h.b16 %v1188
        %v4660 = vunpack.c.l.b16 %v1189
        %v4661 = vunpack.c.h.b16 %v1189
        %v4662 = vunpack.c.l.b16 %v1190
        %v4663 = vunpack.c.h.b16 %v1190
        %v4664 = vunpack.c.l.b16 %v1191
        %v4665 = vunpack.c.h.b16 %v1191
        %v4666 = vunpack.c.l.b16 %v1192
        %v4667 = vunpack.c.h.b16 %v1192
        %v4668 = vunpack.c.l.b16 %v1193
        %v4669 = vunpack.c.h.b16 %v1193
        %v4670 = vunpack.c.l.b16 %v1194
        %v4671 = vunpack.c.h.b16 %v1194
        %v4672 = vunpack.c.l.b16 %v1195
        %v4673 = vunpack.c.h.b16 %v1195
        %v4674 = vunpack.c.l.b16 %v1196
        %v4675 = vunpack.c.h.b16 %v1196
        %v4676 = vunpack.c.l.b16 %v1197
        %v4677 = vunpack.c.h.b16 %v1197
        %v4678 = vunpack.c.l.b16 %v1198
        %v4679 = vunpack.c.h.b16 %v1198
        %v4680 = vunpack.c.l.b16 %v1199
        %v4681 = vunpack.c.h.b16 %v1199
        %v4682 = vunpack.c.l.b16 %v1200
        %v4683 = vunpack.c.h.b16 %v1200
        %v4684 = vunpack.c.l.b16 %v1201
        %v4685 = vunpack.c.h.b16 %v1201
        %v4686 = vunpack.c.l.b16 %v1202
        %v4687 = vunpack.c.h.b16 %v1202
        %v4688 = vunpack.c.l.b16 %v1203
        %v4689 = vunpack.c.h.b16 %v1203
        %v4690 = vunpack.c.l.b16 %v1204
        %v4691 = vunpack.c.h.b16 %v1204
        %v4692 = vunpack.c.l.b16 %v1205
        %v4693 = vunpack.c.h.b16 %v1205
        %v4694 = vunpack.c.l.b16 %v1206
        %v4695 = vunpack.c.h.b16 %v1206
        %v4696 = vunpack.c.l.b16 %v1207
        %v4697 = vunpack.c.h.b16 %v1207
        %v4698 = vunpack.c.l.b16 %v1208
        %v4699 = vunpack.c.h.b16 %v1208
        %v4700 = vunpack.c.l.b16 %v1209
        %v4701 = vunpack.c.h.b16 %v1209
        %v4702 = vunpack.c.l.b16 %v1210
        %v4703 = vunpack.c.h.b16 %v1210
        %v4704 = vunpack.c.l.b16 %v1211
        %v4705 = vunpack.c.h.b16 %v1211
        %v4706 = vunpack.c.l.b16 %v1212
        %v4707 = vunpack.c.h.b16 %v1212
        %v4708 = vunpack.c.l.b16 %v1213
        %v4709 = vunpack.c.h.b16 %v1213
        %v4710 = vunpack.c.l.b16 %v1214
        %v4711 = vunpack.c.h.b16 %v1214
        %v4712 = vunpack.c.l.b16 %v1215
        %v4713 = vunpack.c.h.b16 %v1215
        %v4714 = vunpack.c.l.b16 %v1216
        %v4715 = vunpack.c.h.b16 %v1216
        %v4716 = vunpack.c.l.b16 %v1217
        %v4717 = vunpack.c.h.b16 %v1217
        %v4718 = vunpack.c.l.b16 %v1218
        %v4719 = vunpack.c.h.b16 %v1218
        %v4720 = vunpack.c.l.b16 %v1219
        %v4721 = vunpack.c.h.b16 %v1219
        %v4722 = vunpack.c.l.b16 %v1220
        %v4723 = vunpack.c.h.b16 %v1220
        %v4724 = vunpack.c.l.b16 %v1221
        %v4725 = vunpack.c.h.b16 %v1221
        %v4726 = vunpack.c.l.b16 %v1222
        %v4727 = vunpack.c.h.b16 %v1222
        %v4728 = vunpack.c.l.b16 %v1223
        %v4729 = vunpack.c.h.b16 %v1223
        %v4730 = vunpack.c.l.b16 %v1224
        %v4731 = vunpack.c.h.b16 %v1224
        %v4732 = vunpack.c.l.b16 %v1225
        %v4733 = vunpack.c.h.b16 %v1225
        %v4734 = vunpack.c.l.b16 %v1226
        %v4735 = vunpack.c.h.b16 %v1226
        %v4736 = vunpack.c.l.b16 %v1227
        %v4737 = vunpack.c.h.b16 %v1227
        %v4738 = vunpack.c.l.b16 %v1228
        %v4739 = vunpack.c.h.b16 %v1228
        %v4740 = vunpack.c.l.b16 %v1229
        %v4741 = vunpack.c.h.b16 %v1229
        %v4742 = vunpack.c.l.b16 %v1230
        %v4743 = vunpack.c.h.b16 %v1230
        %v4744 = vunpack.c.l.b16 %v1231
        %v4745 = vunpack.c.h.b16 %v1231
        %v4746 = vunpack.c.l.b16 %v1232
        %v4747 = vunpack.c.h.b16 %v1232
        %v4748 = vunpack.c.l.b16 %v1233
        %v4749 = vunpack.c.h.b16 %v1233
        %v4750 = vunpack.c.l.b16 %v1234
        %v4751 = vunpack.c.h.b16 %v1234
        %v4752 = vunpack.c.l.b16 %v1235
        %v4753 = vunpack.c.h.b16 %v1235
        %v4754 = vunpack.c.l.b16 %v1236
        %v4755 = vunpack.c.h.b16 %v1236
        %v4756 = vunpack.c.l.b16 %v1237
        %v4757 = vunpack.c.h.b16 %v1237
        %v4758 = vunpack.c.l.b16 %v1238
        %v4759 = vunpack.c.h.b16 %v1238
        %v4760 = vunpack.c.l.b16 %v1239
        %v4761 = vunpack.c.h.b16 %v1239
        %v4762 = vunpack.c.l.b16 %v1240
        %v4763 = vunpack.c.h.b16 %v1240
        %v4764 = vunpack.c.l.b16 %v1241
        %v4765 = vunpack.c.h.b16 %v1241
        %v4766 = vunpack.c.l.b16 %v1242
        %v4767 = vunpack.c.h.b16 %v1242
        %v4768 = vunpack.c.l.b16 %v1243
        %v4769 = vunpack.c.h.b16 %v1243
        %v4770 = vunpack.c.l.b16 %v1244
        %v4771 = vunpack.c.h.b16 %v1244
        %v4772 = vunpack.c.l.b16 %v1245
        %v4773 = vunpack.c.h.b16 %v1245
        %v4774 = vunpack.c.l.b16 %v1246
        %v4775 = vunpack.c.h.b16 %v1246
        %v4776 = vunpack.c.l.b16 %v1247
        %v4777 = vunpack.c.h.b16 %v1247
        %v4778 = vunpack.c.l.b16 %v1248
        %v4779 = vunpack.c.h.b16 %v1248
        %v4780 = vunpack.c.l.b16 %v1249
        %v4781 = vunpack.c.h.b16 %v1249
        %v4782 = vunpack.c.l.b16 %v1250
        %v4783 = vunpack.c.h.b16 %v1250
        %v4784 = vunpack.c.l.b16 %v1251
        %v4785 = vunpack.c.h.b16 %v1251
        %v4786 = vpack.c.b16 %v3766, %v3762
        %v4787 = vpack.c.b16 %v3767, %v3763
        %v4788 = vpack.c.b16 %v3768, %v3764
        %v4789 = vpack.c.b16 %v3769, %v3765
        %v4790 = vpack.c.b16 %v3774, %v3770
        %v4791 = vpack.c.b16 %v3775, %v3771
        %v4792 = vpack.c.b16 %v3776, %v3772
        %v4793 = vpack.c.b16 %v3777, %v3773
        %v4794 = vpack.c.b16 %v3782, %v3778
        %v4795 = vpack.c.b16 %v3783, %v3779
        %v4796 = vpack.c.b16 %v3784, %v3780
        %v4797 = vpack.c.b16 %v3785, %v3781
        %v4798 = vpack.c.b16 %v3790, %v3786
        %v4799 = vpack.c.b16 %v3791, %v3787
        %v4800 = vpack.c.b16 %v3792, %v3788
        %v4801 = vpack.c.b16 %v3793, %v3789
        %v4802 = vpack.c.b16 %v3798, %v3794
        %v4803 = vpack.c.b16 %v3799, %v3795
        %v4804 = vpack.c.b16 %v3800, %v3796
        %v4805 = vpack.c.b16 %v3801, %v3797
        %v4806 = vpack.c.b16 %v3806, %v3802
        %v4807 = vpack.c.b16 %v3807, %v3803
        %v4808 = vpack.c.b16 %v3808, %v3804
        %v4809 = vpack.c.b16 %v3809, %v3805
        %v4810 = vpack.c.b16 %v3814, %v3810
        %v4811 = vpack.c.b16 %v3815, %v3811
        %v4812 = vpack.c.b16 %v3816, %v3812
        %v4813 = vpack.c.b16 %v3817, %v3813
        %v4814 = vpack.c.b16 %v3822, %v3818
        %v4815 = vpack.c.b16 %v3823, %v3819
        %v4816 = vpack.c.b16 %v3824, %v3820
        %v4817 = vpack.c.b16 %v3825, %v3821
        %v4818 = vpack.c.b16 %v3830, %v3826
        %v4819 = vpack.c.b16 %v3831, %v3827
        %v4820 = vpack.c.b16 %v3832, %v3828
        %v4821 = vpack.c.b16 %v3833, %v3829
        %v4822 = vpack.c.b16 %v3838, %v3834
        %v4823 = vpack.c.b16 %v3839, %v3835
        %v4824 = vpack.c.b16 %v3840, %v3836
        %v4825 = vpack.c.b16 %v3841, %v3837
        %v4826 = vpack.c.b16 %v3846, %v3842
        %v4827 = vpack.c.b16 %v3847, %v3843
        %v4828 = vpack.c.b16 %v3848, %v3844
        %v4829 = vpack.c.b16 %v3849, %v3845
        %v4830 = vpack.c.b16 %v3854, %v3850
        %v4831 = vpack.c.b16 %v3855, %v3851
        %v4832 = vpack.c.b16 %v3856, %v3852
        %v4833 = vpack.c.b16 %v3857, %v3853
        %v4834 = vpack.c.b16 %v3862, %v3858
        %v4835 = vpack.c.b16 %v3863, %v3859
        %v4836 = vpack.c.b16 %v3864, %v3860
        %v4837 = vpack.c.b16 %v3865, %v3861
        %v4838 = vpack.c.b16 %v3870, %v3866
        %v4839 = vpack.c.b16 %v3871, %v3867
        %v4840 = vpack.c.b16 %v3872, %v3868
        %v4841 = vpack.c.b16 %v3873, %v3869
        %v4842 = vpack.c.b16 %v3878, %v3874
        %v4843 = vpack.c.b16 %v3879, %v3875
        %v4844 = vpack.c.b16 %v3880, %v3876
        %v4845 = vpack.c.b16 %v3881, %v3877
        %v4846 = vpack.c.b16 %v3886, %v3882
        %v4847 = vpack.c.b16 %v3887, %v3883
        %v4848 = vpack.c.b16 %v3888, %v3884
        %v4849 = vpack.c.b16 %v3889, %v3885
        %v4850 = vpack.c.b16 %v3894, %v3890
        %v4851 = vpack.c.b16 %v3895, %v3891
        %v4852 = vpack.c.b16 %v3896, %v3892
        %v4853 = vpack.c.b16 %v3897, %v3893
        %v4854 = vpack.c.b16 %v3902, %v3898
        %v4855 = vpack.c.b16 %v3903, %v3899
        %v4856 = vpack.c.b16 %v3904, %v3900
        %v4857 = vpack.c.b16 %v3905, %v3901
        %v4858 = vpack.c.b16 %v3910, %v3906
        %v4859 = vpack.c.b16 %v3911, %v3907
        %v4860 = vpack.c.b16 %v3912, %v3908
        %v4861 = vpack.c.b16 %v3913, %v3909
        %v4862 = vpack.c.b16 %v3918, %v3914
        %v4863 = vpack.c.b16 %v3919, %v3915
        %v4864 = vpack.c.b16 %v3920, %v3916
        %v4865 = vpack.c.b16 %v3921, %v3917
        %v4866 = vpack.c.b16 %v3926, %v3922
        %v4867 = vpack.c.b16 %v3927, %v3923
        %v4868 = vpack.c.b16 %v3928, %v3924
        %v4869 = vpack.c.b16 %v3929, %v3925
        %v4870 = vpack.c.b16 %v3934, %v3930
        %v4871 = vpack.c.b16 %v3935, %v3931
        %v4872 = vpack.c.b16 %v3936, %v3932
        %v4873 = vpack.c.b16 %v3937, %v3933
        %v4874 = vpack.c.b16 %v3942, %v3938
        %v4875 = vpack.c.b16 %v3943, %v3939
        %v4876 = vpack.c.b16 %v3944, %v3940
        %v4877 = vpack.c.b16 %v3945, %v3941
        %v4878 = vpack.c.b16 %v3950, %v3946
        %v4879 = vpack.c.b16 %v3951, %v3947
        %v4880 = vpack.c.b16 %v3952, %v3948
        %v4881 = vpack.c.b16 %v3953, %v3949
        %v4882 = vpack.c.b16 %v3958, %v3954
        %v4883 = vpack.c.b16 %v3959, %v3955
        %v4884 = vpack.c.b16 %v3960, %v3956
        %v4885 = vpack.c.b16 %v3961, %v3957
        %v4886 = vpack.c.b16 %v3966, %v3962
        %v4887 = vpack.c.b16 %v3967, %v3963
        %v4888 = vpack.c.b16 %v3968, %v3964
        %v4889 = vpack.c.b16 %v3969, %v3965
        %v4890 = vpack.c.b16 %v3974, %v3970
        %v4891 = vpack.c.b16 %v3975, %v3971
        %v4892 = vpack.c.b16 %v3976, %v3972
        %v4893 = vpack.c.b16 %v3977, %v3973
        %v4894 = vpack.c.b16 %v3982, %v3978
        %v4895 = vpack.c.b16 %v3983, %v3979
        %v4896 = vpack.c.b16 %v3984, %v3980
        %v4897 = vpack.c.b16 %v3985, %v3981
        %v4898 = vpack.c.b16 %v3990, %v3986
        %v4899 = vpack.c.b16 %v3991, %v3987
        %v4900 = vpack.c.b16 %v3992, %v3988
        %v4901 = vpack.c.b16 %v3993, %v3989
        %v4902 = vpack.c.b16 %v3998, %v3994
        %v4903 = vpack.c.b16 %v3999, %v3995
        %v4904 = vpack.c.b16 %v4000, %v3996
        %v4905 = vpack.c.b16 %v4001, %v3997
        %v4906 = vpack.c.b16 %v4006, %v4002
        %v4907 = vpack.c.b16 %v4007, %v4003
        %v4908 = vpack.c.b16 %v4008, %v4004
        %v4909 = vpack.c.b16 %v4009, %v4005
        %v4910 = vpack.c.b16 %v4014, %v4010
        %v4911 = vpack.c.b16 %v4015, %v4011
        %v4912 = vpack.c.b16 %v4016, %v4012
        %v4913 = vpack.c.b16 %v4017, %v4013
        %v4914 = vpack.c.b16 %v4022, %v4018
        %v4915 = vpack.c.b16 %v4023, %v4019
        %v4916 = vpack.c.b16 %v4024, %v4020
        %v4917 = vpack.c.b16 %v4025, %v4021
        %v4918 = vpack.c.b16 %v4030, %v4026
        %v4919 = vpack.c.b16 %v4031, %v4027
        %v4920 = vpack.c.b16 %v4032, %v4028
        %v4921 = vpack.c.b16 %v4033, %v4029
        %v4922 = vpack.c.b16 %v4038, %v4034
        %v4923 = vpack.c.b16 %v4039, %v4035
        %v4924 = vpack.c.b16 %v4040, %v4036
        %v4925 = vpack.c.b16 %v4041, %v4037
        %v4926 = vpack.c.b16 %v4046, %v4042
        %v4927 = vpack.c.b16 %v4047, %v4043
        %v4928 = vpack.c.b16 %v4048, %v4044
        %v4929 = vpack.c.b16 %v4049, %v4045
        %v4930 = vpack.c.b16 %v4054, %v4050
        %v4931 = vpack.c.b16 %v4055, %v4051
        %v4932 = vpack.c.b16 %v4056, %v4052
        %v4933 = vpack.c.b16 %v4057, %v4053
        %v4934 = vpack.c.b16 %v4062, %v4058
        %v4935 = vpack.c.b16 %v4063, %v4059
        %v4936 = vpack.c.b16 %v4064, %v4060
        %v4937 = vpack.c.b16 %v4065, %v4061
        %v4938 = vpack.c.b16 %v4070, %v4066
        %v4939 = vpack.c.b16 %v4071, %v4067
        %v4940 = vpack.c.b16 %v4072, %v4068
        %v4941 = vpack.c.b16 %v4073, %v4069
        %v4942 = vpack.c.b16 %v4078, %v4074
        %v4943 = vpack.c.b16 %v4079, %v4075
        %v4944 = vpack.c.b16 %v4080, %v4076
        %v4945 = vpack.c.b16 %v4081, %v4077
        %v4946 = vpack.c.b16 %v4086, %v4082
        %v4947 = vpack.c.b16 %v4087, %v4083
        %v4948 = vpack.c.b16 %v4088, %v4084
        %v4949 = vpack.c.b16 %v4089, %v4085
        %v4950 = vpack.c.b16 %v4094, %v4090
        %v4951 = vpack.c.b16 %v4095, %v4091
        %v4952 = vpack.c.b16 %v4096, %v4092
        %v4953 = vpack.c.b16 %v4097, %v4093
        %v4954 = vpack.c.b16 %v4102, %v4098
        %v4955 = vpack.c.b16 %v4103, %v4099
        %v4956 = vpack.c.b16 %v4104, %v4100
        %v4957 = vpack.c.b16 %v4105, %v4101
        %v4958 = vpack.c.b16 %v4110, %v4106
        %v4959 = vpack.c.b16 %v4111, %v4107
        %v4960 = vpack.c.b16 %v4112, %v4108
        %v4961 = vpack.c.b16 %v4113, %v4109
        %v4962 = vpack.c.b16 %v4118, %v4114
        %v4963 = vpack.c.b16 %v4119, %v4115
        %v4964 = vpack.c.b16 %v4120, %v4116
        %v4965 = vpack.c.b16 %v4121, %v4117
        %v4966 = vpack.c.b16 %v4126, %v4122
        %v4967 = vpack.c.b16 %v4127, %v4123
        %v4968 = vpack.c.b16 %v4128, %v4124
        %v4969 = vpack.c.b16 %v4129, %v4125
        %v4970 = vpack.c.b16 %v4134, %v4130
        %v4971 = vpack.c.b16 %v4135, %v4131
        %v4972 = vpack.c.b16 %v4136, %v4132
        %v4973 = vpack.c.b16 %v4137, %v4133
        %v4974 = vpack.c.b16 %v4142, %v4138
        %v4975 = vpack.c.b16 %v4143, %v4139
        %v4976 = vpack.c.b16 %v4144, %v4140
        %v4977 = vpack.c.b16 %v4145, %v4141
        %v4978 = vpack.c.b16 %v4150, %v4146
        %v4979 = vpack.c.b16 %v4151, %v4147
        %v4980 = vpack.c.b16 %v4152, %v4148
        %v4981 = vpack.c.b16 %v4153, %v4149
        %v4982 = vpack.c.b16 %v4158, %v4154
        %v4983 = vpack.c.b16 %v4159, %v4155
        %v4984 = vpack.c.b16 %v4160, %v4156
        %v4985 = vpack.c.b16 %v4161, %v4157
        %v4986 = vpack.c.b16 %v4166, %v4162
        %v4987 = vpack.c.b16 %v4167, %v4163
        %v4988 = vpack.c.b16 %v4168, %v4164
        %v4989 = vpack.c.b16 %v4169, %v4165
        %v4990 = vpack.c.b16 %v4174, %v4170
        %v4991 = vpack.c.b16 %v4175, %v4171
        %v4992 = vpack.c.b16 %v4176, %v4172
        %v4993 = vpack.c.b16 %v4177, %v4173
        %v4994 = vpack.c.b16 %v4182, %v4178
        %v4995 = vpack.c.b16 %v4183, %v4179
        %v4996 = vpack.c.b16 %v4184, %v4180
        %v4997 = vpack.c.b16 %v4185, %v4181
        %v4998 = vpack.c.b16 %v4190, %v4186
        %v4999 = vpack.c.b16 %v4191, %v4187
        %v5000 = vpack.c.b16 %v4192, %v4188
        %v5001 = vpack.c.b16 %v4193, %v4189
        %v5002 = vpack.c.b16 %v4198, %v4194
        %v5003 = vpack.c.b16 %v4199, %v4195
        %v5004 = vpack.c.b16 %v4200, %v4196
        %v5005 = vpack.c.b16 %v4201, %v4197
        %v5006 = vpack.c.b16 %v4206, %v4202
        %v5007 = vpack.c.b16 %v4207, %v4203
        %v5008 = vpack.c.b16 %v4208, %v4204
        %v5009 = vpack.c.b16 %v4209, %v4205
        %v5010 = vpack.c.b16 %v4214, %v4210
        %v5011 = vpack.c.b16 %v4215, %v4211
        %v5012 = vpack.c.b16 %v4216, %v4212
        %v5013 = vpack.c.b16 %v4217, %v4213
        %v5014 = vpack.c.b16 %v4222, %v4218
        %v5015 = vpack.c.b16 %v4223, %v4219
        %v5016 = vpack.c.b16 %v4224, %v4220
        %v5017 = vpack.c.b16 %v4225, %v4221
        %v5018 = vpack.c.b16 %v4230, %v4226
        %v5019 = vpack.c.b16 %v4231, %v4227
        %v5020 = vpack.c.b16 %v4232, %v4228
        %v5021 = vpack.c.b16 %v4233, %v4229
        %v5022 = vpack.c.b16 %v4238, %v4234
        %v5023 = vpack.c.b16 %v4239, %v4235
        %v5024 = vpack.c.b16 %v4240, %v4236
        %v5025 = vpack.c.b16 %v4241, %v4237
        %v5026 = vpack.c.b16 %v4246, %v4242
        %v5027 = vpack.c.b16 %v4247, %v4243
        %v5028 = vpack.c.b16 %v4248, %v4244
        %v5029 = vpack.c.b16 %v4249, %v4245
        %v5030 = vpack.c.b16 %v4254, %v4250
        %v5031 = vpack.c.b16 %v4255, %v4251
        %v5032 = vpack.c.b16 %v4256, %v4252
        %v5033 = vpack.c.b16 %v4257, %v4253
        %v5034 = vpack.c.b16 %v4262, %v4258
        %v5035 = vpack.c.b16 %v4263, %v4259
        %v5036 = vpack.c.b16 %v4264, %v4260
        %v5037 = vpack.c.b16 %v4265, %v4261
        %v5038 = vpack.c.b16 %v4270, %v4266
        %v5039 = vpack.c.b16 %v4271, %v4267
        %v5040 = vpack.c.b16 %v4272, %v4268
        %v5041 = vpack.c.b16 %v4273, %v4269
        %v5042 = vpack.c.b16 %v4278, %v4274
        %v5043 = vpack.c.b16 %v4279, %v4275
        %v5044 = vpack.c.b16 %v4280, %v4276
        %v5045 = vpack.c.b16 %v4281, %v4277
        %v5046 = vpack.c.b16 %v4286, %v4282
        %v5047 = vpack.c.b16 %v4287, %v4283
        %v5048 = vpack.c.b16 %v4288, %v4284
        %v5049 = vpack.c.b16 %v4289, %v4285
        %v5050 = vpack.c.b16 %v4294, %v4290
        %v5051 = vpack.c.b16 %v4295, %v4291
        %v5052 = vpack.c.b16 %v4296, %v4292
        %v5053 = vpack.c.b16 %v4297, %v4293
        %v5054 = vpack.c.b16 %v4302, %v4298
        %v5055 = vpack.c.b16 %v4303, %v4299
        %v5056 = vpack.c.b16 %v4304, %v4300
        %v5057 = vpack.c.b16 %v4305, %v4301
        %v5058 = vpack.c.b16 %v4310, %v4306
        %v5059 = vpack.c.b16 %v4311, %v4307
        %v5060 = vpack.c.b16 %v4312, %v4308
        %v5061 = vpack.c.b16 %v4313, %v4309
        %v5062 = vpack.c.b16 %v4318, %v4314
        %v5063 = vpack.c.b16 %v4319, %v4315
        %v5064 = vpack.c.b16 %v4320, %v4316
        %v5065 = vpack.c.b16 %v4321, %v4317
        %v5066 = vpack.c.b16 %v4326, %v4322
        %v5067 = vpack.c.b16 %v4327, %v4323
        %v5068 = vpack.c.b16 %v4328, %v4324
        %v5069 = vpack.c.b16 %v4329, %v4325
        %v5070 = vpack.c.b16 %v4334, %v4330
        %v5071 = vpack.c.b16 %v4335, %v4331
        %v5072 = vpack.c.b16 %v4336, %v4332
        %v5073 = vpack.c.b16 %v4337, %v4333
        %v5074 = vpack.c.b16 %v4342, %v4338
        %v5075 = vpack.c.b16 %v4343, %v4339
        %v5076 = vpack.c.b16 %v4344, %v4340
        %v5077 = vpack.c.b16 %v4345, %v4341
        %v5078 = vpack.c.b16 %v4350, %v4346
        %v5079 = vpack.c.b16 %v4351, %v4347
        %v5080 = vpack.c.b16 %v4352, %v4348
        %v5081 = vpack.c.b16 %v4353, %v4349
        %v5082 = vpack.c.b16 %v4358, %v4354
        %v5083 = vpack.c.b16 %v4359, %v4355
        %v5084 = vpack.c.b16 %v4360, %v4356
        %v5085 = vpack.c.b16 %v4361, %v4357
        %v5086 = vpack.c.b16 %v4366, %v4362
        %v5087 = vpack.c.b16 %v4367, %v4363
        %v5088 = vpack.c.b16 %v4368, %v4364
        %v5089 = vpack.c.b16 %v4369, %v4365
        %v5090 = vpack.c.b16 %v4374, %v4370
        %v5091 = vpack.c.b16 %v4375, %v4371
        %v5092 = vpack.c.b16 %v4376, %v4372
        %v5093 = vpack.c.b16 %v4377, %v4373
        %v5094 = vpack.c.b16 %v4382, %v4378
        %v5095 = vpack.c.b16 %v4383, %v4379
        %v5096 = vpack.c.b16 %v4384, %v4380
        %v5097 = vpack.c.b16 %v4385, %v4381
        %v5098 = vpack.c.b16 %v4390, %v4386
        %v5099 = vpack.c.b16 %v4391, %v4387
        %v5100 = vpack.c.b16 %v4392, %v4388
        %v5101 = vpack.c.b16 %v4393, %v4389
        %v5102 = vpack.c.b16 %v4398, %v4394
        %v5103 = vpack.c.b16 %v4399, %v4395
        %v5104 = vpack.c.b16 %v4400, %v4396
        %v5105 = vpack.c.b16 %v4401, %v4397
        %v5106 = vpack.c.b16 %v4406, %v4402
        %v5107 = vpack.c.b16 %v4407, %v4403
        %v5108 = vpack.c.b16 %v4408, %v4404
        %v5109 = vpack.c.b16 %v4409, %v4405
        %v5110 = vpack.c.b16 %v4414, %v4410
        %v5111 = vpack.c.b16 %v4415, %v4411
        %v5112 = vpack.c.b16 %v4416, %v4412
        %v5113 = vpack.c.b16 %v4417, %v4413
        %v5114 = vpack.c.b16 %v4422, %v4418
        %v5115 = vpack.c.b16 %v4423, %v4419
        %v5116 = vpack.c.b16 %v4424, %v4420
        %v5117 = vpack.c.b16 %v4425, %v4421
        %v5118 = vpack.c.b16 %v4430, %v4426
        %v5119 = vpack.c.b16 %v4431, %v4427
        %v5120 = vpack.c.b16 %v4432, %v4428
        %v5121 = vpack.c.b16 %v4433, %v4429
        %v5122 = vpack.c.b16 %v4438, %v4434
        %v5123 = vpack.c.b16 %v4439, %v4435
        %v5124 = vpack.c.b16 %v4440, %v4436
        %v5125 = vpack.c.b16 %v4441, %v4437
        %v5126 = vpack.c.b16 %v4446, %v4442
        %v5127 = vpack.c.b16 %v4447, %v4443
        %v5128 = vpack.c.b16 %v4448, %v4444
        %v5129 = vpack.c.b16 %v4449, %v4445
        %v5130 = vpack.c.b16 %v4454, %v4450
        %v5131 = vpack.c.b16 %v4455, %v4451
        %v5132 = vpack.c.b16 %v4456, %v4452
        %v5133 = vpack.c.b16 %v4457, %v4453
        %v5134 = vpack.c.b16 %v4462, %v4458
        %v5135 = vpack.c.b16 %v4463, %v4459
        %v5136 = vpack.c.b16 %v4464, %v4460
        %v5137 = vpack.c.b16 %v4465, %v4461
        %v5138 = vpack.c.b16 %v4470, %v4466
        %v5139 = vpack.c.b16 %v4471, %v4467
        %v5140 = vpack.c.b16 %v4472, %v4468
        %v5141 = vpack.c.b16 %v4473, %v4469
        %v5142 = vpack.c.b16 %v4478, %v4474
        %v5143 = vpack.c.b16 %v4479, %v4475
        %v5144 = vpack.c.b16 %v4480, %v4476
        %v5145 = vpack.c.b16 %v4481, %v4477
        %v5146 = vpack.c.b16 %v4486, %v4482
        %v5147 = vpack.c.b16 %v4487, %v4483
        %v5148 = vpack.c.b16 %v4488, %v4484
        %v5149 = vpack.c.b16 %v4489, %v4485
        %v5150 = vpack.c.b16 %v4494, %v4490
        %v5151 = vpack.c.b16 %v4495, %v4491
        %v5152 = vpack.c.b16 %v4496, %v4492
        %v5153 = vpack.c.b16 %v4497, %v4493
        %v5154 = vpack.c.b16 %v4502, %v4498
        %v5155 = vpack.c.b16 %v4503, %v4499
        %v5156 = vpack.c.b16 %v4504, %v4500
        %v5157 = vpack.c.b16 %v4505, %v4501
        %v5158 = vpack.c.b16 %v4510, %v4506
        %v5159 = vpack.c.b16 %v4511, %v4507
        %v5160 = vpack.c.b16 %v4512, %v4508
        %v5161 = vpack.c.b16 %v4513, %v4509
        %v5162 = vpack.c.b16 %v4518, %v4514
        %v5163 = vpack.c.b16 %v4519, %v4515
        %v5164 = vpack.c.b16 %v4520, %v4516
        %v5165 = vpack.c.b16 %v4521, %v4517
        %v5166 = vpack.c.b16 %v4526, %v4522
        %v5167 = vpack.c.b16 %v4527, %v4523
        %v5168 = vpack.c.b16 %v4528, %v4524
        %v5169 = vpack.c.b16 %v4529, %v4525
        %v5170 = vpack.c.b16 %v4534, %v4530
        %v5171 = vpack.c.b16 %v4535, %v4531
        %v5172 = vpack.c.b16 %v4536, %v4532
        %v5173 = vpack.c.b16 %v4537, %v4533
        %v5174 = vpack.c.b16 %v4542, %v4538
        %v5175 = vpack.c.b16 %v4543, %v4539
        %v5176 = vpack.c.b16 %v4544, %v4540
        %v5177 = vpack.c.b16 %v4545, %v4541
        %v5178 = vpack.c.b16 %v4550, %v4546
        %v5179 = vpack.c.b16 %v4551, %v4547
        %v5180 = vpack.c.b16 %v4552, %v4548
        %v5181 = vpack.c.b16 %v4553, %v4549
        %v5182 = vpack.c.b16 %v4558, %v4554
        %v5183 = vpack.c.b16 %v4559, %v4555
        %v5184 = vpack.c.b16 %v4560, %v4556
        %v5185 = vpack.c.b16 %v4561, %v4557
        %v5186 = vpack.c.b16 %v4566, %v4562
        %v5187 = vpack.c.b16 %v4567, %v4563
        %v5188 = vpack.c.b16 %v4568, %v4564
        %v5189 = vpack.c.b16 %v4569, %v4565
        %v5190 = vpack.c.b16 %v4574, %v4570
        %v5191 = vpack.c.b16 %v4575, %v4571
        %v5192 = vpack.c.b16 %v4576, %v4572
        %v5193 = vpack.c.b16 %v4577, %v4573
        %v5194 = vpack.c.b16 %v4582, %v4578
        %v5195 = vpack.c.b16 %v4583, %v4579
        %v5196 = vpack.c.b16 %v4584, %v4580
        %v5197 = vpack.c.b16 %v4585, %v4581
        %v5198 = vpack.c.b16 %v4590, %v4586
        %v5199 = vpack.c.b16 %v4591, %v4587
        %v5200 = vpack.c.b16 %v4592, %v4588
        %v5201 = vpack.c.b16 %v4593, %v4589
        %v5202 = vpack.c.b16 %v4598, %v4594
        %v5203 = vpack.c.b16 %v4599, %v4595
        %v5204 = vpack.c.b16 %v4600, %v4596
        %v5205 = vpack.c.b16 %v4601, %v4597
        %v5206 = vpack.c.b16 %v4606, %v4602
        %v5207 = vpack.c.b16 %v4607, %v4603
        %v5208 = vpack.c.b16 %v4608, %v4604
        %v5209 = vpack.c.b16 %v4609, %v4605
        %v5210 = vpack.c.b16 %v4614, %v4610
        %v5211 = vpack.c.b16 %v4615, %v4611
        %v5212 = vpack.c.b16 %v4616, %v4612
        %v5213 = vpack.c.b16 %v4617, %v4613
        %v5214 = vpack.c.b16 %v4622, %v4618
        %v5215 = vpack.c.b16 %v4623, %v4619
        %v5216 = vpack.c.b16 %v4624, %v4620
        %v5217 = vpack.c.b16 %v4625, %v4621
        %v5218 = vpack.c.b16 %v4630, %v4626
        %v5219 = vpack.c.b16 %v4631, %v4627
        %v5220 = vpack.c.b16 %v4632, %v4628
        %v5221 = vpack.c.b16 %v4633, %v4629
        %v5222 = vpack.c.b16 %v4638, %v4634
        %v5223 = vpack.c.b16 %v4639, %v4635
        %v5224 = vpack.c.b16 %v4640, %v4636
        %v5225 = vpack.c.b16 %v4641, %v4637
        %v5226 = vpack.c.b16 %v4646, %v4642
        %v5227 = vpack.c.b16 %v4647, %v4643
        %v5228 = vpack.c.b16 %v4648, %v4644
        %v5229 = vpack.c.b16 %v4649, %v4645
        %v5230 = vpack.c.b16 %v4654, %v4650
        %v5231 = vpack.c.b16 %v4655, %v4651
        %v5232 = vpack.c.b16 %v4656, %v4652
        %v5233 = vpack.c.b16 %v4657, %v4653
        %v5234 = vpack.c.b16 %v4662, %v4658
        %v5235 = vpack.c.b16 %v4663, %v4659
        %v5236 = vpack.c.b16 %v4664, %v4660
        %v5237 = vpack.c.b16 %v4665, %v4661
        %v5238 = vpack.c.b16 %v4670, %v4666
        %v5239 = vpack.c.b16 %v4671, %v4667
        %v5240 = vpack.c.b16 %v4672, %v4668
        %v5241 = vpack.c.b16 %v4673, %v4669
        %v5242 = vpack.c.b16 %v4678, %v4674
        %v5243 = vpack.c.b16 %v4679, %v4675
        %v5244 = vpack.c.b16 %v4680, %v4676
        %v5245 = vpack.c.b16 %v4681, %v4677
        %v5246 = vpack.c.b16 %v4686, %v4682
        %v5247 = vpack.c.b16 %v4687, %v4683
        %v5248 = vpack.c.b16 %v4688, %v4684
        %v5249 = vpack.c.b16 %v4689, %v4685
        %v5250 = vpack.c.b16 %v4694, %v4690
        %v5251 = vpack.c.b16 %v4695, %v4691
        %v5252 = vpack.c.b16 %v4696, %v4692
        %v5253 = vpack.c.b16 %v4697, %v4693
        %v5254 = vpack.c.b16 %v4702, %v4698
        %v5255 = vpack.c.b16 %v4703, %v4699
        %v5256 = vpack.c.b16 %v4704, %v4700
        %v5257 = vpack.c.b16 %v4705, %v4701
        %v5258 = vpack.c.b16 %v4710, %v4706
        %v5259 = vpack.c.b16 %v4711, %v4707
        %v5260 = vpack.c.b16 %v4712, %v4708
        %v5261 = vpack.c.b16 %v4713, %v4709
        %v5262 = vpack.c.b16 %v4718, %v4714
        %v5263 = vpack.c.b16 %v4719, %v4715
        %v5264 = vpack.c.b16 %v4720, %v4716
        %v5265 = vpack.c.b16 %v4721, %v4717
        %v5266 = vpack.c.b16 %v4726, %v4722
        %v5267 = vpack.c.b16 %v4727, %v4723
        %v5268 = vpack.c.b16 %v4728, %v4724
        %v5269 = vpack.c.b16 %v4729, %v4725
        %v5270 = vpack.c.b16 %v4734, %v4730
        %v5271 = vpack.c.b16 %v4735, %v4731
        %v5272 = vpack.c.b16 %v4736, %v4732
        %v5273 = vpack.c.b16 %v4737, %v4733
        %v5274 = vpack.c.b16 %v4742, %v4738
        %v5275 = vpack.c.b16 %v4743, %v4739
        %v5276 = vpack.c.b16 %v4744, %v4740
        %v5277 = vpack.c.b16 %v4745, %v4741
        %v5278 = vpack.c.b16 %v4750, %v4746
        %v5279 = vpack.c.b16 %v4751, %v4747
        %v5280 = vpack.c.b16 %v4752, %v4748
        %v5281 = vpack.c.b16 %v4753, %v4749
        %v5282 = vpack.c.b16 %v4758, %v4754
        %v5283 = vpack.c.b16 %v4759, %v4755
        %v5284 = vpack.c.b16 %v4760, %v4756
        %v5285 = vpack.c.b16 %v4761, %v4757
        %v5286 = vpack.c.b16 %v4766, %v4762
        %v5287 = vpack.c.b16 %v4767, %v4763
        %v5288 = vpack.c.b16 %v4768, %v4764
        %v5289 = vpack.c.b16 %v4769, %v4765
        %v5290 = vpack.c.b16 %v4774, %v4770
        %v5291 = vpack.c.b16 %v4775, %v4771
        %v5292 = vpack.c.b16 %v4776, %v4772
        %v5293 = vpack.c.b16 %v4777, %v4773
        %v5294 = vpack.c.b16 %v4782, %v4778
        %v5295 = vpack.c.b16 %v4783, %v4779
        %v5296 = vpack.c.b16 %v4784, %v4780
        %v5297 = vpack.c.b16 %v4785, %v4781
        %5810 = vmatprep.subr.bf16.mxu0 %v4815
        %5811 = vmatpush1.bf16.msra.mxu0 %v4814
        %5812 = vmatprep.subr.bf16.mxu0 %v4811
        %5813 = vmatpush1.bf16.msra.mxu0 %v4810
        %5814 = vmatprep.subr.bf16.mxu0 %v4807
        %5815 = vmatpush1.bf16.msra.mxu0 %v4806
        %5816 = vmatprep.subr.bf16.mxu0 %v4803
        %5817 = vmatpush1.bf16.msra.mxu0 %v4802
        %5818 = vmatprep.subr.bf16.mxu0 %v4799
        %5819 = vmatpush1.bf16.msra.mxu0 %v4798
        %5820 = vmatprep.subr.bf16.mxu0 %v4795
        %5821 = vmatpush1.bf16.msra.mxu0 %v4794
        %5822 = vmatprep.subr.bf16.mxu0 %v4791
        %5823 = vmatpush1.bf16.msra.mxu0 %v4790
        %5824 = vmatprep.subr.bf16.mxu0 %v4787
        %5825 = vmatpush1.bf16.msra.mxu0 %v4786
        %5826 = vmatprep.subr.bf16.mxu0 %v4847
        %5827 = vmatpush2.bf16.msra.mxu0 %v4846
        %5828 = vmatprep.subr.bf16.mxu0 %v4843
        %5829 = vmatpush2.bf16.msra.mxu0 %v4842
        %5830 = vmatprep.subr.bf16.mxu0 %v4839
        %5831 = vmatpush2.bf16.msra.mxu0 %v4838
        %5832 = vmatprep.subr.bf16.mxu0 %v4835
        %5833 = vmatpush2.bf16.msra.mxu0 %v4834
        %5834 = vmatprep.subr.bf16.mxu0 %v4831
        %5835 = vmatpush2.bf16.msra.mxu0 %v4830
        %5836 = vmatprep.subr.bf16.mxu0 %v4827
        %5837 = vmatpush2.bf16.msra.mxu0 %v4826
        %5838 = vmatprep.subr.bf16.mxu0 %v4823
        %5839 = vmatpush2.bf16.msra.mxu0 %v4822
        %5840 = vmatprep.subr.bf16.mxu0 %v4819
        %5841 = vmatpush2.bf16.msra.mxu0 %v4818
        %5842 = vmatprep.mubr.bf16.mxu0 %v2451
        %5843 = vmatmul.mubr.bf16.gmra.mxu0 %v2450
        %v5844 = vpop.f32.mrf.mxu0
        %v5845 = vadd.f32 %v1257, %v5844
        %v5846 = vpop.f32.mrf.mxu0
        %v5847 = vadd.f32 %v1261, %v5846
        %v5848 = vpop.f32.mrf.mxu0
        %v5849 = vadd.f32 %v1257, %v5848
        %v5850 = vpop.f32.mrf.mxu0
        %v5851 = vadd.f32 %v1261, %v5850
        %5852 = vmatprep.mubr.bf16.mxu0 %v2467
        %5853 = vmatmul.mubr.bf16.gmra.mxu0 %v2466
        %v5854 = vpop.f32.mrf.mxu0
        %v5855 = vadd.f32 %v1257, %v5854
        %v5856 = vpop.f32.mrf.mxu0
        %v5857 = vadd.f32 %v1261, %v5856
        %v5858 = vpop.f32.mrf.mxu0
        %v5859 = vadd.f32 %v1257, %v5858
        %v5860 = vpop.f32.mrf.mxu0
        %v5861 = vadd.f32 %v1261, %v5860
        %5862 = vmatprep.mubr.bf16.mxu0 %v2483
        %5863 = vmatmul.mubr.bf16.gmra.mxu0 %v2482
        %v5864 = vpop.f32.mrf.mxu0
        %v5865 = vadd.f32 %v1257, %v5864
        %v5866 = vpop.f32.mrf.mxu0
        %v5867 = vadd.f32 %v1261, %v5866
        %v5868 = vpop.f32.mrf.mxu0
        %v5869 = vadd.f32 %v1257, %v5868
        %v5870 = vpop.f32.mrf.mxu0
        %v5871 = vadd.f32 %v1261, %v5870
        %5872 = vmatprep.mubr.bf16.mxu0 %v2499
        %5873 = vmatmul.mubr.bf16.gmra.mxu0 %v2498
        %v5874 = vpop.f32.mrf.mxu0
        %v5875 = vadd.f32 %v1257, %v5874
        %v5876 = vpop.f32.mrf.mxu0
        %v5877 = vadd.f32 %v1261, %v5876
        %v5878 = vpop.f32.mrf.mxu0
        %v5879 = vadd.f32 %v1257, %v5878
        %v5880 = vpop.f32.mrf.mxu0
        %v5881 = vadd.f32 %v1261, %v5880
        %5882 = vmatprep.mubr.bf16.mxu0 %v2515
        %5883 = vmatmul.mubr.bf16.gmra.mxu0 %v2514
        %v5884 = vpop.f32.mrf.mxu0
        %v5885 = vadd.f32 %v1257, %v5884
        %v5886 = vpop.f32.mrf.mxu0
        %v5887 = vadd.f32 %v1261, %v5886
        %v5888 = vpop.f32.mrf.mxu0
        %v5889 = vadd.f32 %v1257, %v5888
        %v5890 = vpop.f32.mrf.mxu0
        %v5891 = vadd.f32 %v1261, %v5890
        %5892 = vmatprep.mubr.bf16.mxu0 %v2531
        %5893 = vmatmul.mubr.bf16.gmra.mxu0 %v2530
        %v5894 = vpop.f32.mrf.mxu0
        %v5895 = vadd.f32 %v1257, %v5894
        %v5896 = vpop.f32.mrf.mxu0
        %v5897 = vadd.f32 %v1261, %v5896
        %v5898 = vpop.f32.mrf.mxu0
        %v5899 = vadd.f32 %v1257, %v5898
        %v5900 = vpop.f32.mrf.mxu0
        %v5901 = vadd.f32 %v1261, %v5900
        %5902 = vmatprep.mubr.bf16.mxu0 %v2547
        %5903 = vmatmul.mubr.bf16.gmra.mxu0 %v2546
        %v5904 = vpop.f32.mrf.mxu0
        %v5905 = vadd.f32 %v1257, %v5904
        %v5906 = vpop.f32.mrf.mxu0
        %v5907 = vadd.f32 %v1261, %v5906
        %v5908 = vpop.f32.mrf.mxu0
        %v5909 = vadd.f32 %v1257, %v5908
        %v5910 = vpop.f32.mrf.mxu0
        %v5911 = vadd.f32 %v1261, %v5910
        %5912 = vmatprep.mubr.bf16.mxu0 %v2563
        %5913 = vmatmul.mubr.bf16.gmra.mxu0 %v2562
        %v5914 = vpop.f32.mrf.mxu0
        %v5915 = vadd.f32 %v1257, %v5914
        %v5916 = vpop.f32.mrf.mxu0
        %v5917 = vadd.f32 %v1261, %v5916
        %v5918 = vpop.f32.mrf.mxu0
        %v5919 = vadd.f32 %v1257, %v5918
        %v5920 = vpop.f32.mrf.mxu0
        %v5921 = vadd.f32 %v1261, %v5920
        %5922 = vmatprep.mubr.bf16.mxu0 %v2579
        %5923 = vmatmul.mubr.bf16.gmra.mxu0 %v2578
        %v5924 = vpop.f32.mrf.mxu0
        %v5925 = vadd.f32 %v1257, %v5924
        %v5926 = vpop.f32.mrf.mxu0
        %v5927 = vadd.f32 %v1261, %v5926
        %v5928 = vpop.f32.mrf.mxu0
        %v5929 = vadd.f32 %v1257, %v5928
        %v5930 = vpop.f32.mrf.mxu0
        %v5931 = vadd.f32 %v1261, %v5930
        %5932 = vmatprep.mubr.bf16.mxu0 %v2595
        %5933 = vmatmul.mubr.bf16.gmra.mxu0 %v2594
        %v5934 = vpop.f32.mrf.mxu0
        %v5935 = vadd.f32 %v1257, %v5934
        %v5936 = vpop.f32.mrf.mxu0
        %v5937 = vadd.f32 %v1261, %v5936
        %v5938 = vpop.f32.mrf.mxu0
        %v5939 = vadd.f32 %v1257, %v5938
        %v5940 = vpop.f32.mrf.mxu0
        %v5941 = vadd.f32 %v1261, %v5940
        %5942 = vmatprep.mubr.bf16.mxu0 %v2611
        %5943 = vmatmul.mubr.bf16.gmra.mxu0 %v2610
        %v5944 = vpop.f32.mrf.mxu0
        %v5945 = vadd.f32 %v1257, %v5944
        %v5946 = vpop.f32.mrf.mxu0
        %v5947 = vadd.f32 %v1261, %v5946
        %v5948 = vpop.f32.mrf.mxu0
        %v5949 = vadd.f32 %v1257, %v5948
        %v5950 = vpop.f32.mrf.mxu0
        %v5951 = vadd.f32 %v1261, %v5950
        %5952 = vmatprep.mubr.bf16.mxu0 %v2627
        %5953 = vmatmul.mubr.bf16.gmra.mxu0 %v2626
        %v5954 = vpop.f32.mrf.mxu0
        %v5955 = vadd.f32 %v1257, %v5954
        %v5956 = vpop.f32.mrf.mxu0
        %v5957 = vadd.f32 %v1261, %v5956
        %v5958 = vpop.f32.mrf.mxu0
        %v5959 = vadd.f32 %v1257, %v5958
        %v5960 = vpop.f32.mrf.mxu0
        %v5961 = vadd.f32 %v1261, %v5960
        %5962 = vmatprep.mubr.bf16.mxu0 %v2643
        %5963 = vmatmul.mubr.bf16.gmra.mxu0 %v2642
        %v5964 = vpop.f32.mrf.mxu0
        %v5965 = vadd.f32 %v1257, %v5964
        %v5966 = vpop.f32.mrf.mxu0
        %v5967 = vadd.f32 %v1261, %v5966
        %v5968 = vpop.f32.mrf.mxu0
        %v5969 = vadd.f32 %v1257, %v5968
        %v5970 = vpop.f32.mrf.mxu0
        %v5971 = vadd.f32 %v1261, %v5970
        %5972 = vmatprep.mubr.bf16.mxu0 %v2659
        %5973 = vmatmul.mubr.bf16.gmra.mxu0 %v2658
        %v5974 = vpop.f32.mrf.mxu0
        %v5975 = vadd.f32 %v1257, %v5974
        %v5976 = vpop.f32.mrf.mxu0
        %v5977 = vadd.f32 %v1261, %v5976
        %v5978 = vpop.f32.mrf.mxu0
        %v5979 = vadd.f32 %v1257, %v5978
        %v5980 = vpop.f32.mrf.mxu0
        %v5981 = vadd.f32 %v1261, %v5980
        %5982 = vmatprep.mubr.bf16.mxu0 %v2675
        %5983 = vmatmul.mubr.bf16.gmra.mxu0 %v2674
        %v5984 = vpop.f32.mrf.mxu0
        %v5985 = vadd.f32 %v1257, %v5984
        %v5986 = vpop.f32.mrf.mxu0
        %v5987 = vadd.f32 %v1261, %v5986
        %v5988 = vpop.f32.mrf.mxu0
        %v5989 = vadd.f32 %v1257, %v5988
        %v5990 = vpop.f32.mrf.mxu0
        %v5991 = vadd.f32 %v1261, %v5990
        %5992 = vmatprep.mubr.bf16.mxu0 %v2691
        %5993 = vmatmul.mubr.bf16.gmra.mxu0 %v2690
        %v5994 = vpop.f32.mrf.mxu0
        %v5995 = vadd.f32 %v1257, %v5994
        %v5996 = vpop.f32.mrf.mxu0
        %v5997 = vadd.f32 %v1261, %v5996
        %v5998 = vpop.f32.mrf.mxu0
        %v5999 = vadd.f32 %v1257, %v5998
        %v6000 = vpop.f32.mrf.mxu0
        %v6001 = vadd.f32 %v1261, %v6000
        %6002 = vmatprep.mubr.bf16.mxu0 %v2707
        %6003 = vmatmul.mubr.bf16.gmra.mxu0 %v2706
        %v6004 = vpop.f32.mrf.mxu0
        %v6005 = vadd.f32 %v1257, %v6004
        %v6006 = vpop.f32.mrf.mxu0
        %v6007 = vadd.f32 %v1261, %v6006
        %v6008 = vpop.f32.mrf.mxu0
        %v6009 = vadd.f32 %v1257, %v6008
        %v6010 = vpop.f32.mrf.mxu0
        %v6011 = vadd.f32 %v1261, %v6010
        %6012 = vmatprep.mubr.bf16.mxu0 %v2723
        %6013 = vmatmul.mubr.bf16.gmra.mxu0 %v2722
        %v6014 = vpop.f32.mrf.mxu0
        %v6015 = vadd.f32 %v1257, %v6014
        %v6016 = vpop.f32.mrf.mxu0
        %v6017 = vadd.f32 %v1261, %v6016
        %v6018 = vpop.f32.mrf.mxu0
        %v6019 = vadd.f32 %v1257, %v6018
        %v6020 = vpop.f32.mrf.mxu0
        %v6021 = vadd.f32 %v1261, %v6020
        %6022 = vmatprep.mubr.bf16.mxu0 %v2739
        %6023 = vmatmul.mubr.bf16.gmra.mxu0 %v2738
        %v6024 = vpop.f32.mrf.mxu0
        %v6025 = vadd.f32 %v1257, %v6024
        %v6026 = vpop.f32.mrf.mxu0
        %v6027 = vadd.f32 %v1261, %v6026
        %v6028 = vpop.f32.mrf.mxu0
        %v6029 = vadd.f32 %v1257, %v6028
        %v6030 = vpop.f32.mrf.mxu0
        %v6031 = vadd.f32 %v1261, %v6030
        %6032 = vmatprep.mubr.bf16.mxu0 %v2755
        %6033 = vmatmul.mubr.bf16.gmra.mxu0 %v2754
        %v6034 = vpop.f32.mrf.mxu0
        %v6035 = vadd.f32 %v1257, %v6034
        %v6036 = vpop.f32.mrf.mxu0
        %v6037 = vadd.f32 %v1261, %v6036
        %v6038 = vpop.f32.mrf.mxu0
        %v6039 = vadd.f32 %v1257, %v6038
        %v6040 = vpop.f32.mrf.mxu0
        %v6041 = vadd.f32 %v1261, %v6040
        %6042 = vmatprep.mubr.bf16.mxu0 %v2771
        %6043 = vmatmul.mubr.bf16.gmra.mxu0 %v2770
        %v6044 = vpop.f32.mrf.mxu0
        %v6045 = vadd.f32 %v1257, %v6044
        %v6046 = vpop.f32.mrf.mxu0
        %v6047 = vadd.f32 %v1261, %v6046
        %v6048 = vpop.f32.mrf.mxu0
        %v6049 = vadd.f32 %v1257, %v6048
        %v6050 = vpop.f32.mrf.mxu0
        %v6051 = vadd.f32 %v1261, %v6050
        %6052 = vmatprep.mubr.bf16.mxu0 %v2787
        %6053 = vmatmul.mubr.bf16.gmra.mxu0 %v2786
        %v6054 = vpop.f32.mrf.mxu0
        %v6055 = vadd.f32 %v1257, %v6054
        %v6056 = vpop.f32.mrf.mxu0
        %v6057 = vadd.f32 %v1261, %v6056
        %v6058 = vpop.f32.mrf.mxu0
        %v6059 = vadd.f32 %v1257, %v6058
        %v6060 = vpop.f32.mrf.mxu0
        %v6061 = vadd.f32 %v1261, %v6060
        %6062 = vmatprep.mubr.bf16.mxu0 %v2803
        %6063 = vmatmul.mubr.bf16.gmra.mxu0 %v2802
        %v6064 = vpop.f32.mrf.mxu0
        %v6065 = vadd.f32 %v1257, %v6064
        %v6066 = vpop.f32.mrf.mxu0
        %v6067 = vadd.f32 %v1261, %v6066
        %v6068 = vpop.f32.mrf.mxu0
        %v6069 = vadd.f32 %v1257, %v6068
        %v6070 = vpop.f32.mrf.mxu0
        %v6071 = vadd.f32 %v1261, %v6070
        %6072 = vmatprep.mubr.bf16.mxu0 %v2819
        %6073 = vmatmul.mubr.bf16.gmra.mxu0 %v2818
        %v6074 = vpop.f32.mrf.mxu0
        %v6075 = vadd.f32 %v1257, %v6074
        %v6076 = vpop.f32.mrf.mxu0
        %v6077 = vadd.f32 %v1261, %v6076
        %v6078 = vpop.f32.mrf.mxu0
        %v6079 = vadd.f32 %v1257, %v6078
        %v6080 = vpop.f32.mrf.mxu0
        %v6081 = vadd.f32 %v1261, %v6080
        %6082 = vmatprep.mubr.bf16.mxu0 %v2835
        %6083 = vmatmul.mubr.bf16.gmra.mxu0 %v2834
        %v6084 = vpop.f32.mrf.mxu0
        %v6085 = vadd.f32 %v1257, %v6084
        %v6086 = vpop.f32.mrf.mxu0
        %v6087 = vadd.f32 %v1261, %v6086
        %v6088 = vpop.f32.mrf.mxu0
        %v6089 = vpop.f32.mrf.mxu0
        %6090 = vdwg.mxu0
        %6091 = vmatprep.subr.bf16.mxu0 %v4879
        %6092 = vmatpush1.bf16.msra.mxu0 %v4878
        %6093 = vmatprep.subr.bf16.mxu0 %v4875
        %6094 = vmatpush1.bf16.msra.mxu0 %v4874
        %6095 = vmatprep.subr.bf16.mxu0 %v4871
        %6096 = vmatpush1.bf16.msra.mxu0 %v4870
        %6097 = vmatprep.subr.bf16.mxu0 %v4867
        %6098 = vmatpush1.bf16.msra.mxu0 %v4866
        %6099 = vmatprep.subr.bf16.mxu0 %v4863
        %6100 = vmatpush1.bf16.msra.mxu0 %v4862
        %6101 = vmatprep.subr.bf16.mxu0 %v4859
        %6102 = vmatpush1.bf16.msra.mxu0 %v4858
        %6103 = vmatprep.subr.bf16.mxu0 %v4855
        %6104 = vmatpush1.bf16.msra.mxu0 %v4854
        %6105 = vmatprep.subr.bf16.mxu0 %v4851
        %6106 = vmatpush1.bf16.msra.mxu0 %v4850
        %6107 = vmatprep.subr.bf16.mxu0 %v4911
        %6108 = vmatpush2.bf16.msra.mxu0 %v4910
        %6109 = vmatprep.subr.bf16.mxu0 %v4907
        %6110 = vmatpush2.bf16.msra.mxu0 %v4906
        %6111 = vmatprep.subr.bf16.mxu0 %v4903
        %6112 = vmatpush2.bf16.msra.mxu0 %v4902
        %6113 = vmatprep.subr.bf16.mxu0 %v4899
        %6114 = vmatpush2.bf16.msra.mxu0 %v4898
        %6115 = vmatprep.subr.bf16.mxu0 %v4895
        %6116 = vmatpush2.bf16.msra.mxu0 %v4894
        %6117 = vmatprep.subr.bf16.mxu0 %v4891
        %6118 = vmatpush2.bf16.msra.mxu0 %v4890
        %6119 = vmatprep.subr.bf16.mxu0 %v4887
        %6120 = vmatpush2.bf16.msra.mxu0 %v4886
        %6121 = vmatprep.subr.bf16.mxu0 %v4883
        %6122 = vmatpush2.bf16.msra.mxu0 %v4882
        %6123 = vmatprep.mubr.bf16.mxu0 %v2453
        %6124 = vmatmul.mubr.bf16.gmra.mxu0 %v2452
        %v6125 = vpop.f32.mrf.mxu0
        %v6126 = vadd.f32 %v5845, %v6125
        %v6127 = vpop.f32.mrf.mxu0
        %v6128 = vadd.f32 %v5847, %v6127
        %v6129 = vpop.f32.mrf.mxu0
        %v6130 = vadd.f32 %v5849, %v6129
        %v6131 = vpop.f32.mrf.mxu0
        %v6132 = vadd.f32 %v5851, %v6131
        %6133 = vmatprep.mubr.bf16.mxu0 %v2469
        %6134 = vmatmul.mubr.bf16.gmra.mxu0 %v2468
        %v6135 = vpop.f32.mrf.mxu0
        %v6136 = vadd.f32 %v5855, %v6135
        %v6137 = vpop.f32.mrf.mxu0
        %v6138 = vadd.f32 %v5857, %v6137
        %v6139 = vpop.f32.mrf.mxu0
        %v6140 = vadd.f32 %v5859, %v6139
        %v6141 = vpop.f32.mrf.mxu0
        %v6142 = vadd.f32 %v5861, %v6141
        %6143 = vmatprep.mubr.bf16.mxu0 %v2485
        %6144 = vmatmul.mubr.bf16.gmra.mxu0 %v2484
        %v6145 = vpop.f32.mrf.mxu0
        %v6146 = vadd.f32 %v5865, %v6145
        %v6147 = vpop.f32.mrf.mxu0
        %v6148 = vadd.f32 %v5867, %v6147
        %v6149 = vpop.f32.mrf.mxu0
        %v6150 = vadd.f32 %v5869, %v6149
        %v6151 = vpop.f32.mrf.mxu0
        %v6152 = vadd.f32 %v5871, %v6151
        %6153 = vmatprep.mubr.bf16.mxu0 %v2501
        %6154 = vmatmul.mubr.bf16.gmra.mxu0 %v2500
        %v6155 = vpop.f32.mrf.mxu0
        %v6156 = vadd.f32 %v5875, %v6155
        %v6157 = vpop.f32.mrf.mxu0
        %v6158 = vadd.f32 %v5877, %v6157
        %v6159 = vpop.f32.mrf.mxu0
        %v6160 = vadd.f32 %v5879, %v6159
        %v6161 = vpop.f32.mrf.mxu0
        %v6162 = vadd.f32 %v5881, %v6161
        %6163 = vmatprep.mubr.bf16.mxu0 %v2517
        %6164 = vmatmul.mubr.bf16.gmra.mxu0 %v2516
        %v6165 = vpop.f32.mrf.mxu0
        %v6166 = vadd.f32 %v5885, %v6165
        %v6167 = vpop.f32.mrf.mxu0
        %v6168 = vadd.f32 %v5887, %v6167
        %v6169 = vpop.f32.mrf.mxu0
        %v6170 = vadd.f32 %v5889, %v6169
        %v6171 = vpop.f32.mrf.mxu0
        %v6172 = vadd.f32 %v5891, %v6171
        %6173 = vmatprep.mubr.bf16.mxu0 %v2533
        %6174 = vmatmul.mubr.bf16.gmra.mxu0 %v2532
        %v6175 = vpop.f32.mrf.mxu0
        %v6176 = vadd.f32 %v5895, %v6175
        %v6177 = vpop.f32.mrf.mxu0
        %v6178 = vadd.f32 %v5897, %v6177
        %v6179 = vpop.f32.mrf.mxu0
        %v6180 = vadd.f32 %v5899, %v6179
        %v6181 = vpop.f32.mrf.mxu0
        %v6182 = vadd.f32 %v5901, %v6181
        %6183 = vmatprep.mubr.bf16.mxu0 %v2549
        %6184 = vmatmul.mubr.bf16.gmra.mxu0 %v2548
        %v6185 = vpop.f32.mrf.mxu0
        %v6186 = vadd.f32 %v5905, %v6185
        %v6187 = vpop.f32.mrf.mxu0
        %v6188 = vadd.f32 %v5907, %v6187
        %v6189 = vpop.f32.mrf.mxu0
        %v6190 = vadd.f32 %v5909, %v6189
        %v6191 = vpop.f32.mrf.mxu0
        %v6192 = vadd.f32 %v5911, %v6191
        %6193 = vmatprep.mubr.bf16.mxu0 %v2565
        %6194 = vmatmul.mubr.bf16.gmra.mxu0 %v2564
        %v6195 = vpop.f32.mrf.mxu0
        %v6196 = vadd.f32 %v5915, %v6195
        %v6197 = vpop.f32.mrf.mxu0
        %v6198 = vadd.f32 %v5917, %v6197
        %v6199 = vpop.f32.mrf.mxu0
        %v6200 = vadd.f32 %v5919, %v6199
        %v6201 = vpop.f32.mrf.mxu0
        %v6202 = vadd.f32 %v5921, %v6201
        %6203 = vmatprep.mubr.bf16.mxu0 %v2581
        %6204 = vmatmul.mubr.bf16.gmra.mxu0 %v2580
        %v6205 = vpop.f32.mrf.mxu0
        %v6206 = vadd.f32 %v5925, %v6205
        %v6207 = vpop.f32.mrf.mxu0
        %v6208 = vadd.f32 %v5927, %v6207
        %v6209 = vpop.f32.mrf.mxu0
        %v6210 = vadd.f32 %v5929, %v6209
        %v6211 = vpop.f32.mrf.mxu0
        %v6212 = vadd.f32 %v5931, %v6211
        %6213 = vmatprep.mubr.bf16.mxu0 %v2597
        %6214 = vmatmul.mubr.bf16.gmra.mxu0 %v2596
        %v6215 = vpop.f32.mrf.mxu0
        %v6216 = vadd.f32 %v5935, %v6215
        %v6217 = vpop.f32.mrf.mxu0
        %v6218 = vadd.f32 %v5937, %v6217
        %v6219 = vpop.f32.mrf.mxu0
        %v6220 = vadd.f32 %v5939, %v6219
        %v6221 = vpop.f32.mrf.mxu0
        %v6222 = vadd.f32 %v5941, %v6221
        %6223 = vmatprep.mubr.bf16.mxu0 %v2613
        %6224 = vmatmul.mubr.bf16.gmra.mxu0 %v2612
        %v6225 = vpop.f32.mrf.mxu0
        %v6226 = vadd.f32 %v5945, %v6225
        %v6227 = vpop.f32.mrf.mxu0
        %v6228 = vadd.f32 %v5947, %v6227
        %v6229 = vpop.f32.mrf.mxu0
        %v6230 = vadd.f32 %v5949, %v6229
        %v6231 = vpop.f32.mrf.mxu0
        %v6232 = vadd.f32 %v5951, %v6231
        %6233 = vmatprep.mubr.bf16.mxu0 %v2629
        %6234 = vmatmul.mubr.bf16.gmra.mxu0 %v2628
        %v6235 = vpop.f32.mrf.mxu0
        %v6236 = vadd.f32 %v5955, %v6235
        %v6237 = vpop.f32.mrf.mxu0
        %v6238 = vadd.f32 %v5957, %v6237
        %v6239 = vpop.f32.mrf.mxu0
        %v6240 = vadd.f32 %v5959, %v6239
        %v6241 = vpop.f32.mrf.mxu0
        %v6242 = vadd.f32 %v5961, %v6241
        %6243 = vmatprep.mubr.bf16.mxu0 %v2645
        %6244 = vmatmul.mubr.bf16.gmra.mxu0 %v2644
        %v6245 = vpop.f32.mrf.mxu0
        %v6246 = vadd.f32 %v5965, %v6245
        %v6247 = vpop.f32.mrf.mxu0
        %v6248 = vadd.f32 %v5967, %v6247
        %v6249 = vpop.f32.mrf.mxu0
        %v6250 = vadd.f32 %v5969, %v6249
        %v6251 = vpop.f32.mrf.mxu0
        %v6252 = vadd.f32 %v5971, %v6251
        %6253 = vmatprep.mubr.bf16.mxu0 %v2661
        %6254 = vmatmul.mubr.bf16.gmra.mxu0 %v2660
        %v6255 = vpop.f32.mrf.mxu0
        %v6256 = vadd.f32 %v5975, %v6255
        %v6257 = vpop.f32.mrf.mxu0
        %v6258 = vadd.f32 %v5977, %v6257
        %v6259 = vpop.f32.mrf.mxu0
        %v6260 = vadd.f32 %v5979, %v6259
        %v6261 = vpop.f32.mrf.mxu0
        %v6262 = vadd.f32 %v5981, %v6261
        %6263 = vmatprep.mubr.bf16.mxu0 %v2677
        %6264 = vmatmul.mubr.bf16.gmra.mxu0 %v2676
        %v6265 = vpop.f32.mrf.mxu0
        %v6266 = vadd.f32 %v5985, %v6265
        %v6267 = vpop.f32.mrf.mxu0
        %v6268 = vadd.f32 %v5987, %v6267
        %v6269 = vpop.f32.mrf.mxu0
        %v6270 = vadd.f32 %v5989, %v6269
        %v6271 = vpop.f32.mrf.mxu0
        %v6272 = vadd.f32 %v5991, %v6271
        %6273 = vmatprep.mubr.bf16.mxu0 %v2693
        %6274 = vmatmul.mubr.bf16.gmra.mxu0 %v2692
        %v6275 = vpop.f32.mrf.mxu0
        %v6276 = vadd.f32 %v5995, %v6275
        %v6277 = vpop.f32.mrf.mxu0
        %v6278 = vadd.f32 %v5997, %v6277
        %v6279 = vpop.f32.mrf.mxu0
        %v6280 = vadd.f32 %v5999, %v6279
        %v6281 = vpop.f32.mrf.mxu0
        %v6282 = vadd.f32 %v6001, %v6281
        %6283 = vmatprep.mubr.bf16.mxu0 %v2709
        %6284 = vmatmul.mubr.bf16.gmra.mxu0 %v2708
        %v6285 = vpop.f32.mrf.mxu0
        %v6286 = vadd.f32 %v6005, %v6285
        %v6287 = vpop.f32.mrf.mxu0
        %v6288 = vadd.f32 %v6007, %v6287
        %v6289 = vpop.f32.mrf.mxu0
        %v6290 = vadd.f32 %v6009, %v6289
        %v6291 = vpop.f32.mrf.mxu0
        %v6292 = vadd.f32 %v6011, %v6291
        %6293 = vmatprep.mubr.bf16.mxu0 %v2725
        %6294 = vmatmul.mubr.bf16.gmra.mxu0 %v2724
        %v6295 = vpop.f32.mrf.mxu0
        %v6296 = vadd.f32 %v6015, %v6295
        %v6297 = vpop.f32.mrf.mxu0
        %v6298 = vadd.f32 %v6017, %v6297
        %v6299 = vpop.f32.mrf.mxu0
        %v6300 = vadd.f32 %v6019, %v6299
        %v6301 = vpop.f32.mrf.mxu0
        %v6302 = vadd.f32 %v6021, %v6301
        %6303 = vmatprep.mubr.bf16.mxu0 %v2741
        %6304 = vmatmul.mubr.bf16.gmra.mxu0 %v2740
        %v6305 = vpop.f32.mrf.mxu0
        %v6306 = vadd.f32 %v6025, %v6305
        %v6307 = vpop.f32.mrf.mxu0
        %v6308 = vadd.f32 %v6027, %v6307
        %v6309 = vpop.f32.mrf.mxu0
        %v6310 = vadd.f32 %v6029, %v6309
        %v6311 = vpop.f32.mrf.mxu0
        %v6312 = vadd.f32 %v6031, %v6311
        %6313 = vmatprep.mubr.bf16.mxu0 %v2757
        %6314 = vmatmul.mubr.bf16.gmra.mxu0 %v2756
        %v6315 = vpop.f32.mrf.mxu0
        %v6316 = vadd.f32 %v6035, %v6315
        %v6317 = vpop.f32.mrf.mxu0
        %v6318 = vadd.f32 %v6037, %v6317
        %v6319 = vpop.f32.mrf.mxu0
        %v6320 = vadd.f32 %v6039, %v6319
        %v6321 = vpop.f32.mrf.mxu0
        %v6322 = vadd.f32 %v6041, %v6321
        %6323 = vmatprep.mubr.bf16.mxu0 %v2773
        %6324 = vmatmul.mubr.bf16.gmra.mxu0 %v2772
        %v6325 = vpop.f32.mrf.mxu0
        %v6326 = vadd.f32 %v6045, %v6325
        %v6327 = vpop.f32.mrf.mxu0
        %v6328 = vadd.f32 %v6047, %v6327
        %v6329 = vpop.f32.mrf.mxu0
        %v6330 = vadd.f32 %v6049, %v6329
        %v6331 = vpop.f32.mrf.mxu0
        %v6332 = vadd.f32 %v6051, %v6331
        %6333 = vmatprep.mubr.bf16.mxu0 %v2789
        %6334 = vmatmul.mubr.bf16.gmra.mxu0 %v2788
        %v6335 = vpop.f32.mrf.mxu0
        %v6336 = vadd.f32 %v6055, %v6335
        %v6337 = vpop.f32.mrf.mxu0
        %v6338 = vadd.f32 %v6057, %v6337
        %v6339 = vpop.f32.mrf.mxu0
        %v6340 = vadd.f32 %v6059, %v6339
        %v6341 = vpop.f32.mrf.mxu0
        %v6342 = vadd.f32 %v6061, %v6341
        %6343 = vmatprep.mubr.bf16.mxu0 %v2805
        %6344 = vmatmul.mubr.bf16.gmra.mxu0 %v2804
        %v6345 = vpop.f32.mrf.mxu0
        %v6346 = vadd.f32 %v6065, %v6345
        %v6347 = vpop.f32.mrf.mxu0
        %v6348 = vadd.f32 %v6067, %v6347
        %v6349 = vpop.f32.mrf.mxu0
        %v6350 = vadd.f32 %v6069, %v6349
        %v6351 = vpop.f32.mrf.mxu0
        %v6352 = vadd.f32 %v6071, %v6351
        %6353 = vmatprep.mubr.bf16.mxu0 %v2821
        %6354 = vmatmul.mubr.bf16.gmra.mxu0 %v2820
        %v6355 = vpop.f32.mrf.mxu0
        %v6356 = vadd.f32 %v6075, %v6355
        %v6357 = vpop.f32.mrf.mxu0
        %v6358 = vadd.f32 %v6077, %v6357
        %v6359 = vpop.f32.mrf.mxu0
        %v6360 = vadd.f32 %v6079, %v6359
        %v6361 = vpop.f32.mrf.mxu0
        %v6362 = vadd.f32 %v6081, %v6361
        %6363 = vmatprep.mubr.bf16.mxu0 %v2837
        %6364 = vmatmul.mubr.bf16.gmra.mxu0 %v2836
        %v6365 = vpop.f32.mrf.mxu0
        %v6366 = vadd.f32 %v6085, %v6365
        %v6367 = vpop.f32.mrf.mxu0
        %v6368 = vadd.f32 %v6087, %v6367
        %v6369 = vpop.f32.mrf.mxu0
        %v6370 = vpop.f32.mrf.mxu0
        %6371 = vdwg.mxu0
        %6372 = vmatprep.subr.bf16.mxu0 %v4943
        %6373 = vmatpush1.bf16.msra.mxu0 %v4942
        %6374 = vmatprep.subr.bf16.mxu0 %v4939
        %6375 = vmatpush1.bf16.msra.mxu0 %v4938
        %6376 = vmatprep.subr.bf16.mxu0 %v4935
        %6377 = vmatpush1.bf16.msra.mxu0 %v4934
        %6378 = vmatprep.subr.bf16.mxu0 %v4931
        %6379 = vmatpush1.bf16.msra.mxu0 %v4930
        %6380 = vmatprep.subr.bf16.mxu0 %v4927
        %6381 = vmatpush1.bf16.msra.mxu0 %v4926
        %6382 = vmatprep.subr.bf16.mxu0 %v4923
        %6383 = vmatpush1.bf16.msra.mxu0 %v4922
        %6384 = vmatprep.subr.bf16.mxu0 %v4919
        %6385 = vmatpush1.bf16.msra.mxu0 %v4918
        %6386 = vmatprep.subr.bf16.mxu0 %v4915
        %6387 = vmatpush1.bf16.msra.mxu0 %v4914
        %6388 = vmatprep.subr.bf16.mxu0 %v4975
        %6389 = vmatpush2.bf16.msra.mxu0 %v4974
        %6390 = vmatprep.subr.bf16.mxu0 %v4971
        %6391 = vmatpush2.bf16.msra.mxu0 %v4970
        %6392 = vmatprep.subr.bf16.mxu0 %v4967
        %6393 = vmatpush2.bf16.msra.mxu0 %v4966
        %6394 = vmatprep.subr.bf16.mxu0 %v4963
        %6395 = vmatpush2.bf16.msra.mxu0 %v4962
        %6396 = vmatprep.subr.bf16.mxu0 %v4959
        %6397 = vmatpush2.bf16.msra.mxu0 %v4958
        %6398 = vmatprep.subr.bf16.mxu0 %v4955
        %6399 = vmatpush2.bf16.msra.mxu0 %v4954
        %6400 = vmatprep.subr.bf16.mxu0 %v4951
        %6401 = vmatpush2.bf16.msra.mxu0 %v4950
        %6402 = vmatprep.subr.bf16.mxu0 %v4947
        %6403 = vmatpush2.bf16.msra.mxu0 %v4946
        %6404 = vmatprep.mubr.bf16.mxu0 %v2455
        %6405 = vmatmul.mubr.bf16.gmra.mxu0 %v2454
        %v6406 = vpop.f32.mrf.mxu0
        %v6407 = vadd.f32 %v6126, %v6406
        %v6408 = vpop.f32.mrf.mxu0
        %v6409 = vadd.f32 %v6128, %v6408
        %v6410 = vpop.f32.mrf.mxu0
        %v6411 = vadd.f32 %v6130, %v6410
        %v6412 = vpop.f32.mrf.mxu0
        %v6413 = vadd.f32 %v6132, %v6412
        %6414 = vmatprep.mubr.bf16.mxu0 %v2471
        %6415 = vmatmul.mubr.bf16.gmra.mxu0 %v2470
        %v6416 = vpop.f32.mrf.mxu0
        %v6417 = vadd.f32 %v6136, %v6416
        %v6418 = vpop.f32.mrf.mxu0
        %v6419 = vadd.f32 %v6138, %v6418
        %v6420 = vpop.f32.mrf.mxu0
        %v6421 = vadd.f32 %v6140, %v6420
        %v6422 = vpop.f32.mrf.mxu0
        %v6423 = vadd.f32 %v6142, %v6422
        %6424 = vmatprep.mubr.bf16.mxu0 %v2487
        %6425 = vmatmul.mubr.bf16.gmra.mxu0 %v2486
        %v6426 = vpop.f32.mrf.mxu0
        %v6427 = vadd.f32 %v6146, %v6426
        %v6428 = vpop.f32.mrf.mxu0
        %v6429 = vadd.f32 %v6148, %v6428
        %v6430 = vpop.f32.mrf.mxu0
        %v6431 = vadd.f32 %v6150, %v6430
        %v6432 = vpop.f32.mrf.mxu0
        %v6433 = vadd.f32 %v6152, %v6432
        %6434 = vmatprep.mubr.bf16.mxu0 %v2503
        %6435 = vmatmul.mubr.bf16.gmra.mxu0 %v2502
        %v6436 = vpop.f32.mrf.mxu0
        %v6437 = vadd.f32 %v6156, %v6436
        %v6438 = vpop.f32.mrf.mxu0
        %v6439 = vadd.f32 %v6158, %v6438
        %v6440 = vpop.f32.mrf.mxu0
        %v6441 = vadd.f32 %v6160, %v6440
        %v6442 = vpop.f32.mrf.mxu0
        %v6443 = vadd.f32 %v6162, %v6442
        %6444 = vmatprep.mubr.bf16.mxu0 %v2519
        %6445 = vmatmul.mubr.bf16.gmra.mxu0 %v2518
        %v6446 = vpop.f32.mrf.mxu0
        %v6447 = vadd.f32 %v6166, %v6446
        %v6448 = vpop.f32.mrf.mxu0
        %v6449 = vadd.f32 %v6168, %v6448
        %v6450 = vpop.f32.mrf.mxu0
        %v6451 = vadd.f32 %v6170, %v6450
        %v6452 = vpop.f32.mrf.mxu0
        %v6453 = vadd.f32 %v6172, %v6452
        %6454 = vmatprep.mubr.bf16.mxu0 %v2535
        %6455 = vmatmul.mubr.bf16.gmra.mxu0 %v2534
        %v6456 = vpop.f32.mrf.mxu0
        %v6457 = vadd.f32 %v6176, %v6456
        %v6458 = vpop.f32.mrf.mxu0
        %v6459 = vadd.f32 %v6178, %v6458
        %v6460 = vpop.f32.mrf.mxu0
        %v6461 = vadd.f32 %v6180, %v6460
        %v6462 = vpop.f32.mrf.mxu0
        %v6463 = vadd.f32 %v6182, %v6462
        %6464 = vmatprep.mubr.bf16.mxu0 %v2551
        %6465 = vmatmul.mubr.bf16.gmra.mxu0 %v2550
        %v6466 = vpop.f32.mrf.mxu0
        %v6467 = vadd.f32 %v6186, %v6466
        %v6468 = vpop.f32.mrf.mxu0
        %v6469 = vadd.f32 %v6188, %v6468
        %v6470 = vpop.f32.mrf.mxu0
        %v6471 = vadd.f32 %v6190, %v6470
        %v6472 = vpop.f32.mrf.mxu0
        %v6473 = vadd.f32 %v6192, %v6472
        %6474 = vmatprep.mubr.bf16.mxu0 %v2567
        %6475 = vmatmul.mubr.bf16.gmra.mxu0 %v2566
        %v6476 = vpop.f32.mrf.mxu0
        %v6477 = vadd.f32 %v6196, %v6476
        %v6478 = vpop.f32.mrf.mxu0
        %v6479 = vadd.f32 %v6198, %v6478
        %v6480 = vpop.f32.mrf.mxu0
        %v6481 = vadd.f32 %v6200, %v6480
        %v6482 = vpop.f32.mrf.mxu0
        %v6483 = vadd.f32 %v6202, %v6482
        %6484 = vmatprep.mubr.bf16.mxu0 %v2583
        %6485 = vmatmul.mubr.bf16.gmra.mxu0 %v2582
        %v6486 = vpop.f32.mrf.mxu0
        %v6487 = vadd.f32 %v6206, %v6486
        %v6488 = vpop.f32.mrf.mxu0
        %v6489 = vadd.f32 %v6208, %v6488
        %v6490 = vpop.f32.mrf.mxu0
        %v6491 = vadd.f32 %v6210, %v6490
        %v6492 = vpop.f32.mrf.mxu0
        %v6493 = vadd.f32 %v6212, %v6492
        %6494 = vmatprep.mubr.bf16.mxu0 %v2599
        %6495 = vmatmul.mubr.bf16.gmra.mxu0 %v2598
        %v6496 = vpop.f32.mrf.mxu0
        %v6497 = vadd.f32 %v6216, %v6496
        %v6498 = vpop.f32.mrf.mxu0
        %v6499 = vadd.f32 %v6218, %v6498
        %v6500 = vpop.f32.mrf.mxu0
        %v6501 = vadd.f32 %v6220, %v6500
        %v6502 = vpop.f32.mrf.mxu0
        %v6503 = vadd.f32 %v6222, %v6502
        %6504 = vmatprep.mubr.bf16.mxu0 %v2615
        %6505 = vmatmul.mubr.bf16.gmra.mxu0 %v2614
        %v6506 = vpop.f32.mrf.mxu0
        %v6507 = vadd.f32 %v6226, %v6506
        %v6508 = vpop.f32.mrf.mxu0
        %v6509 = vadd.f32 %v6228, %v6508
        %v6510 = vpop.f32.mrf.mxu0
        %v6511 = vadd.f32 %v6230, %v6510
        %v6512 = vpop.f32.mrf.mxu0
        %v6513 = vadd.f32 %v6232, %v6512
        %6514 = vmatprep.mubr.bf16.mxu0 %v2631
        %6515 = vmatmul.mubr.bf16.gmra.mxu0 %v2630
        %v6516 = vpop.f32.mrf.mxu0
        %v6517 = vadd.f32 %v6236, %v6516
        %v6518 = vpop.f32.mrf.mxu0
        %v6519 = vadd.f32 %v6238, %v6518
        %v6520 = vpop.f32.mrf.mxu0
        %v6521 = vadd.f32 %v6240, %v6520
        %v6522 = vpop.f32.mrf.mxu0
        %v6523 = vadd.f32 %v6242, %v6522
        %6524 = vmatprep.mubr.bf16.mxu0 %v2647
        %6525 = vmatmul.mubr.bf16.gmra.mxu0 %v2646
        %v6526 = vpop.f32.mrf.mxu0
        %v6527 = vadd.f32 %v6246, %v6526
        %v6528 = vpop.f32.mrf.mxu0
        %v6529 = vadd.f32 %v6248, %v6528
        %v6530 = vpop.f32.mrf.mxu0
        %v6531 = vadd.f32 %v6250, %v6530
        %v6532 = vpop.f32.mrf.mxu0
        %v6533 = vadd.f32 %v6252, %v6532
        %6534 = vmatprep.mubr.bf16.mxu0 %v2663
        %6535 = vmatmul.mubr.bf16.gmra.mxu0 %v2662
        %v6536 = vpop.f32.mrf.mxu0
        %v6537 = vadd.f32 %v6256, %v6536
        %v6538 = vpop.f32.mrf.mxu0
        %v6539 = vadd.f32 %v6258, %v6538
        %v6540 = vpop.f32.mrf.mxu0
        %v6541 = vadd.f32 %v6260, %v6540
        %v6542 = vpop.f32.mrf.mxu0
        %v6543 = vadd.f32 %v6262, %v6542
        %6544 = vmatprep.mubr.bf16.mxu0 %v2679
        %6545 = vmatmul.mubr.bf16.gmra.mxu0 %v2678
        %v6546 = vpop.f32.mrf.mxu0
        %v6547 = vadd.f32 %v6266, %v6546
        %v6548 = vpop.f32.mrf.mxu0
        %v6549 = vadd.f32 %v6268, %v6548
        %v6550 = vpop.f32.mrf.mxu0
        %v6551 = vadd.f32 %v6270, %v6550
        %v6552 = vpop.f32.mrf.mxu0
        %v6553 = vadd.f32 %v6272, %v6552
        %6554 = vmatprep.mubr.bf16.mxu0 %v2695
        %6555 = vmatmul.mubr.bf16.gmra.mxu0 %v2694
        %v6556 = vpop.f32.mrf.mxu0
        %v6557 = vadd.f32 %v6276, %v6556
        %v6558 = vpop.f32.mrf.mxu0
        %v6559 = vadd.f32 %v6278, %v6558
        %v6560 = vpop.f32.mrf.mxu0
        %v6561 = vadd.f32 %v6280, %v6560
        %v6562 = vpop.f32.mrf.mxu0
        %v6563 = vadd.f32 %v6282, %v6562
        %6564 = vmatprep.mubr.bf16.mxu0 %v2711
        %6565 = vmatmul.mubr.bf16.gmra.mxu0 %v2710
        %v6566 = vpop.f32.mrf.mxu0
        %v6567 = vadd.f32 %v6286, %v6566
        %v6568 = vpop.f32.mrf.mxu0
        %v6569 = vadd.f32 %v6288, %v6568
        %v6570 = vpop.f32.mrf.mxu0
        %v6571 = vadd.f32 %v6290, %v6570
        %v6572 = vpop.f32.mrf.mxu0
        %v6573 = vadd.f32 %v6292, %v6572
        %6574 = vmatprep.mubr.bf16.mxu0 %v2727
        %6575 = vmatmul.mubr.bf16.gmra.mxu0 %v2726
        %v6576 = vpop.f32.mrf.mxu0
        %v6577 = vadd.f32 %v6296, %v6576
        %v6578 = vpop.f32.mrf.mxu0
        %v6579 = vadd.f32 %v6298, %v6578
        %v6580 = vpop.f32.mrf.mxu0
        %v6581 = vadd.f32 %v6300, %v6580
        %v6582 = vpop.f32.mrf.mxu0
        %v6583 = vadd.f32 %v6302, %v6582
        %6584 = vmatprep.mubr.bf16.mxu0 %v2743
        %6585 = vmatmul.mubr.bf16.gmra.mxu0 %v2742
        %v6586 = vpop.f32.mrf.mxu0
        %v6587 = vadd.f32 %v6306, %v6586
        %v6588 = vpop.f32.mrf.mxu0
        %v6589 = vadd.f32 %v6308, %v6588
        %v6590 = vpop.f32.mrf.mxu0
        %v6591 = vadd.f32 %v6310, %v6590
        %v6592 = vpop.f32.mrf.mxu0
        %v6593 = vadd.f32 %v6312, %v6592
        %6594 = vmatprep.mubr.bf16.mxu0 %v2759
        %6595 = vmatmul.mubr.bf16.gmra.mxu0 %v2758
        %v6596 = vpop.f32.mrf.mxu0
        %v6597 = vadd.f32 %v6316, %v6596
        %v6598 = vpop.f32.mrf.mxu0
        %v6599 = vadd.f32 %v6318, %v6598
        %v6600 = vpop.f32.mrf.mxu0
        %v6601 = vadd.f32 %v6320, %v6600
        %v6602 = vpop.f32.mrf.mxu0
        %v6603 = vadd.f32 %v6322, %v6602
        %6604 = vmatprep.mubr.bf16.mxu0 %v2775
        %6605 = vmatmul.mubr.bf16.gmra.mxu0 %v2774
        %v6606 = vpop.f32.mrf.mxu0
        %v6607 = vadd.f32 %v6326, %v6606
        %v6608 = vpop.f32.mrf.mxu0
        %v6609 = vadd.f32 %v6328, %v6608
        %v6610 = vpop.f32.mrf.mxu0
        %v6611 = vadd.f32 %v6330, %v6610
        %v6612 = vpop.f32.mrf.mxu0
        %v6613 = vadd.f32 %v6332, %v6612
        %6614 = vmatprep.mubr.bf16.mxu0 %v2791
        %6615 = vmatmul.mubr.bf16.gmra.mxu0 %v2790
        %v6616 = vpop.f32.mrf.mxu0
        %v6617 = vadd.f32 %v6336, %v6616
        %v6618 = vpop.f32.mrf.mxu0
        %v6619 = vadd.f32 %v6338, %v6618
        %v6620 = vpop.f32.mrf.mxu0
        %v6621 = vadd.f32 %v6340, %v6620
        %v6622 = vpop.f32.mrf.mxu0
        %v6623 = vadd.f32 %v6342, %v6622
        %6624 = vmatprep.mubr.bf16.mxu0 %v2807
        %6625 = vmatmul.mubr.bf16.gmra.mxu0 %v2806
        %v6626 = vpop.f32.mrf.mxu0
        %v6627 = vadd.f32 %v6346, %v6626
        %v6628 = vpop.f32.mrf.mxu0
        %v6629 = vadd.f32 %v6348, %v6628
        %v6630 = vpop.f32.mrf.mxu0
        %v6631 = vadd.f32 %v6350, %v6630
        %v6632 = vpop.f32.mrf.mxu0
        %v6633 = vadd.f32 %v6352, %v6632
        %6634 = vmatprep.mubr.bf16.mxu0 %v2823
        %6635 = vmatmul.mubr.bf16.gmra.mxu0 %v2822
        %v6636 = vpop.f32.mrf.mxu0
        %v6637 = vadd.f32 %v6356, %v6636
        %v6638 = vpop.f32.mrf.mxu0
        %v6639 = vadd.f32 %v6358, %v6638
        %v6640 = vpop.f32.mrf.mxu0
        %v6641 = vadd.f32 %v6360, %v6640
        %v6642 = vpop.f32.mrf.mxu0
        %v6643 = vadd.f32 %v6362, %v6642
        %6644 = vmatprep.mubr.bf16.mxu0 %v2839
        %6645 = vmatmul.mubr.bf16.gmra.mxu0 %v2838
        %v6646 = vpop.f32.mrf.mxu0
        %v6647 = vadd.f32 %v6366, %v6646
        %v6648 = vpop.f32.mrf.mxu0
        %v6649 = vadd.f32 %v6368, %v6648
        %v6650 = vpop.f32.mrf.mxu0
        %v6651 = vpop.f32.mrf.mxu0
        %6652 = vdwg.mxu0
        %6653 = vmatprep.subr.bf16.mxu0 %v5007
        %6654 = vmatpush1.bf16.msra.mxu0 %v5006
        %6655 = vmatprep.subr.bf16.mxu0 %v5003
        %6656 = vmatpush1.bf16.msra.mxu0 %v5002
        %6657 = vmatprep.subr.bf16.mxu0 %v4999
        %6658 = vmatpush1.bf16.msra.mxu0 %v4998
        %6659 = vmatprep.subr.bf16.mxu0 %v4995
        %6660 = vmatpush1.bf16.msra.mxu0 %v4994
        %6661 = vmatprep.subr.bf16.mxu0 %v4991
        %6662 = vmatpush1.bf16.msra.mxu0 %v4990
        %6663 = vmatprep.subr.bf16.mxu0 %v4987
        %6664 = vmatpush1.bf16.msra.mxu0 %v4986
        %6665 = vmatprep.subr.bf16.mxu0 %v4983
        %6666 = vmatpush1.bf16.msra.mxu0 %v4982
        %6667 = vmatprep.subr.bf16.mxu0 %v4979
        %6668 = vmatpush1.bf16.msra.mxu0 %v4978
        %6669 = vmatprep.subr.bf16.mxu0 %v5039
        %6670 = vmatpush2.bf16.msra.mxu0 %v5038
        %6671 = vmatprep.subr.bf16.mxu0 %v5035
        %6672 = vmatpush2.bf16.msra.mxu0 %v5034
        %6673 = vmatprep.subr.bf16.mxu0 %v5031
        %6674 = vmatpush2.bf16.msra.mxu0 %v5030
        %6675 = vmatprep.subr.bf16.mxu0 %v5027
        %6676 = vmatpush2.bf16.msra.mxu0 %v5026
        %6677 = vmatprep.subr.bf16.mxu0 %v5023
        %6678 = vmatpush2.bf16.msra.mxu0 %v5022
        %6679 = vmatprep.subr.bf16.mxu0 %v5019
        %6680 = vmatpush2.bf16.msra.mxu0 %v5018
        %6681 = vmatprep.subr.bf16.mxu0 %v5015
        %6682 = vmatpush2.bf16.msra.mxu0 %v5014
        %6683 = vmatprep.subr.bf16.mxu0 %v5011
        %6684 = vmatpush2.bf16.msra.mxu0 %v5010
        %6685 = vmatprep.mubr.bf16.mxu0 %v2457
        %6686 = vmatmul.mubr.bf16.gmra.mxu0 %v2456
        %v6687 = vpop.f32.mrf.mxu0
        %v6688 = vadd.f32 %v6407, %v6687
        %v6689 = vpop.f32.mrf.mxu0
        %v6690 = vadd.f32 %v6409, %v6689
        %v6691 = vpop.f32.mrf.mxu0
        %v6692 = vadd.f32 %v6411, %v6691
        %v6693 = vpop.f32.mrf.mxu0
        %v6694 = vadd.f32 %v6413, %v6693
        %6695 = vmatprep.mubr.bf16.mxu0 %v2473
        %6696 = vmatmul.mubr.bf16.gmra.mxu0 %v2472
        %v6697 = vpop.f32.mrf.mxu0
        %v6698 = vadd.f32 %v6417, %v6697
        %v6699 = vpop.f32.mrf.mxu0
        %v6700 = vadd.f32 %v6419, %v6699
        %v6701 = vpop.f32.mrf.mxu0
        %v6702 = vadd.f32 %v6421, %v6701
        %v6703 = vpop.f32.mrf.mxu0
        %v6704 = vadd.f32 %v6423, %v6703
        %6705 = vmatprep.mubr.bf16.mxu0 %v2489
        %6706 = vmatmul.mubr.bf16.gmra.mxu0 %v2488
        %v6707 = vpop.f32.mrf.mxu0
        %v6708 = vadd.f32 %v6427, %v6707
        %v6709 = vpop.f32.mrf.mxu0
        %v6710 = vadd.f32 %v6429, %v6709
        %v6711 = vpop.f32.mrf.mxu0
        %v6712 = vadd.f32 %v6431, %v6711
        %v6713 = vpop.f32.mrf.mxu0
        %v6714 = vadd.f32 %v6433, %v6713
        %6715 = vmatprep.mubr.bf16.mxu0 %v2505
        %6716 = vmatmul.mubr.bf16.gmra.mxu0 %v2504
        %v6717 = vpop.f32.mrf.mxu0
        %v6718 = vadd.f32 %v6437, %v6717
        %v6719 = vpop.f32.mrf.mxu0
        %v6720 = vadd.f32 %v6439, %v6719
        %v6721 = vpop.f32.mrf.mxu0
        %v6722 = vadd.f32 %v6441, %v6721
        %v6723 = vpop.f32.mrf.mxu0
        %v6724 = vadd.f32 %v6443, %v6723
        %6725 = vmatprep.mubr.bf16.mxu0 %v2521
        %6726 = vmatmul.mubr.bf16.gmra.mxu0 %v2520
        %v6727 = vpop.f32.mrf.mxu0
        %v6728 = vadd.f32 %v6447, %v6727
        %v6729 = vpop.f32.mrf.mxu0
        %v6730 = vadd.f32 %v6449, %v6729
        %v6731 = vpop.f32.mrf.mxu0
        %v6732 = vadd.f32 %v6451, %v6731
        %v6733 = vpop.f32.mrf.mxu0
        %v6734 = vadd.f32 %v6453, %v6733
        %6735 = vmatprep.mubr.bf16.mxu0 %v2537
        %6736 = vmatmul.mubr.bf16.gmra.mxu0 %v2536
        %v6737 = vpop.f32.mrf.mxu0
        %v6738 = vadd.f32 %v6457, %v6737
        %v6739 = vpop.f32.mrf.mxu0
        %v6740 = vadd.f32 %v6459, %v6739
        %v6741 = vpop.f32.mrf.mxu0
        %v6742 = vadd.f32 %v6461, %v6741
        %v6743 = vpop.f32.mrf.mxu0
        %v6744 = vadd.f32 %v6463, %v6743
        %6745 = vmatprep.mubr.bf16.mxu0 %v2553
        %6746 = vmatmul.mubr.bf16.gmra.mxu0 %v2552
        %v6747 = vpop.f32.mrf.mxu0
        %v6748 = vadd.f32 %v6467, %v6747
        %v6749 = vpop.f32.mrf.mxu0
        %v6750 = vadd.f32 %v6469, %v6749
        %v6751 = vpop.f32.mrf.mxu0
        %v6752 = vadd.f32 %v6471, %v6751
        %v6753 = vpop.f32.mrf.mxu0
        %v6754 = vadd.f32 %v6473, %v6753
        %6755 = vmatprep.mubr.bf16.mxu0 %v2569
        %6756 = vmatmul.mubr.bf16.gmra.mxu0 %v2568
        %v6757 = vpop.f32.mrf.mxu0
        %v6758 = vadd.f32 %v6477, %v6757
        %v6759 = vpop.f32.mrf.mxu0
        %v6760 = vadd.f32 %v6479, %v6759
        %v6761 = vpop.f32.mrf.mxu0
        %v6762 = vadd.f32 %v6481, %v6761
        %v6763 = vpop.f32.mrf.mxu0
        %v6764 = vadd.f32 %v6483, %v6763
        %6765 = vmatprep.mubr.bf16.mxu0 %v2585
        %6766 = vmatmul.mubr.bf16.gmra.mxu0 %v2584
        %v6767 = vpop.f32.mrf.mxu0
        %v6768 = vadd.f32 %v6487, %v6767
        %v6769 = vpop.f32.mrf.mxu0
        %v6770 = vadd.f32 %v6489, %v6769
        %v6771 = vpop.f32.mrf.mxu0
        %v6772 = vadd.f32 %v6491, %v6771
        %v6773 = vpop.f32.mrf.mxu0
        %v6774 = vadd.f32 %v6493, %v6773
        %6775 = vmatprep.mubr.bf16.mxu0 %v2601
        %6776 = vmatmul.mubr.bf16.gmra.mxu0 %v2600
        %v6777 = vpop.f32.mrf.mxu0
        %v6778 = vadd.f32 %v6497, %v6777
        %v6779 = vpop.f32.mrf.mxu0
        %v6780 = vadd.f32 %v6499, %v6779
        %v6781 = vpop.f32.mrf.mxu0
        %v6782 = vadd.f32 %v6501, %v6781
        %v6783 = vpop.f32.mrf.mxu0
        %v6784 = vadd.f32 %v6503, %v6783
        %6785 = vmatprep.mubr.bf16.mxu0 %v2617
        %6786 = vmatmul.mubr.bf16.gmra.mxu0 %v2616
        %v6787 = vpop.f32.mrf.mxu0
        %v6788 = vadd.f32 %v6507, %v6787
        %v6789 = vpop.f32.mrf.mxu0
        %v6790 = vadd.f32 %v6509, %v6789
        %v6791 = vpop.f32.mrf.mxu0
        %v6792 = vadd.f32 %v6511, %v6791
        %v6793 = vpop.f32.mrf.mxu0
        %v6794 = vadd.f32 %v6513, %v6793
        %6795 = vmatprep.mubr.bf16.mxu0 %v2633
        %6796 = vmatmul.mubr.bf16.gmra.mxu0 %v2632
        %v6797 = vpop.f32.mrf.mxu0
        %v6798 = vadd.f32 %v6517, %v6797
        %v6799 = vpop.f32.mrf.mxu0
        %v6800 = vadd.f32 %v6519, %v6799
        %v6801 = vpop.f32.mrf.mxu0
        %v6802 = vadd.f32 %v6521, %v6801
        %v6803 = vpop.f32.mrf.mxu0
        %v6804 = vadd.f32 %v6523, %v6803
        %6805 = vmatprep.mubr.bf16.mxu0 %v2649
        %6806 = vmatmul.mubr.bf16.gmra.mxu0 %v2648
        %v6807 = vpop.f32.mrf.mxu0
        %v6808 = vadd.f32 %v6527, %v6807
        %v6809 = vpop.f32.mrf.mxu0
        %v6810 = vadd.f32 %v6529, %v6809
        %v6811 = vpop.f32.mrf.mxu0
        %v6812 = vadd.f32 %v6531, %v6811
        %v6813 = vpop.f32.mrf.mxu0
        %v6814 = vadd.f32 %v6533, %v6813
        %6815 = vmatprep.mubr.bf16.mxu0 %v2665
        %6816 = vmatmul.mubr.bf16.gmra.mxu0 %v2664
        %v6817 = vpop.f32.mrf.mxu0
        %v6818 = vadd.f32 %v6537, %v6817
        %v6819 = vpop.f32.mrf.mxu0
        %v6820 = vadd.f32 %v6539, %v6819
        %v6821 = vpop.f32.mrf.mxu0
        %v6822 = vadd.f32 %v6541, %v6821
        %v6823 = vpop.f32.mrf.mxu0
        %v6824 = vadd.f32 %v6543, %v6823
        %6825 = vmatprep.mubr.bf16.mxu0 %v2681
        %6826 = vmatmul.mubr.bf16.gmra.mxu0 %v2680
        %v6827 = vpop.f32.mrf.mxu0
        %v6828 = vadd.f32 %v6547, %v6827
        %v6829 = vpop.f32.mrf.mxu0
        %v6830 = vadd.f32 %v6549, %v6829
        %v6831 = vpop.f32.mrf.mxu0
        %v6832 = vadd.f32 %v6551, %v6831
        %v6833 = vpop.f32.mrf.mxu0
        %v6834 = vadd.f32 %v6553, %v6833
        %6835 = vmatprep.mubr.bf16.mxu0 %v2697
        %6836 = vmatmul.mubr.bf16.gmra.mxu0 %v2696
        %v6837 = vpop.f32.mrf.mxu0
        %v6838 = vadd.f32 %v6557, %v6837
        %v6839 = vpop.f32.mrf.mxu0
        %v6840 = vadd.f32 %v6559, %v6839
        %v6841 = vpop.f32.mrf.mxu0
        %v6842 = vadd.f32 %v6561, %v6841
        %v6843 = vpop.f32.mrf.mxu0
        %v6844 = vadd.f32 %v6563, %v6843
        %6845 = vmatprep.mubr.bf16.mxu0 %v2713
        %6846 = vmatmul.mubr.bf16.gmra.mxu0 %v2712
        %v6847 = vpop.f32.mrf.mxu0
        %v6848 = vadd.f32 %v6567, %v6847
        %v6849 = vpop.f32.mrf.mxu0
        %v6850 = vadd.f32 %v6569, %v6849
        %v6851 = vpop.f32.mrf.mxu0
        %v6852 = vadd.f32 %v6571, %v6851
        %v6853 = vpop.f32.mrf.mxu0
        %v6854 = vadd.f32 %v6573, %v6853
        %6855 = vmatprep.mubr.bf16.mxu0 %v2729
        %6856 = vmatmul.mubr.bf16.gmra.mxu0 %v2728
        %v6857 = vpop.f32.mrf.mxu0
        %v6858 = vadd.f32 %v6577, %v6857
        %v6859 = vpop.f32.mrf.mxu0
        %v6860 = vadd.f32 %v6579, %v6859
        %v6861 = vpop.f32.mrf.mxu0
        %v6862 = vadd.f32 %v6581, %v6861
        %v6863 = vpop.f32.mrf.mxu0
        %v6864 = vadd.f32 %v6583, %v6863
        %6865 = vmatprep.mubr.bf16.mxu0 %v2745
        %6866 = vmatmul.mubr.bf16.gmra.mxu0 %v2744
        %v6867 = vpop.f32.mrf.mxu0
        %v6868 = vadd.f32 %v6587, %v6867
        %v6869 = vpop.f32.mrf.mxu0
        %v6870 = vadd.f32 %v6589, %v6869
        %v6871 = vpop.f32.mrf.mxu0
        %v6872 = vadd.f32 %v6591, %v6871
        %v6873 = vpop.f32.mrf.mxu0
        %v6874 = vadd.f32 %v6593, %v6873
        %6875 = vmatprep.mubr.bf16.mxu0 %v2761
        %6876 = vmatmul.mubr.bf16.gmra.mxu0 %v2760
        %v6877 = vpop.f32.mrf.mxu0
        %v6878 = vadd.f32 %v6597, %v6877
        %v6879 = vpop.f32.mrf.mxu0
        %v6880 = vadd.f32 %v6599, %v6879
        %v6881 = vpop.f32.mrf.mxu0
        %v6882 = vadd.f32 %v6601, %v6881
        %v6883 = vpop.f32.mrf.mxu0
        %v6884 = vadd.f32 %v6603, %v6883
        %6885 = vmatprep.mubr.bf16.mxu0 %v2777
        %6886 = vmatmul.mubr.bf16.gmra.mxu0 %v2776
        %v6887 = vpop.f32.mrf.mxu0
        %v6888 = vadd.f32 %v6607, %v6887
        %v6889 = vpop.f32.mrf.mxu0
        %v6890 = vadd.f32 %v6609, %v6889
        %v6891 = vpop.f32.mrf.mxu0
        %v6892 = vadd.f32 %v6611, %v6891
        %v6893 = vpop.f32.mrf.mxu0
        %v6894 = vadd.f32 %v6613, %v6893
        %6895 = vmatprep.mubr.bf16.mxu0 %v2793
        %6896 = vmatmul.mubr.bf16.gmra.mxu0 %v2792
        %v6897 = vpop.f32.mrf.mxu0
        %v6898 = vadd.f32 %v6617, %v6897
        %v6899 = vpop.f32.mrf.mxu0
        %v6900 = vadd.f32 %v6619, %v6899
        %v6901 = vpop.f32.mrf.mxu0
        %v6902 = vadd.f32 %v6621, %v6901
        %v6903 = vpop.f32.mrf.mxu0
        %v6904 = vadd.f32 %v6623, %v6903
        %6905 = vmatprep.mubr.bf16.mxu0 %v2809
        %6906 = vmatmul.mubr.bf16.gmra.mxu0 %v2808
        %v6907 = vpop.f32.mrf.mxu0
        %v6908 = vadd.f32 %v6627, %v6907
        %v6909 = vpop.f32.mrf.mxu0
        %v6910 = vadd.f32 %v6629, %v6909
        %v6911 = vpop.f32.mrf.mxu0
        %v6912 = vadd.f32 %v6631, %v6911
        %v6913 = vpop.f32.mrf.mxu0
        %v6914 = vadd.f32 %v6633, %v6913
        %6915 = vmatprep.mubr.bf16.mxu0 %v2825
        %6916 = vmatmul.mubr.bf16.gmra.mxu0 %v2824
        %v6917 = vpop.f32.mrf.mxu0
        %v6918 = vadd.f32 %v6637, %v6917
        %v6919 = vpop.f32.mrf.mxu0
        %v6920 = vadd.f32 %v6639, %v6919
        %v6921 = vpop.f32.mrf.mxu0
        %v6922 = vadd.f32 %v6641, %v6921
        %v6923 = vpop.f32.mrf.mxu0
        %v6924 = vadd.f32 %v6643, %v6923
        %6925 = vmatprep.mubr.bf16.mxu0 %v2841
        %6926 = vmatmul.mubr.bf16.gmra.mxu0 %v2840
        %v6927 = vpop.f32.mrf.mxu0
        %v6928 = vadd.f32 %v6647, %v6927
        %v6929 = vpop.f32.mrf.mxu0
        %v6930 = vadd.f32 %v6649, %v6929
        %v6931 = vpop.f32.mrf.mxu0
        %v6932 = vpop.f32.mrf.mxu0
        %6933 = vdwg.mxu0
        %6934 = vmatprep.subr.bf16.mxu0 %v5071
        %6935 = vmatpush1.bf16.msra.mxu0 %v5070
        %6936 = vmatprep.subr.bf16.mxu0 %v5067
        %6937 = vmatpush1.bf16.msra.mxu0 %v5066
        %6938 = vmatprep.subr.bf16.mxu0 %v5063
        %6939 = vmatpush1.bf16.msra.mxu0 %v5062
        %6940 = vmatprep.subr.bf16.mxu0 %v5059
        %6941 = vmatpush1.bf16.msra.mxu0 %v5058
        %6942 = vmatprep.subr.bf16.mxu0 %v5055
        %6943 = vmatpush1.bf16.msra.mxu0 %v5054
        %6944 = vmatprep.subr.bf16.mxu0 %v5051
        %6945 = vmatpush1.bf16.msra.mxu0 %v5050
        %6946 = vmatprep.subr.bf16.mxu0 %v5047
        %6947 = vmatpush1.bf16.msra.mxu0 %v5046
        %6948 = vmatprep.subr.bf16.mxu0 %v5043
        %6949 = vmatpush1.bf16.msra.mxu0 %v5042
        %6950 = vmatprep.subr.bf16.mxu0 %v5103
        %6951 = vmatpush2.bf16.msra.mxu0 %v5102
        %6952 = vmatprep.subr.bf16.mxu0 %v5099
        %6953 = vmatpush2.bf16.msra.mxu0 %v5098
        %6954 = vmatprep.subr.bf16.mxu0 %v5095
        %6955 = vmatpush2.bf16.msra.mxu0 %v5094
        %6956 = vmatprep.subr.bf16.mxu0 %v5091
        %6957 = vmatpush2.bf16.msra.mxu0 %v5090
        %6958 = vmatprep.subr.bf16.mxu0 %v5087
        %6959 = vmatpush2.bf16.msra.mxu0 %v5086
        %6960 = vmatprep.subr.bf16.mxu0 %v5083
        %6961 = vmatpush2.bf16.msra.mxu0 %v5082
        %6962 = vmatprep.subr.bf16.mxu0 %v5079
        %6963 = vmatpush2.bf16.msra.mxu0 %v5078
        %6964 = vmatprep.subr.bf16.mxu0 %v5075
        %6965 = vmatpush2.bf16.msra.mxu0 %v5074
        %6966 = vmatprep.mubr.bf16.mxu0 %v2459
        %6967 = vmatmul.mubr.bf16.gmra.mxu0 %v2458
        %v6968 = vpop.f32.mrf.mxu0
        %v6969 = vadd.f32 %v6688, %v6968
        %v6970 = vpop.f32.mrf.mxu0
        %v6971 = vadd.f32 %v6690, %v6970
        %v6972 = vpop.f32.mrf.mxu0
        %v6973 = vadd.f32 %v6692, %v6972
        %v6974 = vpop.f32.mrf.mxu0
        %v6975 = vadd.f32 %v6694, %v6974
        %6976 = vmatprep.mubr.bf16.mxu0 %v2475
        %6977 = vmatmul.mubr.bf16.gmra.mxu0 %v2474
        %v6978 = vpop.f32.mrf.mxu0
        %v6979 = vadd.f32 %v6698, %v6978
        %v6980 = vpop.f32.mrf.mxu0
        %v6981 = vadd.f32 %v6700, %v6980
        %v6982 = vpop.f32.mrf.mxu0
        %v6983 = vadd.f32 %v6702, %v6982
        %v6984 = vpop.f32.mrf.mxu0
        %v6985 = vadd.f32 %v6704, %v6984
        %6986 = vmatprep.mubr.bf16.mxu0 %v2491
        %6987 = vmatmul.mubr.bf16.gmra.mxu0 %v2490
        %v6988 = vpop.f32.mrf.mxu0
        %v6989 = vadd.f32 %v6708, %v6988
        %v6990 = vpop.f32.mrf.mxu0
        %v6991 = vadd.f32 %v6710, %v6990
        %v6992 = vpop.f32.mrf.mxu0
        %v6993 = vadd.f32 %v6712, %v6992
        %v6994 = vpop.f32.mrf.mxu0
        %v6995 = vadd.f32 %v6714, %v6994
        %6996 = vmatprep.mubr.bf16.mxu0 %v2507
        %6997 = vmatmul.mubr.bf16.gmra.mxu0 %v2506
        %v6998 = vpop.f32.mrf.mxu0
        %v6999 = vadd.f32 %v6718, %v6998
        %v7000 = vpop.f32.mrf.mxu0
        %v7001 = vadd.f32 %v6720, %v7000
        %v7002 = vpop.f32.mrf.mxu0
        %v7003 = vadd.f32 %v6722, %v7002
        %v7004 = vpop.f32.mrf.mxu0
        %v7005 = vadd.f32 %v6724, %v7004
        %7006 = vmatprep.mubr.bf16.mxu0 %v2523
        %7007 = vmatmul.mubr.bf16.gmra.mxu0 %v2522
        %v7008 = vpop.f32.mrf.mxu0
        %v7009 = vadd.f32 %v6728, %v7008
        %v7010 = vpop.f32.mrf.mxu0
        %v7011 = vadd.f32 %v6730, %v7010
        %v7012 = vpop.f32.mrf.mxu0
        %v7013 = vadd.f32 %v6732, %v7012
        %v7014 = vpop.f32.mrf.mxu0
        %v7015 = vadd.f32 %v6734, %v7014
        %7016 = vmatprep.mubr.bf16.mxu0 %v2539
        %7017 = vmatmul.mubr.bf16.gmra.mxu0 %v2538
        %v7018 = vpop.f32.mrf.mxu0
        %v7019 = vadd.f32 %v6738, %v7018
        %v7020 = vpop.f32.mrf.mxu0
        %v7021 = vadd.f32 %v6740, %v7020
        %v7022 = vpop.f32.mrf.mxu0
        %v7023 = vadd.f32 %v6742, %v7022
        %v7024 = vpop.f32.mrf.mxu0
        %v7025 = vadd.f32 %v6744, %v7024
        %7026 = vmatprep.mubr.bf16.mxu0 %v2555
        %7027 = vmatmul.mubr.bf16.gmra.mxu0 %v2554
        %v7028 = vpop.f32.mrf.mxu0
        %v7029 = vadd.f32 %v6748, %v7028
        %v7030 = vpop.f32.mrf.mxu0
        %v7031 = vadd.f32 %v6750, %v7030
        %v7032 = vpop.f32.mrf.mxu0
        %v7033 = vadd.f32 %v6752, %v7032
        %v7034 = vpop.f32.mrf.mxu0
        %v7035 = vadd.f32 %v6754, %v7034
        %7036 = vmatprep.mubr.bf16.mxu0 %v2571
        %7037 = vmatmul.mubr.bf16.gmra.mxu0 %v2570
        %v7038 = vpop.f32.mrf.mxu0
        %v7039 = vadd.f32 %v6758, %v7038
        %v7040 = vpop.f32.mrf.mxu0
        %v7041 = vadd.f32 %v6760, %v7040
        %v7042 = vpop.f32.mrf.mxu0
        %v7043 = vadd.f32 %v6762, %v7042
        %v7044 = vpop.f32.mrf.mxu0
        %v7045 = vadd.f32 %v6764, %v7044
        %7046 = vmatprep.mubr.bf16.mxu0 %v2587
        %7047 = vmatmul.mubr.bf16.gmra.mxu0 %v2586
        %v7048 = vpop.f32.mrf.mxu0
        %v7049 = vadd.f32 %v6768, %v7048
        %v7050 = vpop.f32.mrf.mxu0
        %v7051 = vadd.f32 %v6770, %v7050
        %v7052 = vpop.f32.mrf.mxu0
        %v7053 = vadd.f32 %v6772, %v7052
        %v7054 = vpop.f32.mrf.mxu0
        %v7055 = vadd.f32 %v6774, %v7054
        %7056 = vmatprep.mubr.bf16.mxu0 %v2603
        %7057 = vmatmul.mubr.bf16.gmra.mxu0 %v2602
        %v7058 = vpop.f32.mrf.mxu0
        %v7059 = vadd.f32 %v6778, %v7058
        %v7060 = vpop.f32.mrf.mxu0
        %v7061 = vadd.f32 %v6780, %v7060
        %v7062 = vpop.f32.mrf.mxu0
        %v7063 = vadd.f32 %v6782, %v7062
        %v7064 = vpop.f32.mrf.mxu0
        %v7065 = vadd.f32 %v6784, %v7064
        %7066 = vmatprep.mubr.bf16.mxu0 %v2619
        %7067 = vmatmul.mubr.bf16.gmra.mxu0 %v2618
        %v7068 = vpop.f32.mrf.mxu0
        %v7069 = vadd.f32 %v6788, %v7068
        %v7070 = vpop.f32.mrf.mxu0
        %v7071 = vadd.f32 %v6790, %v7070
        %v7072 = vpop.f32.mrf.mxu0
        %v7073 = vadd.f32 %v6792, %v7072
        %v7074 = vpop.f32.mrf.mxu0
        %v7075 = vadd.f32 %v6794, %v7074
        %7076 = vmatprep.mubr.bf16.mxu0 %v2635
        %7077 = vmatmul.mubr.bf16.gmra.mxu0 %v2634
        %v7078 = vpop.f32.mrf.mxu0
        %v7079 = vadd.f32 %v6798, %v7078
        %v7080 = vpop.f32.mrf.mxu0
        %v7081 = vadd.f32 %v6800, %v7080
        %v7082 = vpop.f32.mrf.mxu0
        %v7083 = vadd.f32 %v6802, %v7082
        %v7084 = vpop.f32.mrf.mxu0
        %v7085 = vadd.f32 %v6804, %v7084
        %7086 = vmatprep.mubr.bf16.mxu0 %v2651
        %7087 = vmatmul.mubr.bf16.gmra.mxu0 %v2650
        %v7088 = vpop.f32.mrf.mxu0
        %v7089 = vadd.f32 %v6808, %v7088
        %v7090 = vpop.f32.mrf.mxu0
        %v7091 = vadd.f32 %v6810, %v7090
        %v7092 = vpop.f32.mrf.mxu0
        %v7093 = vadd.f32 %v6812, %v7092
        %v7094 = vpop.f32.mrf.mxu0
        %v7095 = vadd.f32 %v6814, %v7094
        %7096 = vmatprep.mubr.bf16.mxu0 %v2667
        %7097 = vmatmul.mubr.bf16.gmra.mxu0 %v2666
        %v7098 = vpop.f32.mrf.mxu0
        %v7099 = vadd.f32 %v6818, %v7098
        %v7100 = vpop.f32.mrf.mxu0
        %v7101 = vadd.f32 %v6820, %v7100
        %v7102 = vpop.f32.mrf.mxu0
        %v7103 = vadd.f32 %v6822, %v7102
        %v7104 = vpop.f32.mrf.mxu0
        %v7105 = vadd.f32 %v6824, %v7104
        %7106 = vmatprep.mubr.bf16.mxu0 %v2683
        %7107 = vmatmul.mubr.bf16.gmra.mxu0 %v2682
        %v7108 = vpop.f32.mrf.mxu0
        %v7109 = vadd.f32 %v6828, %v7108
        %v7110 = vpop.f32.mrf.mxu0
        %v7111 = vadd.f32 %v6830, %v7110
        %v7112 = vpop.f32.mrf.mxu0
        %v7113 = vadd.f32 %v6832, %v7112
        %v7114 = vpop.f32.mrf.mxu0
        %v7115 = vadd.f32 %v6834, %v7114
        %7116 = vmatprep.mubr.bf16.mxu0 %v2699
        %7117 = vmatmul.mubr.bf16.gmra.mxu0 %v2698
        %v7118 = vpop.f32.mrf.mxu0
        %v7119 = vadd.f32 %v6838, %v7118
        %v7120 = vpop.f32.mrf.mxu0
        %v7121 = vadd.f32 %v6840, %v7120
        %v7122 = vpop.f32.mrf.mxu0
        %v7123 = vadd.f32 %v6842, %v7122
        %v7124 = vpop.f32.mrf.mxu0
        %v7125 = vadd.f32 %v6844, %v7124
        %7126 = vmatprep.mubr.bf16.mxu0 %v2715
        %7127 = vmatmul.mubr.bf16.gmra.mxu0 %v2714
        %v7128 = vpop.f32.mrf.mxu0
        %v7129 = vadd.f32 %v6848, %v7128
        %v7130 = vpop.f32.mrf.mxu0
        %v7131 = vadd.f32 %v6850, %v7130
        %v7132 = vpop.f32.mrf.mxu0
        %v7133 = vadd.f32 %v6852, %v7132
        %v7134 = vpop.f32.mrf.mxu0
        %v7135 = vadd.f32 %v6854, %v7134
        %7136 = vmatprep.mubr.bf16.mxu0 %v2731
        %7137 = vmatmul.mubr.bf16.gmra.mxu0 %v2730
        %v7138 = vpop.f32.mrf.mxu0
        %v7139 = vadd.f32 %v6858, %v7138
        %v7140 = vpop.f32.mrf.mxu0
        %v7141 = vadd.f32 %v6860, %v7140
        %v7142 = vpop.f32.mrf.mxu0
        %v7143 = vadd.f32 %v6862, %v7142
        %v7144 = vpop.f32.mrf.mxu0
        %v7145 = vadd.f32 %v6864, %v7144
        %7146 = vmatprep.mubr.bf16.mxu0 %v2747
        %7147 = vmatmul.mubr.bf16.gmra.mxu0 %v2746
        %v7148 = vpop.f32.mrf.mxu0
        %v7149 = vadd.f32 %v6868, %v7148
        %v7150 = vpop.f32.mrf.mxu0
        %v7151 = vadd.f32 %v6870, %v7150
        %v7152 = vpop.f32.mrf.mxu0
        %v7153 = vadd.f32 %v6872, %v7152
        %v7154 = vpop.f32.mrf.mxu0
        %v7155 = vadd.f32 %v6874, %v7154
        %7156 = vmatprep.mubr.bf16.mxu0 %v2763
        %7157 = vmatmul.mubr.bf16.gmra.mxu0 %v2762
        %v7158 = vpop.f32.mrf.mxu0
        %v7159 = vadd.f32 %v6878, %v7158
        %v7160 = vpop.f32.mrf.mxu0
        %v7161 = vadd.f32 %v6880, %v7160
        %v7162 = vpop.f32.mrf.mxu0
        %v7163 = vadd.f32 %v6882, %v7162
        %v7164 = vpop.f32.mrf.mxu0
        %v7165 = vadd.f32 %v6884, %v7164
        %7166 = vmatprep.mubr.bf16.mxu0 %v2779
        %7167 = vmatmul.mubr.bf16.gmra.mxu0 %v2778
        %v7168 = vpop.f32.mrf.mxu0
        %v7169 = vadd.f32 %v6888, %v7168
        %v7170 = vpop.f32.mrf.mxu0
        %v7171 = vadd.f32 %v6890, %v7170
        %v7172 = vpop.f32.mrf.mxu0
        %v7173 = vadd.f32 %v6892, %v7172
        %v7174 = vpop.f32.mrf.mxu0
        %v7175 = vadd.f32 %v6894, %v7174
        %7176 = vmatprep.mubr.bf16.mxu0 %v2795
        %7177 = vmatmul.mubr.bf16.gmra.mxu0 %v2794
        %v7178 = vpop.f32.mrf.mxu0
        %v7179 = vadd.f32 %v6898, %v7178
        %v7180 = vpop.f32.mrf.mxu0
        %v7181 = vadd.f32 %v6900, %v7180
        %v7182 = vpop.f32.mrf.mxu0
        %v7183 = vadd.f32 %v6902, %v7182
        %v7184 = vpop.f32.mrf.mxu0
        %v7185 = vadd.f32 %v6904, %v7184
        %7186 = vmatprep.mubr.bf16.mxu0 %v2811
        %7187 = vmatmul.mubr.bf16.gmra.mxu0 %v2810
        %v7188 = vpop.f32.mrf.mxu0
        %v7189 = vadd.f32 %v6908, %v7188
        %v7190 = vpop.f32.mrf.mxu0
        %v7191 = vadd.f32 %v6910, %v7190
        %v7192 = vpop.f32.mrf.mxu0
        %v7193 = vadd.f32 %v6912, %v7192
        %v7194 = vpop.f32.mrf.mxu0
        %v7195 = vadd.f32 %v6914, %v7194
        %7196 = vmatprep.mubr.bf16.mxu0 %v2827
        %7197 = vmatmul.mubr.bf16.gmra.mxu0 %v2826
        %v7198 = vpop.f32.mrf.mxu0
        %v7199 = vadd.f32 %v6918, %v7198
        %v7200 = vpop.f32.mrf.mxu0
        %v7201 = vadd.f32 %v6920, %v7200
        %v7202 = vpop.f32.mrf.mxu0
        %v7203 = vadd.f32 %v6922, %v7202
        %v7204 = vpop.f32.mrf.mxu0
        %v7205 = vadd.f32 %v6924, %v7204
        %7206 = vmatprep.mubr.bf16.mxu0 %v2843
        %7207 = vmatmul.mubr.bf16.gmra.mxu0 %v2842
        %v7208 = vpop.f32.mrf.mxu0
        %v7209 = vadd.f32 %v6928, %v7208
        %v7210 = vpop.f32.mrf.mxu0
        %v7211 = vadd.f32 %v6930, %v7210
        %v7212 = vpop.f32.mrf.mxu0
        %v7213 = vpop.f32.mrf.mxu0
        %7214 = vdwg.mxu0
        %7215 = vmatprep.subr.bf16.mxu0 %v5135
        %7216 = vmatpush1.bf16.msra.mxu0 %v5134
        %7217 = vmatprep.subr.bf16.mxu0 %v5131
        %7218 = vmatpush1.bf16.msra.mxu0 %v5130
        %7219 = vmatprep.subr.bf16.mxu0 %v5127
        %7220 = vmatpush1.bf16.msra.mxu0 %v5126
        %7221 = vmatprep.subr.bf16.mxu0 %v5123
        %7222 = vmatpush1.bf16.msra.mxu0 %v5122
        %7223 = vmatprep.subr.bf16.mxu0 %v5119
        %7224 = vmatpush1.bf16.msra.mxu0 %v5118
        %7225 = vmatprep.subr.bf16.mxu0 %v5115
        %7226 = vmatpush1.bf16.msra.mxu0 %v5114
        %7227 = vmatprep.subr.bf16.mxu0 %v5111
        %7228 = vmatpush1.bf16.msra.mxu0 %v5110
        %7229 = vmatprep.subr.bf16.mxu0 %v5107
        %7230 = vmatpush1.bf16.msra.mxu0 %v5106
        %7231 = vmatprep.subr.bf16.mxu0 %v5167
        %7232 = vmatpush2.bf16.msra.mxu0 %v5166
        %7233 = vmatprep.subr.bf16.mxu0 %v5163
        %7234 = vmatpush2.bf16.msra.mxu0 %v5162
        %7235 = vmatprep.subr.bf16.mxu0 %v5159
        %7236 = vmatpush2.bf16.msra.mxu0 %v5158
        %7237 = vmatprep.subr.bf16.mxu0 %v5155
        %7238 = vmatpush2.bf16.msra.mxu0 %v5154
        %7239 = vmatprep.subr.bf16.mxu0 %v5151
        %7240 = vmatpush2.bf16.msra.mxu0 %v5150
        %7241 = vmatprep.subr.bf16.mxu0 %v5147
        %7242 = vmatpush2.bf16.msra.mxu0 %v5146
        %7243 = vmatprep.subr.bf16.mxu0 %v5143
        %7244 = vmatpush2.bf16.msra.mxu0 %v5142
        %7245 = vmatprep.subr.bf16.mxu0 %v5139
        %7246 = vmatpush2.bf16.msra.mxu0 %v5138
        %7247 = vmatprep.mubr.bf16.mxu0 %v2461
        %7248 = vmatmul.mubr.bf16.gmra.mxu0 %v2460
        %v7249 = vpop.f32.mrf.mxu0
        %v7250 = vadd.f32 %v6969, %v7249
        %v7251 = vpop.f32.mrf.mxu0
        %v7252 = vadd.f32 %v6971, %v7251
        %v7253 = vpop.f32.mrf.mxu0
        %v7254 = vadd.f32 %v6973, %v7253
        %v7255 = vpop.f32.mrf.mxu0
        %v7256 = vadd.f32 %v6975, %v7255
        %7257 = vmatprep.mubr.bf16.mxu0 %v2477
        %7258 = vmatmul.mubr.bf16.gmra.mxu0 %v2476
        %v7259 = vpop.f32.mrf.mxu0
        %v7260 = vadd.f32 %v6979, %v7259
        %v7261 = vpop.f32.mrf.mxu0
        %v7262 = vadd.f32 %v6981, %v7261
        %v7263 = vpop.f32.mrf.mxu0
        %v7264 = vadd.f32 %v6983, %v7263
        %v7265 = vpop.f32.mrf.mxu0
        %v7266 = vadd.f32 %v6985, %v7265
        %7267 = vmatprep.mubr.bf16.mxu0 %v2493
        %7268 = vmatmul.mubr.bf16.gmra.mxu0 %v2492
        %v7269 = vpop.f32.mrf.mxu0
        %v7270 = vadd.f32 %v6989, %v7269
        %v7271 = vpop.f32.mrf.mxu0
        %v7272 = vadd.f32 %v6991, %v7271
        %v7273 = vpop.f32.mrf.mxu0
        %v7274 = vadd.f32 %v6993, %v7273
        %v7275 = vpop.f32.mrf.mxu0
        %v7276 = vadd.f32 %v6995, %v7275
        %7277 = vmatprep.mubr.bf16.mxu0 %v2509
        %7278 = vmatmul.mubr.bf16.gmra.mxu0 %v2508
        %v7279 = vpop.f32.mrf.mxu0
        %v7280 = vadd.f32 %v6999, %v7279
        %v7281 = vpop.f32.mrf.mxu0
        %v7282 = vadd.f32 %v7001, %v7281
        %v7283 = vpop.f32.mrf.mxu0
        %v7284 = vadd.f32 %v7003, %v7283
        %v7285 = vpop.f32.mrf.mxu0
        %v7286 = vadd.f32 %v7005, %v7285
        %7287 = vmatprep.mubr.bf16.mxu0 %v2525
        %7288 = vmatmul.mubr.bf16.gmra.mxu0 %v2524
        %v7289 = vpop.f32.mrf.mxu0
        %v7290 = vadd.f32 %v7009, %v7289
        %v7291 = vpop.f32.mrf.mxu0
        %v7292 = vadd.f32 %v7011, %v7291
        %v7293 = vpop.f32.mrf.mxu0
        %v7294 = vadd.f32 %v7013, %v7293
        %v7295 = vpop.f32.mrf.mxu0
        %v7296 = vadd.f32 %v7015, %v7295
        %7297 = vmatprep.mubr.bf16.mxu0 %v2541
        %7298 = vmatmul.mubr.bf16.gmra.mxu0 %v2540
        %v7299 = vpop.f32.mrf.mxu0
        %v7300 = vadd.f32 %v7019, %v7299
        %v7301 = vpop.f32.mrf.mxu0
        %v7302 = vadd.f32 %v7021, %v7301
        %v7303 = vpop.f32.mrf.mxu0
        %v7304 = vadd.f32 %v7023, %v7303
        %v7305 = vpop.f32.mrf.mxu0
        %v7306 = vadd.f32 %v7025, %v7305
        %7307 = vmatprep.mubr.bf16.mxu0 %v2557
        %7308 = vmatmul.mubr.bf16.gmra.mxu0 %v2556
        %v7309 = vpop.f32.mrf.mxu0
        %v7310 = vadd.f32 %v7029, %v7309
        %v7311 = vpop.f32.mrf.mxu0
        %v7312 = vadd.f32 %v7031, %v7311
        %v7313 = vpop.f32.mrf.mxu0
        %v7314 = vadd.f32 %v7033, %v7313
        %v7315 = vpop.f32.mrf.mxu0
        %v7316 = vadd.f32 %v7035, %v7315
        %7317 = vmatprep.mubr.bf16.mxu0 %v2573
        %7318 = vmatmul.mubr.bf16.gmra.mxu0 %v2572
        %v7319 = vpop.f32.mrf.mxu0
        %v7320 = vadd.f32 %v7039, %v7319
        %v7321 = vpop.f32.mrf.mxu0
        %v7322 = vadd.f32 %v7041, %v7321
        %v7323 = vpop.f32.mrf.mxu0
        %v7324 = vadd.f32 %v7043, %v7323
        %v7325 = vpop.f32.mrf.mxu0
        %v7326 = vadd.f32 %v7045, %v7325
        %7327 = vmatprep.mubr.bf16.mxu0 %v2589
        %7328 = vmatmul.mubr.bf16.gmra.mxu0 %v2588
        %v7329 = vpop.f32.mrf.mxu0
        %v7330 = vadd.f32 %v7049, %v7329
        %v7331 = vpop.f32.mrf.mxu0
        %v7332 = vadd.f32 %v7051, %v7331
        %v7333 = vpop.f32.mrf.mxu0
        %v7334 = vadd.f32 %v7053, %v7333
        %v7335 = vpop.f32.mrf.mxu0
        %v7336 = vadd.f32 %v7055, %v7335
        %7337 = vmatprep.mubr.bf16.mxu0 %v2605
        %7338 = vmatmul.mubr.bf16.gmra.mxu0 %v2604
        %v7339 = vpop.f32.mrf.mxu0
        %v7340 = vadd.f32 %v7059, %v7339
        %v7341 = vpop.f32.mrf.mxu0
        %v7342 = vadd.f32 %v7061, %v7341
        %v7343 = vpop.f32.mrf.mxu0
        %v7344 = vadd.f32 %v7063, %v7343
        %v7345 = vpop.f32.mrf.mxu0
        %v7346 = vadd.f32 %v7065, %v7345
        %7347 = vmatprep.mubr.bf16.mxu0 %v2621
        %7348 = vmatmul.mubr.bf16.gmra.mxu0 %v2620
        %v7349 = vpop.f32.mrf.mxu0
        %v7350 = vadd.f32 %v7069, %v7349
        %v7351 = vpop.f32.mrf.mxu0
        %v7352 = vadd.f32 %v7071, %v7351
        %v7353 = vpop.f32.mrf.mxu0
        %v7354 = vadd.f32 %v7073, %v7353
        %v7355 = vpop.f32.mrf.mxu0
        %v7356 = vadd.f32 %v7075, %v7355
        %7357 = vmatprep.mubr.bf16.mxu0 %v2637
        %7358 = vmatmul.mubr.bf16.gmra.mxu0 %v2636
        %v7359 = vpop.f32.mrf.mxu0
        %v7360 = vadd.f32 %v7079, %v7359
        %v7361 = vpop.f32.mrf.mxu0
        %v7362 = vadd.f32 %v7081, %v7361
        %v7363 = vpop.f32.mrf.mxu0
        %v7364 = vadd.f32 %v7083, %v7363
        %v7365 = vpop.f32.mrf.mxu0
        %v7366 = vadd.f32 %v7085, %v7365
        %7367 = vmatprep.mubr.bf16.mxu0 %v2653
        %7368 = vmatmul.mubr.bf16.gmra.mxu0 %v2652
        %v7369 = vpop.f32.mrf.mxu0
        %v7370 = vadd.f32 %v7089, %v7369
        %v7371 = vpop.f32.mrf.mxu0
        %v7372 = vadd.f32 %v7091, %v7371
        %v7373 = vpop.f32.mrf.mxu0
        %v7374 = vadd.f32 %v7093, %v7373
        %v7375 = vpop.f32.mrf.mxu0
        %v7376 = vadd.f32 %v7095, %v7375
        %7377 = vmatprep.mubr.bf16.mxu0 %v2669
        %7378 = vmatmul.mubr.bf16.gmra.mxu0 %v2668
        %v7379 = vpop.f32.mrf.mxu0
        %v7380 = vadd.f32 %v7099, %v7379
        %v7381 = vpop.f32.mrf.mxu0
        %v7382 = vadd.f32 %v7101, %v7381
        %v7383 = vpop.f32.mrf.mxu0
        %v7384 = vadd.f32 %v7103, %v7383
        %v7385 = vpop.f32.mrf.mxu0
        %v7386 = vadd.f32 %v7105, %v7385
        %7387 = vmatprep.mubr.bf16.mxu0 %v2685
        %7388 = vmatmul.mubr.bf16.gmra.mxu0 %v2684
        %v7389 = vpop.f32.mrf.mxu0
        %v7390 = vadd.f32 %v7109, %v7389
        %v7391 = vpop.f32.mrf.mxu0
        %v7392 = vadd.f32 %v7111, %v7391
        %v7393 = vpop.f32.mrf.mxu0
        %v7394 = vadd.f32 %v7113, %v7393
        %v7395 = vpop.f32.mrf.mxu0
        %v7396 = vadd.f32 %v7115, %v7395
        %7397 = vmatprep.mubr.bf16.mxu0 %v2701
        %7398 = vmatmul.mubr.bf16.gmra.mxu0 %v2700
        %v7399 = vpop.f32.mrf.mxu0
        %v7400 = vadd.f32 %v7119, %v7399
        %v7401 = vpop.f32.mrf.mxu0
        %v7402 = vadd.f32 %v7121, %v7401
        %v7403 = vpop.f32.mrf.mxu0
        %v7404 = vadd.f32 %v7123, %v7403
        %v7405 = vpop.f32.mrf.mxu0
        %v7406 = vadd.f32 %v7125, %v7405
        %7407 = vmatprep.mubr.bf16.mxu0 %v2717
        %7408 = vmatmul.mubr.bf16.gmra.mxu0 %v2716
        %v7409 = vpop.f32.mrf.mxu0
        %v7410 = vadd.f32 %v7129, %v7409
        %v7411 = vpop.f32.mrf.mxu0
        %v7412 = vadd.f32 %v7131, %v7411
        %v7413 = vpop.f32.mrf.mxu0
        %v7414 = vadd.f32 %v7133, %v7413
        %v7415 = vpop.f32.mrf.mxu0
        %v7416 = vadd.f32 %v7135, %v7415
        %7417 = vmatprep.mubr.bf16.mxu0 %v2733
        %7418 = vmatmul.mubr.bf16.gmra.mxu0 %v2732
        %v7419 = vpop.f32.mrf.mxu0
        %v7420 = vadd.f32 %v7139, %v7419
        %v7421 = vpop.f32.mrf.mxu0
        %v7422 = vadd.f32 %v7141, %v7421
        %v7423 = vpop.f32.mrf.mxu0
        %v7424 = vadd.f32 %v7143, %v7423
        %v7425 = vpop.f32.mrf.mxu0
        %v7426 = vadd.f32 %v7145, %v7425
        %7427 = vmatprep.mubr.bf16.mxu0 %v2749
        %7428 = vmatmul.mubr.bf16.gmra.mxu0 %v2748
        %v7429 = vpop.f32.mrf.mxu0
        %v7430 = vadd.f32 %v7149, %v7429
        %v7431 = vpop.f32.mrf.mxu0
        %v7432 = vadd.f32 %v7151, %v7431
        %v7433 = vpop.f32.mrf.mxu0
        %v7434 = vadd.f32 %v7153, %v7433
        %v7435 = vpop.f32.mrf.mxu0
        %v7436 = vadd.f32 %v7155, %v7435
        %7437 = vmatprep.mubr.bf16.mxu0 %v2765
        %7438 = vmatmul.mubr.bf16.gmra.mxu0 %v2764
        %v7439 = vpop.f32.mrf.mxu0
        %v7440 = vadd.f32 %v7159, %v7439
        %v7441 = vpop.f32.mrf.mxu0
        %v7442 = vadd.f32 %v7161, %v7441
        %v7443 = vpop.f32.mrf.mxu0
        %v7444 = vadd.f32 %v7163, %v7443
        %v7445 = vpop.f32.mrf.mxu0
        %v7446 = vadd.f32 %v7165, %v7445
        %7447 = vmatprep.mubr.bf16.mxu0 %v2781
        %7448 = vmatmul.mubr.bf16.gmra.mxu0 %v2780
        %v7449 = vpop.f32.mrf.mxu0
        %v7450 = vadd.f32 %v7169, %v7449
        %v7451 = vpop.f32.mrf.mxu0
        %v7452 = vadd.f32 %v7171, %v7451
        %v7453 = vpop.f32.mrf.mxu0
        %v7454 = vadd.f32 %v7173, %v7453
        %v7455 = vpop.f32.mrf.mxu0
        %v7456 = vadd.f32 %v7175, %v7455
        %7457 = vmatprep.mubr.bf16.mxu0 %v2797
        %7458 = vmatmul.mubr.bf16.gmra.mxu0 %v2796
        %v7459 = vpop.f32.mrf.mxu0
        %v7460 = vadd.f32 %v7179, %v7459
        %v7461 = vpop.f32.mrf.mxu0
        %v7462 = vadd.f32 %v7181, %v7461
        %v7463 = vpop.f32.mrf.mxu0
        %v7464 = vadd.f32 %v7183, %v7463
        %v7465 = vpop.f32.mrf.mxu0
        %v7466 = vadd.f32 %v7185, %v7465
        %7467 = vmatprep.mubr.bf16.mxu0 %v2813
        %7468 = vmatmul.mubr.bf16.gmra.mxu0 %v2812
        %v7469 = vpop.f32.mrf.mxu0
        %v7470 = vadd.f32 %v7189, %v7469
        %v7471 = vpop.f32.mrf.mxu0
        %v7472 = vadd.f32 %v7191, %v7471
        %v7473 = vpop.f32.mrf.mxu0
        %v7474 = vadd.f32 %v7193, %v7473
        %v7475 = vpop.f32.mrf.mxu0
        %v7476 = vadd.f32 %v7195, %v7475
        %7477 = vmatprep.mubr.bf16.mxu0 %v2829
        %7478 = vmatmul.mubr.bf16.gmra.mxu0 %v2828
        %v7479 = vpop.f32.mrf.mxu0
        %v7480 = vadd.f32 %v7199, %v7479
        %v7481 = vpop.f32.mrf.mxu0
        %v7482 = vadd.f32 %v7201, %v7481
        %v7483 = vpop.f32.mrf.mxu0
        %v7484 = vadd.f32 %v7203, %v7483
        %v7485 = vpop.f32.mrf.mxu0
        %v7486 = vadd.f32 %v7205, %v7485
        %7487 = vmatprep.mubr.bf16.mxu0 %v2845
        %7488 = vmatmul.mubr.bf16.gmra.mxu0 %v2844
        %v7489 = vpop.f32.mrf.mxu0
        %v7490 = vadd.f32 %v7209, %v7489
        %v7491 = vpop.f32.mrf.mxu0
        %v7492 = vadd.f32 %v7211, %v7491
        %v7493 = vpop.f32.mrf.mxu0
        %v7494 = vpop.f32.mrf.mxu0
        %7495 = vdwg.mxu0
        %7496 = vmatprep.subr.bf16.mxu0 %v5199
        %7497 = vmatpush1.bf16.msra.mxu0 %v5198
        %7498 = vmatprep.subr.bf16.mxu0 %v5195
        %7499 = vmatpush1.bf16.msra.mxu0 %v5194
        %7500 = vmatprep.subr.bf16.mxu0 %v5191
        %7501 = vmatpush1.bf16.msra.mxu0 %v5190
        %7502 = vmatprep.subr.bf16.mxu0 %v5187
        %7503 = vmatpush1.bf16.msra.mxu0 %v5186
        %7504 = vmatprep.subr.bf16.mxu0 %v5183
        %7505 = vmatpush1.bf16.msra.mxu0 %v5182
        %7506 = vmatprep.subr.bf16.mxu0 %v5179
        %7507 = vmatpush1.bf16.msra.mxu0 %v5178
        %7508 = vmatprep.subr.bf16.mxu0 %v5175
        %7509 = vmatpush1.bf16.msra.mxu0 %v5174
        %7510 = vmatprep.subr.bf16.mxu0 %v5171
        %7511 = vmatpush1.bf16.msra.mxu0 %v5170
        %7512 = vmatprep.subr.bf16.mxu0 %v5231
        %7513 = vmatpush2.bf16.msra.mxu0 %v5230
        %7514 = vmatprep.subr.bf16.mxu0 %v5227
        %7515 = vmatpush2.bf16.msra.mxu0 %v5226
        %7516 = vmatprep.subr.bf16.mxu0 %v5223
        %7517 = vmatpush2.bf16.msra.mxu0 %v5222
        %7518 = vmatprep.subr.bf16.mxu0 %v5219
        %7519 = vmatpush2.bf16.msra.mxu0 %v5218
        %7520 = vmatprep.subr.bf16.mxu0 %v5215
        %7521 = vmatpush2.bf16.msra.mxu0 %v5214
        %7522 = vmatprep.subr.bf16.mxu0 %v5211
        %7523 = vmatpush2.bf16.msra.mxu0 %v5210
        %7524 = vmatprep.subr.bf16.mxu0 %v5207
        %7525 = vmatpush2.bf16.msra.mxu0 %v5206
        %7526 = vmatprep.subr.bf16.mxu0 %v5203
        %7527 = vmatpush2.bf16.msra.mxu0 %v5202
        %7528 = vmatprep.mubr.bf16.mxu0 %v2463
        %7529 = vmatmul.mubr.bf16.gmra.mxu0 %v2462
        %v7530 = vpop.f32.mrf.mxu0
        %v7531 = vadd.f32 %v7250, %v7530
        %v7532 = vpop.f32.mrf.mxu0
        %v7533 = vadd.f32 %v7252, %v7532
        %v7534 = vpop.f32.mrf.mxu0
        %v7535 = vadd.f32 %v7254, %v7534
        %v7536 = vpop.f32.mrf.mxu0
        %v7537 = vadd.f32 %v7256, %v7536
        %7538 = vmatprep.mubr.bf16.mxu0 %v2479
        %7539 = vmatmul.mubr.bf16.gmra.mxu0 %v2478
        %v7540 = vpop.f32.mrf.mxu0
        %v7541 = vadd.f32 %v7260, %v7540
        %v7542 = vpop.f32.mrf.mxu0
        %v7543 = vadd.f32 %v7262, %v7542
        %v7544 = vpop.f32.mrf.mxu0
        %v7545 = vadd.f32 %v7264, %v7544
        %v7546 = vpop.f32.mrf.mxu0
        %v7547 = vadd.f32 %v7266, %v7546
        %7548 = vmatprep.mubr.bf16.mxu0 %v2495
        %7549 = vmatmul.mubr.bf16.gmra.mxu0 %v2494
        %v7550 = vpop.f32.mrf.mxu0
        %v7551 = vadd.f32 %v7270, %v7550
        %v7552 = vpop.f32.mrf.mxu0
        %v7553 = vadd.f32 %v7272, %v7552
        %v7554 = vpop.f32.mrf.mxu0
        %v7555 = vadd.f32 %v7274, %v7554
        %v7556 = vpop.f32.mrf.mxu0
        %v7557 = vadd.f32 %v7276, %v7556
        %7558 = vmatprep.mubr.bf16.mxu0 %v2511
        %7559 = vmatmul.mubr.bf16.gmra.mxu0 %v2510
        %v7560 = vpop.f32.mrf.mxu0
        %v7561 = vadd.f32 %v7280, %v7560
        %v7562 = vpop.f32.mrf.mxu0
        %v7563 = vadd.f32 %v7282, %v7562
        %v7564 = vpop.f32.mrf.mxu0
        %v7565 = vadd.f32 %v7284, %v7564
        %v7566 = vpop.f32.mrf.mxu0
        %v7567 = vadd.f32 %v7286, %v7566
        %7568 = vmatprep.mubr.bf16.mxu0 %v2527
        %7569 = vmatmul.mubr.bf16.gmra.mxu0 %v2526
        %v7570 = vpop.f32.mrf.mxu0
        %v7571 = vadd.f32 %v7290, %v7570
        %v7572 = vpop.f32.mrf.mxu0
        %v7573 = vadd.f32 %v7292, %v7572
        %v7574 = vpop.f32.mrf.mxu0
        %v7575 = vadd.f32 %v7294, %v7574
        %v7576 = vpop.f32.mrf.mxu0
        %v7577 = vadd.f32 %v7296, %v7576
        %7578 = vmatprep.mubr.bf16.mxu0 %v2543
        %7579 = vmatmul.mubr.bf16.gmra.mxu0 %v2542
        %v7580 = vpop.f32.mrf.mxu0
        %v7581 = vadd.f32 %v7300, %v7580
        %v7582 = vpop.f32.mrf.mxu0
        %v7583 = vadd.f32 %v7302, %v7582
        %v7584 = vpop.f32.mrf.mxu0
        %v7585 = vadd.f32 %v7304, %v7584
        %v7586 = vpop.f32.mrf.mxu0
        %v7587 = vadd.f32 %v7306, %v7586
        %7588 = vmatprep.mubr.bf16.mxu0 %v2559
        %7589 = vmatmul.mubr.bf16.gmra.mxu0 %v2558
        %v7590 = vpop.f32.mrf.mxu0
        %v7591 = vadd.f32 %v7310, %v7590
        %v7592 = vpop.f32.mrf.mxu0
        %v7593 = vadd.f32 %v7312, %v7592
        %v7594 = vpop.f32.mrf.mxu0
        %v7595 = vadd.f32 %v7314, %v7594
        %v7596 = vpop.f32.mrf.mxu0
        %v7597 = vadd.f32 %v7316, %v7596
        %7598 = vmatprep.mubr.bf16.mxu0 %v2575
        %7599 = vmatmul.mubr.bf16.gmra.mxu0 %v2574
        %v7600 = vpop.f32.mrf.mxu0
        %v7601 = vadd.f32 %v7320, %v7600
        %v7602 = vpop.f32.mrf.mxu0
        %v7603 = vadd.f32 %v7322, %v7602
        %v7604 = vpop.f32.mrf.mxu0
        %v7605 = vadd.f32 %v7324, %v7604
        %v7606 = vpop.f32.mrf.mxu0
        %v7607 = vadd.f32 %v7326, %v7606
        %7608 = vmatprep.mubr.bf16.mxu0 %v2591
        %7609 = vmatmul.mubr.bf16.gmra.mxu0 %v2590
        %v7610 = vpop.f32.mrf.mxu0
        %v7611 = vadd.f32 %v7330, %v7610
        %v7612 = vpop.f32.mrf.mxu0
        %v7613 = vadd.f32 %v7332, %v7612
        %v7614 = vpop.f32.mrf.mxu0
        %v7615 = vadd.f32 %v7334, %v7614
        %v7616 = vpop.f32.mrf.mxu0
        %v7617 = vadd.f32 %v7336, %v7616
        %7618 = vmatprep.mubr.bf16.mxu0 %v2607
        %7619 = vmatmul.mubr.bf16.gmra.mxu0 %v2606
        %v7620 = vpop.f32.mrf.mxu0
        %v7621 = vadd.f32 %v7340, %v7620
        %v7622 = vpop.f32.mrf.mxu0
        %v7623 = vadd.f32 %v7342, %v7622
        %v7624 = vpop.f32.mrf.mxu0
        %v7625 = vadd.f32 %v7344, %v7624
        %v7626 = vpop.f32.mrf.mxu0
        %v7627 = vadd.f32 %v7346, %v7626
        %7628 = vmatprep.mubr.bf16.mxu0 %v2623
        %7629 = vmatmul.mubr.bf16.gmra.mxu0 %v2622
        %v7630 = vpop.f32.mrf.mxu0
        %v7631 = vadd.f32 %v7350, %v7630
        %v7632 = vpop.f32.mrf.mxu0
        %v7633 = vadd.f32 %v7352, %v7632
        %v7634 = vpop.f32.mrf.mxu0
        %v7635 = vadd.f32 %v7354, %v7634
        %v7636 = vpop.f32.mrf.mxu0
        %v7637 = vadd.f32 %v7356, %v7636
        %7638 = vmatprep.mubr.bf16.mxu0 %v2639
        %7639 = vmatmul.mubr.bf16.gmra.mxu0 %v2638
        %v7640 = vpop.f32.mrf.mxu0
        %v7641 = vadd.f32 %v7360, %v7640
        %v7642 = vpop.f32.mrf.mxu0
        %v7643 = vadd.f32 %v7362, %v7642
        %v7644 = vpop.f32.mrf.mxu0
        %v7645 = vadd.f32 %v7364, %v7644
        %v7646 = vpop.f32.mrf.mxu0
        %v7647 = vadd.f32 %v7366, %v7646
        %7648 = vmatprep.mubr.bf16.mxu0 %v2655
        %7649 = vmatmul.mubr.bf16.gmra.mxu0 %v2654
        %v7650 = vpop.f32.mrf.mxu0
        %v7651 = vadd.f32 %v7370, %v7650
        %v7652 = vpop.f32.mrf.mxu0
        %v7653 = vadd.f32 %v7372, %v7652
        %v7654 = vpop.f32.mrf.mxu0
        %v7655 = vadd.f32 %v7374, %v7654
        %v7656 = vpop.f32.mrf.mxu0
        %v7657 = vadd.f32 %v7376, %v7656
        %7658 = vmatprep.mubr.bf16.mxu0 %v2671
        %7659 = vmatmul.mubr.bf16.gmra.mxu0 %v2670
        %v7660 = vpop.f32.mrf.mxu0
        %v7661 = vadd.f32 %v7380, %v7660
        %v7662 = vpop.f32.mrf.mxu0
        %v7663 = vadd.f32 %v7382, %v7662
        %v7664 = vpop.f32.mrf.mxu0
        %v7665 = vadd.f32 %v7384, %v7664
        %v7666 = vpop.f32.mrf.mxu0
        %v7667 = vadd.f32 %v7386, %v7666
        %7668 = vmatprep.mubr.bf16.mxu0 %v2687
        %7669 = vmatmul.mubr.bf16.gmra.mxu0 %v2686
        %v7670 = vpop.f32.mrf.mxu0
        %v7671 = vadd.f32 %v7390, %v7670
        %v7672 = vpop.f32.mrf.mxu0
        %v7673 = vadd.f32 %v7392, %v7672
        %v7674 = vpop.f32.mrf.mxu0
        %v7675 = vadd.f32 %v7394, %v7674
        %v7676 = vpop.f32.mrf.mxu0
        %v7677 = vadd.f32 %v7396, %v7676
        %7678 = vmatprep.mubr.bf16.mxu0 %v2703
        %7679 = vmatmul.mubr.bf16.gmra.mxu0 %v2702
        %v7680 = vpop.f32.mrf.mxu0
        %v7681 = vadd.f32 %v7400, %v7680
        %v7682 = vpop.f32.mrf.mxu0
        %v7683 = vadd.f32 %v7402, %v7682
        %v7684 = vpop.f32.mrf.mxu0
        %v7685 = vadd.f32 %v7404, %v7684
        %v7686 = vpop.f32.mrf.mxu0
        %v7687 = vadd.f32 %v7406, %v7686
        %7688 = vmatprep.mubr.bf16.mxu0 %v2719
        %7689 = vmatmul.mubr.bf16.gmra.mxu0 %v2718
        %v7690 = vpop.f32.mrf.mxu0
        %v7691 = vadd.f32 %v7410, %v7690
        %v7692 = vpop.f32.mrf.mxu0
        %v7693 = vadd.f32 %v7412, %v7692
        %v7694 = vpop.f32.mrf.mxu0
        %v7695 = vadd.f32 %v7414, %v7694
        %v7696 = vpop.f32.mrf.mxu0
        %v7697 = vadd.f32 %v7416, %v7696
        %7698 = vmatprep.mubr.bf16.mxu0 %v2735
        %7699 = vmatmul.mubr.bf16.gmra.mxu0 %v2734
        %v7700 = vpop.f32.mrf.mxu0
        %v7701 = vadd.f32 %v7420, %v7700
        %v7702 = vpop.f32.mrf.mxu0
        %v7703 = vadd.f32 %v7422, %v7702
        %v7704 = vpop.f32.mrf.mxu0
        %v7705 = vadd.f32 %v7424, %v7704
        %v7706 = vpop.f32.mrf.mxu0
        %v7707 = vadd.f32 %v7426, %v7706
        %7708 = vmatprep.mubr.bf16.mxu0 %v2751
        %7709 = vmatmul.mubr.bf16.gmra.mxu0 %v2750
        %v7710 = vpop.f32.mrf.mxu0
        %v7711 = vadd.f32 %v7430, %v7710
        %v7712 = vpop.f32.mrf.mxu0
        %v7713 = vadd.f32 %v7432, %v7712
        %v7714 = vpop.f32.mrf.mxu0
        %v7715 = vadd.f32 %v7434, %v7714
        %v7716 = vpop.f32.mrf.mxu0
        %v7717 = vadd.f32 %v7436, %v7716
        %7718 = vmatprep.mubr.bf16.mxu0 %v2767
        %7719 = vmatmul.mubr.bf16.gmra.mxu0 %v2766
        %v7720 = vpop.f32.mrf.mxu0
        %v7721 = vadd.f32 %v7440, %v7720
        %v7722 = vpop.f32.mrf.mxu0
        %v7723 = vadd.f32 %v7442, %v7722
        %v7724 = vpop.f32.mrf.mxu0
        %v7725 = vadd.f32 %v7444, %v7724
        %v7726 = vpop.f32.mrf.mxu0
        %v7727 = vadd.f32 %v7446, %v7726
        %7728 = vmatprep.mubr.bf16.mxu0 %v2783
        %7729 = vmatmul.mubr.bf16.gmra.mxu0 %v2782
        %v7730 = vpop.f32.mrf.mxu0
        %v7731 = vadd.f32 %v7450, %v7730
        %v7732 = vpop.f32.mrf.mxu0
        %v7733 = vadd.f32 %v7452, %v7732
        %v7734 = vpop.f32.mrf.mxu0
        %v7735 = vadd.f32 %v7454, %v7734
        %v7736 = vpop.f32.mrf.mxu0
        %v7737 = vadd.f32 %v7456, %v7736
        %7738 = vmatprep.mubr.bf16.mxu0 %v2799
        %7739 = vmatmul.mubr.bf16.gmra.mxu0 %v2798
        %v7740 = vpop.f32.mrf.mxu0
        %v7741 = vadd.f32 %v7460, %v7740
        %v7742 = vpop.f32.mrf.mxu0
        %v7743 = vadd.f32 %v7462, %v7742
        %v7744 = vpop.f32.mrf.mxu0
        %v7745 = vadd.f32 %v7464, %v7744
        %v7746 = vpop.f32.mrf.mxu0
        %v7747 = vadd.f32 %v7466, %v7746
        %7748 = vmatprep.mubr.bf16.mxu0 %v2815
        %7749 = vmatmul.mubr.bf16.gmra.mxu0 %v2814
        %v7750 = vpop.f32.mrf.mxu0
        %v7751 = vadd.f32 %v7470, %v7750
        %v7752 = vpop.f32.mrf.mxu0
        %v7753 = vadd.f32 %v7472, %v7752
        %v7754 = vpop.f32.mrf.mxu0
        %v7755 = vadd.f32 %v7474, %v7754
        %v7756 = vpop.f32.mrf.mxu0
        %v7757 = vadd.f32 %v7476, %v7756
        %7758 = vmatprep.mubr.bf16.mxu0 %v2831
        %7759 = vmatmul.mubr.bf16.gmra.mxu0 %v2830
        %v7760 = vpop.f32.mrf.mxu0
        %v7761 = vadd.f32 %v7480, %v7760
        %v7762 = vpop.f32.mrf.mxu0
        %v7763 = vadd.f32 %v7482, %v7762
        %v7764 = vpop.f32.mrf.mxu0
        %v7765 = vadd.f32 %v7484, %v7764
        %v7766 = vpop.f32.mrf.mxu0
        %v7767 = vadd.f32 %v7486, %v7766
        %7768 = vmatprep.mubr.bf16.mxu0 %v2847
        %7769 = vmatmul.mubr.bf16.gmra.mxu0 %v2846
        %v7770 = vpop.f32.mrf.mxu0
        %v7771 = vadd.f32 %v7490, %v7770
        %v7772 = vpop.f32.mrf.mxu0
        %v7773 = vadd.f32 %v7492, %v7772
        %v7774 = vpop.f32.mrf.mxu0
        %v7775 = vpop.f32.mrf.mxu0
        %7776 = vdwg.mxu0
        %7777 = vmatprep.subr.bf16.mxu0 %v5263
        %7778 = vmatpush1.bf16.msra.mxu0 %v5262
        %7779 = vmatprep.subr.bf16.mxu0 %v5259
        %7780 = vmatpush1.bf16.msra.mxu0 %v5258
        %7781 = vmatprep.subr.bf16.mxu0 %v5255
        %7782 = vmatpush1.bf16.msra.mxu0 %v5254
        %7783 = vmatprep.subr.bf16.mxu0 %v5251
        %7784 = vmatpush1.bf16.msra.mxu0 %v5250
        %7785 = vmatprep.subr.bf16.mxu0 %v5247
        %7786 = vmatpush1.bf16.msra.mxu0 %v5246
        %7787 = vmatprep.subr.bf16.mxu0 %v5243
        %7788 = vmatpush1.bf16.msra.mxu0 %v5242
        %7789 = vmatprep.subr.bf16.mxu0 %v5239
        %7790 = vmatpush1.bf16.msra.mxu0 %v5238
        %7791 = vmatprep.subr.bf16.mxu0 %v5235
        %7792 = vmatpush1.bf16.msra.mxu0 %v5234
        %7793 = vmatprep.subr.bf16.mxu0 %v5295
        %7794 = vmatpush2.bf16.msra.mxu0 %v5294
        %7795 = vmatprep.subr.bf16.mxu0 %v5291
        %7796 = vmatpush2.bf16.msra.mxu0 %v5290
        %7797 = vmatprep.subr.bf16.mxu0 %v5287
        %7798 = vmatpush2.bf16.msra.mxu0 %v5286
        %7799 = vmatprep.subr.bf16.mxu0 %v5283
        %7800 = vmatpush2.bf16.msra.mxu0 %v5282
        %7801 = vmatprep.subr.bf16.mxu0 %v5279
        %7802 = vmatpush2.bf16.msra.mxu0 %v5278
        %7803 = vmatprep.subr.bf16.mxu0 %v5275
        %7804 = vmatpush2.bf16.msra.mxu0 %v5274
        %7805 = vmatprep.subr.bf16.mxu0 %v5271
        %7806 = vmatpush2.bf16.msra.mxu0 %v5270
        %7807 = vmatprep.subr.bf16.mxu0 %v5267
        %7808 = vmatpush2.bf16.msra.mxu0 %v5266
        %7809 = vmatprep.mubr.bf16.mxu0 %v2465
        %7810 = vmatmul.mubr.bf16.gmra.mxu0 %v2464
        %v7811 = vpop.f32.mrf.mxu0
        %v7812 = vadd.f32 %v7531, %v7811
        %v7813 = vpop.f32.mrf.mxu0
        %v7814 = vadd.f32 %v7533, %v7813
        %v7815 = vpop.f32.mrf.mxu0
        %v7816 = vadd.f32 %v7535, %v7815
        %v7817 = vpop.f32.mrf.mxu0
        %v7818 = vadd.f32 %v7537, %v7817
        %7819 = vmatprep.mubr.bf16.mxu0 %v2481
        %7820 = vmatmul.mubr.bf16.gmra.mxu0 %v2480
        %v7821 = vpop.f32.mrf.mxu0
        %v7822 = vadd.f32 %v7541, %v7821
        %v7823 = vpop.f32.mrf.mxu0
        %v7824 = vadd.f32 %v7543, %v7823
        %v7825 = vpop.f32.mrf.mxu0
        %v7826 = vadd.f32 %v7545, %v7825
        %v7827 = vpop.f32.mrf.mxu0
        %v7828 = vadd.f32 %v7547, %v7827
        %7829 = vmatprep.mubr.bf16.mxu0 %v2497
        %7830 = vmatmul.mubr.bf16.gmra.mxu0 %v2496
        %v7831 = vpop.f32.mrf.mxu0
        %v7832 = vadd.f32 %v7551, %v7831
        %v7833 = vpop.f32.mrf.mxu0
        %v7834 = vadd.f32 %v7553, %v7833
        %v7835 = vpop.f32.mrf.mxu0
        %v7836 = vadd.f32 %v7555, %v7835
        %v7837 = vpop.f32.mrf.mxu0
        %v7838 = vadd.f32 %v7557, %v7837
        %7839 = vmatprep.mubr.bf16.mxu0 %v2513
        %7840 = vmatmul.mubr.bf16.gmra.mxu0 %v2512
        %v7841 = vpop.f32.mrf.mxu0
        %v7842 = vadd.f32 %v7561, %v7841
        %v7843 = vpop.f32.mrf.mxu0
        %v7844 = vadd.f32 %v7563, %v7843
        %v7845 = vpop.f32.mrf.mxu0
        %v7846 = vadd.f32 %v7565, %v7845
        %v7847 = vpop.f32.mrf.mxu0
        %v7848 = vadd.f32 %v7567, %v7847
        %7849 = vmatprep.mubr.bf16.mxu0 %v2529
        %7850 = vmatmul.mubr.bf16.gmra.mxu0 %v2528
        %v7851 = vpop.f32.mrf.mxu0
        %v7852 = vadd.f32 %v7571, %v7851
        %v7853 = vpop.f32.mrf.mxu0
        %v7854 = vadd.f32 %v7573, %v7853
        %v7855 = vpop.f32.mrf.mxu0
        %v7856 = vadd.f32 %v7575, %v7855
        %v7857 = vpop.f32.mrf.mxu0
        %v7858 = vadd.f32 %v7577, %v7857
        %7859 = vmatprep.mubr.bf16.mxu0 %v2545
        %7860 = vmatmul.mubr.bf16.gmra.mxu0 %v2544
        %v7861 = vpop.f32.mrf.mxu0
        %v7862 = vadd.f32 %v7581, %v7861
        %v7863 = vpop.f32.mrf.mxu0
        %v7864 = vadd.f32 %v7583, %v7863
        %v7865 = vpop.f32.mrf.mxu0
        %v7866 = vadd.f32 %v7585, %v7865
        %v7867 = vpop.f32.mrf.mxu0
        %v7868 = vadd.f32 %v7587, %v7867
        %7869 = vmatprep.mubr.bf16.mxu0 %v2561
        %7870 = vmatmul.mubr.bf16.gmra.mxu0 %v2560
        %v7871 = vpop.f32.mrf.mxu0
        %v7872 = vadd.f32 %v7591, %v7871
        %v7873 = vpop.f32.mrf.mxu0
        %v7874 = vadd.f32 %v7593, %v7873
        %v7875 = vpop.f32.mrf.mxu0
        %v7876 = vadd.f32 %v7595, %v7875
        %v7877 = vpop.f32.mrf.mxu0
        %v7878 = vadd.f32 %v7597, %v7877
        %7879 = vmatprep.mubr.bf16.mxu0 %v2577
        %7880 = vmatmul.mubr.bf16.gmra.mxu0 %v2576
        %v7881 = vpop.f32.mrf.mxu0
        %v7882 = vadd.f32 %v7601, %v7881
        %v7883 = vpop.f32.mrf.mxu0
        %v7884 = vadd.f32 %v7603, %v7883
        %v7885 = vpop.f32.mrf.mxu0
        %v7886 = vadd.f32 %v7605, %v7885
        %v7887 = vpop.f32.mrf.mxu0
        %v7888 = vadd.f32 %v7607, %v7887
        %7889 = vmatprep.mubr.bf16.mxu0 %v2593
        %7890 = vmatmul.mubr.bf16.gmra.mxu0 %v2592
        %v7891 = vpop.f32.mrf.mxu0
        %v7892 = vadd.f32 %v7611, %v7891
        %v7893 = vpop.f32.mrf.mxu0
        %v7894 = vadd.f32 %v7613, %v7893
        %v7895 = vpop.f32.mrf.mxu0
        %v7896 = vadd.f32 %v7615, %v7895
        %v7897 = vpop.f32.mrf.mxu0
        %v7898 = vadd.f32 %v7617, %v7897
        %7899 = vmatprep.mubr.bf16.mxu0 %v2609
        %7900 = vmatmul.mubr.bf16.gmra.mxu0 %v2608
        %v7901 = vpop.f32.mrf.mxu0
        %v7902 = vadd.f32 %v7621, %v7901
        %v7903 = vpop.f32.mrf.mxu0
        %v7904 = vadd.f32 %v7623, %v7903
        %v7905 = vpop.f32.mrf.mxu0
        %v7906 = vadd.f32 %v7625, %v7905
        %v7907 = vpop.f32.mrf.mxu0
        %v7908 = vadd.f32 %v7627, %v7907
        %7909 = vmatprep.mubr.bf16.mxu0 %v2625
        %7910 = vmatmul.mubr.bf16.gmra.mxu0 %v2624
        %v7911 = vpop.f32.mrf.mxu0
        %v7912 = vadd.f32 %v7631, %v7911
        %v7913 = vpop.f32.mrf.mxu0
        %v7914 = vadd.f32 %v7633, %v7913
        %v7915 = vpop.f32.mrf.mxu0
        %v7916 = vadd.f32 %v7635, %v7915
        %v7917 = vpop.f32.mrf.mxu0
        %v7918 = vadd.f32 %v7637, %v7917
        %7919 = vmatprep.mubr.bf16.mxu0 %v2641
        %7920 = vmatmul.mubr.bf16.gmra.mxu0 %v2640
        %v7921 = vpop.f32.mrf.mxu0
        %v7922 = vadd.f32 %v7641, %v7921
        %v7923 = vpop.f32.mrf.mxu0
        %v7924 = vadd.f32 %v7643, %v7923
        %v7925 = vpop.f32.mrf.mxu0
        %v7926 = vadd.f32 %v7645, %v7925
        %v7927 = vpop.f32.mrf.mxu0
        %v7928 = vadd.f32 %v7647, %v7927
        %7929 = vmatprep.mubr.bf16.mxu0 %v2657
        %7930 = vmatmul.mubr.bf16.gmra.mxu0 %v2656
        %v7931 = vpop.f32.mrf.mxu0
        %v7932 = vadd.f32 %v7651, %v7931
        %v7933 = vpop.f32.mrf.mxu0
        %v7934 = vadd.f32 %v7653, %v7933
        %v7935 = vpop.f32.mrf.mxu0
        %v7936 = vadd.f32 %v7655, %v7935
        %v7937 = vpop.f32.mrf.mxu0
        %v7938 = vadd.f32 %v7657, %v7937
        %7939 = vmatprep.mubr.bf16.mxu0 %v2673
        %7940 = vmatmul.mubr.bf16.gmra.mxu0 %v2672
        %v7941 = vpop.f32.mrf.mxu0
        %v7942 = vadd.f32 %v7661, %v7941
        %v7943 = vpop.f32.mrf.mxu0
        %v7944 = vadd.f32 %v7663, %v7943
        %v7945 = vpop.f32.mrf.mxu0
        %v7946 = vadd.f32 %v7665, %v7945
        %v7947 = vpop.f32.mrf.mxu0
        %v7948 = vadd.f32 %v7667, %v7947
        %7949 = vmatprep.mubr.bf16.mxu0 %v2689
        %7950 = vmatmul.mubr.bf16.gmra.mxu0 %v2688
        %v7951 = vpop.f32.mrf.mxu0
        %v7952 = vadd.f32 %v7671, %v7951
        %v7953 = vpop.f32.mrf.mxu0
        %v7954 = vadd.f32 %v7673, %v7953
        %v7955 = vpop.f32.mrf.mxu0
        %v7956 = vadd.f32 %v7675, %v7955
        %v7957 = vpop.f32.mrf.mxu0
        %v7958 = vadd.f32 %v7677, %v7957
        %7959 = vmatprep.mubr.bf16.mxu0 %v2705
        %7960 = vmatmul.mubr.bf16.gmra.mxu0 %v2704
        %v7961 = vpop.f32.mrf.mxu0
        %v7962 = vadd.f32 %v7681, %v7961
        %v7963 = vpop.f32.mrf.mxu0
        %v7964 = vadd.f32 %v7683, %v7963
        %v7965 = vpop.f32.mrf.mxu0
        %v7966 = vadd.f32 %v7685, %v7965
        %v7967 = vpop.f32.mrf.mxu0
        %v7968 = vadd.f32 %v7687, %v7967
        %7969 = vmatprep.mubr.bf16.mxu0 %v2721
        %7970 = vmatmul.mubr.bf16.gmra.mxu0 %v2720
        %v7971 = vpop.f32.mrf.mxu0
        %v7972 = vadd.f32 %v7691, %v7971
        %v7973 = vpop.f32.mrf.mxu0
        %v7974 = vadd.f32 %v7693, %v7973
        %v7975 = vpop.f32.mrf.mxu0
        %v7976 = vadd.f32 %v7695, %v7975
        %v7977 = vpop.f32.mrf.mxu0
        %v7978 = vadd.f32 %v7697, %v7977
        %7979 = vmatprep.mubr.bf16.mxu0 %v2737
        %7980 = vmatmul.mubr.bf16.gmra.mxu0 %v2736
        %v7981 = vpop.f32.mrf.mxu0
        %v7982 = vadd.f32 %v7701, %v7981
        %v7983 = vpop.f32.mrf.mxu0
        %v7984 = vadd.f32 %v7703, %v7983
        %v7985 = vpop.f32.mrf.mxu0
        %v7986 = vadd.f32 %v7705, %v7985
        %v7987 = vpop.f32.mrf.mxu0
        %v7988 = vadd.f32 %v7707, %v7987
        %7989 = vmatprep.mubr.bf16.mxu0 %v2753
        %7990 = vmatmul.mubr.bf16.gmra.mxu0 %v2752
        %v7991 = vpop.f32.mrf.mxu0
        %v7992 = vadd.f32 %v7711, %v7991
        %v7993 = vpop.f32.mrf.mxu0
        %v7994 = vadd.f32 %v7713, %v7993
        %v7995 = vpop.f32.mrf.mxu0
        %v7996 = vadd.f32 %v7715, %v7995
        %v7997 = vpop.f32.mrf.mxu0
        %v7998 = vadd.f32 %v7717, %v7997
        %7999 = vmatprep.mubr.bf16.mxu0 %v2769
        %8000 = vmatmul.mubr.bf16.gmra.mxu0 %v2768
        %v8001 = vpop.f32.mrf.mxu0
        %v8002 = vadd.f32 %v7721, %v8001
        %v8003 = vpop.f32.mrf.mxu0
        %v8004 = vadd.f32 %v7723, %v8003
        %v8005 = vpop.f32.mrf.mxu0
        %v8006 = vadd.f32 %v7725, %v8005
        %v8007 = vpop.f32.mrf.mxu0
        %v8008 = vadd.f32 %v7727, %v8007
        %8009 = vmatprep.mubr.bf16.mxu0 %v2785
        %8010 = vmatmul.mubr.bf16.gmra.mxu0 %v2784
        %v8011 = vpop.f32.mrf.mxu0
        %v8012 = vadd.f32 %v7731, %v8011
        %v8013 = vpop.f32.mrf.mxu0
        %v8014 = vadd.f32 %v7733, %v8013
        %v8015 = vpop.f32.mrf.mxu0
        %v8016 = vadd.f32 %v7735, %v8015
        %v8017 = vpop.f32.mrf.mxu0
        %v8018 = vadd.f32 %v7737, %v8017
        %8019 = vmatprep.mubr.bf16.mxu0 %v2801
        %8020 = vmatmul.mubr.bf16.gmra.mxu0 %v2800
        %v8021 = vpop.f32.mrf.mxu0
        %v8022 = vadd.f32 %v7741, %v8021
        %v8023 = vpop.f32.mrf.mxu0
        %v8024 = vadd.f32 %v7743, %v8023
        %v8025 = vpop.f32.mrf.mxu0
        %v8026 = vadd.f32 %v7745, %v8025
        %v8027 = vpop.f32.mrf.mxu0
        %v8028 = vadd.f32 %v7747, %v8027
        %8029 = vmatprep.mubr.bf16.mxu0 %v2817
        %8030 = vmatmul.mubr.bf16.gmra.mxu0 %v2816
        %v8031 = vpop.f32.mrf.mxu0
        %v8032 = vadd.f32 %v7751, %v8031
        %v8033 = vpop.f32.mrf.mxu0
        %v8034 = vadd.f32 %v7753, %v8033
        %v8035 = vpop.f32.mrf.mxu0
        %v8036 = vadd.f32 %v7755, %v8035
        %v8037 = vpop.f32.mrf.mxu0
        %v8038 = vadd.f32 %v7757, %v8037
        %8039 = vmatprep.mubr.bf16.mxu0 %v2833
        %8040 = vmatmul.mubr.bf16.gmra.mxu0 %v2832
        %v8041 = vpop.f32.mrf.mxu0
        %v8042 = vadd.f32 %v7761, %v8041
        %v8043 = vpop.f32.mrf.mxu0
        %v8044 = vadd.f32 %v7763, %v8043
        %v8045 = vpop.f32.mrf.mxu0
        %v8046 = vadd.f32 %v7765, %v8045
        %v8047 = vpop.f32.mrf.mxu0
        %v8048 = vadd.f32 %v7767, %v8047
        %8049 = vmatprep.mubr.bf16.mxu0 %v2849
        %8050 = vmatmul.mubr.bf16.gmra.mxu0 %v2848
        %v8051 = vpop.f32.mrf.mxu0
        %v8052 = vadd.f32 %v7771, %v8051
        %v8053 = vpop.f32.mrf.mxu0
        %v8054 = vadd.f32 %v7773, %v8053
        %v8055 = vpop.f32.mrf.mxu0
        %v8056 = vpop.f32.mrf.mxu0
        %8057 = vdwg.mxu0
        %8058 = vmatprep.subr.bf16.mxu0 %v4817
        %8059 = vmatpush1.bf16.msra.mxu0 %v4816
        %8060 = vmatprep.subr.bf16.mxu0 %v4813
        %8061 = vmatpush1.bf16.msra.mxu0 %v4812
        %8062 = vmatprep.subr.bf16.mxu0 %v4809
        %8063 = vmatpush1.bf16.msra.mxu0 %v4808
        %8064 = vmatprep.subr.bf16.mxu0 %v4805
        %8065 = vmatpush1.bf16.msra.mxu0 %v4804
        %8066 = vmatprep.subr.bf16.mxu0 %v4801
        %8067 = vmatpush1.bf16.msra.mxu0 %v4800
        %8068 = vmatprep.subr.bf16.mxu0 %v4797
        %8069 = vmatpush1.bf16.msra.mxu0 %v4796
        %8070 = vmatprep.subr.bf16.mxu0 %v4793
        %8071 = vmatpush1.bf16.msra.mxu0 %v4792
        %8072 = vmatprep.subr.bf16.mxu0 %v4789
        %8073 = vmatpush1.bf16.msra.mxu0 %v4788
        %8074 = vmatprep.subr.bf16.mxu0 %v4849
        %8075 = vmatpush2.bf16.msra.mxu0 %v4848
        %8076 = vmatprep.subr.bf16.mxu0 %v4845
        %8077 = vmatpush2.bf16.msra.mxu0 %v4844
        %8078 = vmatprep.subr.bf16.mxu0 %v4841
        %8079 = vmatpush2.bf16.msra.mxu0 %v4840
        %8080 = vmatprep.subr.bf16.mxu0 %v4837
        %8081 = vmatpush2.bf16.msra.mxu0 %v4836
        %8082 = vmatprep.subr.bf16.mxu0 %v4833
        %8083 = vmatpush2.bf16.msra.mxu0 %v4832
        %8084 = vmatprep.subr.bf16.mxu0 %v4829
        %8085 = vmatpush2.bf16.msra.mxu0 %v4828
        %8086 = vmatprep.subr.bf16.mxu0 %v4825
        %8087 = vmatpush2.bf16.msra.mxu0 %v4824
        %8088 = vmatprep.subr.bf16.mxu0 %v4821
        %8089 = vmatpush2.bf16.msra.mxu0 %v4820
        %8090 = vmatprep.mubr.bf16.mxu0 %v2451
        %8091 = vmatmul.mubr.bf16.gmra.mxu0 %v2450
        %v8092 = vpop.f32.mrf.mxu0
        %v8093 = vadd.f32 %v1265, %v8092
        %v8094 = vpop.f32.mrf.mxu0
        %v8095 = vadd.f32 %v1269, %v8094
        %v8096 = vpop.f32.mrf.mxu0
        %v8097 = vadd.f32 %v1265, %v8096
        %v8098 = vpop.f32.mrf.mxu0
        %v8099 = vadd.f32 %v1269, %v8098
        %8100 = vmatprep.mubr.bf16.mxu0 %v2467
        %8101 = vmatmul.mubr.bf16.gmra.mxu0 %v2466
        %v8102 = vpop.f32.mrf.mxu0
        %v8103 = vadd.f32 %v1265, %v8102
        %v8104 = vpop.f32.mrf.mxu0
        %v8105 = vadd.f32 %v1269, %v8104
        %v8106 = vpop.f32.mrf.mxu0
        %v8107 = vadd.f32 %v1265, %v8106
        %v8108 = vpop.f32.mrf.mxu0
        %v8109 = vadd.f32 %v1269, %v8108
        %8110 = vmatprep.mubr.bf16.mxu0 %v2483
        %8111 = vmatmul.mubr.bf16.gmra.mxu0 %v2482
        %v8112 = vpop.f32.mrf.mxu0
        %v8113 = vadd.f32 %v1265, %v8112
        %v8114 = vpop.f32.mrf.mxu0
        %v8115 = vadd.f32 %v1269, %v8114
        %v8116 = vpop.f32.mrf.mxu0
        %v8117 = vadd.f32 %v1265, %v8116
        %v8118 = vpop.f32.mrf.mxu0
        %v8119 = vadd.f32 %v1269, %v8118
        %8120 = vmatprep.mubr.bf16.mxu0 %v2499
        %8121 = vmatmul.mubr.bf16.gmra.mxu0 %v2498
        %v8122 = vpop.f32.mrf.mxu0
        %v8123 = vadd.f32 %v1265, %v8122
        %v8124 = vpop.f32.mrf.mxu0
        %v8125 = vadd.f32 %v1269, %v8124
        %v8126 = vpop.f32.mrf.mxu0
        %v8127 = vadd.f32 %v1265, %v8126
        %v8128 = vpop.f32.mrf.mxu0
        %v8129 = vadd.f32 %v1269, %v8128
        %8130 = vmatprep.mubr.bf16.mxu0 %v2515
        %8131 = vmatmul.mubr.bf16.gmra.mxu0 %v2514
        %v8132 = vpop.f32.mrf.mxu0
        %v8133 = vadd.f32 %v1265, %v8132
        %v8134 = vpop.f32.mrf.mxu0
        %v8135 = vadd.f32 %v1269, %v8134
        %v8136 = vpop.f32.mrf.mxu0
        %v8137 = vadd.f32 %v1265, %v8136
        %v8138 = vpop.f32.mrf.mxu0
        %v8139 = vadd.f32 %v1269, %v8138
        %8140 = vmatprep.mubr.bf16.mxu0 %v2531
        %8141 = vmatmul.mubr.bf16.gmra.mxu0 %v2530
        %v8142 = vpop.f32.mrf.mxu0
        %v8143 = vadd.f32 %v1265, %v8142
        %v8144 = vpop.f32.mrf.mxu0
        %v8145 = vadd.f32 %v1269, %v8144
        %v8146 = vpop.f32.mrf.mxu0
        %v8147 = vadd.f32 %v1265, %v8146
        %v8148 = vpop.f32.mrf.mxu0
        %v8149 = vadd.f32 %v1269, %v8148
        %8150 = vmatprep.mubr.bf16.mxu0 %v2547
        %8151 = vmatmul.mubr.bf16.gmra.mxu0 %v2546
        %v8152 = vpop.f32.mrf.mxu0
        %v8153 = vadd.f32 %v1265, %v8152
        %v8154 = vpop.f32.mrf.mxu0
        %v8155 = vadd.f32 %v1269, %v8154
        %v8156 = vpop.f32.mrf.mxu0
        %v8157 = vadd.f32 %v1265, %v8156
        %v8158 = vpop.f32.mrf.mxu0
        %v8159 = vadd.f32 %v1269, %v8158
        %8160 = vmatprep.mubr.bf16.mxu0 %v2563
        %8161 = vmatmul.mubr.bf16.gmra.mxu0 %v2562
        %v8162 = vpop.f32.mrf.mxu0
        %v8163 = vadd.f32 %v1265, %v8162
        %v8164 = vpop.f32.mrf.mxu0
        %v8165 = vadd.f32 %v1269, %v8164
        %v8166 = vpop.f32.mrf.mxu0
        %v8167 = vadd.f32 %v1265, %v8166
        %v8168 = vpop.f32.mrf.mxu0
        %v8169 = vadd.f32 %v1269, %v8168
        %8170 = vmatprep.mubr.bf16.mxu0 %v2579
        %8171 = vmatmul.mubr.bf16.gmra.mxu0 %v2578
        %v8172 = vpop.f32.mrf.mxu0
        %v8173 = vadd.f32 %v1265, %v8172
        %v8174 = vpop.f32.mrf.mxu0
        %v8175 = vadd.f32 %v1269, %v8174
        %v8176 = vpop.f32.mrf.mxu0
        %v8177 = vadd.f32 %v1265, %v8176
        %v8178 = vpop.f32.mrf.mxu0
        %v8179 = vadd.f32 %v1269, %v8178
        %8180 = vmatprep.mubr.bf16.mxu0 %v2595
        %8181 = vmatmul.mubr.bf16.gmra.mxu0 %v2594
        %v8182 = vpop.f32.mrf.mxu0
        %v8183 = vadd.f32 %v1265, %v8182
        %v8184 = vpop.f32.mrf.mxu0
        %v8185 = vadd.f32 %v1269, %v8184
        %v8186 = vpop.f32.mrf.mxu0
        %v8187 = vadd.f32 %v1265, %v8186
        %v8188 = vpop.f32.mrf.mxu0
        %v8189 = vadd.f32 %v1269, %v8188
        %8190 = vmatprep.mubr.bf16.mxu0 %v2611
        %8191 = vmatmul.mubr.bf16.gmra.mxu0 %v2610
        %v8192 = vpop.f32.mrf.mxu0
        %v8193 = vadd.f32 %v1265, %v8192
        %v8194 = vpop.f32.mrf.mxu0
        %v8195 = vadd.f32 %v1269, %v8194
        %v8196 = vpop.f32.mrf.mxu0
        %v8197 = vadd.f32 %v1265, %v8196
        %v8198 = vpop.f32.mrf.mxu0
        %v8199 = vadd.f32 %v1269, %v8198
        %8200 = vmatprep.mubr.bf16.mxu0 %v2627
        %8201 = vmatmul.mubr.bf16.gmra.mxu0 %v2626
        %v8202 = vpop.f32.mrf.mxu0
        %v8203 = vadd.f32 %v1265, %v8202
        %v8204 = vpop.f32.mrf.mxu0
        %v8205 = vadd.f32 %v1269, %v8204
        %v8206 = vpop.f32.mrf.mxu0
        %v8207 = vadd.f32 %v1265, %v8206
        %v8208 = vpop.f32.mrf.mxu0
        %v8209 = vadd.f32 %v1269, %v8208
        %8210 = vmatprep.mubr.bf16.mxu0 %v2643
        %8211 = vmatmul.mubr.bf16.gmra.mxu0 %v2642
        %v8212 = vpop.f32.mrf.mxu0
        %v8213 = vadd.f32 %v1265, %v8212
        %v8214 = vpop.f32.mrf.mxu0
        %v8215 = vadd.f32 %v1269, %v8214
        %v8216 = vpop.f32.mrf.mxu0
        %v8217 = vadd.f32 %v1265, %v8216
        %v8218 = vpop.f32.mrf.mxu0
        %v8219 = vadd.f32 %v1269, %v8218
        %8220 = vmatprep.mubr.bf16.mxu0 %v2659
        %8221 = vmatmul.mubr.bf16.gmra.mxu0 %v2658
        %v8222 = vpop.f32.mrf.mxu0
        %v8223 = vadd.f32 %v1265, %v8222
        %v8224 = vpop.f32.mrf.mxu0
        %v8225 = vadd.f32 %v1269, %v8224
        %v8226 = vpop.f32.mrf.mxu0
        %v8227 = vadd.f32 %v1265, %v8226
        %v8228 = vpop.f32.mrf.mxu0
        %v8229 = vadd.f32 %v1269, %v8228
        %8230 = vmatprep.mubr.bf16.mxu0 %v2675
        %8231 = vmatmul.mubr.bf16.gmra.mxu0 %v2674
        %v8232 = vpop.f32.mrf.mxu0
        %v8233 = vadd.f32 %v1265, %v8232
        %v8234 = vpop.f32.mrf.mxu0
        %v8235 = vadd.f32 %v1269, %v8234
        %v8236 = vpop.f32.mrf.mxu0
        %v8237 = vadd.f32 %v1265, %v8236
        %v8238 = vpop.f32.mrf.mxu0
        %v8239 = vadd.f32 %v1269, %v8238
        %8240 = vmatprep.mubr.bf16.mxu0 %v2691
        %8241 = vmatmul.mubr.bf16.gmra.mxu0 %v2690
        %v8242 = vpop.f32.mrf.mxu0
        %v8243 = vadd.f32 %v1265, %v8242
        %v8244 = vpop.f32.mrf.mxu0
        %v8245 = vadd.f32 %v1269, %v8244
        %v8246 = vpop.f32.mrf.mxu0
        %v8247 = vadd.f32 %v1265, %v8246
        %v8248 = vpop.f32.mrf.mxu0
        %v8249 = vadd.f32 %v1269, %v8248
        %8250 = vmatprep.mubr.bf16.mxu0 %v2707
        %8251 = vmatmul.mubr.bf16.gmra.mxu0 %v2706
        %v8252 = vpop.f32.mrf.mxu0
        %v8253 = vadd.f32 %v1265, %v8252
        %v8254 = vpop.f32.mrf.mxu0
        %v8255 = vadd.f32 %v1269, %v8254
        %v8256 = vpop.f32.mrf.mxu0
        %v8257 = vadd.f32 %v1265, %v8256
        %v8258 = vpop.f32.mrf.mxu0
        %v8259 = vadd.f32 %v1269, %v8258
        %8260 = vmatprep.mubr.bf16.mxu0 %v2723
        %8261 = vmatmul.mubr.bf16.gmra.mxu0 %v2722
        %v8262 = vpop.f32.mrf.mxu0
        %v8263 = vadd.f32 %v1265, %v8262
        %v8264 = vpop.f32.mrf.mxu0
        %v8265 = vadd.f32 %v1269, %v8264
        %v8266 = vpop.f32.mrf.mxu0
        %v8267 = vadd.f32 %v1265, %v8266
        %v8268 = vpop.f32.mrf.mxu0
        %v8269 = vadd.f32 %v1269, %v8268
        %8270 = vmatprep.mubr.bf16.mxu0 %v2739
        %8271 = vmatmul.mubr.bf16.gmra.mxu0 %v2738
        %v8272 = vpop.f32.mrf.mxu0
        %v8273 = vadd.f32 %v1265, %v8272
        %v8274 = vpop.f32.mrf.mxu0
        %v8275 = vadd.f32 %v1269, %v8274
        %v8276 = vpop.f32.mrf.mxu0
        %v8277 = vadd.f32 %v1265, %v8276
        %v8278 = vpop.f32.mrf.mxu0
        %v8279 = vadd.f32 %v1269, %v8278
        %8280 = vmatprep.mubr.bf16.mxu0 %v2755
        %8281 = vmatmul.mubr.bf16.gmra.mxu0 %v2754
        %v8282 = vpop.f32.mrf.mxu0
        %v8283 = vadd.f32 %v1265, %v8282
        %v8284 = vpop.f32.mrf.mxu0
        %v8285 = vadd.f32 %v1269, %v8284
        %v8286 = vpop.f32.mrf.mxu0
        %v8287 = vadd.f32 %v1265, %v8286
        %v8288 = vpop.f32.mrf.mxu0
        %v8289 = vadd.f32 %v1269, %v8288
        %8290 = vmatprep.mubr.bf16.mxu0 %v2771
        %8291 = vmatmul.mubr.bf16.gmra.mxu0 %v2770
        %v8292 = vpop.f32.mrf.mxu0
        %v8293 = vadd.f32 %v1265, %v8292
        %v8294 = vpop.f32.mrf.mxu0
        %v8295 = vadd.f32 %v1269, %v8294
        %v8296 = vpop.f32.mrf.mxu0
        %v8297 = vadd.f32 %v1265, %v8296
        %v8298 = vpop.f32.mrf.mxu0
        %v8299 = vadd.f32 %v1269, %v8298
        %8300 = vmatprep.mubr.bf16.mxu0 %v2787
        %8301 = vmatmul.mubr.bf16.gmra.mxu0 %v2786
        %v8302 = vpop.f32.mrf.mxu0
        %v8303 = vadd.f32 %v1265, %v8302
        %v8304 = vpop.f32.mrf.mxu0
        %v8305 = vadd.f32 %v1269, %v8304
        %v8306 = vpop.f32.mrf.mxu0
        %v8307 = vadd.f32 %v1265, %v8306
        %v8308 = vpop.f32.mrf.mxu0
        %v8309 = vadd.f32 %v1269, %v8308
        %8310 = vmatprep.mubr.bf16.mxu0 %v2803
        %8311 = vmatmul.mubr.bf16.gmra.mxu0 %v2802
        %v8312 = vpop.f32.mrf.mxu0
        %v8313 = vadd.f32 %v1265, %v8312
        %v8314 = vpop.f32.mrf.mxu0
        %v8315 = vadd.f32 %v1269, %v8314
        %v8316 = vpop.f32.mrf.mxu0
        %v8317 = vadd.f32 %v1265, %v8316
        %v8318 = vpop.f32.mrf.mxu0
        %v8319 = vadd.f32 %v1269, %v8318
        %8320 = vmatprep.mubr.bf16.mxu0 %v2819
        %8321 = vmatmul.mubr.bf16.gmra.mxu0 %v2818
        %v8322 = vpop.f32.mrf.mxu0
        %v8323 = vadd.f32 %v1265, %v8322
        %v8324 = vpop.f32.mrf.mxu0
        %v8325 = vadd.f32 %v1269, %v8324
        %v8326 = vpop.f32.mrf.mxu0
        %v8327 = vadd.f32 %v1265, %v8326
        %v8328 = vpop.f32.mrf.mxu0
        %v8329 = vadd.f32 %v1269, %v8328
        %8330 = vmatprep.mubr.bf16.mxu0 %v2835
        %8331 = vmatmul.mubr.bf16.gmra.mxu0 %v2834
        %v8332 = vpop.f32.mrf.mxu0
        %v8333 = vadd.f32 %v1265, %v8332
        %v8334 = vpop.f32.mrf.mxu0
        %v8335 = vadd.f32 %v1269, %v8334
        %v8336 = vpop.f32.mrf.mxu0
        %v8337 = vpop.f32.mrf.mxu0
        %8338 = vdwg.mxu0
        %8339 = vmatprep.subr.bf16.mxu0 %v4881
        %8340 = vmatpush1.bf16.msra.mxu0 %v4880
        %8341 = vmatprep.subr.bf16.mxu0 %v4877
        %8342 = vmatpush1.bf16.msra.mxu0 %v4876
        %8343 = vmatprep.subr.bf16.mxu0 %v4873
        %8344 = vmatpush1.bf16.msra.mxu0 %v4872
        %8345 = vmatprep.subr.bf16.mxu0 %v4869
        %8346 = vmatpush1.bf16.msra.mxu0 %v4868
        %8347 = vmatprep.subr.bf16.mxu0 %v4865
        %8348 = vmatpush1.bf16.msra.mxu0 %v4864
        %8349 = vmatprep.subr.bf16.mxu0 %v4861
        %8350 = vmatpush1.bf16.msra.mxu0 %v4860
        %8351 = vmatprep.subr.bf16.mxu0 %v4857
        %8352 = vmatpush1.bf16.msra.mxu0 %v4856
        %8353 = vmatprep.subr.bf16.mxu0 %v4853
        %8354 = vmatpush1.bf16.msra.mxu0 %v4852
        %8355 = vmatprep.subr.bf16.mxu0 %v4913
        %8356 = vmatpush2.bf16.msra.mxu0 %v4912
        %8357 = vmatprep.subr.bf16.mxu0 %v4909
        %8358 = vmatpush2.bf16.msra.mxu0 %v4908
        %8359 = vmatprep.subr.bf16.mxu0 %v4905
        %8360 = vmatpush2.bf16.msra.mxu0 %v4904
        %8361 = vmatprep.subr.bf16.mxu0 %v4901
        %8362 = vmatpush2.bf16.msra.mxu0 %v4900
        %8363 = vmatprep.subr.bf16.mxu0 %v4897
        %8364 = vmatpush2.bf16.msra.mxu0 %v4896
        %8365 = vmatprep.subr.bf16.mxu0 %v4893
        %8366 = vmatpush2.bf16.msra.mxu0 %v4892
        %8367 = vmatprep.subr.bf16.mxu0 %v4889
        %8368 = vmatpush2.bf16.msra.mxu0 %v4888
        %8369 = vmatprep.subr.bf16.mxu0 %v4885
        %8370 = vmatpush2.bf16.msra.mxu0 %v4884
        %8371 = vmatprep.mubr.bf16.mxu0 %v2453
        %8372 = vmatmul.mubr.bf16.gmra.mxu0 %v2452
        %v8373 = vpop.f32.mrf.mxu0
        %v8374 = vadd.f32 %v8093, %v8373
        %v8375 = vpop.f32.mrf.mxu0
        %v8376 = vadd.f32 %v8095, %v8375
        %v8377 = vpop.f32.mrf.mxu0
        %v8378 = vadd.f32 %v8097, %v8377
        %v8379 = vpop.f32.mrf.mxu0
        %v8380 = vadd.f32 %v8099, %v8379
        %8381 = vmatprep.mubr.bf16.mxu0 %v2469
        %8382 = vmatmul.mubr.bf16.gmra.mxu0 %v2468
        %v8383 = vpop.f32.mrf.mxu0
        %v8384 = vadd.f32 %v8103, %v8383
        %v8385 = vpop.f32.mrf.mxu0
        %v8386 = vadd.f32 %v8105, %v8385
        %v8387 = vpop.f32.mrf.mxu0
        %v8388 = vadd.f32 %v8107, %v8387
        %v8389 = vpop.f32.mrf.mxu0
        %v8390 = vadd.f32 %v8109, %v8389
        %8391 = vmatprep.mubr.bf16.mxu0 %v2485
        %8392 = vmatmul.mubr.bf16.gmra.mxu0 %v2484
        %v8393 = vpop.f32.mrf.mxu0
        %v8394 = vadd.f32 %v8113, %v8393
        %v8395 = vpop.f32.mrf.mxu0
        %v8396 = vadd.f32 %v8115, %v8395
        %v8397 = vpop.f32.mrf.mxu0
        %v8398 = vadd.f32 %v8117, %v8397
        %v8399 = vpop.f32.mrf.mxu0
        %v8400 = vadd.f32 %v8119, %v8399
        %8401 = vmatprep.mubr.bf16.mxu0 %v2501
        %8402 = vmatmul.mubr.bf16.gmra.mxu0 %v2500
        %v8403 = vpop.f32.mrf.mxu0
        %v8404 = vadd.f32 %v8123, %v8403
        %v8405 = vpop.f32.mrf.mxu0
        %v8406 = vadd.f32 %v8125, %v8405
        %v8407 = vpop.f32.mrf.mxu0
        %v8408 = vadd.f32 %v8127, %v8407
        %v8409 = vpop.f32.mrf.mxu0
        %v8410 = vadd.f32 %v8129, %v8409
        %8411 = vmatprep.mubr.bf16.mxu0 %v2517
        %8412 = vmatmul.mubr.bf16.gmra.mxu0 %v2516
        %v8413 = vpop.f32.mrf.mxu0
        %v8414 = vadd.f32 %v8133, %v8413
        %v8415 = vpop.f32.mrf.mxu0
        %v8416 = vadd.f32 %v8135, %v8415
        %v8417 = vpop.f32.mrf.mxu0
        %v8418 = vadd.f32 %v8137, %v8417
        %v8419 = vpop.f32.mrf.mxu0
        %v8420 = vadd.f32 %v8139, %v8419
        %8421 = vmatprep.mubr.bf16.mxu0 %v2533
        %8422 = vmatmul.mubr.bf16.gmra.mxu0 %v2532
        %v8423 = vpop.f32.mrf.mxu0
        %v8424 = vadd.f32 %v8143, %v8423
        %v8425 = vpop.f32.mrf.mxu0
        %v8426 = vadd.f32 %v8145, %v8425
        %v8427 = vpop.f32.mrf.mxu0
        %v8428 = vadd.f32 %v8147, %v8427
        %v8429 = vpop.f32.mrf.mxu0
        %v8430 = vadd.f32 %v8149, %v8429
        %8431 = vmatprep.mubr.bf16.mxu0 %v2549
        %8432 = vmatmul.mubr.bf16.gmra.mxu0 %v2548
        %v8433 = vpop.f32.mrf.mxu0
        %v8434 = vadd.f32 %v8153, %v8433
        %v8435 = vpop.f32.mrf.mxu0
        %v8436 = vadd.f32 %v8155, %v8435
        %v8437 = vpop.f32.mrf.mxu0
        %v8438 = vadd.f32 %v8157, %v8437
        %v8439 = vpop.f32.mrf.mxu0
        %v8440 = vadd.f32 %v8159, %v8439
        %8441 = vmatprep.mubr.bf16.mxu0 %v2565
        %8442 = vmatmul.mubr.bf16.gmra.mxu0 %v2564
        %v8443 = vpop.f32.mrf.mxu0
        %v8444 = vadd.f32 %v8163, %v8443
        %v8445 = vpop.f32.mrf.mxu0
        %v8446 = vadd.f32 %v8165, %v8445
        %v8447 = vpop.f32.mrf.mxu0
        %v8448 = vadd.f32 %v8167, %v8447
        %v8449 = vpop.f32.mrf.mxu0
        %v8450 = vadd.f32 %v8169, %v8449
        %8451 = vmatprep.mubr.bf16.mxu0 %v2581
        %8452 = vmatmul.mubr.bf16.gmra.mxu0 %v2580
        %v8453 = vpop.f32.mrf.mxu0
        %v8454 = vadd.f32 %v8173, %v8453
        %v8455 = vpop.f32.mrf.mxu0
        %v8456 = vadd.f32 %v8175, %v8455
        %v8457 = vpop.f32.mrf.mxu0
        %v8458 = vadd.f32 %v8177, %v8457
        %v8459 = vpop.f32.mrf.mxu0
        %v8460 = vadd.f32 %v8179, %v8459
        %8461 = vmatprep.mubr.bf16.mxu0 %v2597
        %8462 = vmatmul.mubr.bf16.gmra.mxu0 %v2596
        %v8463 = vpop.f32.mrf.mxu0
        %v8464 = vadd.f32 %v8183, %v8463
        %v8465 = vpop.f32.mrf.mxu0
        %v8466 = vadd.f32 %v8185, %v8465
        %v8467 = vpop.f32.mrf.mxu0
        %v8468 = vadd.f32 %v8187, %v8467
        %v8469 = vpop.f32.mrf.mxu0
        %v8470 = vadd.f32 %v8189, %v8469
        %8471 = vmatprep.mubr.bf16.mxu0 %v2613
        %8472 = vmatmul.mubr.bf16.gmra.mxu0 %v2612
        %v8473 = vpop.f32.mrf.mxu0
        %v8474 = vadd.f32 %v8193, %v8473
        %v8475 = vpop.f32.mrf.mxu0
        %v8476 = vadd.f32 %v8195, %v8475
        %v8477 = vpop.f32.mrf.mxu0
        %v8478 = vadd.f32 %v8197, %v8477
        %v8479 = vpop.f32.mrf.mxu0
        %v8480 = vadd.f32 %v8199, %v8479
        %8481 = vmatprep.mubr.bf16.mxu0 %v2629
        %8482 = vmatmul.mubr.bf16.gmra.mxu0 %v2628
        %v8483 = vpop.f32.mrf.mxu0
        %v8484 = vadd.f32 %v8203, %v8483
        %v8485 = vpop.f32.mrf.mxu0
        %v8486 = vadd.f32 %v8205, %v8485
        %v8487 = vpop.f32.mrf.mxu0
        %v8488 = vadd.f32 %v8207, %v8487
        %v8489 = vpop.f32.mrf.mxu0
        %v8490 = vadd.f32 %v8209, %v8489
        %8491 = vmatprep.mubr.bf16.mxu0 %v2645
        %8492 = vmatmul.mubr.bf16.gmra.mxu0 %v2644
        %v8493 = vpop.f32.mrf.mxu0
        %v8494 = vadd.f32 %v8213, %v8493
        %v8495 = vpop.f32.mrf.mxu0
        %v8496 = vadd.f32 %v8215, %v8495
        %v8497 = vpop.f32.mrf.mxu0
        %v8498 = vadd.f32 %v8217, %v8497
        %v8499 = vpop.f32.mrf.mxu0
        %v8500 = vadd.f32 %v8219, %v8499
        %8501 = vmatprep.mubr.bf16.mxu0 %v2661
        %8502 = vmatmul.mubr.bf16.gmra.mxu0 %v2660
        %v8503 = vpop.f32.mrf.mxu0
        %v8504 = vadd.f32 %v8223, %v8503
        %v8505 = vpop.f32.mrf.mxu0
        %v8506 = vadd.f32 %v8225, %v8505
        %v8507 = vpop.f32.mrf.mxu0
        %v8508 = vadd.f32 %v8227, %v8507
        %v8509 = vpop.f32.mrf.mxu0
        %v8510 = vadd.f32 %v8229, %v8509
        %8511 = vmatprep.mubr.bf16.mxu0 %v2677
        %8512 = vmatmul.mubr.bf16.gmra.mxu0 %v2676
        %v8513 = vpop.f32.mrf.mxu0
        %v8514 = vadd.f32 %v8233, %v8513
        %v8515 = vpop.f32.mrf.mxu0
        %v8516 = vadd.f32 %v8235, %v8515
        %v8517 = vpop.f32.mrf.mxu0
        %v8518 = vadd.f32 %v8237, %v8517
        %v8519 = vpop.f32.mrf.mxu0
        %v8520 = vadd.f32 %v8239, %v8519
        %8521 = vmatprep.mubr.bf16.mxu0 %v2693
        %8522 = vmatmul.mubr.bf16.gmra.mxu0 %v2692
        %v8523 = vpop.f32.mrf.mxu0
        %v8524 = vadd.f32 %v8243, %v8523
        %v8525 = vpop.f32.mrf.mxu0
        %v8526 = vadd.f32 %v8245, %v8525
        %v8527 = vpop.f32.mrf.mxu0
        %v8528 = vadd.f32 %v8247, %v8527
        %v8529 = vpop.f32.mrf.mxu0
        %v8530 = vadd.f32 %v8249, %v8529
        %8531 = vmatprep.mubr.bf16.mxu0 %v2709
        %8532 = vmatmul.mubr.bf16.gmra.mxu0 %v2708
        %v8533 = vpop.f32.mrf.mxu0
        %v8534 = vadd.f32 %v8253, %v8533
        %v8535 = vpop.f32.mrf.mxu0
        %v8536 = vadd.f32 %v8255, %v8535
        %v8537 = vpop.f32.mrf.mxu0
        %v8538 = vadd.f32 %v8257, %v8537
        %v8539 = vpop.f32.mrf.mxu0
        %v8540 = vadd.f32 %v8259, %v8539
        %8541 = vmatprep.mubr.bf16.mxu0 %v2725
        %8542 = vmatmul.mubr.bf16.gmra.mxu0 %v2724
        %v8543 = vpop.f32.mrf.mxu0
        %v8544 = vadd.f32 %v8263, %v8543
        %v8545 = vpop.f32.mrf.mxu0
        %v8546 = vadd.f32 %v8265, %v8545
        %v8547 = vpop.f32.mrf.mxu0
        %v8548 = vadd.f32 %v8267, %v8547
        %v8549 = vpop.f32.mrf.mxu0
        %v8550 = vadd.f32 %v8269, %v8549
        %8551 = vmatprep.mubr.bf16.mxu0 %v2741
        %8552 = vmatmul.mubr.bf16.gmra.mxu0 %v2740
        %v8553 = vpop.f32.mrf.mxu0
        %v8554 = vadd.f32 %v8273, %v8553
        %v8555 = vpop.f32.mrf.mxu0
        %v8556 = vadd.f32 %v8275, %v8555
        %v8557 = vpop.f32.mrf.mxu0
        %v8558 = vadd.f32 %v8277, %v8557
        %v8559 = vpop.f32.mrf.mxu0
        %v8560 = vadd.f32 %v8279, %v8559
        %8561 = vmatprep.mubr.bf16.mxu0 %v2757
        %8562 = vmatmul.mubr.bf16.gmra.mxu0 %v2756
        %v8563 = vpop.f32.mrf.mxu0
        %v8564 = vadd.f32 %v8283, %v8563
        %v8565 = vpop.f32.mrf.mxu0
        %v8566 = vadd.f32 %v8285, %v8565
        %v8567 = vpop.f32.mrf.mxu0
        %v8568 = vadd.f32 %v8287, %v8567
        %v8569 = vpop.f32.mrf.mxu0
        %v8570 = vadd.f32 %v8289, %v8569
        %8571 = vmatprep.mubr.bf16.mxu0 %v2773
        %8572 = vmatmul.mubr.bf16.gmra.mxu0 %v2772
        %v8573 = vpop.f32.mrf.mxu0
        %v8574 = vadd.f32 %v8293, %v8573
        %v8575 = vpop.f32.mrf.mxu0
        %v8576 = vadd.f32 %v8295, %v8575
        %v8577 = vpop.f32.mrf.mxu0
        %v8578 = vadd.f32 %v8297, %v8577
        %v8579 = vpop.f32.mrf.mxu0
        %v8580 = vadd.f32 %v8299, %v8579
        %8581 = vmatprep.mubr.bf16.mxu0 %v2789
        %8582 = vmatmul.mubr.bf16.gmra.mxu0 %v2788
        %v8583 = vpop.f32.mrf.mxu0
        %v8584 = vadd.f32 %v8303, %v8583
        %v8585 = vpop.f32.mrf.mxu0
        %v8586 = vadd.f32 %v8305, %v8585
        %v8587 = vpop.f32.mrf.mxu0
        %v8588 = vadd.f32 %v8307, %v8587
        %v8589 = vpop.f32.mrf.mxu0
        %v8590 = vadd.f32 %v8309, %v8589
        %8591 = vmatprep.mubr.bf16.mxu0 %v2805
        %8592 = vmatmul.mubr.bf16.gmra.mxu0 %v2804
        %v8593 = vpop.f32.mrf.mxu0
        %v8594 = vadd.f32 %v8313, %v8593
        %v8595 = vpop.f32.mrf.mxu0
        %v8596 = vadd.f32 %v8315, %v8595
        %v8597 = vpop.f32.mrf.mxu0
        %v8598 = vadd.f32 %v8317, %v8597
        %v8599 = vpop.f32.mrf.mxu0
        %v8600 = vadd.f32 %v8319, %v8599
        %8601 = vmatprep.mubr.bf16.mxu0 %v2821
        %8602 = vmatmul.mubr.bf16.gmra.mxu0 %v2820
        %v8603 = vpop.f32.mrf.mxu0
        %v8604 = vadd.f32 %v8323, %v8603
        %v8605 = vpop.f32.mrf.mxu0
        %v8606 = vadd.f32 %v8325, %v8605
        %v8607 = vpop.f32.mrf.mxu0
        %v8608 = vadd.f32 %v8327, %v8607
        %v8609 = vpop.f32.mrf.mxu0
        %v8610 = vadd.f32 %v8329, %v8609
        %8611 = vmatprep.mubr.bf16.mxu0 %v2837
        %8612 = vmatmul.mubr.bf16.gmra.mxu0 %v2836
        %v8613 = vpop.f32.mrf.mxu0
        %v8614 = vadd.f32 %v8333, %v8613
        %v8615 = vpop.f32.mrf.mxu0
        %v8616 = vadd.f32 %v8335, %v8615
        %v8617 = vpop.f32.mrf.mxu0
        %v8618 = vpop.f32.mrf.mxu0
        %8619 = vdwg.mxu0
        %8620 = vmatprep.subr.bf16.mxu0 %v4945
        %8621 = vmatpush1.bf16.msra.mxu0 %v4944
        %8622 = vmatprep.subr.bf16.mxu0 %v4941
        %8623 = vmatpush1.bf16.msra.mxu0 %v4940
        %8624 = vmatprep.subr.bf16.mxu0 %v4937
        %8625 = vmatpush1.bf16.msra.mxu0 %v4936
        %8626 = vmatprep.subr.bf16.mxu0 %v4933
        %8627 = vmatpush1.bf16.msra.mxu0 %v4932
        %8628 = vmatprep.subr.bf16.mxu0 %v4929
        %8629 = vmatpush1.bf16.msra.mxu0 %v4928
        %8630 = vmatprep.subr.bf16.mxu0 %v4925
        %8631 = vmatpush1.bf16.msra.mxu0 %v4924
        %8632 = vmatprep.subr.bf16.mxu0 %v4921
        %8633 = vmatpush1.bf16.msra.mxu0 %v4920
        %8634 = vmatprep.subr.bf16.mxu0 %v4917
        %8635 = vmatpush1.bf16.msra.mxu0 %v4916
        %8636 = vmatprep.subr.bf16.mxu0 %v4977
        %8637 = vmatpush2.bf16.msra.mxu0 %v4976
        %8638 = vmatprep.subr.bf16.mxu0 %v4973
        %8639 = vmatpush2.bf16.msra.mxu0 %v4972
        %8640 = vmatprep.subr.bf16.mxu0 %v4969
        %8641 = vmatpush2.bf16.msra.mxu0 %v4968
        %8642 = vmatprep.subr.bf16.mxu0 %v4965
        %8643 = vmatpush2.bf16.msra.mxu0 %v4964
        %8644 = vmatprep.subr.bf16.mxu0 %v4961
        %8645 = vmatpush2.bf16.msra.mxu0 %v4960
        %8646 = vmatprep.subr.bf16.mxu0 %v4957
        %8647 = vmatpush2.bf16.msra.mxu0 %v4956
        %8648 = vmatprep.subr.bf16.mxu0 %v4953
        %8649 = vmatpush2.bf16.msra.mxu0 %v4952
        %8650 = vmatprep.subr.bf16.mxu0 %v4949
        %8651 = vmatpush2.bf16.msra.mxu0 %v4948
        %8652 = vmatprep.mubr.bf16.mxu0 %v2455
        %8653 = vmatmul.mubr.bf16.gmra.mxu0 %v2454
        %v8654 = vpop.f32.mrf.mxu0
        %v8655 = vadd.f32 %v8374, %v8654
        %v8656 = vpop.f32.mrf.mxu0
        %v8657 = vadd.f32 %v8376, %v8656
        %v8658 = vpop.f32.mrf.mxu0
        %v8659 = vadd.f32 %v8378, %v8658
        %v8660 = vpop.f32.mrf.mxu0
        %v8661 = vadd.f32 %v8380, %v8660
        %8662 = vmatprep.mubr.bf16.mxu0 %v2471
        %8663 = vmatmul.mubr.bf16.gmra.mxu0 %v2470
        %v8664 = vpop.f32.mrf.mxu0
        %v8665 = vadd.f32 %v8384, %v8664
        %v8666 = vpop.f32.mrf.mxu0
        %v8667 = vadd.f32 %v8386, %v8666
        %v8668 = vpop.f32.mrf.mxu0
        %v8669 = vadd.f32 %v8388, %v8668
        %v8670 = vpop.f32.mrf.mxu0
        %v8671 = vadd.f32 %v8390, %v8670
        %8672 = vmatprep.mubr.bf16.mxu0 %v2487
        %8673 = vmatmul.mubr.bf16.gmra.mxu0 %v2486
        %v8674 = vpop.f32.mrf.mxu0
        %v8675 = vadd.f32 %v8394, %v8674
        %v8676 = vpop.f32.mrf.mxu0
        %v8677 = vadd.f32 %v8396, %v8676
        %v8678 = vpop.f32.mrf.mxu0
        %v8679 = vadd.f32 %v8398, %v8678
        %v8680 = vpop.f32.mrf.mxu0
        %v8681 = vadd.f32 %v8400, %v8680
        %8682 = vmatprep.mubr.bf16.mxu0 %v2503
        %8683 = vmatmul.mubr.bf16.gmra.mxu0 %v2502
        %v8684 = vpop.f32.mrf.mxu0
        %v8685 = vadd.f32 %v8404, %v8684
        %v8686 = vpop.f32.mrf.mxu0
        %v8687 = vadd.f32 %v8406, %v8686
        %v8688 = vpop.f32.mrf.mxu0
        %v8689 = vadd.f32 %v8408, %v8688
        %v8690 = vpop.f32.mrf.mxu0
        %v8691 = vadd.f32 %v8410, %v8690
        %8692 = vmatprep.mubr.bf16.mxu0 %v2519
        %8693 = vmatmul.mubr.bf16.gmra.mxu0 %v2518
        %v8694 = vpop.f32.mrf.mxu0
        %v8695 = vadd.f32 %v8414, %v8694
        %v8696 = vpop.f32.mrf.mxu0
        %v8697 = vadd.f32 %v8416, %v8696
        %v8698 = vpop.f32.mrf.mxu0
        %v8699 = vadd.f32 %v8418, %v8698
        %v8700 = vpop.f32.mrf.mxu0
        %v8701 = vadd.f32 %v8420, %v8700
        %8702 = vmatprep.mubr.bf16.mxu0 %v2535
        %8703 = vmatmul.mubr.bf16.gmra.mxu0 %v2534
        %v8704 = vpop.f32.mrf.mxu0
        %v8705 = vadd.f32 %v8424, %v8704
        %v8706 = vpop.f32.mrf.mxu0
        %v8707 = vadd.f32 %v8426, %v8706
        %v8708 = vpop.f32.mrf.mxu0
        %v8709 = vadd.f32 %v8428, %v8708
        %v8710 = vpop.f32.mrf.mxu0
        %v8711 = vadd.f32 %v8430, %v8710
        %8712 = vmatprep.mubr.bf16.mxu0 %v2551
        %8713 = vmatmul.mubr.bf16.gmra.mxu0 %v2550
        %v8714 = vpop.f32.mrf.mxu0
        %v8715 = vadd.f32 %v8434, %v8714
        %v8716 = vpop.f32.mrf.mxu0
        %v8717 = vadd.f32 %v8436, %v8716
        %v8718 = vpop.f32.mrf.mxu0
        %v8719 = vadd.f32 %v8438, %v8718
        %v8720 = vpop.f32.mrf.mxu0
        %v8721 = vadd.f32 %v8440, %v8720
        %8722 = vmatprep.mubr.bf16.mxu0 %v2567
        %8723 = vmatmul.mubr.bf16.gmra.mxu0 %v2566
        %v8724 = vpop.f32.mrf.mxu0
        %v8725 = vadd.f32 %v8444, %v8724
        %v8726 = vpop.f32.mrf.mxu0
        %v8727 = vadd.f32 %v8446, %v8726
        %v8728 = vpop.f32.mrf.mxu0
        %v8729 = vadd.f32 %v8448, %v8728
        %v8730 = vpop.f32.mrf.mxu0
        %v8731 = vadd.f32 %v8450, %v8730
        %8732 = vmatprep.mubr.bf16.mxu0 %v2583
        %8733 = vmatmul.mubr.bf16.gmra.mxu0 %v2582
        %v8734 = vpop.f32.mrf.mxu0
        %v8735 = vadd.f32 %v8454, %v8734
        %v8736 = vpop.f32.mrf.mxu0
        %v8737 = vadd.f32 %v8456, %v8736
        %v8738 = vpop.f32.mrf.mxu0
        %v8739 = vadd.f32 %v8458, %v8738
        %v8740 = vpop.f32.mrf.mxu0
        %v8741 = vadd.f32 %v8460, %v8740
        %8742 = vmatprep.mubr.bf16.mxu0 %v2599
        %8743 = vmatmul.mubr.bf16.gmra.mxu0 %v2598
        %v8744 = vpop.f32.mrf.mxu0
        %v8745 = vadd.f32 %v8464, %v8744
        %v8746 = vpop.f32.mrf.mxu0
        %v8747 = vadd.f32 %v8466, %v8746
        %v8748 = vpop.f32.mrf.mxu0
        %v8749 = vadd.f32 %v8468, %v8748
        %v8750 = vpop.f32.mrf.mxu0
        %v8751 = vadd.f32 %v8470, %v8750
        %8752 = vmatprep.mubr.bf16.mxu0 %v2615
        %8753 = vmatmul.mubr.bf16.gmra.mxu0 %v2614
        %v8754 = vpop.f32.mrf.mxu0
        %v8755 = vadd.f32 %v8474, %v8754
        %v8756 = vpop.f32.mrf.mxu0
        %v8757 = vadd.f32 %v8476, %v8756
        %v8758 = vpop.f32.mrf.mxu0
        %v8759 = vadd.f32 %v8478, %v8758
        %v8760 = vpop.f32.mrf.mxu0
        %v8761 = vadd.f32 %v8480, %v8760
        %8762 = vmatprep.mubr.bf16.mxu0 %v2631
        %8763 = vmatmul.mubr.bf16.gmra.mxu0 %v2630
        %v8764 = vpop.f32.mrf.mxu0
        %v8765 = vadd.f32 %v8484, %v8764
        %v8766 = vpop.f32.mrf.mxu0
        %v8767 = vadd.f32 %v8486, %v8766
        %v8768 = vpop.f32.mrf.mxu0
        %v8769 = vadd.f32 %v8488, %v8768
        %v8770 = vpop.f32.mrf.mxu0
        %v8771 = vadd.f32 %v8490, %v8770
        %8772 = vmatprep.mubr.bf16.mxu0 %v2647
        %8773 = vmatmul.mubr.bf16.gmra.mxu0 %v2646
        %v8774 = vpop.f32.mrf.mxu0
        %v8775 = vadd.f32 %v8494, %v8774
        %v8776 = vpop.f32.mrf.mxu0
        %v8777 = vadd.f32 %v8496, %v8776
        %v8778 = vpop.f32.mrf.mxu0
        %v8779 = vadd.f32 %v8498, %v8778
        %v8780 = vpop.f32.mrf.mxu0
        %v8781 = vadd.f32 %v8500, %v8780
        %8782 = vmatprep.mubr.bf16.mxu0 %v2663
        %8783 = vmatmul.mubr.bf16.gmra.mxu0 %v2662
        %v8784 = vpop.f32.mrf.mxu0
        %v8785 = vadd.f32 %v8504, %v8784
        %v8786 = vpop.f32.mrf.mxu0
        %v8787 = vadd.f32 %v8506, %v8786
        %v8788 = vpop.f32.mrf.mxu0
        %v8789 = vadd.f32 %v8508, %v8788
        %v8790 = vpop.f32.mrf.mxu0
        %v8791 = vadd.f32 %v8510, %v8790
        %8792 = vmatprep.mubr.bf16.mxu0 %v2679
        %8793 = vmatmul.mubr.bf16.gmra.mxu0 %v2678
        %v8794 = vpop.f32.mrf.mxu0
        %v8795 = vadd.f32 %v8514, %v8794
        %v8796 = vpop.f32.mrf.mxu0
        %v8797 = vadd.f32 %v8516, %v8796
        %v8798 = vpop.f32.mrf.mxu0
        %v8799 = vadd.f32 %v8518, %v8798
        %v8800 = vpop.f32.mrf.mxu0
        %v8801 = vadd.f32 %v8520, %v8800
        %8802 = vmatprep.mubr.bf16.mxu0 %v2695
        %8803 = vmatmul.mubr.bf16.gmra.mxu0 %v2694
        %v8804 = vpop.f32.mrf.mxu0
        %v8805 = vadd.f32 %v8524, %v8804
        %v8806 = vpop.f32.mrf.mxu0
        %v8807 = vadd.f32 %v8526, %v8806
        %v8808 = vpop.f32.mrf.mxu0
        %v8809 = vadd.f32 %v8528, %v8808
        %v8810 = vpop.f32.mrf.mxu0
        %v8811 = vadd.f32 %v8530, %v8810
        %8812 = vmatprep.mubr.bf16.mxu0 %v2711
        %8813 = vmatmul.mubr.bf16.gmra.mxu0 %v2710
        %v8814 = vpop.f32.mrf.mxu0
        %v8815 = vadd.f32 %v8534, %v8814
        %v8816 = vpop.f32.mrf.mxu0
        %v8817 = vadd.f32 %v8536, %v8816
        %v8818 = vpop.f32.mrf.mxu0
        %v8819 = vadd.f32 %v8538, %v8818
        %v8820 = vpop.f32.mrf.mxu0
        %v8821 = vadd.f32 %v8540, %v8820
        %8822 = vmatprep.mubr.bf16.mxu0 %v2727
        %8823 = vmatmul.mubr.bf16.gmra.mxu0 %v2726
        %v8824 = vpop.f32.mrf.mxu0
        %v8825 = vadd.f32 %v8544, %v8824
        %v8826 = vpop.f32.mrf.mxu0
        %v8827 = vadd.f32 %v8546, %v8826
        %v8828 = vpop.f32.mrf.mxu0
        %v8829 = vadd.f32 %v8548, %v8828
        %v8830 = vpop.f32.mrf.mxu0
        %v8831 = vadd.f32 %v8550, %v8830
        %8832 = vmatprep.mubr.bf16.mxu0 %v2743
        %8833 = vmatmul.mubr.bf16.gmra.mxu0 %v2742
        %v8834 = vpop.f32.mrf.mxu0
        %v8835 = vadd.f32 %v8554, %v8834
        %v8836 = vpop.f32.mrf.mxu0
        %v8837 = vadd.f32 %v8556, %v8836
        %v8838 = vpop.f32.mrf.mxu0
        %v8839 = vadd.f32 %v8558, %v8838
        %v8840 = vpop.f32.mrf.mxu0
        %v8841 = vadd.f32 %v8560, %v8840
        %8842 = vmatprep.mubr.bf16.mxu0 %v2759
        %8843 = vmatmul.mubr.bf16.gmra.mxu0 %v2758
        %v8844 = vpop.f32.mrf.mxu0
        %v8845 = vadd.f32 %v8564, %v8844
        %v8846 = vpop.f32.mrf.mxu0
        %v8847 = vadd.f32 %v8566, %v8846
        %v8848 = vpop.f32.mrf.mxu0
        %v8849 = vadd.f32 %v8568, %v8848
        %v8850 = vpop.f32.mrf.mxu0
        %v8851 = vadd.f32 %v8570, %v8850
        %8852 = vmatprep.mubr.bf16.mxu0 %v2775
        %8853 = vmatmul.mubr.bf16.gmra.mxu0 %v2774
        %v8854 = vpop.f32.mrf.mxu0
        %v8855 = vadd.f32 %v8574, %v8854
        %v8856 = vpop.f32.mrf.mxu0
        %v8857 = vadd.f32 %v8576, %v8856
        %v8858 = vpop.f32.mrf.mxu0
        %v8859 = vadd.f32 %v8578, %v8858
        %v8860 = vpop.f32.mrf.mxu0
        %v8861 = vadd.f32 %v8580, %v8860
        %8862 = vmatprep.mubr.bf16.mxu0 %v2791
        %8863 = vmatmul.mubr.bf16.gmra.mxu0 %v2790
        %v8864 = vpop.f32.mrf.mxu0
        %v8865 = vadd.f32 %v8584, %v8864
        %v8866 = vpop.f32.mrf.mxu0
        %v8867 = vadd.f32 %v8586, %v8866
        %v8868 = vpop.f32.mrf.mxu0
        %v8869 = vadd.f32 %v8588, %v8868
        %v8870 = vpop.f32.mrf.mxu0
        %v8871 = vadd.f32 %v8590, %v8870
        %8872 = vmatprep.mubr.bf16.mxu0 %v2807
        %8873 = vmatmul.mubr.bf16.gmra.mxu0 %v2806
        %v8874 = vpop.f32.mrf.mxu0
        %v8875 = vadd.f32 %v8594, %v8874
        %v8876 = vpop.f32.mrf.mxu0
        %v8877 = vadd.f32 %v8596, %v8876
        %v8878 = vpop.f32.mrf.mxu0
        %v8879 = vadd.f32 %v8598, %v8878
        %v8880 = vpop.f32.mrf.mxu0
        %v8881 = vadd.f32 %v8600, %v8880
        %8882 = vmatprep.mubr.bf16.mxu0 %v2823
        %8883 = vmatmul.mubr.bf16.gmra.mxu0 %v2822
        %v8884 = vpop.f32.mrf.mxu0
        %v8885 = vadd.f32 %v8604, %v8884
        %v8886 = vpop.f32.mrf.mxu0
        %v8887 = vadd.f32 %v8606, %v8886
        %v8888 = vpop.f32.mrf.mxu0
        %v8889 = vadd.f32 %v8608, %v8888
        %v8890 = vpop.f32.mrf.mxu0
        %v8891 = vadd.f32 %v8610, %v8890
        %8892 = vmatprep.mubr.bf16.mxu0 %v2839
        %8893 = vmatmul.mubr.bf16.gmra.mxu0 %v2838
        %v8894 = vpop.f32.mrf.mxu0
        %v8895 = vadd.f32 %v8614, %v8894
        %v8896 = vpop.f32.mrf.mxu0
        %v8897 = vadd.f32 %v8616, %v8896
        %v8898 = vpop.f32.mrf.mxu0
        %v8899 = vpop.f32.mrf.mxu0
        %8900 = vdwg.mxu0
        %8901 = vmatprep.subr.bf16.mxu0 %v5009
        %8902 = vmatpush1.bf16.msra.mxu0 %v5008
        %8903 = vmatprep.subr.bf16.mxu0 %v5005
        %8904 = vmatpush1.bf16.msra.mxu0 %v5004
        %8905 = vmatprep.subr.bf16.mxu0 %v5001
        %8906 = vmatpush1.bf16.msra.mxu0 %v5000
        %8907 = vmatprep.subr.bf16.mxu0 %v4997
        %8908 = vmatpush1.bf16.msra.mxu0 %v4996
        %8909 = vmatprep.subr.bf16.mxu0 %v4993
        %8910 = vmatpush1.bf16.msra.mxu0 %v4992
        %8911 = vmatprep.subr.bf16.mxu0 %v4989
        %8912 = vmatpush1.bf16.msra.mxu0 %v4988
        %8913 = vmatprep.subr.bf16.mxu0 %v4985
        %8914 = vmatpush1.bf16.msra.mxu0 %v4984
        %8915 = vmatprep.subr.bf16.mxu0 %v4981
        %8916 = vmatpush1.bf16.msra.mxu0 %v4980
        %8917 = vmatprep.subr.bf16.mxu0 %v5041
        %8918 = vmatpush2.bf16.msra.mxu0 %v5040
        %8919 = vmatprep.subr.bf16.mxu0 %v5037
        %8920 = vmatpush2.bf16.msra.mxu0 %v5036
        %8921 = vmatprep.subr.bf16.mxu0 %v5033
        %8922 = vmatpush2.bf16.msra.mxu0 %v5032
        %8923 = vmatprep.subr.bf16.mxu0 %v5029
        %8924 = vmatpush2.bf16.msra.mxu0 %v5028
        %8925 = vmatprep.subr.bf16.mxu0 %v5025
        %8926 = vmatpush2.bf16.msra.mxu0 %v5024
        %8927 = vmatprep.subr.bf16.mxu0 %v5021
        %8928 = vmatpush2.bf16.msra.mxu0 %v5020
        %8929 = vmatprep.subr.bf16.mxu0 %v5017
        %8930 = vmatpush2.bf16.msra.mxu0 %v5016
        %8931 = vmatprep.subr.bf16.mxu0 %v5013
        %8932 = vmatpush2.bf16.msra.mxu0 %v5012
        %8933 = vmatprep.mubr.bf16.mxu0 %v2457
        %8934 = vmatmul.mubr.bf16.gmra.mxu0 %v2456
        %v8935 = vpop.f32.mrf.mxu0
        %v8936 = vadd.f32 %v8655, %v8935
        %v8937 = vpop.f32.mrf.mxu0
        %v8938 = vadd.f32 %v8657, %v8937
        %v8939 = vpop.f32.mrf.mxu0
        %v8940 = vadd.f32 %v8659, %v8939
        %v8941 = vpop.f32.mrf.mxu0
        %v8942 = vadd.f32 %v8661, %v8941
        %8943 = vmatprep.mubr.bf16.mxu0 %v2473
        %8944 = vmatmul.mubr.bf16.gmra.mxu0 %v2472
        %v8945 = vpop.f32.mrf.mxu0
        %v8946 = vadd.f32 %v8665, %v8945
        %v8947 = vpop.f32.mrf.mxu0
        %v8948 = vadd.f32 %v8667, %v8947
        %v8949 = vpop.f32.mrf.mxu0
        %v8950 = vadd.f32 %v8669, %v8949
        %v8951 = vpop.f32.mrf.mxu0
        %v8952 = vadd.f32 %v8671, %v8951
        %8953 = vmatprep.mubr.bf16.mxu0 %v2489
        %8954 = vmatmul.mubr.bf16.gmra.mxu0 %v2488
        %v8955 = vpop.f32.mrf.mxu0
        %v8956 = vadd.f32 %v8675, %v8955
        %v8957 = vpop.f32.mrf.mxu0
        %v8958 = vadd.f32 %v8677, %v8957
        %v8959 = vpop.f32.mrf.mxu0
        %v8960 = vadd.f32 %v8679, %v8959
        %v8961 = vpop.f32.mrf.mxu0
        %v8962 = vadd.f32 %v8681, %v8961
        %8963 = vmatprep.mubr.bf16.mxu0 %v2505
        %8964 = vmatmul.mubr.bf16.gmra.mxu0 %v2504
        %v8965 = vpop.f32.mrf.mxu0
        %v8966 = vadd.f32 %v8685, %v8965
        %v8967 = vpop.f32.mrf.mxu0
        %v8968 = vadd.f32 %v8687, %v8967
        %v8969 = vpop.f32.mrf.mxu0
        %v8970 = vadd.f32 %v8689, %v8969
        %v8971 = vpop.f32.mrf.mxu0
        %v8972 = vadd.f32 %v8691, %v8971
        %8973 = vmatprep.mubr.bf16.mxu0 %v2521
        %8974 = vmatmul.mubr.bf16.gmra.mxu0 %v2520
        %v8975 = vpop.f32.mrf.mxu0
        %v8976 = vadd.f32 %v8695, %v8975
        %v8977 = vpop.f32.mrf.mxu0
        %v8978 = vadd.f32 %v8697, %v8977
        %v8979 = vpop.f32.mrf.mxu0
        %v8980 = vadd.f32 %v8699, %v8979
        %v8981 = vpop.f32.mrf.mxu0
        %v8982 = vadd.f32 %v8701, %v8981
        %8983 = vmatprep.mubr.bf16.mxu0 %v2537
        %8984 = vmatmul.mubr.bf16.gmra.mxu0 %v2536
        %v8985 = vpop.f32.mrf.mxu0
        %v8986 = vadd.f32 %v8705, %v8985
        %v8987 = vpop.f32.mrf.mxu0
        %v8988 = vadd.f32 %v8707, %v8987
        %v8989 = vpop.f32.mrf.mxu0
        %v8990 = vadd.f32 %v8709, %v8989
        %v8991 = vpop.f32.mrf.mxu0
        %v8992 = vadd.f32 %v8711, %v8991
        %8993 = vmatprep.mubr.bf16.mxu0 %v2553
        %8994 = vmatmul.mubr.bf16.gmra.mxu0 %v2552
        %v8995 = vpop.f32.mrf.mxu0
        %v8996 = vadd.f32 %v8715, %v8995
        %v8997 = vpop.f32.mrf.mxu0
        %v8998 = vadd.f32 %v8717, %v8997
        %v8999 = vpop.f32.mrf.mxu0
        %v9000 = vadd.f32 %v8719, %v8999
        %v9001 = vpop.f32.mrf.mxu0
        %v9002 = vadd.f32 %v8721, %v9001
        %9003 = vmatprep.mubr.bf16.mxu0 %v2569
        %9004 = vmatmul.mubr.bf16.gmra.mxu0 %v2568
        %v9005 = vpop.f32.mrf.mxu0
        %v9006 = vadd.f32 %v8725, %v9005
        %v9007 = vpop.f32.mrf.mxu0
        %v9008 = vadd.f32 %v8727, %v9007
        %v9009 = vpop.f32.mrf.mxu0
        %v9010 = vadd.f32 %v8729, %v9009
        %v9011 = vpop.f32.mrf.mxu0
        %v9012 = vadd.f32 %v8731, %v9011
        %9013 = vmatprep.mubr.bf16.mxu0 %v2585
        %9014 = vmatmul.mubr.bf16.gmra.mxu0 %v2584
        %v9015 = vpop.f32.mrf.mxu0
        %v9016 = vadd.f32 %v8735, %v9015
        %v9017 = vpop.f32.mrf.mxu0
        %v9018 = vadd.f32 %v8737, %v9017
        %v9019 = vpop.f32.mrf.mxu0
        %v9020 = vadd.f32 %v8739, %v9019
        %v9021 = vpop.f32.mrf.mxu0
        %v9022 = vadd.f32 %v8741, %v9021
        %9023 = vmatprep.mubr.bf16.mxu0 %v2601
        %9024 = vmatmul.mubr.bf16.gmra.mxu0 %v2600
        %v9025 = vpop.f32.mrf.mxu0
        %v9026 = vadd.f32 %v8745, %v9025
        %v9027 = vpop.f32.mrf.mxu0
        %v9028 = vadd.f32 %v8747, %v9027
        %v9029 = vpop.f32.mrf.mxu0
        %v9030 = vadd.f32 %v8749, %v9029
        %v9031 = vpop.f32.mrf.mxu0
        %v9032 = vadd.f32 %v8751, %v9031
        %9033 = vmatprep.mubr.bf16.mxu0 %v2617
        %9034 = vmatmul.mubr.bf16.gmra.mxu0 %v2616
        %v9035 = vpop.f32.mrf.mxu0
        %v9036 = vadd.f32 %v8755, %v9035
        %v9037 = vpop.f32.mrf.mxu0
        %v9038 = vadd.f32 %v8757, %v9037
        %v9039 = vpop.f32.mrf.mxu0
        %v9040 = vadd.f32 %v8759, %v9039
        %v9041 = vpop.f32.mrf.mxu0
        %v9042 = vadd.f32 %v8761, %v9041
        %9043 = vmatprep.mubr.bf16.mxu0 %v2633
        %9044 = vmatmul.mubr.bf16.gmra.mxu0 %v2632
        %v9045 = vpop.f32.mrf.mxu0
        %v9046 = vadd.f32 %v8765, %v9045
        %v9047 = vpop.f32.mrf.mxu0
        %v9048 = vadd.f32 %v8767, %v9047
        %v9049 = vpop.f32.mrf.mxu0
        %v9050 = vadd.f32 %v8769, %v9049
        %v9051 = vpop.f32.mrf.mxu0
        %v9052 = vadd.f32 %v8771, %v9051
        %9053 = vmatprep.mubr.bf16.mxu0 %v2649
        %9054 = vmatmul.mubr.bf16.gmra.mxu0 %v2648
        %v9055 = vpop.f32.mrf.mxu0
        %v9056 = vadd.f32 %v8775, %v9055
        %v9057 = vpop.f32.mrf.mxu0
        %v9058 = vadd.f32 %v8777, %v9057
        %v9059 = vpop.f32.mrf.mxu0
        %v9060 = vadd.f32 %v8779, %v9059
        %v9061 = vpop.f32.mrf.mxu0
        %v9062 = vadd.f32 %v8781, %v9061
        %9063 = vmatprep.mubr.bf16.mxu0 %v2665
        %9064 = vmatmul.mubr.bf16.gmra.mxu0 %v2664
        %v9065 = vpop.f32.mrf.mxu0
        %v9066 = vadd.f32 %v8785, %v9065
        %v9067 = vpop.f32.mrf.mxu0
        %v9068 = vadd.f32 %v8787, %v9067
        %v9069 = vpop.f32.mrf.mxu0
        %v9070 = vadd.f32 %v8789, %v9069
        %v9071 = vpop.f32.mrf.mxu0
        %v9072 = vadd.f32 %v8791, %v9071
        %9073 = vmatprep.mubr.bf16.mxu0 %v2681
        %9074 = vmatmul.mubr.bf16.gmra.mxu0 %v2680
        %v9075 = vpop.f32.mrf.mxu0
        %v9076 = vadd.f32 %v8795, %v9075
        %v9077 = vpop.f32.mrf.mxu0
        %v9078 = vadd.f32 %v8797, %v9077
        %v9079 = vpop.f32.mrf.mxu0
        %v9080 = vadd.f32 %v8799, %v9079
        %v9081 = vpop.f32.mrf.mxu0
        %v9082 = vadd.f32 %v8801, %v9081
        %9083 = vmatprep.mubr.bf16.mxu0 %v2697
        %9084 = vmatmul.mubr.bf16.gmra.mxu0 %v2696
        %v9085 = vpop.f32.mrf.mxu0
        %v9086 = vadd.f32 %v8805, %v9085
        %v9087 = vpop.f32.mrf.mxu0
        %v9088 = vadd.f32 %v8807, %v9087
        %v9089 = vpop.f32.mrf.mxu0
        %v9090 = vadd.f32 %v8809, %v9089
        %v9091 = vpop.f32.mrf.mxu0
        %v9092 = vadd.f32 %v8811, %v9091
        %9093 = vmatprep.mubr.bf16.mxu0 %v2713
        %9094 = vmatmul.mubr.bf16.gmra.mxu0 %v2712
        %v9095 = vpop.f32.mrf.mxu0
        %v9096 = vadd.f32 %v8815, %v9095
        %v9097 = vpop.f32.mrf.mxu0
        %v9098 = vadd.f32 %v8817, %v9097
        %v9099 = vpop.f32.mrf.mxu0
        %v9100 = vadd.f32 %v8819, %v9099
        %v9101 = vpop.f32.mrf.mxu0
        %v9102 = vadd.f32 %v8821, %v9101
        %9103 = vmatprep.mubr.bf16.mxu0 %v2729
        %9104 = vmatmul.mubr.bf16.gmra.mxu0 %v2728
        %v9105 = vpop.f32.mrf.mxu0
        %v9106 = vadd.f32 %v8825, %v9105
        %v9107 = vpop.f32.mrf.mxu0
        %v9108 = vadd.f32 %v8827, %v9107
        %v9109 = vpop.f32.mrf.mxu0
        %v9110 = vadd.f32 %v8829, %v9109
        %v9111 = vpop.f32.mrf.mxu0
        %v9112 = vadd.f32 %v8831, %v9111
        %9113 = vmatprep.mubr.bf16.mxu0 %v2745
        %9114 = vmatmul.mubr.bf16.gmra.mxu0 %v2744
        %v9115 = vpop.f32.mrf.mxu0
        %v9116 = vadd.f32 %v8835, %v9115
        %v9117 = vpop.f32.mrf.mxu0
        %v9118 = vadd.f32 %v8837, %v9117
        %v9119 = vpop.f32.mrf.mxu0
        %v9120 = vadd.f32 %v8839, %v9119
        %v9121 = vpop.f32.mrf.mxu0
        %v9122 = vadd.f32 %v8841, %v9121
        %9123 = vmatprep.mubr.bf16.mxu0 %v2761
        %9124 = vmatmul.mubr.bf16.gmra.mxu0 %v2760
        %v9125 = vpop.f32.mrf.mxu0
        %v9126 = vadd.f32 %v8845, %v9125
        %v9127 = vpop.f32.mrf.mxu0
        %v9128 = vadd.f32 %v8847, %v9127
        %v9129 = vpop.f32.mrf.mxu0
        %v9130 = vadd.f32 %v8849, %v9129
        %v9131 = vpop.f32.mrf.mxu0
        %v9132 = vadd.f32 %v8851, %v9131
        %9133 = vmatprep.mubr.bf16.mxu0 %v2777
        %9134 = vmatmul.mubr.bf16.gmra.mxu0 %v2776
        %v9135 = vpop.f32.mrf.mxu0
        %v9136 = vadd.f32 %v8855, %v9135
        %v9137 = vpop.f32.mrf.mxu0
        %v9138 = vadd.f32 %v8857, %v9137
        %v9139 = vpop.f32.mrf.mxu0
        %v9140 = vadd.f32 %v8859, %v9139
        %v9141 = vpop.f32.mrf.mxu0
        %v9142 = vadd.f32 %v8861, %v9141
        %9143 = vmatprep.mubr.bf16.mxu0 %v2793
        %9144 = vmatmul.mubr.bf16.gmra.mxu0 %v2792
        %v9145 = vpop.f32.mrf.mxu0
        %v9146 = vadd.f32 %v8865, %v9145
        %v9147 = vpop.f32.mrf.mxu0
        %v9148 = vadd.f32 %v8867, %v9147
        %v9149 = vpop.f32.mrf.mxu0
        %v9150 = vadd.f32 %v8869, %v9149
        %v9151 = vpop.f32.mrf.mxu0
        %v9152 = vadd.f32 %v8871, %v9151
        %9153 = vmatprep.mubr.bf16.mxu0 %v2809
        %9154 = vmatmul.mubr.bf16.gmra.mxu0 %v2808
        %v9155 = vpop.f32.mrf.mxu0
        %v9156 = vadd.f32 %v8875, %v9155
        %v9157 = vpop.f32.mrf.mxu0
        %v9158 = vadd.f32 %v8877, %v9157
        %v9159 = vpop.f32.mrf.mxu0
        %v9160 = vadd.f32 %v8879, %v9159
        %v9161 = vpop.f32.mrf.mxu0
        %v9162 = vadd.f32 %v8881, %v9161
        %9163 = vmatprep.mubr.bf16.mxu0 %v2825
        %9164 = vmatmul.mubr.bf16.gmra.mxu0 %v2824
        %v9165 = vpop.f32.mrf.mxu0
        %v9166 = vadd.f32 %v8885, %v9165
        %v9167 = vpop.f32.mrf.mxu0
        %v9168 = vadd.f32 %v8887, %v9167
        %v9169 = vpop.f32.mrf.mxu0
        %v9170 = vadd.f32 %v8889, %v9169
        %v9171 = vpop.f32.mrf.mxu0
        %v9172 = vadd.f32 %v8891, %v9171
        %9173 = vmatprep.mubr.bf16.mxu0 %v2841
        %9174 = vmatmul.mubr.bf16.gmra.mxu0 %v2840
        %v9175 = vpop.f32.mrf.mxu0
        %v9176 = vadd.f32 %v8895, %v9175
        %v9177 = vpop.f32.mrf.mxu0
        %v9178 = vadd.f32 %v8897, %v9177
        %v9179 = vpop.f32.mrf.mxu0
        %v9180 = vpop.f32.mrf.mxu0
        %9181 = vdwg.mxu0
        %9182 = vmatprep.subr.bf16.mxu0 %v5073
        %9183 = vmatpush1.bf16.msra.mxu0 %v5072
        %9184 = vmatprep.subr.bf16.mxu0 %v5069
        %9185 = vmatpush1.bf16.msra.mxu0 %v5068
        %9186 = vmatprep.subr.bf16.mxu0 %v5065
        %9187 = vmatpush1.bf16.msra.mxu0 %v5064
        %9188 = vmatprep.subr.bf16.mxu0 %v5061
        %9189 = vmatpush1.bf16.msra.mxu0 %v5060
        %9190 = vmatprep.subr.bf16.mxu0 %v5057
        %9191 = vmatpush1.bf16.msra.mxu0 %v5056
        %9192 = vmatprep.subr.bf16.mxu0 %v5053
        %9193 = vmatpush1.bf16.msra.mxu0 %v5052
        %9194 = vmatprep.subr.bf16.mxu0 %v5049
        %9195 = vmatpush1.bf16.msra.mxu0 %v5048
        %9196 = vmatprep.subr.bf16.mxu0 %v5045
        %9197 = vmatpush1.bf16.msra.mxu0 %v5044
        %9198 = vmatprep.subr.bf16.mxu0 %v5105
        %9199 = vmatpush2.bf16.msra.mxu0 %v5104
        %9200 = vmatprep.subr.bf16.mxu0 %v5101
        %9201 = vmatpush2.bf16.msra.mxu0 %v5100
        %9202 = vmatprep.subr.bf16.mxu0 %v5097
        %9203 = vmatpush2.bf16.msra.mxu0 %v5096
        %9204 = vmatprep.subr.bf16.mxu0 %v5093
        %9205 = vmatpush2.bf16.msra.mxu0 %v5092
        %9206 = vmatprep.subr.bf16.mxu0 %v5089
        %9207 = vmatpush2.bf16.msra.mxu0 %v5088
        %9208 = vmatprep.subr.bf16.mxu0 %v5085
        %9209 = vmatpush2.bf16.msra.mxu0 %v5084
        %9210 = vmatprep.subr.bf16.mxu0 %v5081
        %9211 = vmatpush2.bf16.msra.mxu0 %v5080
        %9212 = vmatprep.subr.bf16.mxu0 %v5077
        %9213 = vmatpush2.bf16.msra.mxu0 %v5076
        %9214 = vmatprep.mubr.bf16.mxu0 %v2459
        %9215 = vmatmul.mubr.bf16.gmra.mxu0 %v2458
        %v9216 = vpop.f32.mrf.mxu0
        %v9217 = vadd.f32 %v8936, %v9216
        %v9218 = vpop.f32.mrf.mxu0
        %v9219 = vadd.f32 %v8938, %v9218
        %v9220 = vpop.f32.mrf.mxu0
        %v9221 = vadd.f32 %v8940, %v9220
        %v9222 = vpop.f32.mrf.mxu0
        %v9223 = vadd.f32 %v8942, %v9222
        %9224 = vmatprep.mubr.bf16.mxu0 %v2475
        %9225 = vmatmul.mubr.bf16.gmra.mxu0 %v2474
        %v9226 = vpop.f32.mrf.mxu0
        %v9227 = vadd.f32 %v8946, %v9226
        %v9228 = vpop.f32.mrf.mxu0
        %v9229 = vadd.f32 %v8948, %v9228
        %v9230 = vpop.f32.mrf.mxu0
        %v9231 = vadd.f32 %v8950, %v9230
        %v9232 = vpop.f32.mrf.mxu0
        %v9233 = vadd.f32 %v8952, %v9232
        %9234 = vmatprep.mubr.bf16.mxu0 %v2491
        %9235 = vmatmul.mubr.bf16.gmra.mxu0 %v2490
        %v9236 = vpop.f32.mrf.mxu0
        %v9237 = vadd.f32 %v8956, %v9236
        %v9238 = vpop.f32.mrf.mxu0
        %v9239 = vadd.f32 %v8958, %v9238
        %v9240 = vpop.f32.mrf.mxu0
        %v9241 = vadd.f32 %v8960, %v9240
        %v9242 = vpop.f32.mrf.mxu0
        %v9243 = vadd.f32 %v8962, %v9242
        %9244 = vmatprep.mubr.bf16.mxu0 %v2507
        %9245 = vmatmul.mubr.bf16.gmra.mxu0 %v2506
        %v9246 = vpop.f32.mrf.mxu0
        %v9247 = vadd.f32 %v8966, %v9246
        %v9248 = vpop.f32.mrf.mxu0
        %v9249 = vadd.f32 %v8968, %v9248
        %v9250 = vpop.f32.mrf.mxu0
        %v9251 = vadd.f32 %v8970, %v9250
        %v9252 = vpop.f32.mrf.mxu0
        %v9253 = vadd.f32 %v8972, %v9252
        %9254 = vmatprep.mubr.bf16.mxu0 %v2523
        %9255 = vmatmul.mubr.bf16.gmra.mxu0 %v2522
        %v9256 = vpop.f32.mrf.mxu0
        %v9257 = vadd.f32 %v8976, %v9256
        %v9258 = vpop.f32.mrf.mxu0
        %v9259 = vadd.f32 %v8978, %v9258
        %v9260 = vpop.f32.mrf.mxu0
        %v9261 = vadd.f32 %v8980, %v9260
        %v9262 = vpop.f32.mrf.mxu0
        %v9263 = vadd.f32 %v8982, %v9262
        %9264 = vmatprep.mubr.bf16.mxu0 %v2539
        %9265 = vmatmul.mubr.bf16.gmra.mxu0 %v2538
        %v9266 = vpop.f32.mrf.mxu0
        %v9267 = vadd.f32 %v8986, %v9266
        %v9268 = vpop.f32.mrf.mxu0
        %v9269 = vadd.f32 %v8988, %v9268
        %v9270 = vpop.f32.mrf.mxu0
        %v9271 = vadd.f32 %v8990, %v9270
        %v9272 = vpop.f32.mrf.mxu0
        %v9273 = vadd.f32 %v8992, %v9272
        %9274 = vmatprep.mubr.bf16.mxu0 %v2555
        %9275 = vmatmul.mubr.bf16.gmra.mxu0 %v2554
        %v9276 = vpop.f32.mrf.mxu0
        %v9277 = vadd.f32 %v8996, %v9276
        %v9278 = vpop.f32.mrf.mxu0
        %v9279 = vadd.f32 %v8998, %v9278
        %v9280 = vpop.f32.mrf.mxu0
        %v9281 = vadd.f32 %v9000, %v9280
        %v9282 = vpop.f32.mrf.mxu0
        %v9283 = vadd.f32 %v9002, %v9282
        %9284 = vmatprep.mubr.bf16.mxu0 %v2571
        %9285 = vmatmul.mubr.bf16.gmra.mxu0 %v2570
        %v9286 = vpop.f32.mrf.mxu0
        %v9287 = vadd.f32 %v9006, %v9286
        %v9288 = vpop.f32.mrf.mxu0
        %v9289 = vadd.f32 %v9008, %v9288
        %v9290 = vpop.f32.mrf.mxu0
        %v9291 = vadd.f32 %v9010, %v9290
        %v9292 = vpop.f32.mrf.mxu0
        %v9293 = vadd.f32 %v9012, %v9292
        %9294 = vmatprep.mubr.bf16.mxu0 %v2587
        %9295 = vmatmul.mubr.bf16.gmra.mxu0 %v2586
        %v9296 = vpop.f32.mrf.mxu0
        %v9297 = vadd.f32 %v9016, %v9296
        %v9298 = vpop.f32.mrf.mxu0
        %v9299 = vadd.f32 %v9018, %v9298
        %v9300 = vpop.f32.mrf.mxu0
        %v9301 = vadd.f32 %v9020, %v9300
        %v9302 = vpop.f32.mrf.mxu0
        %v9303 = vadd.f32 %v9022, %v9302
        %9304 = vmatprep.mubr.bf16.mxu0 %v2603
        %9305 = vmatmul.mubr.bf16.gmra.mxu0 %v2602
        %v9306 = vpop.f32.mrf.mxu0
        %v9307 = vadd.f32 %v9026, %v9306
        %v9308 = vpop.f32.mrf.mxu0
        %v9309 = vadd.f32 %v9028, %v9308
        %v9310 = vpop.f32.mrf.mxu0
        %v9311 = vadd.f32 %v9030, %v9310
        %v9312 = vpop.f32.mrf.mxu0
        %v9313 = vadd.f32 %v9032, %v9312
        %9314 = vmatprep.mubr.bf16.mxu0 %v2619
        %9315 = vmatmul.mubr.bf16.gmra.mxu0 %v2618
        %v9316 = vpop.f32.mrf.mxu0
        %v9317 = vadd.f32 %v9036, %v9316
        %v9318 = vpop.f32.mrf.mxu0
        %v9319 = vadd.f32 %v9038, %v9318
        %v9320 = vpop.f32.mrf.mxu0
        %v9321 = vadd.f32 %v9040, %v9320
        %v9322 = vpop.f32.mrf.mxu0
        %v9323 = vadd.f32 %v9042, %v9322
        %9324 = vmatprep.mubr.bf16.mxu0 %v2635
        %9325 = vmatmul.mubr.bf16.gmra.mxu0 %v2634
        %v9326 = vpop.f32.mrf.mxu0
        %v9327 = vadd.f32 %v9046, %v9326
        %v9328 = vpop.f32.mrf.mxu0
        %v9329 = vadd.f32 %v9048, %v9328
        %v9330 = vpop.f32.mrf.mxu0
        %v9331 = vadd.f32 %v9050, %v9330
        %v9332 = vpop.f32.mrf.mxu0
        %v9333 = vadd.f32 %v9052, %v9332
        %9334 = vmatprep.mubr.bf16.mxu0 %v2651
        %9335 = vmatmul.mubr.bf16.gmra.mxu0 %v2650
        %v9336 = vpop.f32.mrf.mxu0
        %v9337 = vadd.f32 %v9056, %v9336
        %v9338 = vpop.f32.mrf.mxu0
        %v9339 = vadd.f32 %v9058, %v9338
        %v9340 = vpop.f32.mrf.mxu0
        %v9341 = vadd.f32 %v9060, %v9340
        %v9342 = vpop.f32.mrf.mxu0
        %v9343 = vadd.f32 %v9062, %v9342
        %9344 = vmatprep.mubr.bf16.mxu0 %v2667
        %9345 = vmatmul.mubr.bf16.gmra.mxu0 %v2666
        %v9346 = vpop.f32.mrf.mxu0
        %v9347 = vadd.f32 %v9066, %v9346
        %v9348 = vpop.f32.mrf.mxu0
        %v9349 = vadd.f32 %v9068, %v9348
        %v9350 = vpop.f32.mrf.mxu0
        %v9351 = vadd.f32 %v9070, %v9350
        %v9352 = vpop.f32.mrf.mxu0
        %v9353 = vadd.f32 %v9072, %v9352
        %9354 = vmatprep.mubr.bf16.mxu0 %v2683
        %9355 = vmatmul.mubr.bf16.gmra.mxu0 %v2682
        %v9356 = vpop.f32.mrf.mxu0
        %v9357 = vadd.f32 %v9076, %v9356
        %v9358 = vpop.f32.mrf.mxu0
        %v9359 = vadd.f32 %v9078, %v9358
        %v9360 = vpop.f32.mrf.mxu0
        %v9361 = vadd.f32 %v9080, %v9360
        %v9362 = vpop.f32.mrf.mxu0
        %v9363 = vadd.f32 %v9082, %v9362
        %9364 = vmatprep.mubr.bf16.mxu0 %v2699
        %9365 = vmatmul.mubr.bf16.gmra.mxu0 %v2698
        %v9366 = vpop.f32.mrf.mxu0
        %v9367 = vadd.f32 %v9086, %v9366
        %v9368 = vpop.f32.mrf.mxu0
        %v9369 = vadd.f32 %v9088, %v9368
        %v9370 = vpop.f32.mrf.mxu0
        %v9371 = vadd.f32 %v9090, %v9370
        %v9372 = vpop.f32.mrf.mxu0
        %v9373 = vadd.f32 %v9092, %v9372
        %9374 = vmatprep.mubr.bf16.mxu0 %v2715
        %9375 = vmatmul.mubr.bf16.gmra.mxu0 %v2714
        %v9376 = vpop.f32.mrf.mxu0
        %v9377 = vadd.f32 %v9096, %v9376
        %v9378 = vpop.f32.mrf.mxu0
        %v9379 = vadd.f32 %v9098, %v9378
        %v9380 = vpop.f32.mrf.mxu0
        %v9381 = vadd.f32 %v9100, %v9380
        %v9382 = vpop.f32.mrf.mxu0
        %v9383 = vadd.f32 %v9102, %v9382
        %9384 = vmatprep.mubr.bf16.mxu0 %v2731
        %9385 = vmatmul.mubr.bf16.gmra.mxu0 %v2730
        %v9386 = vpop.f32.mrf.mxu0
        %v9387 = vadd.f32 %v9106, %v9386
        %v9388 = vpop.f32.mrf.mxu0
        %v9389 = vadd.f32 %v9108, %v9388
        %v9390 = vpop.f32.mrf.mxu0
        %v9391 = vadd.f32 %v9110, %v9390
        %v9392 = vpop.f32.mrf.mxu0
        %v9393 = vadd.f32 %v9112, %v9392
        %9394 = vmatprep.mubr.bf16.mxu0 %v2747
        %9395 = vmatmul.mubr.bf16.gmra.mxu0 %v2746
        %v9396 = vpop.f32.mrf.mxu0
        %v9397 = vadd.f32 %v9116, %v9396
        %v9398 = vpop.f32.mrf.mxu0
        %v9399 = vadd.f32 %v9118, %v9398
        %v9400 = vpop.f32.mrf.mxu0
        %v9401 = vadd.f32 %v9120, %v9400
        %v9402 = vpop.f32.mrf.mxu0
        %v9403 = vadd.f32 %v9122, %v9402
        %9404 = vmatprep.mubr.bf16.mxu0 %v2763
        %9405 = vmatmul.mubr.bf16.gmra.mxu0 %v2762
        %v9406 = vpop.f32.mrf.mxu0
        %v9407 = vadd.f32 %v9126, %v9406
        %v9408 = vpop.f32.mrf.mxu0
        %v9409 = vadd.f32 %v9128, %v9408
        %v9410 = vpop.f32.mrf.mxu0
        %v9411 = vadd.f32 %v9130, %v9410
        %v9412 = vpop.f32.mrf.mxu0
        %v9413 = vadd.f32 %v9132, %v9412
        %9414 = vmatprep.mubr.bf16.mxu0 %v2779
        %9415 = vmatmul.mubr.bf16.gmra.mxu0 %v2778
        %v9416 = vpop.f32.mrf.mxu0
        %v9417 = vadd.f32 %v9136, %v9416
        %v9418 = vpop.f32.mrf.mxu0
        %v9419 = vadd.f32 %v9138, %v9418
        %v9420 = vpop.f32.mrf.mxu0
        %v9421 = vadd.f32 %v9140, %v9420
        %v9422 = vpop.f32.mrf.mxu0
        %v9423 = vadd.f32 %v9142, %v9422
        %9424 = vmatprep.mubr.bf16.mxu0 %v2795
        %9425 = vmatmul.mubr.bf16.gmra.mxu0 %v2794
        %v9426 = vpop.f32.mrf.mxu0
        %v9427 = vadd.f32 %v9146, %v9426
        %v9428 = vpop.f32.mrf.mxu0
        %v9429 = vadd.f32 %v9148, %v9428
        %v9430 = vpop.f32.mrf.mxu0
        %v9431 = vadd.f32 %v9150, %v9430
        %v9432 = vpop.f32.mrf.mxu0
        %v9433 = vadd.f32 %v9152, %v9432
        %9434 = vmatprep.mubr.bf16.mxu0 %v2811
        %9435 = vmatmul.mubr.bf16.gmra.mxu0 %v2810
        %v9436 = vpop.f32.mrf.mxu0
        %v9437 = vadd.f32 %v9156, %v9436
        %v9438 = vpop.f32.mrf.mxu0
        %v9439 = vadd.f32 %v9158, %v9438
        %v9440 = vpop.f32.mrf.mxu0
        %v9441 = vadd.f32 %v9160, %v9440
        %v9442 = vpop.f32.mrf.mxu0
        %v9443 = vadd.f32 %v9162, %v9442
        %9444 = vmatprep.mubr.bf16.mxu0 %v2827
        %9445 = vmatmul.mubr.bf16.gmra.mxu0 %v2826
        %v9446 = vpop.f32.mrf.mxu0
        %v9447 = vadd.f32 %v9166, %v9446
        %v9448 = vpop.f32.mrf.mxu0
        %v9449 = vadd.f32 %v9168, %v9448
        %v9450 = vpop.f32.mrf.mxu0
        %v9451 = vadd.f32 %v9170, %v9450
        %v9452 = vpop.f32.mrf.mxu0
        %v9453 = vadd.f32 %v9172, %v9452
        %9454 = vmatprep.mubr.bf16.mxu0 %v2843
        %9455 = vmatmul.mubr.bf16.gmra.mxu0 %v2842
        %v9456 = vpop.f32.mrf.mxu0
        %v9457 = vadd.f32 %v9176, %v9456
        %v9458 = vpop.f32.mrf.mxu0
        %v9459 = vadd.f32 %v9178, %v9458
        %v9460 = vpop.f32.mrf.mxu0
        %v9461 = vpop.f32.mrf.mxu0
        %9462 = vdwg.mxu0
        %9463 = vmatprep.subr.bf16.mxu0 %v5137
        %9464 = vmatpush1.bf16.msra.mxu0 %v5136
        %9465 = vmatprep.subr.bf16.mxu0 %v5133
        %9466 = vmatpush1.bf16.msra.mxu0 %v5132
        %9467 = vmatprep.subr.bf16.mxu0 %v5129
        %9468 = vmatpush1.bf16.msra.mxu0 %v5128
        %9469 = vmatprep.subr.bf16.mxu0 %v5125
        %9470 = vmatpush1.bf16.msra.mxu0 %v5124
        %9471 = vmatprep.subr.bf16.mxu0 %v5121
        %9472 = vmatpush1.bf16.msra.mxu0 %v5120
        %9473 = vmatprep.subr.bf16.mxu0 %v5117
        %9474 = vmatpush1.bf16.msra.mxu0 %v5116
        %9475 = vmatprep.subr.bf16.mxu0 %v5113
        %9476 = vmatpush1.bf16.msra.mxu0 %v5112
        %9477 = vmatprep.subr.bf16.mxu0 %v5109
        %9478 = vmatpush1.bf16.msra.mxu0 %v5108
        %9479 = vmatprep.subr.bf16.mxu0 %v5169
        %9480 = vmatpush2.bf16.msra.mxu0 %v5168
        %9481 = vmatprep.subr.bf16.mxu0 %v5165
        %9482 = vmatpush2.bf16.msra.mxu0 %v5164
        %9483 = vmatprep.subr.bf16.mxu0 %v5161
        %9484 = vmatpush2.bf16.msra.mxu0 %v5160
        %9485 = vmatprep.subr.bf16.mxu0 %v5157
        %9486 = vmatpush2.bf16.msra.mxu0 %v5156
        %9487 = vmatprep.subr.bf16.mxu0 %v5153
        %9488 = vmatpush2.bf16.msra.mxu0 %v5152
        %9489 = vmatprep.subr.bf16.mxu0 %v5149
        %9490 = vmatpush2.bf16.msra.mxu0 %v5148
        %9491 = vmatprep.subr.bf16.mxu0 %v5145
        %9492 = vmatpush2.bf16.msra.mxu0 %v5144
        %9493 = vmatprep.subr.bf16.mxu0 %v5141
        %9494 = vmatpush2.bf16.msra.mxu0 %v5140
        %9495 = vmatprep.mubr.bf16.mxu0 %v2461
        %9496 = vmatmul.mubr.bf16.gmra.mxu0 %v2460
        %v9497 = vpop.f32.mrf.mxu0
        %v9498 = vadd.f32 %v9217, %v9497
        %v9499 = vpop.f32.mrf.mxu0
        %v9500 = vadd.f32 %v9219, %v9499
        %v9501 = vpop.f32.mrf.mxu0
        %v9502 = vadd.f32 %v9221, %v9501
        %v9503 = vpop.f32.mrf.mxu0
        %v9504 = vadd.f32 %v9223, %v9503
        %9505 = vmatprep.mubr.bf16.mxu0 %v2477
        %9506 = vmatmul.mubr.bf16.gmra.mxu0 %v2476
        %v9507 = vpop.f32.mrf.mxu0
        %v9508 = vadd.f32 %v9227, %v9507
        %v9509 = vpop.f32.mrf.mxu0
        %v9510 = vadd.f32 %v9229, %v9509
        %v9511 = vpop.f32.mrf.mxu0
        %v9512 = vadd.f32 %v9231, %v9511
        %v9513 = vpop.f32.mrf.mxu0
        %v9514 = vadd.f32 %v9233, %v9513
        %9515 = vmatprep.mubr.bf16.mxu0 %v2493
        %9516 = vmatmul.mubr.bf16.gmra.mxu0 %v2492
        %v9517 = vpop.f32.mrf.mxu0
        %v9518 = vadd.f32 %v9237, %v9517
        %v9519 = vpop.f32.mrf.mxu0
        %v9520 = vadd.f32 %v9239, %v9519
        %v9521 = vpop.f32.mrf.mxu0
        %v9522 = vadd.f32 %v9241, %v9521
        %v9523 = vpop.f32.mrf.mxu0
        %v9524 = vadd.f32 %v9243, %v9523
        %9525 = vmatprep.mubr.bf16.mxu0 %v2509
        %9526 = vmatmul.mubr.bf16.gmra.mxu0 %v2508
        %v9527 = vpop.f32.mrf.mxu0
        %v9528 = vadd.f32 %v9247, %v9527
        %v9529 = vpop.f32.mrf.mxu0
        %v9530 = vadd.f32 %v9249, %v9529
        %v9531 = vpop.f32.mrf.mxu0
        %v9532 = vadd.f32 %v9251, %v9531
        %v9533 = vpop.f32.mrf.mxu0
        %v9534 = vadd.f32 %v9253, %v9533
        %9535 = vmatprep.mubr.bf16.mxu0 %v2525
        %9536 = vmatmul.mubr.bf16.gmra.mxu0 %v2524
        %v9537 = vpop.f32.mrf.mxu0
        %v9538 = vadd.f32 %v9257, %v9537
        %v9539 = vpop.f32.mrf.mxu0
        %v9540 = vadd.f32 %v9259, %v9539
        %v9541 = vpop.f32.mrf.mxu0
        %v9542 = vadd.f32 %v9261, %v9541
        %v9543 = vpop.f32.mrf.mxu0
        %v9544 = vadd.f32 %v9263, %v9543
        %9545 = vmatprep.mubr.bf16.mxu0 %v2541
        %9546 = vmatmul.mubr.bf16.gmra.mxu0 %v2540
        %v9547 = vpop.f32.mrf.mxu0
        %v9548 = vadd.f32 %v9267, %v9547
        %v9549 = vpop.f32.mrf.mxu0
        %v9550 = vadd.f32 %v9269, %v9549
        %v9551 = vpop.f32.mrf.mxu0
        %v9552 = vadd.f32 %v9271, %v9551
        %v9553 = vpop.f32.mrf.mxu0
        %v9554 = vadd.f32 %v9273, %v9553
        %9555 = vmatprep.mubr.bf16.mxu0 %v2557
        %9556 = vmatmul.mubr.bf16.gmra.mxu0 %v2556
        %v9557 = vpop.f32.mrf.mxu0
        %v9558 = vadd.f32 %v9277, %v9557
        %v9559 = vpop.f32.mrf.mxu0
        %v9560 = vadd.f32 %v9279, %v9559
        %v9561 = vpop.f32.mrf.mxu0
        %v9562 = vadd.f32 %v9281, %v9561
        %v9563 = vpop.f32.mrf.mxu0
        %v9564 = vadd.f32 %v9283, %v9563
        %9565 = vmatprep.mubr.bf16.mxu0 %v2573
        %9566 = vmatmul.mubr.bf16.gmra.mxu0 %v2572
        %v9567 = vpop.f32.mrf.mxu0
        %v9568 = vadd.f32 %v9287, %v9567
        %v9569 = vpop.f32.mrf.mxu0
        %v9570 = vadd.f32 %v9289, %v9569
        %v9571 = vpop.f32.mrf.mxu0
        %v9572 = vadd.f32 %v9291, %v9571
        %v9573 = vpop.f32.mrf.mxu0
        %v9574 = vadd.f32 %v9293, %v9573
        %9575 = vmatprep.mubr.bf16.mxu0 %v2589
        %9576 = vmatmul.mubr.bf16.gmra.mxu0 %v2588
        %v9577 = vpop.f32.mrf.mxu0
        %v9578 = vadd.f32 %v9297, %v9577
        %v9579 = vpop.f32.mrf.mxu0
        %v9580 = vadd.f32 %v9299, %v9579
        %v9581 = vpop.f32.mrf.mxu0
        %v9582 = vadd.f32 %v9301, %v9581
        %v9583 = vpop.f32.mrf.mxu0
        %v9584 = vadd.f32 %v9303, %v9583
        %9585 = vmatprep.mubr.bf16.mxu0 %v2605
        %9586 = vmatmul.mubr.bf16.gmra.mxu0 %v2604
        %v9587 = vpop.f32.mrf.mxu0
        %v9588 = vadd.f32 %v9307, %v9587
        %v9589 = vpop.f32.mrf.mxu0
        %v9590 = vadd.f32 %v9309, %v9589
        %v9591 = vpop.f32.mrf.mxu0
        %v9592 = vadd.f32 %v9311, %v9591
        %v9593 = vpop.f32.mrf.mxu0
        %v9594 = vadd.f32 %v9313, %v9593
        %9595 = vmatprep.mubr.bf16.mxu0 %v2621
        %9596 = vmatmul.mubr.bf16.gmra.mxu0 %v2620
        %v9597 = vpop.f32.mrf.mxu0
        %v9598 = vadd.f32 %v9317, %v9597
        %v9599 = vpop.f32.mrf.mxu0
        %v9600 = vadd.f32 %v9319, %v9599
        %v9601 = vpop.f32.mrf.mxu0
        %v9602 = vadd.f32 %v9321, %v9601
        %v9603 = vpop.f32.mrf.mxu0
        %v9604 = vadd.f32 %v9323, %v9603
        %9605 = vmatprep.mubr.bf16.mxu0 %v2637
        %9606 = vmatmul.mubr.bf16.gmra.mxu0 %v2636
        %v9607 = vpop.f32.mrf.mxu0
        %v9608 = vadd.f32 %v9327, %v9607
        %v9609 = vpop.f32.mrf.mxu0
        %v9610 = vadd.f32 %v9329, %v9609
        %v9611 = vpop.f32.mrf.mxu0
        %v9612 = vadd.f32 %v9331, %v9611
        %v9613 = vpop.f32.mrf.mxu0
        %v9614 = vadd.f32 %v9333, %v9613
        %9615 = vmatprep.mubr.bf16.mxu0 %v2653
        %9616 = vmatmul.mubr.bf16.gmra.mxu0 %v2652
        %v9617 = vpop.f32.mrf.mxu0
        %v9618 = vadd.f32 %v9337, %v9617
        %v9619 = vpop.f32.mrf.mxu0
        %v9620 = vadd.f32 %v9339, %v9619
        %v9621 = vpop.f32.mrf.mxu0
        %v9622 = vadd.f32 %v9341, %v9621
        %v9623 = vpop.f32.mrf.mxu0
        %v9624 = vadd.f32 %v9343, %v9623
        %9625 = vmatprep.mubr.bf16.mxu0 %v2669
        %9626 = vmatmul.mubr.bf16.gmra.mxu0 %v2668
        %v9627 = vpop.f32.mrf.mxu0
        %v9628 = vadd.f32 %v9347, %v9627
        %v9629 = vpop.f32.mrf.mxu0
        %v9630 = vadd.f32 %v9349, %v9629
        %v9631 = vpop.f32.mrf.mxu0
        %v9632 = vadd.f32 %v9351, %v9631
        %v9633 = vpop.f32.mrf.mxu0
        %v9634 = vadd.f32 %v9353, %v9633
        %9635 = vmatprep.mubr.bf16.mxu0 %v2685
        %9636 = vmatmul.mubr.bf16.gmra.mxu0 %v2684
        %v9637 = vpop.f32.mrf.mxu0
        %v9638 = vadd.f32 %v9357, %v9637
        %v9639 = vpop.f32.mrf.mxu0
        %v9640 = vadd.f32 %v9359, %v9639
        %v9641 = vpop.f32.mrf.mxu0
        %v9642 = vadd.f32 %v9361, %v9641
        %v9643 = vpop.f32.mrf.mxu0
        %v9644 = vadd.f32 %v9363, %v9643
        %9645 = vmatprep.mubr.bf16.mxu0 %v2701
        %9646 = vmatmul.mubr.bf16.gmra.mxu0 %v2700
        %v9647 = vpop.f32.mrf.mxu0
        %v9648 = vadd.f32 %v9367, %v9647
        %v9649 = vpop.f32.mrf.mxu0
        %v9650 = vadd.f32 %v9369, %v9649
        %v9651 = vpop.f32.mrf.mxu0
        %v9652 = vadd.f32 %v9371, %v9651
        %v9653 = vpop.f32.mrf.mxu0
        %v9654 = vadd.f32 %v9373, %v9653
        %9655 = vmatprep.mubr.bf16.mxu0 %v2717
        %9656 = vmatmul.mubr.bf16.gmra.mxu0 %v2716
        %v9657 = vpop.f32.mrf.mxu0
        %v9658 = vadd.f32 %v9377, %v9657
        %v9659 = vpop.f32.mrf.mxu0
        %v9660 = vadd.f32 %v9379, %v9659
        %v9661 = vpop.f32.mrf.mxu0
        %v9662 = vadd.f32 %v9381, %v9661
        %v9663 = vpop.f32.mrf.mxu0
        %v9664 = vadd.f32 %v9383, %v9663
        %9665 = vmatprep.mubr.bf16.mxu0 %v2733
        %9666 = vmatmul.mubr.bf16.gmra.mxu0 %v2732
        %v9667 = vpop.f32.mrf.mxu0
        %v9668 = vadd.f32 %v9387, %v9667
        %v9669 = vpop.f32.mrf.mxu0
        %v9670 = vadd.f32 %v9389, %v9669
        %v9671 = vpop.f32.mrf.mxu0
        %v9672 = vadd.f32 %v9391, %v9671
        %v9673 = vpop.f32.mrf.mxu0
        %v9674 = vadd.f32 %v9393, %v9673
        %9675 = vmatprep.mubr.bf16.mxu0 %v2749
        %9676 = vmatmul.mubr.bf16.gmra.mxu0 %v2748
        %v9677 = vpop.f32.mrf.mxu0
        %v9678 = vadd.f32 %v9397, %v9677
        %v9679 = vpop.f32.mrf.mxu0
        %v9680 = vadd.f32 %v9399, %v9679
        %v9681 = vpop.f32.mrf.mxu0
        %v9682 = vadd.f32 %v9401, %v9681
        %v9683 = vpop.f32.mrf.mxu0
        %v9684 = vadd.f32 %v9403, %v9683
        %9685 = vmatprep.mubr.bf16.mxu0 %v2765
        %9686 = vmatmul.mubr.bf16.gmra.mxu0 %v2764
        %v9687 = vpop.f32.mrf.mxu0
        %v9688 = vadd.f32 %v9407, %v9687
        %v9689 = vpop.f32.mrf.mxu0
        %v9690 = vadd.f32 %v9409, %v9689
        %v9691 = vpop.f32.mrf.mxu0
        %v9692 = vadd.f32 %v9411, %v9691
        %v9693 = vpop.f32.mrf.mxu0
        %v9694 = vadd.f32 %v9413, %v9693
        %9695 = vmatprep.mubr.bf16.mxu0 %v2781
        %9696 = vmatmul.mubr.bf16.gmra.mxu0 %v2780
        %v9697 = vpop.f32.mrf.mxu0
        %v9698 = vadd.f32 %v9417, %v9697
        %v9699 = vpop.f32.mrf.mxu0
        %v9700 = vadd.f32 %v9419, %v9699
        %v9701 = vpop.f32.mrf.mxu0
        %v9702 = vadd.f32 %v9421, %v9701
        %v9703 = vpop.f32.mrf.mxu0
        %v9704 = vadd.f32 %v9423, %v9703
        %9705 = vmatprep.mubr.bf16.mxu0 %v2797
        %9706 = vmatmul.mubr.bf16.gmra.mxu0 %v2796
        %v9707 = vpop.f32.mrf.mxu0
        %v9708 = vadd.f32 %v9427, %v9707
        %v9709 = vpop.f32.mrf.mxu0
        %v9710 = vadd.f32 %v9429, %v9709
        %v9711 = vpop.f32.mrf.mxu0
        %v9712 = vadd.f32 %v9431, %v9711
        %v9713 = vpop.f32.mrf.mxu0
        %v9714 = vadd.f32 %v9433, %v9713
        %9715 = vmatprep.mubr.bf16.mxu0 %v2813
        %9716 = vmatmul.mubr.bf16.gmra.mxu0 %v2812
        %v9717 = vpop.f32.mrf.mxu0
        %v9718 = vadd.f32 %v9437, %v9717
        %v9719 = vpop.f32.mrf.mxu0
        %v9720 = vadd.f32 %v9439, %v9719
        %v9721 = vpop.f32.mrf.mxu0
        %v9722 = vadd.f32 %v9441, %v9721
        %v9723 = vpop.f32.mrf.mxu0
        %v9724 = vadd.f32 %v9443, %v9723
        %9725 = vmatprep.mubr.bf16.mxu0 %v2829
        %9726 = vmatmul.mubr.bf16.gmra.mxu0 %v2828
        %v9727 = vpop.f32.mrf.mxu0
        %v9728 = vadd.f32 %v9447, %v9727
        %v9729 = vpop.f32.mrf.mxu0
        %v9730 = vadd.f32 %v9449, %v9729
        %v9731 = vpop.f32.mrf.mxu0
        %v9732 = vadd.f32 %v9451, %v9731
        %v9733 = vpop.f32.mrf.mxu0
        %v9734 = vadd.f32 %v9453, %v9733
        %9735 = vmatprep.mubr.bf16.mxu0 %v2845
        %9736 = vmatmul.mubr.bf16.gmra.mxu0 %v2844
        %v9737 = vpop.f32.mrf.mxu0
        %v9738 = vadd.f32 %v9457, %v9737
        %v9739 = vpop.f32.mrf.mxu0
        %v9740 = vadd.f32 %v9459, %v9739
        %v9741 = vpop.f32.mrf.mxu0
        %v9742 = vpop.f32.mrf.mxu0
        %9743 = vdwg.mxu0
        %9744 = vmatprep.subr.bf16.mxu0 %v5201
        %9745 = vmatpush1.bf16.msra.mxu0 %v5200
        %9746 = vmatprep.subr.bf16.mxu0 %v5197
        %9747 = vmatpush1.bf16.msra.mxu0 %v5196
        %9748 = vmatprep.subr.bf16.mxu0 %v5193
        %9749 = vmatpush1.bf16.msra.mxu0 %v5192
        %9750 = vmatprep.subr.bf16.mxu0 %v5189
        %9751 = vmatpush1.bf16.msra.mxu0 %v5188
        %9752 = vmatprep.subr.bf16.mxu0 %v5185
        %9753 = vmatpush1.bf16.msra.mxu0 %v5184
        %9754 = vmatprep.subr.bf16.mxu0 %v5181
        %9755 = vmatpush1.bf16.msra.mxu0 %v5180
        %9756 = vmatprep.subr.bf16.mxu0 %v5177
        %9757 = vmatpush1.bf16.msra.mxu0 %v5176
        %9758 = vmatprep.subr.bf16.mxu0 %v5173
        %9759 = vmatpush1.bf16.msra.mxu0 %v5172
        %9760 = vmatprep.subr.bf16.mxu0 %v5233
        %9761 = vmatpush2.bf16.msra.mxu0 %v5232
        %9762 = vmatprep.subr.bf16.mxu0 %v5229
        %9763 = vmatpush2.bf16.msra.mxu0 %v5228
        %9764 = vmatprep.subr.bf16.mxu0 %v5225
        %9765 = vmatpush2.bf16.msra.mxu0 %v5224
        %9766 = vmatprep.subr.bf16.mxu0 %v5221
        %9767 = vmatpush2.bf16.msra.mxu0 %v5220
        %9768 = vmatprep.subr.bf16.mxu0 %v5217
        %9769 = vmatpush2.bf16.msra.mxu0 %v5216
        %9770 = vmatprep.subr.bf16.mxu0 %v5213
        %9771 = vmatpush2.bf16.msra.mxu0 %v5212
        %9772 = vmatprep.subr.bf16.mxu0 %v5209
        %9773 = vmatpush2.bf16.msra.mxu0 %v5208
        %9774 = vmatprep.subr.bf16.mxu0 %v5205
        %9775 = vmatpush2.bf16.msra.mxu0 %v5204
        %9776 = vmatprep.mubr.bf16.mxu0 %v2463
        %9777 = vmatmul.mubr.bf16.gmra.mxu0 %v2462
        %v9778 = vpop.f32.mrf.mxu0
        %v9779 = vadd.f32 %v9498, %v9778
        %v9780 = vpop.f32.mrf.mxu0
        %v9781 = vadd.f32 %v9500, %v9780
        %v9782 = vpop.f32.mrf.mxu0
        %v9783 = vadd.f32 %v9502, %v9782
        %v9784 = vpop.f32.mrf.mxu0
        %v9785 = vadd.f32 %v9504, %v9784
        %9786 = vmatprep.mubr.bf16.mxu0 %v2479
        %9787 = vmatmul.mubr.bf16.gmra.mxu0 %v2478
        %v9788 = vpop.f32.mrf.mxu0
        %v9789 = vadd.f32 %v9508, %v9788
        %v9790 = vpop.f32.mrf.mxu0
        %v9791 = vadd.f32 %v9510, %v9790
        %v9792 = vpop.f32.mrf.mxu0
        %v9793 = vadd.f32 %v9512, %v9792
        %v9794 = vpop.f32.mrf.mxu0
        %v9795 = vadd.f32 %v9514, %v9794
        %9796 = vmatprep.mubr.bf16.mxu0 %v2495
        %9797 = vmatmul.mubr.bf16.gmra.mxu0 %v2494
        %v9798 = vpop.f32.mrf.mxu0
        %v9799 = vadd.f32 %v9518, %v9798
        %v9800 = vpop.f32.mrf.mxu0
        %v9801 = vadd.f32 %v9520, %v9800
        %v9802 = vpop.f32.mrf.mxu0
        %v9803 = vadd.f32 %v9522, %v9802
        %v9804 = vpop.f32.mrf.mxu0
        %v9805 = vadd.f32 %v9524, %v9804
        %9806 = vmatprep.mubr.bf16.mxu0 %v2511
        %9807 = vmatmul.mubr.bf16.gmra.mxu0 %v2510
        %v9808 = vpop.f32.mrf.mxu0
        %v9809 = vadd.f32 %v9528, %v9808
        %v9810 = vpop.f32.mrf.mxu0
        %v9811 = vadd.f32 %v9530, %v9810
        %v9812 = vpop.f32.mrf.mxu0
        %v9813 = vadd.f32 %v9532, %v9812
        %v9814 = vpop.f32.mrf.mxu0
        %v9815 = vadd.f32 %v9534, %v9814
        %9816 = vmatprep.mubr.bf16.mxu0 %v2527
        %9817 = vmatmul.mubr.bf16.gmra.mxu0 %v2526
        %v9818 = vpop.f32.mrf.mxu0
        %v9819 = vadd.f32 %v9538, %v9818
        %v9820 = vpop.f32.mrf.mxu0
        %v9821 = vadd.f32 %v9540, %v9820
        %v9822 = vpop.f32.mrf.mxu0
        %v9823 = vadd.f32 %v9542, %v9822
        %v9824 = vpop.f32.mrf.mxu0
        %v9825 = vadd.f32 %v9544, %v9824
        %9826 = vmatprep.mubr.bf16.mxu0 %v2543
        %9827 = vmatmul.mubr.bf16.gmra.mxu0 %v2542
        %v9828 = vpop.f32.mrf.mxu0
        %v9829 = vadd.f32 %v9548, %v9828
        %v9830 = vpop.f32.mrf.mxu0
        %v9831 = vadd.f32 %v9550, %v9830
        %v9832 = vpop.f32.mrf.mxu0
        %v9833 = vadd.f32 %v9552, %v9832
        %v9834 = vpop.f32.mrf.mxu0
        %v9835 = vadd.f32 %v9554, %v9834
        %9836 = vmatprep.mubr.bf16.mxu0 %v2559
        %9837 = vmatmul.mubr.bf16.gmra.mxu0 %v2558
        %v9838 = vpop.f32.mrf.mxu0
        %v9839 = vadd.f32 %v9558, %v9838
        %v9840 = vpop.f32.mrf.mxu0
        %v9841 = vadd.f32 %v9560, %v9840
        %v9842 = vpop.f32.mrf.mxu0
        %v9843 = vadd.f32 %v9562, %v9842
        %v9844 = vpop.f32.mrf.mxu0
        %v9845 = vadd.f32 %v9564, %v9844
        %9846 = vmatprep.mubr.bf16.mxu0 %v2575
        %9847 = vmatmul.mubr.bf16.gmra.mxu0 %v2574
        %v9848 = vpop.f32.mrf.mxu0
        %v9849 = vadd.f32 %v9568, %v9848
        %v9850 = vpop.f32.mrf.mxu0
        %v9851 = vadd.f32 %v9570, %v9850
        %v9852 = vpop.f32.mrf.mxu0
        %v9853 = vadd.f32 %v9572, %v9852
        %v9854 = vpop.f32.mrf.mxu0
        %v9855 = vadd.f32 %v9574, %v9854
        %9856 = vmatprep.mubr.bf16.mxu0 %v2591
        %9857 = vmatmul.mubr.bf16.gmra.mxu0 %v2590
        %v9858 = vpop.f32.mrf.mxu0
        %v9859 = vadd.f32 %v9578, %v9858
        %v9860 = vpop.f32.mrf.mxu0
        %v9861 = vadd.f32 %v9580, %v9860
        %v9862 = vpop.f32.mrf.mxu0
        %v9863 = vadd.f32 %v9582, %v9862
        %v9864 = vpop.f32.mrf.mxu0
        %v9865 = vadd.f32 %v9584, %v9864
        %9866 = vmatprep.mubr.bf16.mxu0 %v2607
        %9867 = vmatmul.mubr.bf16.gmra.mxu0 %v2606
        %v9868 = vpop.f32.mrf.mxu0
        %v9869 = vadd.f32 %v9588, %v9868
        %v9870 = vpop.f32.mrf.mxu0
        %v9871 = vadd.f32 %v9590, %v9870
        %v9872 = vpop.f32.mrf.mxu0
        %v9873 = vadd.f32 %v9592, %v9872
        %v9874 = vpop.f32.mrf.mxu0
        %v9875 = vadd.f32 %v9594, %v9874
        %9876 = vmatprep.mubr.bf16.mxu0 %v2623
        %9877 = vmatmul.mubr.bf16.gmra.mxu0 %v2622
        %v9878 = vpop.f32.mrf.mxu0
        %v9879 = vadd.f32 %v9598, %v9878
        %v9880 = vpop.f32.mrf.mxu0
        %v9881 = vadd.f32 %v9600, %v9880
        %v9882 = vpop.f32.mrf.mxu0
        %v9883 = vadd.f32 %v9602, %v9882
        %v9884 = vpop.f32.mrf.mxu0
        %v9885 = vadd.f32 %v9604, %v9884
        %9886 = vmatprep.mubr.bf16.mxu0 %v2639
        %9887 = vmatmul.mubr.bf16.gmra.mxu0 %v2638
        %v9888 = vpop.f32.mrf.mxu0
        %v9889 = vadd.f32 %v9608, %v9888
        %v9890 = vpop.f32.mrf.mxu0
        %v9891 = vadd.f32 %v9610, %v9890
        %v9892 = vpop.f32.mrf.mxu0
        %v9893 = vadd.f32 %v9612, %v9892
        %v9894 = vpop.f32.mrf.mxu0
        %v9895 = vadd.f32 %v9614, %v9894
        %9896 = vmatprep.mubr.bf16.mxu0 %v2655
        %9897 = vmatmul.mubr.bf16.gmra.mxu0 %v2654
        %v9898 = vpop.f32.mrf.mxu0
        %v9899 = vadd.f32 %v9618, %v9898
        %v9900 = vpop.f32.mrf.mxu0
        %v9901 = vadd.f32 %v9620, %v9900
        %v9902 = vpop.f32.mrf.mxu0
        %v9903 = vadd.f32 %v9622, %v9902
        %v9904 = vpop.f32.mrf.mxu0
        %v9905 = vadd.f32 %v9624, %v9904
        %9906 = vmatprep.mubr.bf16.mxu0 %v2671
        %9907 = vmatmul.mubr.bf16.gmra.mxu0 %v2670
        %v9908 = vpop.f32.mrf.mxu0
        %v9909 = vadd.f32 %v9628, %v9908
        %v9910 = vpop.f32.mrf.mxu0
        %v9911 = vadd.f32 %v9630, %v9910
        %v9912 = vpop.f32.mrf.mxu0
        %v9913 = vadd.f32 %v9632, %v9912
        %v9914 = vpop.f32.mrf.mxu0
        %v9915 = vadd.f32 %v9634, %v9914
        %9916 = vmatprep.mubr.bf16.mxu0 %v2687
        %9917 = vmatmul.mubr.bf16.gmra.mxu0 %v2686
        %v9918 = vpop.f32.mrf.mxu0
        %v9919 = vadd.f32 %v9638, %v9918
        %v9920 = vpop.f32.mrf.mxu0
        %v9921 = vadd.f32 %v9640, %v9920
        %v9922 = vpop.f32.mrf.mxu0
        %v9923 = vadd.f32 %v9642, %v9922
        %v9924 = vpop.f32.mrf.mxu0
        %v9925 = vadd.f32 %v9644, %v9924
        %9926 = vmatprep.mubr.bf16.mxu0 %v2703
        %9927 = vmatmul.mubr.bf16.gmra.mxu0 %v2702
        %v9928 = vpop.f32.mrf.mxu0
        %v9929 = vadd.f32 %v9648, %v9928
        %v9930 = vpop.f32.mrf.mxu0
        %v9931 = vadd.f32 %v9650, %v9930
        %v9932 = vpop.f32.mrf.mxu0
        %v9933 = vadd.f32 %v9652, %v9932
        %v9934 = vpop.f32.mrf.mxu0
        %v9935 = vadd.f32 %v9654, %v9934
        %9936 = vmatprep.mubr.bf16.mxu0 %v2719
        %9937 = vmatmul.mubr.bf16.gmra.mxu0 %v2718
        %v9938 = vpop.f32.mrf.mxu0
        %v9939 = vadd.f32 %v9658, %v9938
        %v9940 = vpop.f32.mrf.mxu0
        %v9941 = vadd.f32 %v9660, %v9940
        %v9942 = vpop.f32.mrf.mxu0
        %v9943 = vadd.f32 %v9662, %v9942
        %v9944 = vpop.f32.mrf.mxu0
        %v9945 = vadd.f32 %v9664, %v9944
        %9946 = vmatprep.mubr.bf16.mxu0 %v2735
        %9947 = vmatmul.mubr.bf16.gmra.mxu0 %v2734
        %v9948 = vpop.f32.mrf.mxu0
        %v9949 = vadd.f32 %v9668, %v9948
        %v9950 = vpop.f32.mrf.mxu0
        %v9951 = vadd.f32 %v9670, %v9950
        %v9952 = vpop.f32.mrf.mxu0
        %v9953 = vadd.f32 %v9672, %v9952
        %v9954 = vpop.f32.mrf.mxu0
        %v9955 = vadd.f32 %v9674, %v9954
        %9956 = vmatprep.mubr.bf16.mxu0 %v2751
        %9957 = vmatmul.mubr.bf16.gmra.mxu0 %v2750
        %v9958 = vpop.f32.mrf.mxu0
        %v9959 = vadd.f32 %v9678, %v9958
        %v9960 = vpop.f32.mrf.mxu0
        %v9961 = vadd.f32 %v9680, %v9960
        %v9962 = vpop.f32.mrf.mxu0
        %v9963 = vadd.f32 %v9682, %v9962
        %v9964 = vpop.f32.mrf.mxu0
        %v9965 = vadd.f32 %v9684, %v9964
        %9966 = vmatprep.mubr.bf16.mxu0 %v2767
        %9967 = vmatmul.mubr.bf16.gmra.mxu0 %v2766
        %v9968 = vpop.f32.mrf.mxu0
        %v9969 = vadd.f32 %v9688, %v9968
        %v9970 = vpop.f32.mrf.mxu0
        %v9971 = vadd.f32 %v9690, %v9970
        %v9972 = vpop.f32.mrf.mxu0
        %v9973 = vadd.f32 %v9692, %v9972
        %v9974 = vpop.f32.mrf.mxu0
        %v9975 = vadd.f32 %v9694, %v9974
        %9976 = vmatprep.mubr.bf16.mxu0 %v2783
        %9977 = vmatmul.mubr.bf16.gmra.mxu0 %v2782
        %v9978 = vpop.f32.mrf.mxu0
        %v9979 = vadd.f32 %v9698, %v9978
        %v9980 = vpop.f32.mrf.mxu0
        %v9981 = vadd.f32 %v9700, %v9980
        %v9982 = vpop.f32.mrf.mxu0
        %v9983 = vadd.f32 %v9702, %v9982
        %v9984 = vpop.f32.mrf.mxu0
        %v9985 = vadd.f32 %v9704, %v9984
        %9986 = vmatprep.mubr.bf16.mxu0 %v2799
        %9987 = vmatmul.mubr.bf16.gmra.mxu0 %v2798
        %v9988 = vpop.f32.mrf.mxu0
        %v9989 = vadd.f32 %v9708, %v9988
        %v9990 = vpop.f32.mrf.mxu0
        %v9991 = vadd.f32 %v9710, %v9990
        %v9992 = vpop.f32.mrf.mxu0
        %v9993 = vadd.f32 %v9712, %v9992
        %v9994 = vpop.f32.mrf.mxu0
        %v9995 = vadd.f32 %v9714, %v9994
        %9996 = vmatprep.mubr.bf16.mxu0 %v2815
        %9997 = vmatmul.mubr.bf16.gmra.mxu0 %v2814
        %v9998 = vpop.f32.mrf.mxu0
        %v9999 = vadd.f32 %v9718, %v9998
        %v10000 = vpop.f32.mrf.mxu0
        %v10001 = vadd.f32 %v9720, %v10000
        %v10002 = vpop.f32.mrf.mxu0
        %v10003 = vadd.f32 %v9722, %v10002
        %v10004 = vpop.f32.mrf.mxu0
        %v10005 = vadd.f32 %v9724, %v10004
        %10006 = vmatprep.mubr.bf16.mxu0 %v2831
        %10007 = vmatmul.mubr.bf16.gmra.mxu0 %v2830
        %v10008 = vpop.f32.mrf.mxu0
        %v10009 = vadd.f32 %v9728, %v10008
        %v10010 = vpop.f32.mrf.mxu0
        %v10011 = vadd.f32 %v9730, %v10010
        %v10012 = vpop.f32.mrf.mxu0
        %v10013 = vadd.f32 %v9732, %v10012
        %v10014 = vpop.f32.mrf.mxu0
        %v10015 = vadd.f32 %v9734, %v10014
        %10016 = vmatprep.mubr.bf16.mxu0 %v2847
        %10017 = vmatmul.mubr.bf16.gmra.mxu0 %v2846
        %v10018 = vpop.f32.mrf.mxu0
        %v10019 = vadd.f32 %v9738, %v10018
        %v10020 = vpop.f32.mrf.mxu0
        %v10021 = vadd.f32 %v9740, %v10020
        %v10022 = vpop.f32.mrf.mxu0
        %v10023 = vpop.f32.mrf.mxu0
        %10024 = vdwg.mxu0
        %10025 = vmatprep.subr.bf16.mxu0 %v5265
        %10026 = vmatpush1.bf16.msra.mxu0 %v5264
        %10027 = vmatprep.subr.bf16.mxu0 %v5261
        %10028 = vmatpush1.bf16.msra.mxu0 %v5260
        %10029 = vmatprep.subr.bf16.mxu0 %v5257
        %10030 = vmatpush1.bf16.msra.mxu0 %v5256
        %10031 = vmatprep.subr.bf16.mxu0 %v5253
        %10032 = vmatpush1.bf16.msra.mxu0 %v5252
        %10033 = vmatprep.subr.bf16.mxu0 %v5249
        %10034 = vmatpush1.bf16.msra.mxu0 %v5248
        %10035 = vmatprep.subr.bf16.mxu0 %v5245
        %10036 = vmatpush1.bf16.msra.mxu0 %v5244
        %10037 = vmatprep.subr.bf16.mxu0 %v5241
        %10038 = vmatpush1.bf16.msra.mxu0 %v5240
        %10039 = vmatprep.subr.bf16.mxu0 %v5237
        %10040 = vmatpush1.bf16.msra.mxu0 %v5236
        %10041 = vmatprep.subr.bf16.mxu0 %v5297
        %10042 = vmatpush2.bf16.msra.mxu0 %v5296
        %10043 = vmatprep.subr.bf16.mxu0 %v5293
        %10044 = vmatpush2.bf16.msra.mxu0 %v5292
        %10045 = vmatprep.subr.bf16.mxu0 %v5289
        %10046 = vmatpush2.bf16.msra.mxu0 %v5288
        %10047 = vmatprep.subr.bf16.mxu0 %v5285
        %10048 = vmatpush2.bf16.msra.mxu0 %v5284
        %10049 = vmatprep.subr.bf16.mxu0 %v5281
        %10050 = vmatpush2.bf16.msra.mxu0 %v5280
        %10051 = vmatprep.subr.bf16.mxu0 %v5277
        %10052 = vmatpush2.bf16.msra.mxu0 %v5276
        %10053 = vmatprep.subr.bf16.mxu0 %v5273
        %10054 = vmatpush2.bf16.msra.mxu0 %v5272
        %10055 = vmatprep.subr.bf16.mxu0 %v5269
        %10056 = vmatpush2.bf16.msra.mxu0 %v5268
        %10057 = vmatprep.mubr.bf16.mxu0 %v2465
        %10058 = vmatmul.mubr.bf16.gmra.mxu0 %v2464
        %v10059 = vpop.f32.mrf.mxu0
        %v10060 = vadd.f32 %v9779, %v10059
        %v10061 = vpop.f32.mrf.mxu0
        %v10062 = vadd.f32 %v9781, %v10061
        %v10063 = vpop.f32.mrf.mxu0
        %v10064 = vadd.f32 %v9783, %v10063
        %v10065 = vpop.f32.mrf.mxu0
        %v10066 = vadd.f32 %v9785, %v10065
        %10067 = vmatprep.mubr.bf16.mxu0 %v2481
        %10068 = vmatmul.mubr.bf16.gmra.mxu0 %v2480
        %v10069 = vpop.f32.mrf.mxu0
        %v10070 = vadd.f32 %v9789, %v10069
        %v10071 = vpop.f32.mrf.mxu0
        %v10072 = vadd.f32 %v9791, %v10071
        %v10073 = vpop.f32.mrf.mxu0
        %v10074 = vadd.f32 %v9793, %v10073
        %v10075 = vpop.f32.mrf.mxu0
        %v10076 = vadd.f32 %v9795, %v10075
        %10077 = vmatprep.mubr.bf16.mxu0 %v2497
        %10078 = vmatmul.mubr.bf16.gmra.mxu0 %v2496
        %v10079 = vpop.f32.mrf.mxu0
        %v10080 = vadd.f32 %v9799, %v10079
        %v10081 = vpop.f32.mrf.mxu0
        %v10082 = vadd.f32 %v9801, %v10081
        %v10083 = vpop.f32.mrf.mxu0
        %v10084 = vadd.f32 %v9803, %v10083
        %v10085 = vpop.f32.mrf.mxu0
        %v10086 = vadd.f32 %v9805, %v10085
        %10087 = vmatprep.mubr.bf16.mxu0 %v2513
        %10088 = vmatmul.mubr.bf16.gmra.mxu0 %v2512
        %v10089 = vpop.f32.mrf.mxu0
        %v10090 = vadd.f32 %v9809, %v10089
        %v10091 = vpop.f32.mrf.mxu0
        %v10092 = vadd.f32 %v9811, %v10091
        %v10093 = vpop.f32.mrf.mxu0
        %v10094 = vadd.f32 %v9813, %v10093
        %v10095 = vpop.f32.mrf.mxu0
        %v10096 = vadd.f32 %v9815, %v10095
        %10097 = vmatprep.mubr.bf16.mxu0 %v2529
        %10098 = vmatmul.mubr.bf16.gmra.mxu0 %v2528
        %v10099 = vpop.f32.mrf.mxu0
        %v10100 = vadd.f32 %v9819, %v10099
        %v10101 = vpop.f32.mrf.mxu0
        %v10102 = vadd.f32 %v9821, %v10101
        %v10103 = vpop.f32.mrf.mxu0
        %v10104 = vadd.f32 %v9823, %v10103
        %v10105 = vpop.f32.mrf.mxu0
        %v10106 = vadd.f32 %v9825, %v10105
        %10107 = vmatprep.mubr.bf16.mxu0 %v2545
        %10108 = vmatmul.mubr.bf16.gmra.mxu0 %v2544
        %v10109 = vpop.f32.mrf.mxu0
        %v10110 = vadd.f32 %v9829, %v10109
        %v10111 = vpop.f32.mrf.mxu0
        %v10112 = vadd.f32 %v9831, %v10111
        %v10113 = vpop.f32.mrf.mxu0
        %v10114 = vadd.f32 %v9833, %v10113
        %v10115 = vpop.f32.mrf.mxu0
        %v10116 = vadd.f32 %v9835, %v10115
        %10117 = vmatprep.mubr.bf16.mxu0 %v2561
        %10118 = vmatmul.mubr.bf16.gmra.mxu0 %v2560
        %v10119 = vpop.f32.mrf.mxu0
        %v10120 = vadd.f32 %v9839, %v10119
        %v10121 = vpop.f32.mrf.mxu0
        %v10122 = vadd.f32 %v9841, %v10121
        %v10123 = vpop.f32.mrf.mxu0
        %v10124 = vadd.f32 %v9843, %v10123
        %v10125 = vpop.f32.mrf.mxu0
        %v10126 = vadd.f32 %v9845, %v10125
        %10127 = vmatprep.mubr.bf16.mxu0 %v2577
        %10128 = vmatmul.mubr.bf16.gmra.mxu0 %v2576
        %v10129 = vpop.f32.mrf.mxu0
        %v10130 = vadd.f32 %v9849, %v10129
        %v10131 = vpop.f32.mrf.mxu0
        %v10132 = vadd.f32 %v9851, %v10131
        %v10133 = vpop.f32.mrf.mxu0
        %v10134 = vadd.f32 %v9853, %v10133
        %v10135 = vpop.f32.mrf.mxu0
        %v10136 = vadd.f32 %v9855, %v10135
        %10137 = vmatprep.mubr.bf16.mxu0 %v2593
        %10138 = vmatmul.mubr.bf16.gmra.mxu0 %v2592
        %v10139 = vpop.f32.mrf.mxu0
        %v10140 = vadd.f32 %v9859, %v10139
        %v10141 = vpop.f32.mrf.mxu0
        %v10142 = vadd.f32 %v9861, %v10141
        %v10143 = vpop.f32.mrf.mxu0
        %v10144 = vadd.f32 %v9863, %v10143
        %v10145 = vpop.f32.mrf.mxu0
        %v10146 = vadd.f32 %v9865, %v10145
        %10147 = vmatprep.mubr.bf16.mxu0 %v2609
        %10148 = vmatmul.mubr.bf16.gmra.mxu0 %v2608
        %v10149 = vpop.f32.mrf.mxu0
        %v10150 = vadd.f32 %v9869, %v10149
        %v10151 = vpop.f32.mrf.mxu0
        %v10152 = vadd.f32 %v9871, %v10151
        %v10153 = vpop.f32.mrf.mxu0
        %v10154 = vadd.f32 %v9873, %v10153
        %v10155 = vpop.f32.mrf.mxu0
        %v10156 = vadd.f32 %v9875, %v10155
        %10157 = vmatprep.mubr.bf16.mxu0 %v2625
        %10158 = vmatmul.mubr.bf16.gmra.mxu0 %v2624
        %v10159 = vpop.f32.mrf.mxu0
        %v10160 = vadd.f32 %v9879, %v10159
        %v10161 = vpop.f32.mrf.mxu0
        %v10162 = vadd.f32 %v9881, %v10161
        %v10163 = vpop.f32.mrf.mxu0
        %v10164 = vadd.f32 %v9883, %v10163
        %v10165 = vpop.f32.mrf.mxu0
        %v10166 = vadd.f32 %v9885, %v10165
        %10167 = vmatprep.mubr.bf16.mxu0 %v2641
        %10168 = vmatmul.mubr.bf16.gmra.mxu0 %v2640
        %v10169 = vpop.f32.mrf.mxu0
        %v10170 = vadd.f32 %v9889, %v10169
        %v10171 = vpop.f32.mrf.mxu0
        %v10172 = vadd.f32 %v9891, %v10171
        %v10173 = vpop.f32.mrf.mxu0
        %v10174 = vadd.f32 %v9893, %v10173
        %v10175 = vpop.f32.mrf.mxu0
        %v10176 = vadd.f32 %v9895, %v10175
        %10177 = vmatprep.mubr.bf16.mxu0 %v2657
        %10178 = vmatmul.mubr.bf16.gmra.mxu0 %v2656
        %v10179 = vpop.f32.mrf.mxu0
        %v10180 = vadd.f32 %v9899, %v10179
        %v10181 = vpop.f32.mrf.mxu0
        %v10182 = vadd.f32 %v9901, %v10181
        %v10183 = vpop.f32.mrf.mxu0
        %v10184 = vadd.f32 %v9903, %v10183
        %v10185 = vpop.f32.mrf.mxu0
        %v10186 = vadd.f32 %v9905, %v10185
        %10187 = vmatprep.mubr.bf16.mxu0 %v2673
        %10188 = vmatmul.mubr.bf16.gmra.mxu0 %v2672
        %v10189 = vpop.f32.mrf.mxu0
        %v10190 = vadd.f32 %v9909, %v10189
        %v10191 = vpop.f32.mrf.mxu0
        %v10192 = vadd.f32 %v9911, %v10191
        %v10193 = vpop.f32.mrf.mxu0
        %v10194 = vadd.f32 %v9913, %v10193
        %v10195 = vpop.f32.mrf.mxu0
        %v10196 = vadd.f32 %v9915, %v10195
        %10197 = vmatprep.mubr.bf16.mxu0 %v2689
        %10198 = vmatmul.mubr.bf16.gmra.mxu0 %v2688
        %v10199 = vpop.f32.mrf.mxu0
        %v10200 = vadd.f32 %v9919, %v10199
        %v10201 = vpop.f32.mrf.mxu0
        %v10202 = vadd.f32 %v9921, %v10201
        %v10203 = vpop.f32.mrf.mxu0
        %v10204 = vadd.f32 %v9923, %v10203
        %v10205 = vpop.f32.mrf.mxu0
        %v10206 = vadd.f32 %v9925, %v10205
        %10207 = vmatprep.mubr.bf16.mxu0 %v2705
        %10208 = vmatmul.mubr.bf16.gmra.mxu0 %v2704
        %v10209 = vpop.f32.mrf.mxu0
        %v10210 = vadd.f32 %v9929, %v10209
        %v10211 = vpop.f32.mrf.mxu0
        %v10212 = vadd.f32 %v9931, %v10211
        %v10213 = vpop.f32.mrf.mxu0
        %v10214 = vadd.f32 %v9933, %v10213
        %v10215 = vpop.f32.mrf.mxu0
        %v10216 = vadd.f32 %v9935, %v10215
        %10217 = vmatprep.mubr.bf16.mxu0 %v2721
        %10218 = vmatmul.mubr.bf16.gmra.mxu0 %v2720
        %v10219 = vpop.f32.mrf.mxu0
        %v10220 = vadd.f32 %v9939, %v10219
        %v10221 = vpop.f32.mrf.mxu0
        %v10222 = vadd.f32 %v9941, %v10221
        %v10223 = vpop.f32.mrf.mxu0
        %v10224 = vadd.f32 %v9943, %v10223
        %v10225 = vpop.f32.mrf.mxu0
        %v10226 = vadd.f32 %v9945, %v10225
        %10227 = vmatprep.mubr.bf16.mxu0 %v2737
        %10228 = vmatmul.mubr.bf16.gmra.mxu0 %v2736
        %v10229 = vpop.f32.mrf.mxu0
        %v10230 = vadd.f32 %v9949, %v10229
        %v10231 = vpop.f32.mrf.mxu0
        %v10232 = vadd.f32 %v9951, %v10231
        %v10233 = vpop.f32.mrf.mxu0
        %v10234 = vadd.f32 %v9953, %v10233
        %v10235 = vpop.f32.mrf.mxu0
        %v10236 = vadd.f32 %v9955, %v10235
        %10237 = vmatprep.mubr.bf16.mxu0 %v2753
        %10238 = vmatmul.mubr.bf16.gmra.mxu0 %v2752
        %v10239 = vpop.f32.mrf.mxu0
        %v10240 = vadd.f32 %v9959, %v10239
        %v10241 = vpop.f32.mrf.mxu0
        %v10242 = vadd.f32 %v9961, %v10241
        %v10243 = vpop.f32.mrf.mxu0
        %v10244 = vadd.f32 %v9963, %v10243
        %v10245 = vpop.f32.mrf.mxu0
        %v10246 = vadd.f32 %v9965, %v10245
        %10247 = vmatprep.mubr.bf16.mxu0 %v2769
        %10248 = vmatmul.mubr.bf16.gmra.mxu0 %v2768
        %v10249 = vpop.f32.mrf.mxu0
        %v10250 = vadd.f32 %v9969, %v10249
        %v10251 = vpop.f32.mrf.mxu0
        %v10252 = vadd.f32 %v9971, %v10251
        %v10253 = vpop.f32.mrf.mxu0
        %v10254 = vadd.f32 %v9973, %v10253
        %v10255 = vpop.f32.mrf.mxu0
        %v10256 = vadd.f32 %v9975, %v10255
        %10257 = vmatprep.mubr.bf16.mxu0 %v2785
        %10258 = vmatmul.mubr.bf16.gmra.mxu0 %v2784
        %v10259 = vpop.f32.mrf.mxu0
        %v10260 = vadd.f32 %v9979, %v10259
        %v10261 = vpop.f32.mrf.mxu0
        %v10262 = vadd.f32 %v9981, %v10261
        %v10263 = vpop.f32.mrf.mxu0
        %v10264 = vadd.f32 %v9983, %v10263
        %v10265 = vpop.f32.mrf.mxu0
        %v10266 = vadd.f32 %v9985, %v10265
        %10267 = vmatprep.mubr.bf16.mxu0 %v2801
        %10268 = vmatmul.mubr.bf16.gmra.mxu0 %v2800
        %v10269 = vpop.f32.mrf.mxu0
        %v10270 = vadd.f32 %v9989, %v10269
        %v10271 = vpop.f32.mrf.mxu0
        %v10272 = vadd.f32 %v9991, %v10271
        %v10273 = vpop.f32.mrf.mxu0
        %v10274 = vadd.f32 %v9993, %v10273
        %v10275 = vpop.f32.mrf.mxu0
        %v10276 = vadd.f32 %v9995, %v10275
        %10277 = vmatprep.mubr.bf16.mxu0 %v2817
        %10278 = vmatmul.mubr.bf16.gmra.mxu0 %v2816
        %v10279 = vpop.f32.mrf.mxu0
        %v10280 = vadd.f32 %v9999, %v10279
        %v10281 = vpop.f32.mrf.mxu0
        %v10282 = vadd.f32 %v10001, %v10281
        %v10283 = vpop.f32.mrf.mxu0
        %v10284 = vadd.f32 %v10003, %v10283
        %v10285 = vpop.f32.mrf.mxu0
        %v10286 = vadd.f32 %v10005, %v10285
        %10287 = vmatprep.mubr.bf16.mxu0 %v2833
        %10288 = vmatmul.mubr.bf16.gmra.mxu0 %v2832
        %v10289 = vpop.f32.mrf.mxu0
        %v10290 = vadd.f32 %v10009, %v10289
        %v10291 = vpop.f32.mrf.mxu0
        %v10292 = vadd.f32 %v10011, %v10291
        %v10293 = vpop.f32.mrf.mxu0
        %v10294 = vadd.f32 %v10013, %v10293
        %v10295 = vpop.f32.mrf.mxu0
        %v10296 = vadd.f32 %v10015, %v10295
        %10297 = vmatprep.mubr.bf16.mxu0 %v2849
        %10298 = vmatmul.mubr.bf16.gmra.mxu0 %v2848
        %v10299 = vpop.f32.mrf.mxu0
        %v10300 = vadd.f32 %v10019, %v10299
        %v10301 = vpop.f32.mrf.mxu0
        %v10302 = vadd.f32 %v10021, %v10301
        %v10303 = vpop.f32.mrf.mxu0
        %v10304 = vpop.f32.mrf.mxu0
        %10305 = vdwg.mxu0
        %v10306 = vmax.f32 %v7812, 0.0
        %v10307 = vmax.f32 %v7814, 0.0
        %v10308 = vmax.f32 %v10060, 0.0
        %v10309 = vmax.f32 %v10062, 0.0
        %v10310 = vmax.f32 %v7816, 0.0
        %v10311 = vmax.f32 %v7818, 0.0
        %v10312 = vmax.f32 %v10064, 0.0
        %v10313 = vmax.f32 %v10066, 0.0
        %v10314 = vmax.f32 %v7822, 0.0
        %v10315 = vmax.f32 %v7824, 0.0
        %v10316 = vmax.f32 %v10070, 0.0
        %v10317 = vmax.f32 %v10072, 0.0
        %v10318 = vmax.f32 %v7826, 0.0
        %v10319 = vmax.f32 %v7828, 0.0
        %v10320 = vmax.f32 %v10074, 0.0
        %v10321 = vmax.f32 %v10076, 0.0
        %v10322 = vmax.f32 %v7832, 0.0
        %v10323 = vmax.f32 %v7834, 0.0
        %v10324 = vmax.f32 %v10080, 0.0
        %v10325 = vmax.f32 %v10082, 0.0
        %v10326 = vmax.f32 %v7836, 0.0
        %v10327 = vmax.f32 %v7838, 0.0
        %v10328 = vmax.f32 %v10084, 0.0
        %v10329 = vmax.f32 %v10086, 0.0
        %v10330 = vmax.f32 %v7842, 0.0
        %v10331 = vmax.f32 %v7844, 0.0
        %v10332 = vmax.f32 %v10090, 0.0
        %v10333 = vmax.f32 %v10092, 0.0
        %v10334 = vmax.f32 %v7846, 0.0
        %v10335 = vmax.f32 %v7848, 0.0
        %v10336 = vmax.f32 %v10094, 0.0
        %v10337 = vmax.f32 %v10096, 0.0
        %v10338 = vmax.f32 %v7852, 0.0
        %v10339 = vmax.f32 %v7854, 0.0
        %v10340 = vmax.f32 %v10100, 0.0
        %v10341 = vmax.f32 %v10102, 0.0
        %v10342 = vmax.f32 %v7856, 0.0
        %v10343 = vmax.f32 %v7858, 0.0
        %v10344 = vmax.f32 %v10104, 0.0
        %v10345 = vmax.f32 %v10106, 0.0
        %v10346 = vmax.f32 %v7862, 0.0
        %v10347 = vmax.f32 %v7864, 0.0
        %v10348 = vmax.f32 %v10110, 0.0
        %v10349 = vmax.f32 %v10112, 0.0
        %v10350 = vmax.f32 %v7866, 0.0
        %v10351 = vmax.f32 %v7868, 0.0
        %v10352 = vmax.f32 %v10114, 0.0
        %v10353 = vmax.f32 %v10116, 0.0
        %v10354 = vmax.f32 %v7872, 0.0
        %v10355 = vmax.f32 %v7874, 0.0
        %v10356 = vmax.f32 %v10120, 0.0
        %v10357 = vmax.f32 %v10122, 0.0
        %v10358 = vmax.f32 %v7876, 0.0
        %v10359 = vmax.f32 %v7878, 0.0
        %v10360 = vmax.f32 %v10124, 0.0
        %v10361 = vmax.f32 %v10126, 0.0
        %v10362 = vmax.f32 %v7882, 0.0
        %v10363 = vmax.f32 %v7884, 0.0
        %v10364 = vmax.f32 %v10130, 0.0
        %v10365 = vmax.f32 %v10132, 0.0
        %v10366 = vmax.f32 %v7886, 0.0
        %v10367 = vmax.f32 %v7888, 0.0
        %v10368 = vmax.f32 %v10134, 0.0
        %v10369 = vmax.f32 %v10136, 0.0
        %v10370 = vmax.f32 %v7892, 0.0
        %v10371 = vmax.f32 %v7894, 0.0
        %v10372 = vmax.f32 %v10140, 0.0
        %v10373 = vmax.f32 %v10142, 0.0
        %v10374 = vmax.f32 %v7896, 0.0
        %v10375 = vmax.f32 %v7898, 0.0
        %v10376 = vmax.f32 %v10144, 0.0
        %v10377 = vmax.f32 %v10146, 0.0
        %v10378 = vmax.f32 %v7902, 0.0
        %v10379 = vmax.f32 %v7904, 0.0
        %v10380 = vmax.f32 %v10150, 0.0
        %v10381 = vmax.f32 %v10152, 0.0
        %v10382 = vmax.f32 %v7906, 0.0
        %v10383 = vmax.f32 %v7908, 0.0
        %v10384 = vmax.f32 %v10154, 0.0
        %v10385 = vmax.f32 %v10156, 0.0
        %v10386 = vmax.f32 %v7912, 0.0
        %v10387 = vmax.f32 %v7914, 0.0
        %v10388 = vmax.f32 %v10160, 0.0
        %v10389 = vmax.f32 %v10162, 0.0
        %v10390 = vmax.f32 %v7916, 0.0
        %v10391 = vmax.f32 %v7918, 0.0
        %v10392 = vmax.f32 %v10164, 0.0
        %v10393 = vmax.f32 %v10166, 0.0
        %v10394 = vmax.f32 %v7922, 0.0
        %v10395 = vmax.f32 %v7924, 0.0
        %v10396 = vmax.f32 %v10170, 0.0
        %v10397 = vmax.f32 %v10172, 0.0
        %v10398 = vmax.f32 %v7926, 0.0
        %v10399 = vmax.f32 %v7928, 0.0
        %v10400 = vmax.f32 %v10174, 0.0
        %v10401 = vmax.f32 %v10176, 0.0
        %v10402 = vmax.f32 %v7932, 0.0
        %v10403 = vmax.f32 %v7934, 0.0
        %v10404 = vmax.f32 %v10180, 0.0
        %v10405 = vmax.f32 %v10182, 0.0
        %v10406 = vmax.f32 %v7936, 0.0
        %v10407 = vmax.f32 %v7938, 0.0
        %v10408 = vmax.f32 %v10184, 0.0
        %v10409 = vmax.f32 %v10186, 0.0
        %v10410 = vmax.f32 %v7942, 0.0
        %v10411 = vmax.f32 %v7944, 0.0
        %v10412 = vmax.f32 %v10190, 0.0
        %v10413 = vmax.f32 %v10192, 0.0
        %v10414 = vmax.f32 %v7946, 0.0
        %v10415 = vmax.f32 %v7948, 0.0
        %v10416 = vmax.f32 %v10194, 0.0
        %v10417 = vmax.f32 %v10196, 0.0
        %v10418 = vmax.f32 %v7952, 0.0
        %v10419 = vmax.f32 %v7954, 0.0
        %v10420 = vmax.f32 %v10200, 0.0
        %v10421 = vmax.f32 %v10202, 0.0
        %v10422 = vmax.f32 %v7956, 0.0
        %v10423 = vmax.f32 %v7958, 0.0
        %v10424 = vmax.f32 %v10204, 0.0
        %v10425 = vmax.f32 %v10206, 0.0
        %v10426 = vmax.f32 %v7962, 0.0
        %v10427 = vmax.f32 %v7964, 0.0
        %v10428 = vmax.f32 %v10210, 0.0
        %v10429 = vmax.f32 %v10212, 0.0
        %v10430 = vmax.f32 %v7966, 0.0
        %v10431 = vmax.f32 %v7968, 0.0
        %v10432 = vmax.f32 %v10214, 0.0
        %v10433 = vmax.f32 %v10216, 0.0
        %v10434 = vmax.f32 %v7972, 0.0
        %v10435 = vmax.f32 %v7974, 0.0
        %v10436 = vmax.f32 %v10220, 0.0
        %v10437 = vmax.f32 %v10222, 0.0
        %v10438 = vmax.f32 %v7976, 0.0
        %v10439 = vmax.f32 %v7978, 0.0
        %v10440 = vmax.f32 %v10224, 0.0
        %v10441 = vmax.f32 %v10226, 0.0
        %v10442 = vmax.f32 %v7982, 0.0
        %v10443 = vmax.f32 %v7984, 0.0
        %v10444 = vmax.f32 %v10230, 0.0
        %v10445 = vmax.f32 %v10232, 0.0
        %v10446 = vmax.f32 %v7986, 0.0
        %v10447 = vmax.f32 %v7988, 0.0
        %v10448 = vmax.f32 %v10234, 0.0
        %v10449 = vmax.f32 %v10236, 0.0
        %v10450 = vmax.f32 %v7992, 0.0
        %v10451 = vmax.f32 %v7994, 0.0
        %v10452 = vmax.f32 %v10240, 0.0
        %v10453 = vmax.f32 %v10242, 0.0
        %v10454 = vmax.f32 %v7996, 0.0
        %v10455 = vmax.f32 %v7998, 0.0
        %v10456 = vmax.f32 %v10244, 0.0
        %v10457 = vmax.f32 %v10246, 0.0
        %v10458 = vmax.f32 %v8002, 0.0
        %v10459 = vmax.f32 %v8004, 0.0
        %v10460 = vmax.f32 %v10250, 0.0
        %v10461 = vmax.f32 %v10252, 0.0
        %v10462 = vmax.f32 %v8006, 0.0
        %v10463 = vmax.f32 %v8008, 0.0
        %v10464 = vmax.f32 %v10254, 0.0
        %v10465 = vmax.f32 %v10256, 0.0
        %v10466 = vmax.f32 %v8012, 0.0
        %v10467 = vmax.f32 %v8014, 0.0
        %v10468 = vmax.f32 %v10260, 0.0
        %v10469 = vmax.f32 %v10262, 0.0
        %v10470 = vmax.f32 %v8016, 0.0
        %v10471 = vmax.f32 %v8018, 0.0
        %v10472 = vmax.f32 %v10264, 0.0
        %v10473 = vmax.f32 %v10266, 0.0
        %v10474 = vmax.f32 %v8022, 0.0
        %v10475 = vmax.f32 %v8024, 0.0
        %v10476 = vmax.f32 %v10270, 0.0
        %v10477 = vmax.f32 %v10272, 0.0
        %v10478 = vmax.f32 %v8026, 0.0
        %v10479 = vmax.f32 %v8028, 0.0
        %v10480 = vmax.f32 %v10274, 0.0
        %v10481 = vmax.f32 %v10276, 0.0
        %v10482 = vmax.f32 %v8032, 0.0
        %v10483 = vmax.f32 %v8034, 0.0
        %v10484 = vmax.f32 %v10280, 0.0
        %v10485 = vmax.f32 %v10282, 0.0
        %v10486 = vmax.f32 %v8036, 0.0
        %v10487 = vmax.f32 %v8038, 0.0
        %v10488 = vmax.f32 %v10284, 0.0
        %v10489 = vmax.f32 %v10286, 0.0
        %v10490 = vmax.f32 %v8042, 0.0
        %v10491 = vmax.f32 %v8044, 0.0
        %v10492 = vmax.f32 %v10290, 0.0
        %v10493 = vmax.f32 %v10292, 0.0
        %v10494 = vmax.f32 %v8046, 0.0
        %v10495 = vmax.f32 %v8048, 0.0
        %v10496 = vmax.f32 %v10294, 0.0
        %v10497 = vmax.f32 %v10296, 0.0
        %v10498 = vmax.f32 %v8052, 0.0
        %v10499 = vmax.f32 %v8054, 0.0
        %v10500 = vmax.f32 %v10300, 0.0
        %v10501 = vmax.f32 %v10302, 0.0
        %10502 = vst [vmem:[%s334] sm:$0xff] %v10306
        %10503 = vst [vmem:[%s334 + $0x8] sm:$0xff] %v10307
        %10504 = vst [vmem:[%s334 + $0x10] sm:$0xff] %v10308
        %10505 = vst [vmem:[%s334 + $0x18] sm:$0xff] %v10309
        %10506 = vst [vmem:[%s334 + $0x20] sm:$0xff] %v10310
        %10507 = vst [vmem:[%s334 + $0x28] sm:$0xff] %v10311
        %10508 = vst [vmem:[%s334 + $0x30] sm:$0xff] %v10312
        %10509 = vst [vmem:[%s334 + $0x38] sm:$0xff] %v10313
        %10510 = vst [vmem:[%s334 + $0x40] sm:$0xff] %v10314
        %10511 = vst [vmem:[%s334 + $0x48] sm:$0xff] %v10315
        %10512 = vst [vmem:[%s334 + $0x50] sm:$0xff] %v10316
        %10513 = vst [vmem:[%s334 + $0x58] sm:$0xff] %v10317
        %10514 = vst [vmem:[%s334 + $0x60] sm:$0xff] %v10318
        %10515 = vst [vmem:[%s334 + $0x68] sm:$0xff] %v10319
        %10516 = vst [vmem:[%s334 + $0x70] sm:$0xff] %v10320
        %10517 = vst [vmem:[%s334 + $0x78] sm:$0xff] %v10321
        %10518 = vst [vmem:[%s334 + $0x80] sm:$0xff] %v10322
        %10519 = vst [vmem:[%s334 + $0x88] sm:$0xff] %v10323
        %10520 = vst [vmem:[%s334 + $0x90] sm:$0xff] %v10324
        %10521 = vst [vmem:[%s334 + $0x98] sm:$0xff] %v10325
        %10522 = vst [vmem:[%s334 + $0xa0] sm:$0xff] %v10326
        %10523 = vst [vmem:[%s334 + $0xa8] sm:$0xff] %v10327
        %10524 = vst [vmem:[%s334 + $0xb0] sm:$0xff] %v10328
        %10525 = vst [vmem:[%s334 + $0xb8] sm:$0xff] %v10329
        %10526 = vst [vmem:[%s334 + $0xc0] sm:$0xff] %v10330
        %10527 = vst [vmem:[%s334 + $0xc8] sm:$0xff] %v10331
        %10528 = vst [vmem:[%s334 + $0xd0] sm:$0xff] %v10332
        %10529 = vst [vmem:[%s334 + $0xd8] sm:$0xff] %v10333
        %10530 = vst [vmem:[%s334 + $0xe0] sm:$0xff] %v10334
        %10531 = vst [vmem:[%s334 + $0xe8] sm:$0xff] %v10335
        %10532 = vst [vmem:[%s334 + $0xf0] sm:$0xff] %v10336
        %10533 = vst [vmem:[%s334 + $0xf8] sm:$0xff] %v10337
        %10534 = vst [vmem:[%s334 + $0x100] sm:$0xff] %v10338
        %10535 = vst [vmem:[%s334 + $0x108] sm:$0xff] %v10339
        %10536 = vst [vmem:[%s334 + $0x110] sm:$0xff] %v10340
        %10537 = vst [vmem:[%s334 + $0x118] sm:$0xff] %v10341
        %10538 = vst [vmem:[%s334 + $0x120] sm:$0xff] %v10342
        %10539 = vst [vmem:[%s334 + $0x128] sm:$0xff] %v10343
        %10540 = vst [vmem:[%s334 + $0x130] sm:$0xff] %v10344
        %10541 = vst [vmem:[%s334 + $0x138] sm:$0xff] %v10345
        %10542 = vst [vmem:[%s334 + $0x140] sm:$0xff] %v10346
        %10543 = vst [vmem:[%s334 + $0x148] sm:$0xff] %v10347
        %10544 = vst [vmem:[%s334 + $0x150] sm:$0xff] %v10348
        %10545 = vst [vmem:[%s334 + $0x158] sm:$0xff] %v10349
        %10546 = vst [vmem:[%s334 + $0x160] sm:$0xff] %v10350
        %10547 = vst [vmem:[%s334 + $0x168] sm:$0xff] %v10351
        %10548 = vst [vmem:[%s334 + $0x170] sm:$0xff] %v10352
        %10549 = vst [vmem:[%s334 + $0x178] sm:$0xff] %v10353
        %10550 = vst [vmem:[%s334 + $0x180] sm:$0xff] %v10354
        %10551 = vst [vmem:[%s334 + $0x188] sm:$0xff] %v10355
        %10552 = vst [vmem:[%s334 + $0x190] sm:$0xff] %v10356
        %10553 = vst [vmem:[%s334 + $0x198] sm:$0xff] %v10357
        %10554 = vst [vmem:[%s334 + $0x1a0] sm:$0xff] %v10358
        %10555 = vst [vmem:[%s334 + $0x1a8] sm:$0xff] %v10359
        %10556 = vst [vmem:[%s334 + $0x1b0] sm:$0xff] %v10360
        %10557 = vst [vmem:[%s334 + $0x1b8] sm:$0xff] %v10361
        %10558 = vst [vmem:[%s334 + $0x1c0] sm:$0xff] %v10362
        %10559 = vst [vmem:[%s334 + $0x1c8] sm:$0xff] %v10363
        %10560 = vst [vmem:[%s334 + $0x1d0] sm:$0xff] %v10364
        %10561 = vst [vmem:[%s334 + $0x1d8] sm:$0xff] %v10365
        %10562 = vst [vmem:[%s334 + $0x1e0] sm:$0xff] %v10366
        %10563 = vst [vmem:[%s334 + $0x1e8] sm:$0xff] %v10367
        %10564 = vst [vmem:[%s334 + $0x1f0] sm:$0xff] %v10368
        %10565 = vst [vmem:[%s334 + $0x1f8] sm:$0xff] %v10369
        %10566 = vst [vmem:[%s334 + $0x200] sm:$0xff] %v10370
        %10567 = vst [vmem:[%s334 + $0x208] sm:$0xff] %v10371
        %10568 = vst [vmem:[%s334 + $0x210] sm:$0xff] %v10372
        %10569 = vst [vmem:[%s334 + $0x218] sm:$0xff] %v10373
        %10570 = vst [vmem:[%s334 + $0x220] sm:$0xff] %v10374
        %10571 = vst [vmem:[%s334 + $0x228] sm:$0xff] %v10375
        %10572 = vst [vmem:[%s334 + $0x230] sm:$0xff] %v10376
        %10573 = vst [vmem:[%s334 + $0x238] sm:$0xff] %v10377
        %10574 = vst [vmem:[%s334 + $0x240] sm:$0xff] %v10378
        %10575 = vst [vmem:[%s334 + $0x248] sm:$0xff] %v10379
        %10576 = vst [vmem:[%s334 + $0x250] sm:$0xff] %v10380
        %10577 = vst [vmem:[%s334 + $0x258] sm:$0xff] %v10381
        %10578 = vst [vmem:[%s334 + $0x260] sm:$0xff] %v10382
        %10579 = vst [vmem:[%s334 + $0x268] sm:$0xff] %v10383
        %10580 = vst [vmem:[%s334 + $0x270] sm:$0xff] %v10384
        %10581 = vst [vmem:[%s334 + $0x278] sm:$0xff] %v10385
        %10582 = vst [vmem:[%s334 + $0x280] sm:$0xff] %v10386
        %10583 = vst [vmem:[%s334 + $0x288] sm:$0xff] %v10387
        %10584 = vst [vmem:[%s334 + $0x290] sm:$0xff] %v10388
        %10585 = vst [vmem:[%s334 + $0x298] sm:$0xff] %v10389
        %10586 = vst [vmem:[%s334 + $0x2a0] sm:$0xff] %v10390
        %10587 = vst [vmem:[%s334 + $0x2a8] sm:$0xff] %v10391
        %10588 = vst [vmem:[%s334 + $0x2b0] sm:$0xff] %v10392
        %10589 = vst [vmem:[%s334 + $0x2b8] sm:$0xff] %v10393
        %10590 = vst [vmem:[%s334 + $0x2c0] sm:$0xff] %v10394
        %10591 = vst [vmem:[%s334 + $0x2c8] sm:$0xff] %v10395
        %10592 = vst [vmem:[%s334 + $0x2d0] sm:$0xff] %v10396
        %10593 = vst [vmem:[%s334 + $0x2d8] sm:$0xff] %v10397
        %10594 = vst [vmem:[%s334 + $0x2e0] sm:$0xff] %v10398
        %10595 = vst [vmem:[%s334 + $0x2e8] sm:$0xff] %v10399
        %10596 = vst [vmem:[%s334 + $0x2f0] sm:$0xff] %v10400
        %10597 = vst [vmem:[%s334 + $0x2f8] sm:$0xff] %v10401
        %10598 = vst [vmem:[%s334 + $0x300] sm:$0xff] %v10402
        %10599 = vst [vmem:[%s334 + $0x308] sm:$0xff] %v10403
        %10600 = vst [vmem:[%s334 + $0x310] sm:$0xff] %v10404
        %10601 = vst [vmem:[%s334 + $0x318] sm:$0xff] %v10405
        %10602 = vst [vmem:[%s334 + $0x320] sm:$0xff] %v10406
        %10603 = vst [vmem:[%s334 + $0x328] sm:$0xff] %v10407
        %10604 = vst [vmem:[%s334 + $0x330] sm:$0xff] %v10408
        %10605 = vst [vmem:[%s334 + $0x338] sm:$0xff] %v10409
        %10606 = vst [vmem:[%s334 + $0x340] sm:$0xff] %v10410
        %10607 = vst [vmem:[%s334 + $0x348] sm:$0xff] %v10411
        %10608 = vst [vmem:[%s334 + $0x350] sm:$0xff] %v10412
        %10609 = vst [vmem:[%s334 + $0x358] sm:$0xff] %v10413
        %10610 = vst [vmem:[%s334 + $0x360] sm:$0xff] %v10414
        %10611 = vst [vmem:[%s334 + $0x368] sm:$0xff] %v10415
        %10612 = vst [vmem:[%s334 + $0x370] sm:$0xff] %v10416
        %10613 = vst [vmem:[%s334 + $0x378] sm:$0xff] %v10417
        %10614 = vst [vmem:[%s334 + $0x380] sm:$0xff] %v10418
        %10615 = vst [vmem:[%s334 + $0x388] sm:$0xff] %v10419
        %10616 = vst [vmem:[%s334 + $0x390] sm:$0xff] %v10420
        %10617 = vst [vmem:[%s334 + $0x398] sm:$0xff] %v10421
        %10618 = vst [vmem:[%s334 + $0x3a0] sm:$0xff] %v10422
        %10619 = vst [vmem:[%s334 + $0x3a8] sm:$0xff] %v10423
        %10620 = vst [vmem:[%s334 + $0x3b0] sm:$0xff] %v10424
        %10621 = vst [vmem:[%s334 + $0x3b8] sm:$0xff] %v10425
        %10622 = vst [vmem:[%s334 + $0x3c0] sm:$0xff] %v10426
        %10623 = vst [vmem:[%s334 + $0x3c8] sm:$0xff] %v10427
        %10624 = vst [vmem:[%s334 + $0x3d0] sm:$0xff] %v10428
        %10625 = vst [vmem:[%s334 + $0x3d8] sm:$0xff] %v10429
        %10626 = vst [vmem:[%s334 + $0x3e0] sm:$0xff] %v10430
        %10627 = vst [vmem:[%s334 + $0x3e8] sm:$0xff] %v10431
        %10628 = vst [vmem:[%s334 + $0x3f0] sm:$0xff] %v10432
        %10629 = vst [vmem:[%s334 + $0x3f8] sm:$0xff] %v10433
        %10630 = vst [vmem:[%s334 + $0x400] sm:$0xff] %v10434
        %10631 = vst [vmem:[%s334 + $0x408] sm:$0xff] %v10435
        %10632 = vst [vmem:[%s334 + $0x410] sm:$0xff] %v10436
        %10633 = vst [vmem:[%s334 + $0x418] sm:$0xff] %v10437
        %10634 = vst [vmem:[%s334 + $0x420] sm:$0xff] %v10438
        %10635 = vst [vmem:[%s334 + $0x428] sm:$0xff] %v10439
        %10636 = vst [vmem:[%s334 + $0x430] sm:$0xff] %v10440
        %10637 = vst [vmem:[%s334 + $0x438] sm:$0xff] %v10441
        %10638 = vst [vmem:[%s334 + $0x440] sm:$0xff] %v10442
        %10639 = vst [vmem:[%s334 + $0x448] sm:$0xff] %v10443
        %10640 = vst [vmem:[%s334 + $0x450] sm:$0xff] %v10444
        %10641 = vst [vmem:[%s334 + $0x458] sm:$0xff] %v10445
        %10642 = vst [vmem:[%s334 + $0x460] sm:$0xff] %v10446
        %10643 = vst [vmem:[%s334 + $0x468] sm:$0xff] %v10447
        %10644 = vst [vmem:[%s334 + $0x470] sm:$0xff] %v10448
        %10645 = vst [vmem:[%s334 + $0x478] sm:$0xff] %v10449
        %10646 = vst [vmem:[%s334 + $0x480] sm:$0xff] %v10450
        %10647 = vst [vmem:[%s334 + $0x488] sm:$0xff] %v10451
        %10648 = vst [vmem:[%s334 + $0x490] sm:$0xff] %v10452
        %10649 = vst [vmem:[%s334 + $0x498] sm:$0xff] %v10453
        %10650 = vst [vmem:[%s334 + $0x4a0] sm:$0xff] %v10454
        %10651 = vst [vmem:[%s334 + $0x4a8] sm:$0xff] %v10455
        %10652 = vst [vmem:[%s334 + $0x4b0] sm:$0xff] %v10456
        %10653 = vst [vmem:[%s334 + $0x4b8] sm:$0xff] %v10457
        %10654 = vst [vmem:[%s334 + $0x4c0] sm:$0xff] %v10458
        %10655 = vst [vmem:[%s334 + $0x4c8] sm:$0xff] %v10459
        %10656 = vst [vmem:[%s334 + $0x4d0] sm:$0xff] %v10460
        %10657 = vst [vmem:[%s334 + $0x4d8] sm:$0xff] %v10461
        %10658 = vst [vmem:[%s334 + $0x4e0] sm:$0xff] %v10462
        %10659 = vst [vmem:[%s334 + $0x4e8] sm:$0xff] %v10463
        %10660 = vst [vmem:[%s334 + $0x4f0] sm:$0xff] %v10464
        %10661 = vst [vmem:[%s334 + $0x4f8] sm:$0xff] %v10465
        %10662 = vst [vmem:[%s334 + $0x500] sm:$0xff] %v10466
        %10663 = vst [vmem:[%s334 + $0x508] sm:$0xff] %v10467
        %10664 = vst [vmem:[%s334 + $0x510] sm:$0xff] %v10468
        %10665 = vst [vmem:[%s334 + $0x518] sm:$0xff] %v10469
        %10666 = vst [vmem:[%s334 + $0x520] sm:$0xff] %v10470
        %10667 = vst [vmem:[%s334 + $0x528] sm:$0xff] %v10471
        %10668 = vst [vmem:[%s334 + $0x530] sm:$0xff] %v10472
        %10669 = vst [vmem:[%s334 + $0x538] sm:$0xff] %v10473
        %10670 = vst [vmem:[%s334 + $0x540] sm:$0xff] %v10474
        %10671 = vst [vmem:[%s334 + $0x548] sm:$0xff] %v10475
        %10672 = vst [vmem:[%s334 + $0x550] sm:$0xff] %v10476
        %10673 = vst [vmem:[%s334 + $0x558] sm:$0xff] %v10477
        %10674 = vst [vmem:[%s334 + $0x560] sm:$0xff] %v10478
        %10675 = vst [vmem:[%s334 + $0x568] sm:$0xff] %v10479
        %10676 = vst [vmem:[%s334 + $0x570] sm:$0xff] %v10480
        %10677 = vst [vmem:[%s334 + $0x578] sm:$0xff] %v10481
        %10678 = vst [vmem:[%s334 + $0x580] sm:$0xff] %v10482
        %10679 = vst [vmem:[%s334 + $0x588] sm:$0xff] %v10483
        %10680 = vst [vmem:[%s334 + $0x590] sm:$0xff] %v10484
        %10681 = vst [vmem:[%s334 + $0x598] sm:$0xff] %v10485
        %10682 = vst [vmem:[%s334 + $0x5a0] sm:$0xff] %v10486
        %10683 = vst [vmem:[%s334 + $0x5a8] sm:$0xff] %v10487
        %10684 = vst [vmem:[%s334 + $0x5b0] sm:$0xff] %v10488
        %10685 = vst [vmem:[%s334 + $0x5b8] sm:$0xff] %v10489
        %10686 = vst [vmem:[%s334 + $0x5c0] sm:$0xff] %v10490
        %10687 = vst [vmem:[%s334 + $0x5c8] sm:$0xff] %v10491
        %10688 = vst [vmem:[%s334 + $0x5d0] sm:$0xff] %v10492
        %10689 = vst [vmem:[%s334 + $0x5d8] sm:$0xff] %v10493
        %10690 = vst [vmem:[%s334 + $0x5e0] sm:$0xff] %v10494
        %10691 = vst [vmem:[%s334 + $0x5e8] sm:$0xff] %v10495
        %10692 = vst [vmem:[%s334 + $0x5f0] sm:$0xff] %v10496
        %10693 = vst [vmem:[%s334 + $0x5f8] sm:$0xff] %v10497
        %10694 = vst [vmem:[%s334 + $0x600] sm:$0xff] %v10498
        %10695 = vst [vmem:[%s334 + $0x608] sm:$0xff] %v10499
        %10696 = vst [vmem:[%s334 + $0x610] sm:$0xff] %v10500
        %10697 = vst [vmem:[%s334 + $0x618] sm:$0xff] %v10501
        %v10698 = vld [vmem:[#allocation8] sm:$0xff]
        %v10700 = vcombine.high %v10698, %v10698
        %v10702 = vunpack.c.l.s4 1983009808
        %v10703 = vunpack.c.0.s8 %v10702
        %v10704 = vlaneseq
        %v10705 = vshrl.u32 %v10704, 7
        %v10706 = vsub.s32 %v10703, %v10705
        %v10707 = vrot.slane %v10698, %v10706
        %v10709 = vunpack.c.l.s4 1983009808
        %v10710 = vunpack.c.0.s8 %v10709
        %v10711 = vlaneseq
        %v10712 = vshrl.u32 %v10711, 7
        %v10713 = vsub.s32 %v10710, %v10712
        %v10714 = vrot.slane %v10700, %v10713
        %v10715 = vcombine.high %v10707, %v10707
        %v10716 = vcombine.high %v10714, %v10714
        %vm10720 = vcmask 64512
        %v10721 = vsel %vm10720, %v10716, 0
        %10723 = vmatprep.subr.mxu0 %v10367
        %10724 = vmatpush1.msra.mxu0 %v10366
        %10725 = vmatprep.subr.mxu0 %v10363
        %10726 = vmatpush1.msra.mxu0 %v10362
        %10727 = vmatprep.subr.mxu0 %v10359
        %10728 = vmatpush1.msra.mxu0 %v10358
        %10729 = vmatprep.subr.mxu0 %v10355
        %10730 = vmatpush1.msra.mxu0 %v10354
        %10731 = vmatprep.subr.mxu0 %v10351
        %10732 = vmatpush1.msra.mxu0 %v10350
        %10733 = vmatprep.subr.mxu0 %v10347
        %10734 = vmatpush1.msra.mxu0 %v10346
        %10735 = vmatprep.subr.mxu0 %v10343
        %10736 = vmatpush1.msra.mxu0 %v10342
        %10737 = vmatprep.subr.mxu0 %v10339
        %10738 = vmatpush1.msra.mxu0 %v10338
        %10739 = vmatprep.subr.mxu0 %v10335
        %10740 = vmatpush1.msra.mxu0 %v10334
        %10741 = vmatprep.subr.mxu0 %v10331
        %10742 = vmatpush1.msra.mxu0 %v10330
        %10743 = vmatprep.subr.mxu0 %v10327
        %10744 = vmatpush1.msra.mxu0 %v10326
        %10745 = vmatprep.subr.mxu0 %v10323
        %10746 = vmatpush1.msra.mxu0 %v10322
        %10747 = vmatprep.subr.mxu0 %v10319
        %10748 = vmatpush1.msra.mxu0 %v10318
        %10749 = vmatprep.subr.mxu0 %v10315
        %10750 = vmatpush1.msra.mxu0 %v10314
        %10751 = vmatprep.subr.mxu0 %v10311
        %10752 = vmatpush1.msra.mxu0 %v10310
        %10753 = vmatprep.subr.mxu0 %v10307
        %10754 = vmatpush1.msra.mxu0 %v10306
        %10755 = vmatprep.subr.mxu0 %v10431
        %10756 = vmatpush2.msra.mxu0 %v10430
        %10757 = vmatprep.subr.mxu0 %v10427
        %10758 = vmatpush2.msra.mxu0 %v10426
        %10759 = vmatprep.subr.mxu0 %v10423
        %10760 = vmatpush2.msra.mxu0 %v10422
        %10761 = vmatprep.subr.mxu0 %v10419
        %10762 = vmatpush2.msra.mxu0 %v10418
        %10763 = vmatprep.subr.mxu0 %v10415
        %10764 = vmatpush2.msra.mxu0 %v10414
        %10765 = vmatprep.subr.mxu0 %v10411
        %10766 = vmatpush2.msra.mxu0 %v10410
        %10767 = vmatprep.subr.mxu0 %v10407
        %10768 = vmatpush2.msra.mxu0 %v10406
        %10769 = vmatprep.subr.mxu0 %v10403
        %10770 = vmatpush2.msra.mxu0 %v10402
        %10771 = vmatprep.subr.mxu0 %v10399
        %10772 = vmatpush2.msra.mxu0 %v10398
        %10773 = vmatprep.subr.mxu0 %v10395
        %10774 = vmatpush2.msra.mxu0 %v10394
        %10775 = vmatprep.subr.mxu0 %v10391
        %10776 = vmatpush2.msra.mxu0 %v10390
        %10777 = vmatprep.subr.mxu0 %v10387
        %10778 = vmatpush2.msra.mxu0 %v10386
        %10779 = vmatprep.subr.mxu0 %v10383
        %10780 = vmatpush2.msra.mxu0 %v10382
        %10781 = vmatprep.subr.mxu0 %v10379
        %10782 = vmatpush2.msra.mxu0 %v10378
        %10783 = vmatprep.subr.mxu0 %v10375
        %10784 = vmatpush2.msra.mxu0 %v10374
        %10785 = vmatprep.subr.mxu0 %v10371
        %10786 = vmatpush2.msra.mxu0 %v10370
        %10787 = vmatprep.mubr.f32.mxu0 %v10715
        %10788 = vmatmul.mubr.f32.gmra.mxu0 %v10707
        %v10789 = vpop.f32.mrf.mxu0
        %v10790 = vadd.f32 0.0, %v10789
        %v10791 = vpop.f32.mrf.mxu0
        %v10792 = vadd.f32 0.0, %v10791
        %10793 = vdwg.mxu0
        %10794 = vmatprep.subr.mxu0 %v10495
        %10795 = vmatpush1.msra.mxu0 %v10494
        %10796 = vmatprep.subr.mxu0 %v10491
        %10797 = vmatpush1.msra.mxu0 %v10490
        %10798 = vmatprep.subr.mxu0 %v10487
        %10799 = vmatpush1.msra.mxu0 %v10486
        %10800 = vmatprep.subr.mxu0 %v10483
        %10801 = vmatpush1.msra.mxu0 %v10482
        %10802 = vmatprep.subr.mxu0 %v10479
        %10803 = vmatpush1.msra.mxu0 %v10478
        %10804 = vmatprep.subr.mxu0 %v10475
        %10805 = vmatpush1.msra.mxu0 %v10474
        %10806 = vmatprep.subr.mxu0 %v10471
        %10807 = vmatpush1.msra.mxu0 %v10470
        %10808 = vmatprep.subr.mxu0 %v10467
        %10809 = vmatpush1.msra.mxu0 %v10466
        %10810 = vmatprep.subr.mxu0 %v10463
        %10811 = vmatpush1.msra.mxu0 %v10462
        %10812 = vmatprep.subr.mxu0 %v10459
        %10813 = vmatpush1.msra.mxu0 %v10458
        %10814 = vmatprep.subr.mxu0 %v10455
        %10815 = vmatpush1.msra.mxu0 %v10454
        %10816 = vmatprep.subr.mxu0 %v10451
        %10817 = vmatpush1.msra.mxu0 %v10450
        %10818 = vmatprep.subr.mxu0 %v10447
        %10819 = vmatpush1.msra.mxu0 %v10446
        %10820 = vmatprep.subr.mxu0 %v10443
        %10821 = vmatpush1.msra.mxu0 %v10442
        %10822 = vmatprep.subr.mxu0 %v10439
        %10823 = vmatpush1.msra.mxu0 %v10438
        %10824 = vmatprep.subr.mxu0 %v10435
        %10825 = vmatpush1.msra.mxu0 %v10434
        %10826 = vmatprep.subr.mxu0 0.0
        %10827 = vmatpush2.msra.mxu0 0.0
        %10828 = vmatprep.subr.mxu0 0.0
        %10829 = vmatpush2.msra.mxu0 0.0
        %10830 = vmatprep.subr.mxu0 0.0
        %10831 = vmatpush2.msra.mxu0 0.0
        %10832 = vmatprep.subr.mxu0 0.0
        %10833 = vmatpush2.msra.mxu0 0.0
        %10834 = vmatprep.subr.mxu0 0.0
        %10835 = vmatpush2.msra.mxu0 0.0
        %10836 = vmatprep.subr.mxu0 0.0
        %10837 = vmatpush2.msra.mxu0 0.0
        %10838 = vmatprep.subr.mxu0 0.0
        %10839 = vmatpush2.msra.mxu0 0.0
        %10840 = vmatprep.subr.mxu0 0.0
        %10841 = vmatpush2.msra.mxu0 0.0
        %10842 = vmatprep.subr.mxu0 0.0
        %10843 = vmatpush2.msra.mxu0 0.0
        %10844 = vmatprep.subr.mxu0 0.0
        %10845 = vmatpush2.msra.mxu0 0.0
        %10846 = vmatprep.subr.mxu0 0.0
        %10847 = vmatpush2.msra.mxu0 0.0
        %10848 = vmatprep.subr.mxu0 0.0
        %10849 = vmatpush2.msra.mxu0 0.0
        %10850 = vmatprep.subr.mxu0 0.0
        %10851 = vmatpush2.msra.mxu0 0.0
        %10852 = vmatprep.subr.mxu0 0.0
        %10853 = vmatpush2.msra.mxu0 0.0
        %10854 = vmatprep.subr.mxu0 0.0
        %10855 = vmatpush2.msra.mxu0 0.0
        %10856 = vmatprep.subr.mxu0 %v10499
        %10857 = vmatpush2.msra.mxu0 %v10498
        %10858 = vmatprep.mubr.f32.mxu0 %v10721
        %10859 = vmatmul.mubr.f32.gmra.mxu0 %v10714
        %v10860 = vpop.f32.mrf.mxu0
        %v10861 = vadd.f32 %v10790, %v10860
        %v10862 = vpop.f32.mrf.mxu0
        %v10863 = vadd.f32 %v10792, %v10862
        %10864 = vdwg.mxu0
        %10865 = vmatprep.subr.mxu0 %v10369
        %10866 = vmatpush1.msra.mxu0 %v10368
        %10867 = vmatprep.subr.mxu0 %v10365
        %10868 = vmatpush1.msra.mxu0 %v10364
        %10869 = vmatprep.subr.mxu0 %v10361
        %10870 = vmatpush1.msra.mxu0 %v10360
        %10871 = vmatprep.subr.mxu0 %v10357
        %10872 = vmatpush1.msra.mxu0 %v10356
        %10873 = vmatprep.subr.mxu0 %v10353
        %10874 = vmatpush1.msra.mxu0 %v10352
        %10875 = vmatprep.subr.mxu0 %v10349
        %10876 = vmatpush1.msra.mxu0 %v10348
        %10877 = vmatprep.subr.mxu0 %v10345
        %10878 = vmatpush1.msra.mxu0 %v10344
        %10879 = vmatprep.subr.mxu0 %v10341
        %10880 = vmatpush1.msra.mxu0 %v10340
        %10881 = vmatprep.subr.mxu0 %v10337
        %10882 = vmatpush1.msra.mxu0 %v10336
        %10883 = vmatprep.subr.mxu0 %v10333
        %10884 = vmatpush1.msra.mxu0 %v10332
        %10885 = vmatprep.subr.mxu0 %v10329
        %10886 = vmatpush1.msra.mxu0 %v10328
        %10887 = vmatprep.subr.mxu0 %v10325
        %10888 = vmatpush1.msra.mxu0 %v10324
        %10889 = vmatprep.subr.mxu0 %v10321
        %10890 = vmatpush1.msra.mxu0 %v10320
        %10891 = vmatprep.subr.mxu0 %v10317
        %10892 = vmatpush1.msra.mxu0 %v10316
        %10893 = vmatprep.subr.mxu0 %v10313
        %10894 = vmatpush1.msra.mxu0 %v10312
        %10895 = vmatprep.subr.mxu0 %v10309
        %10896 = vmatpush1.msra.mxu0 %v10308
        %10897 = vmatprep.subr.mxu0 %v10433
        %10898 = vmatpush2.msra.mxu0 %v10432
        %10899 = vmatprep.subr.mxu0 %v10429
        %10900 = vmatpush2.msra.mxu0 %v10428
        %10901 = vmatprep.subr.mxu0 %v10425
        %10902 = vmatpush2.msra.mxu0 %v10424
        %10903 = vmatprep.subr.mxu0 %v10421
        %10904 = vmatpush2.msra.mxu0 %v10420
        %10905 = vmatprep.subr.mxu0 %v10417
        %10906 = vmatpush2.msra.mxu0 %v10416
        %10907 = vmatprep.subr.mxu0 %v10413
        %10908 = vmatpush2.msra.mxu0 %v10412
        %10909 = vmatprep.subr.mxu0 %v10409
        %10910 = vmatpush2.msra.mxu0 %v10408
        %10911 = vmatprep.subr.mxu0 %v10405
        %10912 = vmatpush2.msra.mxu0 %v10404
        %10913 = vmatprep.subr.mxu0 %v10401
        %10914 = vmatpush2.msra.mxu0 %v10400
        %10915 = vmatprep.subr.mxu0 %v10397
        %10916 = vmatpush2.msra.mxu0 %v10396
        %10917 = vmatprep.subr.mxu0 %v10393
        %10918 = vmatpush2.msra.mxu0 %v10392
        %10919 = vmatprep.subr.mxu0 %v10389
        %10920 = vmatpush2.msra.mxu0 %v10388
        %10921 = vmatprep.subr.mxu0 %v10385
        %10922 = vmatpush2.msra.mxu0 %v10384
        %10923 = vmatprep.subr.mxu0 %v10381
        %10924 = vmatpush2.msra.mxu0 %v10380
        %10925 = vmatprep.subr.mxu0 %v10377
        %10926 = vmatpush2.msra.mxu0 %v10376
        %10927 = vmatprep.subr.mxu0 %v10373
        %10928 = vmatpush2.msra.mxu0 %v10372
        %10929 = vmatprep.mubr.f32.mxu0 %v10715
        %10930 = vmatmul.mubr.f32.gmra.mxu0 %v10707
        %v10931 = vpop.f32.mrf.mxu0
        %v10932 = vadd.f32 0.0, %v10931
        %v10933 = vpop.f32.mrf.mxu0
        %v10934 = vadd.f32 0.0, %v10933
        %10935 = vdwg.mxu0
        %10936 = vmatprep.subr.mxu0 %v10497
        %10937 = vmatpush1.msra.mxu0 %v10496
        %10938 = vmatprep.subr.mxu0 %v10493
        %10939 = vmatpush1.msra.mxu0 %v10492
        %10940 = vmatprep.subr.mxu0 %v10489
        %10941 = vmatpush1.msra.mxu0 %v10488
        %10942 = vmatprep.subr.mxu0 %v10485
        %10943 = vmatpush1.msra.mxu0 %v10484
        %10944 = vmatprep.subr.mxu0 %v10481
        %10945 = vmatpush1.msra.mxu0 %v10480
        %10946 = vmatprep.subr.mxu0 %v10477
        %10947 = vmatpush1.msra.mxu0 %v10476
        %10948 = vmatprep.subr.mxu0 %v10473
        %10949 = vmatpush1.msra.mxu0 %v10472
        %10950 = vmatprep.subr.mxu0 %v10469
        %10951 = vmatpush1.msra.mxu0 %v10468
        %10952 = vmatprep.subr.mxu0 %v10465
        %10953 = vmatpush1.msra.mxu0 %v10464
        %10954 = vmatprep.subr.mxu0 %v10461
        %10955 = vmatpush1.msra.mxu0 %v10460
        %10956 = vmatprep.subr.mxu0 %v10457
        %10957 = vmatpush1.msra.mxu0 %v10456
        %10958 = vmatprep.subr.mxu0 %v10453
        %10959 = vmatpush1.msra.mxu0 %v10452
        %10960 = vmatprep.subr.mxu0 %v10449
        %10961 = vmatpush1.msra.mxu0 %v10448
        %10962 = vmatprep.subr.mxu0 %v10445
        %10963 = vmatpush1.msra.mxu0 %v10444
        %10964 = vmatprep.subr.mxu0 %v10441
        %10965 = vmatpush1.msra.mxu0 %v10440
        %10966 = vmatprep.subr.mxu0 %v10437
        %10967 = vmatpush1.msra.mxu0 %v10436
        %10968 = vmatprep.subr.mxu0 0.0
        %10969 = vmatpush2.msra.mxu0 0.0
        %10970 = vmatprep.subr.mxu0 0.0
        %10971 = vmatpush2.msra.mxu0 0.0
        %10972 = vmatprep.subr.mxu0 0.0
        %10973 = vmatpush2.msra.mxu0 0.0
        %10974 = vmatprep.subr.mxu0 0.0
        %10975 = vmatpush2.msra.mxu0 0.0
        %10976 = vmatprep.subr.mxu0 0.0
        %10977 = vmatpush2.msra.mxu0 0.0
        %10978 = vmatprep.subr.mxu0 0.0
        %10979 = vmatpush2.msra.mxu0 0.0
        %10980 = vmatprep.subr.mxu0 0.0
        %10981 = vmatpush2.msra.mxu0 0.0
        %10982 = vmatprep.subr.mxu0 0.0
        %10983 = vmatpush2.msra.mxu0 0.0
        %10984 = vmatprep.subr.mxu0 0.0
        %10985 = vmatpush2.msra.mxu0 0.0
        %10986 = vmatprep.subr.mxu0 0.0
        %10987 = vmatpush2.msra.mxu0 0.0
        %10988 = vmatprep.subr.mxu0 0.0
        %10989 = vmatpush2.msra.mxu0 0.0
        %10990 = vmatprep.subr.mxu0 0.0
        %10991 = vmatpush2.msra.mxu0 0.0
        %10992 = vmatprep.subr.mxu0 0.0
        %10993 = vmatpush2.msra.mxu0 0.0
        %10994 = vmatprep.subr.mxu0 0.0
        %10995 = vmatpush2.msra.mxu0 0.0
        %10996 = vmatprep.subr.mxu0 0.0
        %10997 = vmatpush2.msra.mxu0 0.0
        %10998 = vmatprep.subr.mxu0 %v10501
        %10999 = vmatpush2.msra.mxu0 %v10500
        %11000 = vmatprep.mubr.f32.mxu0 %v10721
        %11001 = vmatmul.mubr.f32.gmra.mxu0 %v10714
        %v11002 = vpop.f32.mrf.mxu0
        %v11003 = vadd.f32 %v10932, %v11002
        %v11004 = vpop.f32.mrf.mxu0
        %v11005 = vadd.f32 %v10934, %v11004
        %11006 = vdwg.mxu0
        %v11011 = vcombine.low %v10861, %v10863
        %v11012 = vcombine.low %v11003, %v11005
        %v11014 = vunpack.c.l.s4 1983009808
        %v11015 = vunpack.c.0.s8 %v11014
        %v11016 = vlaneseq
        %v11017 = vshrl.u32 %v11016, 7
        %v11018 = vsub.s32 %v11015, %v11017
        %v11019 = vrot.slane %v11011, %v11018
        %v11021 = vunpack.c.l.s4 1983009808
        %v11022 = vunpack.c.0.s8 %v11021
        %v11023 = vlaneseq
        %v11024 = vshrl.u32 %v11023, 7
        %v11025 = vsub.s32 %v11022, %v11024
        %v11026 = vrot.slane %v11012, %v11025
        %v11027 = vcombine.low %v11019, %v11026
        %11029 = vst [vmem:[%s341] sm:$0xff] %v11027
        %s11030 = sand.u32 %s149, 1
        %s11031 = scalar_lea.sflag [#allocation4], %s11030
        %s11032 = sand.u32 %s149, 1
        %s11033 = smul.addr %s11032, 1568
        %s11034 = scalar_lea.vmem [#allocation10], %s11033
        %s11035 = sand.u32 %s177, 1
        %s11036 = scalar_lea.sflag [#allocation12], %s11035
        %s11037 = sand.u32 %s177, 1
        %s11038 = smul.addr %s11037, 8
        %s11039 = scalar_lea.vmem [#allocation11], %s11038
        // Predicated region
        $region53: #{tpu_custom_call.1} parent=35 // pred_check
          %p11040 = pneg %p159
        $region54: #{tpu_custom_call.1} parent=35 // pred_check_branch
          %11042 = sbr.rel (%p11040) target = $region56
        $region55: #{tpu_custom_call.1} parent=35 // pred_region
          %s11043 = smul.u32 49, %s32
          %s11044 = smul.u32 4, %s33
          %s11046 = ssub.s32 25088, 25088
          %11047 = vsyncadd %s11031, %s11046
          %s11048 = smul.addr %s11043, 8
          %s11049 = sadd.s32 %s11044, %s11048
          %s11050 = smul.addr %s11049, 128
          %s11051 = scalar_lea.hbm %s4, %s11050
          %s11052 = sshll.u32 %s11034, 4
          %s11053 = int_to_ptr.vmem [resolvable:$true] %s11052
          %11058 = dma.vmem_to_hbm [thread:$0]  %s11053, 25088, %s11051, %s11031, 512, 1024, 32
        $region56: #{tpu_custom_call.1} parent=35 // pred_fallthru
          _
        // Predicated region
        $region57: #{tpu_custom_call.1} parent=35 // pred_check
          %p11059 = pneg %p187
        $region58: #{tpu_custom_call.1} parent=35 // pred_check_branch
          %11061 = sbr.rel (%p11059) target = $region60
        $region59: #{tpu_custom_call.1} parent=35 // pred_region
          %s11062 = smul.u32 4, %s33
          %s11064 = ssub.s32 128, 128
          %11065 = vsyncadd %s11036, %s11064
          %s11066 = smul.addr %s32, 8
          %s11067 = sadd.s32 %s11062, %s11066
          %s11068 = smul.addr %s11067, 32
          %s11069 = scalar_lea.hbm %s5, %s11068
          %s11071 = sshll.u32 %s11039, 4
          %s11072 = int_to_ptr.vmem [resolvable:$true] %s11071
          %11074 = dma.vmem_to_hbm [thread:$0]  %s11072, 128, %s11069, %s11036
        $region60: #{tpu_custom_call.1} parent=35 // pred_fallthru
          _
      $region36: #{tpu_custom_call.1} parent=5 // pred_fallthru
        _
      %p11075 = scmp.le.s32.totalorder 2, %s23
      // Predicated region
      $region61: #{tpu_custom_call.1} parent=5 // pred_check
        %p11076 = pneg %p11075
      $region62: #{tpu_custom_call.1} parent=5 // pred_check_branch
        %11078 = sbr.rel (%p11076) target = $region64
      $region63: #{tpu_custom_call.1} parent=5 // pred_region
        %s11079 = ssub.s32 %s23, 2
        // Predicated region
        $region65: #{tpu_custom_call.1} parent=63 // pred_check
          %p11080 = pneg %p165
        $region66: #{tpu_custom_call.1} parent=63 // pred_check_branch
          %11082 = sbr.rel (%p11080) target = $region68
        $region67: #{tpu_custom_call.1} parent=63 // pred_region
          %s11083 = sand.u32 %s150, 1
          %s11084 = scalar_lea.sflag [#allocation4], %s11083
          %s11085 = sand.u32 %s150, 1
          %s11086 = smul.addr %s11085, 1568
          %s11087 = scalar_lea.vmem [#allocation10], %s11086
          %11088 = dma.done %s11084, 25088
        $region68: #{tpu_custom_call.1} parent=63 // pred_fallthru
          _
        // Predicated region
        $region69: #{tpu_custom_call.1} parent=63 // pred_check
          %p11089 = pneg %p193
        $region70: #{tpu_custom_call.1} parent=63 // pred_check_branch
          %11091 = sbr.rel (%p11089) target = $region72
        $region71: #{tpu_custom_call.1} parent=63 // pred_region
          %s11092 = sand.u32 %s178, 1
          %s11093 = scalar_lea.sflag [#allocation12], %s11092
          %s11094 = sand.u32 %s178, 1
          %s11095 = smul.addr %s11094, 8
          %s11096 = scalar_lea.vmem [#allocation11], %s11095
          %11097 = dma.done %s11093, 128
        $region72: #{tpu_custom_call.1} parent=63 // pred_fallthru
          _
      $region64: #{tpu_custom_call.1} parent=5 // pred_fallthru
        _
    $region6: #{tpu_custom_call.1} parent=1 // loop_footer
      %s27 = sadd.s32 1, %s23
    $region7: #{tpu_custom_call.1} parent=1 // loop_footer_branch
      %22 = sbr.rel target = $region3
    $region8: #{tpu_custom_call.1} parent=1 // loop_exit
      _
    %11098 = vsyncpa [#allocation3], 1
    %s11099 = scalar_lea.sflag [#allocation3], 1
    %11100 = vsyncpa %s11099, 1
    %11101 = vsyncpa [#allocation6], 1
    %s11102 = scalar_lea.sflag [#allocation6], 1
    %11103 = vsyncpa %s11102, 1
    %11104 = vsyncpa [#allocation9], 1
    %11105 = vsyncpa [#allocation4], 1
    %s11106 = scalar_lea.sflag [#allocation4], 1
    %11107 = vsyncpa %s11106, 1
    %11108 = vsyncpa [#allocation12], 1
    %s11109 = scalar_lea.sflag [#allocation12], 1
    %11110 = vsyncpa %s11109, 1

</llo_original>
